<compile_context>
chip_gen: v5e
topology: v5e:2x2
jax: 0.10.0
libtpu: 0.0.40
codegen_flags: <defaults>
</compile_context>

<pallas_src>
import math

import jax
import jax.numpy as jnp
from jax import lax
from jax.experimental import pallas as pl
from jax.experimental.pallas import tpu as pltpu

# ------------------------- configuration (small shapes) -------------------------
NUM_FEATURES = (16, 32, 64)        # dense layer widths; 64 == prod(RESHAPE)
RESHAPE = (4, 4, 4)                # (C0, H0, W0) between dense and conv layers
NUM_CHANNELS = (4, 8, 1)           # conv channel schedule; NUM_CHANNELS[0] == RESHAPE[0]
KERNEL_SIZE = 3
SCALING = 2
NEG_SLOPE = 0.01                   # torch LeakyReLU default negative_slope

N_DENSE = len(NUM_FEATURES) - 1
N_TRANS = len(NUM_CHANNELS) - 1
MAX_TB = 128                       # batch-block cap (well inside every chip's VMEM)


def _round_up(a, m):
    return (a + m - 1) // m * m


def _leaky_relu(x):
    return jnp.where(x > 0, x, NEG_SLOPE * x)


# Per-layer (Din, Dout) of the flattened linear maps, in forward order:
#   dense*  |  per transition: ConvT (+ DoubleConv except last)  |  head DoubleConv
def _layer_dims():
    dims = []
    for i in range(N_DENSE):
        dims.append((NUM_FEATURES[i], NUM_FEATURES[i + 1]))
    _, H, W = RESHAPE
    cin = NUM_CHANNELS[0]
    for i in range(N_TRANS):
        dims.append((cin * H * W, cin * H * W * SCALING * SCALING))   # ConvTranspose2d
        H, W = H * SCALING, W * SCALING
        if i < N_TRANS - 1:                                           # DoubleConv
            cout = NUM_CHANNELS[i + 1]
            dims.append((cin * H * W, cout * H * W))
            dims.append((cout * H * W, cout * H * W))
            cin = cout
    cl = NUM_CHANNELS[-1]                                             # bernoulli_logits
    dims.append((cin * H * W, cl * H * W))
    dims.append((cl * H * W, cl * H * W))
    return tuple(dims), (H, W)


LAYER_DIMS, (OUT_H, OUT_W) = _layer_dims()
N_LAYERS = len(LAYER_DIMS)                      # = 8 for the default config
D_OUT = LAYER_DIMS[-1][1]                       # = 256 (lane-dense output block)

# all biases packed into ONE operand; every segment starts at a 128-aligned lane offset
BIAS_OFFSETS = []
_off = 0
for _, _dout in LAYER_DIMS:
    BIAS_OFFSETS.append(_off)
    _off += _round_up(_dout, 128)
BIAS_TOTAL = _off                               # = 4096 for the default config


# --------------------------------- fused kernel ----------------------------------
def _decoder_kernel(*refs):
    """Whole ConvDecoder forward for a (TB, F0) block of latents.

    refs = (x_ref, w_ref[0..N_LAYERS-1], bias_ref, o_ref).
    Each layer is a lane-dense matmul  h <- h @ W_l + b_l  (+ leaky_relu except last).
    """
    x_ref = refs[0]
    w_refs = refs[1:1 + N_LAYERS]
    b_ref = refs[1 + N_LAYERS]
    o_ref = refs[2 + N_LAYERS]

    h = x_ref[...]                                                    # (TB, F0)
    for li in range(N_LAYERS):
        dout = LAYER_DIMS[li][1]
        off = BIAS_OFFSETS[li]                                        # 128-aligned
        h = jnp.dot(h, w_refs[li][...], preferred_element_type=jnp.float32)
        h = h + b_ref[:, off:off + dout]                              # (1, dout) bcast
        if li < N_LAYERS - 1:              # activation='leaky_relu', last_activation=None
            h = _leaky_relu(h)
    o_ref[...] = h                                                    # (TB, 256)


# ------------------------ parameters (PyTorch-style layouts) ----------------------
def init_params(key):
    keys = iter(jax.random.split(key, 64))

    def nrm(shape, scale=0.1):
        return scale * jax.random.normal(next(keys), shape, dtype=jnp.float32)

    params = {}
    # DenseBlock: Linear weights stored pre-transposed as (F_in, F_out) + bias (F_out,)
    params["dense"] = [
        (nrm((NUM_FEATURES[i], NUM_FEATURES[i + 1])), nrm((NUM_FEATURES[i + 1],)))
        for i in range(N_DENSE)
    ]
    # ConvUp: per transition a ConvTranspose2d weight (Cin, Cout=Cin, s, s) + bias, and
    # for all but the last transition (conv_last=False) a DoubleConv (inout_first).
    ups, dbls = [], []
    for i in range(N_TRANS):
        cin = NUM_CHANNELS[i]
        ups.append((nrm((cin, cin, SCALING, SCALING)), nrm((cin,))))
        if i < N_TRANS - 1:
            cout = NUM_CHANNELS[i + 1]
            dbls.append((
                (nrm((cout, cin, KERNEL_SIZE, KERNEL_SIZE)), nrm((cout,))),
                (nrm((cout, cout, KERNEL_SIZE, KERNEL_SIZE)), nrm((cout,))),
            ))
    params["up"] = ups
    params["double"] = dbls
    # bernoulli_logits head: DoubleConv(nc[-2] -> nc[-1]), last_activation=None
    c_in, c_out = NUM_CHANNELS[-2], NUM_CHANNELS[-1]
    params["head"] = (
        (nrm((c_out, c_in, KERNEL_SIZE, KERNEL_SIZE)), nrm((c_out,))),
        (nrm((c_out, c_out, KERNEL_SIZE, KERNEL_SIZE)), nrm((c_out,))),
    )
    return params


def prepare_params(params):
    """One-time host-side lowering of PyTorch-layout params to the kernel layouts.

    Every layer becomes a dense (Din, Dout) matrix acting on the flattened NHWC image
    (the kernel computes x_flat @ M + b):
      * Linear layers keep their (Fin, Fout) weight; the LAST dense layer's output
        columns are permuted from NCHW-flat (x.view(-1, C, H, W)) to NHWC-flat so the
        handoff to the conv matrices needs no in-kernel transpose.
      * ConvTranspose2d(k=s, stride=s) and 3x3 'same' convs are densified by pushing
        the identity basis through the exact reference op at HIGHEST precision.
      * All per-layer biases (tiled over pixels in NHWC order) are packed into a single
        lane-aligned (1, BIAS_TOTAL) operand.
    """
    hp = lax.Precision.HIGHEST
    C0, H0, W0 = RESHAPE
    s = SCALING

    def conv_same_nhwc(img, w_pt):            # img (H, W, Cin), w_pt (Cout, Cin, K, K)
        y = lax.conv_general_dilated(img[None], w_pt, (1, 1), "SAME",
                                     dimension_numbers=("NHWC", "OIHW", "NHWC"),
                                     precision=hp)
        return y[0]

    def conv_transpose_nhwc(img, w_pt):       # img (H, W, Cin), w_pt (Cin, Cout, s, s)
        H, W = img.shape[0], img.shape[1]
        y = jnp.einsum("hwc,cdij->hiwjd", img, w_pt, precision=hp)
        return y.reshape(H * s, W * s, w_pt.shape[1])

    def densify(op, in_shape, w_pt):          # linear op -> (Din, Dout) matrix, x@M form
        din = math.prod(in_shape)
        eye = jnp.eye(din, dtype=jnp.float32)
        return jax.vmap(lambda v: op(v.reshape(in_shape), w_pt).reshape(-1))(eye)

    mats, biases = [], []
    # ---- DenseBlock ----
    for li, (w, b) in enumerate(params["dense"]):
        if li == N_DENSE - 1:
            j = jnp.arange(C0 * H0 * W0)
            old = (j % C0) * (H0 * W0) + (j // C0)   # NHWC-flat col <- NCHW-flat col
            w, b = w[:, old], b[old]
        mats.append(w.astype(jnp.float32))
        biases.append(b)
    # ---- ConvUp ----
    H, W = H0, W0
    cin = NUM_CHANNELS[0]
    for i in range(N_TRANS):
        w_up, b_up = params["up"][i]
        mats.append(densify(conv_transpose_nhwc, (H, W, cin), w_up))
        H, W = H * s, W * s
        biases.append(jnp.tile(b_up, H * W))
        if i < N_TRANS - 1:
            cout = NUM_CHANNELS[i + 1]
            (w1, b1), (w2, b2) = params["double"][i]
            mats.append(densify(conv_same_nhwc, (H, W, cin), w1))
            biases.append(jnp.tile(b1, H * W))
            mats.append(densify(conv_same_nhwc, (H, W, cout), w2))
            biases.append(jnp.tile(b2, H * W))
            cin = cout
    # ---- bernoulli_logits head ----
    (w1, b1), (w2, b2) = params["head"]
    cl = NUM_CHANNELS[-1]
    mats.append(densify(conv_same_nhwc, (H, W, cin), w1))
    biases.append(jnp.tile(b1, H * W))
    mats.append(densify(conv_same_nhwc, (H, W, cl), w2))
    biases.append(jnp.tile(b2, H * W))

    assert len(mats) == N_LAYERS
    for m, (din, dout) in zip(mats, LAYER_DIMS):
        assert m.shape == (din, dout), (m.shape, din, dout)

    b_pack = jnp.zeros((1, BIAS_TOTAL), jnp.float32)
    for off, b in zip(BIAS_OFFSETS, biases):
        b_pack = b_pack.at[0, off:off + b.shape[0]].set(b.astype(jnp.float32))
    return {"mats": mats, "bias": b_pack}


# ------------------------------- pallas_call wrapper ------------------------------
def conv_decoder_forward(kparams, x):
    """x: (B, NUM_FEATURES[0]) latent -> Bernoulli logits (B, NUM_CHANNELS[-1], H, W)."""
    B, F0 = x.shape
    assert F0 == NUM_FEATURES[0]

    # Batch block: multiple of 8 sublanes, capped, and >= 2 grid steps when possible so
    # dimension_semantics=("parallel",) actually feeds both TensorCores on v7x.
    TB = min(MAX_TB, _round_up(max(1, (B + 1) // 2), 8))
    Bp = _round_up(B, TB)
    if Bp != B:
        x = jnp.pad(x, ((0, Bp - B), (0, 0)))

    mats, b_pack = kparams["mats"], kparams["bias"]

    in_specs = [pl.BlockSpec((TB, F0), lambda b: (b, 0))]
    # Weight matrices + packed bias: full-array blocks with constant index maps —
    # Pallas copies them into VMEM once and elides the DMA on subsequent grid steps.
    in_specs += [pl.BlockSpec((din, dout), lambda b: (0, 0)) for din, dout in LAYER_DIMS]
    in_specs += [pl.BlockSpec((1, BIAS_TOTAL), lambda b: (0, 0))]

    out = pl.pallas_call(
        _decoder_kernel,
        out_shape=jax.ShapeDtypeStruct((Bp, D_OUT), jnp.float32),
        grid=(Bp // TB,),
        in_specs=in_specs,
        out_specs=pl.BlockSpec((TB, D_OUT), lambda b: (b, 0)),
        compiler_params=pltpu.CompilerParams(
            dimension_semantics=("parallel",),        # batch blocks are independent
            vmem_limit_bytes=48 * 1024 * 1024,        # ~16 MiB dbl-buffered weights + blocks
        ),
    )(x, *mats, b_pack)

    # lane-dense NHWC-flat (Bp, H*W*C) -> NCHW logits (tiny metadata-level reshuffle)
    out = out[:B].reshape(B, OUT_H, OUT_W, NUM_CHANNELS[-1])
    return jnp.transpose(out, (0, 3, 1, 2))


# ----------------------- pure-JAX reference (for validation) ----------------------
def _reference_forward(params, x):
    hp = lax.Precision.HIGHEST
    h = x
    for w, b in params["dense"]:
        h = _leaky_relu(jnp.dot(h, w, precision=hp) + b)
    B = x.shape[0]
    C0, H0, W0 = RESHAPE
    h = h.reshape(B, C0, H0, W0)                                      # NCHW

    def conv_same(t, w_pt, b):
        y = lax.conv_general_dilated(t, w_pt, (1, 1), "SAME",
                                     dimension_numbers=("NCHW", "OIHW", "NCHW"),
                                     precision=hp)
        return y + b.reshape(1, -1, 1, 1)

    def conv_transpose_up(t, w_pt, b):                                # kernel == stride
        Bt, _, H, W = t.shape
        Cout, s = w_pt.shape[1], w_pt.shape[2]
        y = jnp.einsum("bchw,cdij->bdhiwj", t, w_pt, precision=hp)
        return y.reshape(Bt, Cout, H * s, W * s) + b.reshape(1, -1, 1, 1)

    for i in range(N_TRANS):
        w_up, b_up = params["up"][i]
        h = _leaky_relu(conv_transpose_up(h, w_up, b_up))
        if i < N_TRANS - 1:
            (w1, b1), (w2, b2) = params["double"][i]
            h = _leaky_relu(conv_same(h, w1, b1))
            h = _leaky_relu(conv_same(h, w2, b2))
    (w1, b1), (w2, b2) = params["head"]
    h = _leaky_relu(conv_same(h, w1, b1))
    return conv_same(h, w2, b2)


# -------------------------------------- main ---------------------------------------
if __name__ == "__main__":
    key = jax.random.PRNGKey(0)
    k_param, k_x = jax.random.split(key)
    params = init_params(k_param)            # PyTorch-layout parameters
    kparams = prepare_params(params)         # one-time densification (hoisted)

    B = 16                                    # -> TB = 8, grid of 2 parallel steps
    x = jax.random.normal(k_x, (B, NUM_FEATURES[0]), dtype=jnp.float32)

    fwd = jax.jit(conv_decoder_forward)
    logits = jax.block_until_ready(fwd(kparams, x))

    assert logits.shape == (B, NUM_CHANNELS[-1], OUT_H, OUT_W), logits.shape
    assert bool(jnp.all(jnp.isfinite(logits)))

    # validate the fused kernel against a pure-XLA reference of the same module
    # (5e-3 normalized-max tolerance leaves room for the MXU's f32 pass rounding)
    ref = _reference_forward(params, x)
    err = float(jnp.max(jnp.abs(logits - ref)) / (jnp.max(jnp.abs(ref)) + 1e-12))
    assert err < 5e-3, err

    print("KERNEL_OK")
</pallas_src>

<mosaic_0001>
module attributes {stable_mosaic.version = 11 : i64} {
  func.func @_decoder_kernel(%arg0: i32, %arg1: memref<8x16xf32, #tpu.memory_space<vmem>>, %arg2: memref<16x32xf32, #tpu.memory_space<vmem>>, %arg3: memref<32x64xf32, #tpu.memory_space<vmem>>, %arg4: memref<64x256xf32, #tpu.memory_space<vmem>>, %arg5: memref<256x512xf32, #tpu.memory_space<vmem>>, %arg6: memref<512x512xf32, #tpu.memory_space<vmem>>, %arg7: memref<512x2048xf32, #tpu.memory_space<vmem>>, %arg8: memref<2048x256xf32, #tpu.memory_space<vmem>>, %arg9: memref<256x256xf32, #tpu.memory_space<vmem>>, %arg10: memref<1x4096xf32, #tpu.memory_space<vmem>>, %arg11: memref<8x256xf32, #tpu.memory_space<vmem>>) attributes {dimension_semantics = [#tpu.dimension_semantics<parallel>], iteration_bounds = array<i64: 2>, scalar_prefetch = 0 : i64, scratch_operands = 0 : i64, tpu.core_type = #tpu.core_type<tc>, window_params = [{transform_indices = @transform_0, window_bounds = array<i64: 8, 16>}, {pipeline_mode = #tpu.pipeline_mode<synchronous>, transform_indices = @transform_1, window_bounds = array<i64: 16, 32>}, {pipeline_mode = #tpu.pipeline_mode<synchronous>, transform_indices = @transform_2, window_bounds = array<i64: 32, 64>}, {pipeline_mode = #tpu.pipeline_mode<synchronous>, transform_indices = @transform_3, window_bounds = array<i64: 64, 256>}, {pipeline_mode = #tpu.pipeline_mode<synchronous>, transform_indices = @transform_4, window_bounds = array<i64: 256, 512>}, {pipeline_mode = #tpu.pipeline_mode<synchronous>, transform_indices = @transform_5, window_bounds = array<i64: 512, 512>}, {pipeline_mode = #tpu.pipeline_mode<synchronous>, transform_indices = @transform_6, window_bounds = array<i64: 512, 2048>}, {pipeline_mode = #tpu.pipeline_mode<synchronous>, transform_indices = @transform_7, window_bounds = array<i64: 2048, 256>}, {pipeline_mode = #tpu.pipeline_mode<synchronous>, transform_indices = @transform_8, window_bounds = array<i64: 256, 256>}, {pipeline_mode = #tpu.pipeline_mode<synchronous>, transform_indices = @transform_9, window_bounds = array<i64: 1, 4096>}, {transform_indices = @transform_10, window_bounds = array<i64: 8, 256>}]} {
    %c0 = arith.constant 0 : index
    %c0_0 = arith.constant 0 : index
    %0 = vector.load %arg1[%c0, %c0_0] : memref<8x16xf32, #tpu.memory_space<vmem>>, vector<8x16xf32>
    %c0_1 = arith.constant 0 : index
    %c0_2 = arith.constant 0 : index
    %1 = vector.load %arg2[%c0_1, %c0_2] : memref<16x32xf32, #tpu.memory_space<vmem>>, vector<16x32xf32>
    %cst = arith.constant dense<0.000000e+00> : vector<8x32xf32>
    %2 = tpu.matmul %0, %1, %cst {dimension_numbers = #tpu.dot_dimension_numbers<[1], [0], [0], [1], [0, 0, 1, 1], [], []>} : vector<8x16xf32>, vector<16x32xf32>, vector<8x32xf32> -> vector<8x32xf32>
    %c0_3 = arith.constant 0 : index
    %c0_4 = arith.constant 0 : index
    %3 = vector.load %arg10[%c0_3, %c0_4] : memref<1x4096xf32, #tpu.memory_space<vmem>>, vector<1x32xf32>
    %4 = vector.broadcast %3 : vector<1x32xf32> to vector<8x32xf32>
    %5 = arith.addf %2, %4 : vector<8x32xf32>
    %cst_5 = arith.constant 0.000000e+00 : f32
    %6 = vector.broadcast %cst_5 : f32 to vector<8x32xf32>
    %7 = arith.cmpf ogt, %5, %6 : vector<8x32xf32>
    %cst_6 = arith.constant 0.00999999977 : f32
    %8 = vector.broadcast %cst_6 : f32 to vector<8x32xf32>
    %9 = arith.mulf %8, %5 : vector<8x32xf32>
    %10 = arith.select %7, %5, %9 : vector<8x32xi1>, vector<8x32xf32>
    %c0_7 = arith.constant 0 : index
    %c0_8 = arith.constant 0 : index
    %11 = vector.load %arg3[%c0_7, %c0_8] : memref<32x64xf32, #tpu.memory_space<vmem>>, vector<32x64xf32>
    %cst_9 = arith.constant dense<0.000000e+00> : vector<8x64xf32>
    %12 = tpu.matmul %10, %11, %cst_9 {dimension_numbers = #tpu.dot_dimension_numbers<[1], [0], [0], [1], [0, 0, 1, 1], [], []>} : vector<8x32xf32>, vector<32x64xf32>, vector<8x64xf32> -> vector<8x64xf32>
    %c0_10 = arith.constant 0 : index
    %c128 = arith.constant 128 : index
    %13 = vector.load %arg10[%c0_10, %c128] : memref<1x4096xf32, #tpu.memory_space<vmem>>, vector<1x64xf32>
    %14 = vector.broadcast %13 : vector<1x64xf32> to vector<8x64xf32>
    %15 = arith.addf %12, %14 : vector<8x64xf32>
    %cst_11 = arith.constant 0.000000e+00 : f32
    %16 = vector.broadcast %cst_11 : f32 to vector<8x64xf32>
    %17 = arith.cmpf ogt, %15, %16 : vector<8x64xf32>
    %cst_12 = arith.constant 0.00999999977 : f32
    %18 = vector.broadcast %cst_12 : f32 to vector<8x64xf32>
    %19 = arith.mulf %18, %15 : vector<8x64xf32>
    %20 = arith.select %17, %15, %19 : vector<8x64xi1>, vector<8x64xf32>
    %c0_13 = arith.constant 0 : index
    %c0_14 = arith.constant 0 : index
    %21 = vector.load %arg4[%c0_13, %c0_14] : memref<64x256xf32, #tpu.memory_space<vmem>>, vector<64x256xf32>
    %cst_15 = arith.constant dense<0.000000e+00> : vector<8x256xf32>
    %22 = tpu.matmul %20, %21, %cst_15 {dimension_numbers = #tpu.dot_dimension_numbers<[1], [0], [0], [1], [0, 0, 1, 1], [], []>} : vector<8x64xf32>, vector<64x256xf32>, vector<8x256xf32> -> vector<8x256xf32>
    %c0_16 = arith.constant 0 : index
    %c256 = arith.constant 256 : index
    %23 = vector.load %arg10[%c0_16, %c256] : memref<1x4096xf32, #tpu.memory_space<vmem>>, vector<1x256xf32>
    %24 = vector.broadcast %23 : vector<1x256xf32> to vector<8x256xf32>
    %25 = arith.addf %22, %24 : vector<8x256xf32>
    %cst_17 = arith.constant 0.000000e+00 : f32
    %26 = vector.broadcast %cst_17 : f32 to vector<8x256xf32>
    %27 = arith.cmpf ogt, %25, %26 : vector<8x256xf32>
    %cst_18 = arith.constant 0.00999999977 : f32
    %28 = vector.broadcast %cst_18 : f32 to vector<8x256xf32>
    %29 = arith.mulf %28, %25 : vector<8x256xf32>
    %30 = arith.select %27, %25, %29 : vector<8x256xi1>, vector<8x256xf32>
    %c0_19 = arith.constant 0 : index
    %c0_20 = arith.constant 0 : index
    %31 = vector.load %arg5[%c0_19, %c0_20] : memref<256x512xf32, #tpu.memory_space<vmem>>, vector<256x512xf32>
    %cst_21 = arith.constant dense<0.000000e+00> : vector<8x512xf32>
    %32 = tpu.matmul %30, %31, %cst_21 {dimension_numbers = #tpu.dot_dimension_numbers<[1], [0], [0], [1], [0, 0, 1, 1], [], []>} : vector<8x256xf32>, vector<256x512xf32>, vector<8x512xf32> -> vector<8x512xf32>
    %c0_22 = arith.constant 0 : index
    %c512 = arith.constant 512 : index
    %33 = vector.load %arg10[%c0_22, %c512] : memref<1x4096xf32, #tpu.memory_space<vmem>>, vector<1x512xf32>
    %34 = vector.broadcast %33 : vector<1x512xf32> to vector<8x512xf32>
    %35 = arith.addf %32, %34 : vector<8x512xf32>
    %cst_23 = arith.constant 0.000000e+00 : f32
    %36 = vector.broadcast %cst_23 : f32 to vector<8x512xf32>
    %37 = arith.cmpf ogt, %35, %36 : vector<8x512xf32>
    %cst_24 = arith.constant 0.00999999977 : f32
    %38 = vector.broadcast %cst_24 : f32 to vector<8x512xf32>
    %39 = arith.mulf %38, %35 : vector<8x512xf32>
    %40 = arith.select %37, %35, %39 : vector<8x512xi1>, vector<8x512xf32>
    %c0_25 = arith.constant 0 : index
    %c0_26 = arith.constant 0 : index
    %41 = vector.load %arg6[%c0_25, %c0_26] : memref<512x512xf32, #tpu.memory_space<vmem>>, vector<512x512xf32>
    %cst_27 = arith.constant dense<0.000000e+00> : vector<8x512xf32>
    %42 = tpu.matmul %40, %41, %cst_27 {dimension_numbers = #tpu.dot_dimension_numbers<[1], [0], [0], [1], [0, 0, 1, 1], [], []>} : vector<8x512xf32>, vector<512x512xf32>, vector<8x512xf32> -> vector<8x512xf32>
    %c0_28 = arith.constant 0 : index
    %c1024 = arith.constant 1024 : index
    %43 = vector.load %arg10[%c0_28, %c1024] : memref<1x4096xf32, #tpu.memory_space<vmem>>, vector<1x512xf32>
    %44 = vector.broadcast %43 : vector<1x512xf32> to vector<8x512xf32>
    %45 = arith.addf %42, %44 : vector<8x512xf32>
    %cst_29 = arith.constant 0.000000e+00 : f32
    %46 = vector.broadcast %cst_29 : f32 to vector<8x512xf32>
    %47 = arith.cmpf ogt, %45, %46 : vector<8x512xf32>
    %cst_30 = arith.constant 0.00999999977 : f32
    %48 = vector.broadcast %cst_30 : f32 to vector<8x512xf32>
    %49 = arith.mulf %48, %45 : vector<8x512xf32>
    %50 = arith.select %47, %45, %49 : vector<8x512xi1>, vector<8x512xf32>
    %c0_31 = arith.constant 0 : index
    %c0_32 = arith.constant 0 : index
    %51 = vector.load %arg7[%c0_31, %c0_32] : memref<512x2048xf32, #tpu.memory_space<vmem>>, vector<512x2048xf32>
    %cst_33 = arith.constant dense<0.000000e+00> : vector<8x2048xf32>
    %52 = tpu.matmul %50, %51, %cst_33 {dimension_numbers = #tpu.dot_dimension_numbers<[1], [0], [0], [1], [0, 0, 1, 1], [], []>} : vector<8x512xf32>, vector<512x2048xf32>, vector<8x2048xf32> -> vector<8x2048xf32>
    %c0_34 = arith.constant 0 : index
    %c1536 = arith.constant 1536 : index
    %53 = vector.load %arg10[%c0_34, %c1536] : memref<1x4096xf32, #tpu.memory_space<vmem>>, vector<1x2048xf32>
    %54 = vector.broadcast %53 : vector<1x2048xf32> to vector<8x2048xf32>
    %55 = arith.addf %52, %54 : vector<8x2048xf32>
    %cst_35 = arith.constant 0.000000e+00 : f32
    %56 = vector.broadcast %cst_35 : f32 to vector<8x2048xf32>
    %57 = arith.cmpf ogt, %55, %56 : vector<8x2048xf32>
    %cst_36 = arith.constant 0.00999999977 : f32
    %58 = vector.broadcast %cst_36 : f32 to vector<8x2048xf32>
    %59 = arith.mulf %58, %55 : vector<8x2048xf32>
    %60 = arith.select %57, %55, %59 : vector<8x2048xi1>, vector<8x2048xf32>
    %c0_37 = arith.constant 0 : index
    %c0_38 = arith.constant 0 : index
    %61 = vector.load %arg8[%c0_37, %c0_38] : memref<2048x256xf32, #tpu.memory_space<vmem>>, vector<2048x256xf32>
    %cst_39 = arith.constant dense<0.000000e+00> : vector<8x256xf32>
    %62 = tpu.matmul %60, %61, %cst_39 {dimension_numbers = #tpu.dot_dimension_numbers<[1], [0], [0], [1], [0, 0, 1, 1], [], []>} : vector<8x2048xf32>, vector<2048x256xf32>, vector<8x256xf32> -> vector<8x256xf32>
    %c0_40 = arith.constant 0 : index
    %c3584 = arith.constant 3584 : index
    %63 = vector.load %arg10[%c0_40, %c3584] : memref<1x4096xf32, #tpu.memory_space<vmem>>, vector<1x256xf32>
    %64 = vector.broadcast %63 : vector<1x256xf32> to vector<8x256xf32>
    %65 = arith.addf %62, %64 : vector<8x256xf32>
    %cst_41 = arith.constant 0.000000e+00 : f32
    %66 = vector.broadcast %cst_41 : f32 to vector<8x256xf32>
    %67 = arith.cmpf ogt, %65, %66 : vector<8x256xf32>
    %cst_42 = arith.constant 0.00999999977 : f32
    %68 = vector.broadcast %cst_42 : f32 to vector<8x256xf32>
    %69 = arith.mulf %68, %65 : vector<8x256xf32>
    %70 = arith.select %67, %65, %69 : vector<8x256xi1>, vector<8x256xf32>
    %c0_43 = arith.constant 0 : index
    %c0_44 = arith.constant 0 : index
    %71 = vector.load %arg9[%c0_43, %c0_44] : memref<256x256xf32, #tpu.memory_space<vmem>>, vector<256x256xf32>
    %cst_45 = arith.constant dense<0.000000e+00> : vector<8x256xf32>
    %72 = tpu.matmul %70, %71, %cst_45 {dimension_numbers = #tpu.dot_dimension_numbers<[1], [0], [0], [1], [0, 0, 1, 1], [], []>} : vector<8x256xf32>, vector<256x256xf32>, vector<8x256xf32> -> vector<8x256xf32>
    %c0_46 = arith.constant 0 : index
    %c3840 = arith.constant 3840 : index
    %73 = vector.load %arg10[%c0_46, %c3840] : memref<1x4096xf32, #tpu.memory_space<vmem>>, vector<1x256xf32>
    %74 = vector.broadcast %73 : vector<1x256xf32> to vector<8x256xf32>
    %75 = arith.addf %72, %74 : vector<8x256xf32>
    %c0_47 = arith.constant 0 : index
    %c0_48 = arith.constant 0 : index
    %76 = vector.load %arg11[%c0_47, %c0_48] : memref<8x256xf32, #tpu.memory_space<vmem>>, vector<8x256xf32>
    tpu.vector_store %arg11[%c0_47, %c0_48], %75 {strides = array<i32>} : memref<8x256xf32, #tpu.memory_space<vmem>>, vector<8x256xf32>,
    return
  }
  func.func @transform_0(%arg0: i32) -> (i32, i32) {
    %c0_i32 = arith.constant 0 : i32
    %c0_i32_0 = arith.constant 0 : i32
    return %arg0, %c0_i32 : i32, i32
  }
  func.func @transform_1(%arg0: i32) -> (i32, i32) {
    %c0_i32 = arith.constant 0 : i32
    %c0_i32_0 = arith.constant 0 : i32
    %c0_i32_1 = arith.constant 0 : i32
    return %c0_i32, %c0_i32_0 : i32, i32
  }
  func.func @transform_2(%arg0: i32) -> (i32, i32) {
    %c0_i32 = arith.constant 0 : i32
    %c0_i32_0 = arith.constant 0 : i32
    %c0_i32_1 = arith.constant 0 : i32
    return %c0_i32, %c0_i32_0 : i32, i32
  }
  func.func @transform_3(%arg0: i32) -> (i32, i32) {
    %c0_i32 = arith.constant 0 : i32
    %c0_i32_0 = arith.constant 0 : i32
    %c0_i32_1 = arith.constant 0 : i32
    return %c0_i32, %c0_i32_0 : i32, i32
  }
  func.func @transform_4(%arg0: i32) -> (i32, i32) {
    %c0_i32 = arith.constant 0 : i32
    %c0_i32_0 = arith.constant 0 : i32
    %c0_i32_1 = arith.constant 0 : i32
    return %c0_i32, %c0_i32_0 : i32, i32
  }
  func.func @transform_5(%arg0: i32) -> (i32, i32) {
    %c0_i32 = arith.constant 0 : i32
    %c0_i32_0 = arith.constant 0 : i32
    %c0_i32_1 = arith.constant 0 : i32
    return %c0_i32, %c0_i32_0 : i32, i32
  }
  func.func @transform_6(%arg0: i32) -> (i32, i32) {
    %c0_i32 = arith.constant 0 : i32
    %c0_i32_0 = arith.constant 0 : i32
    %c0_i32_1 = arith.constant 0 : i32
    return %c0_i32, %c0_i32_0 : i32, i32
  }
  func.func @transform_7(%arg0: i32) -> (i32, i32) {
    %c0_i32 = arith.constant 0 : i32
    %c0_i32_0 = arith.constant 0 : i32
    %c0_i32_1 = arith.constant 0 : i32
    return %c0_i32, %c0_i32_0 : i32, i32
  }
  func.func @transform_8(%arg0: i32) -> (i32, i32) {
    %c0_i32 = arith.constant 0 : i32
    %c0_i32_0 = arith.constant 0 : i32
    %c0_i32_1 = arith.constant 0 : i32
    return %c0_i32, %c0_i32_0 : i32, i32
  }
  func.func @transform_9(%arg0: i32) -> (i32, i32) {
    %c0_i32 = arith.constant 0 : i32
    %c0_i32_0 = arith.constant 0 : i32
    %c0_i32_1 = arith.constant 0 : i32
    return %c0_i32, %c0_i32_0 : i32, i32
  }
  func.func @transform_10(%arg0: i32) -> (i32, i32) {
    %c0_i32 = arith.constant 0 : i32
    %c0_i32_0 = arith.constant 0 : i32
    return %arg0, %c0_i32 : i32, i32
  }
}

</mosaic_0001>

<llo_original>
// kernel: conv_decoder_forward.1
$region0: #{conv_decoder_forward.1}
  #allocation0 [shape = 'u32[]', space=smem, size = 0x4, offset = 0x4, fixed_abs, tag = 'smem constant byte address 0x4 - core index']
  #allocation1 [shape = 'u32[72,128]{1,0:T(1,128)}', space=vmem, size = 0x9000, scoped, tag = 'internal scratch']
  %s0 = inlined_call_operand.hbm [shape: f32[16,16], index: 0, kind: input, shape index: {}]
  %s1 = inlined_call_operand.hbm [shape: f32[16,32], index: 1, kind: input, shape index: {}]
  %s2 = inlined_call_operand.hbm [shape: f32[32,64], index: 2, kind: input, shape index: {}]
  %s3 = inlined_call_operand.hbm [shape: f32[64,256], index: 3, kind: input, shape index: {}]
  %s4 = inlined_call_operand.hbm [shape: f32[256,512], index: 4, kind: input, shape index: {}]
  %s5 = inlined_call_operand.hbm [shape: f32[512,512], index: 5, kind: input, shape index: {}]
  %s6 = inlined_call_operand.hbm [shape: f32[512,2048], index: 6, kind: input, shape index: {}]
  %s7 = inlined_call_operand.hbm [shape: f32[2048,256], index: 7, kind: input, shape index: {}]
  %s8 = inlined_call_operand.hbm [shape: f32[256,256], index: 8, kind: input, shape index: {}]
  %s9 = inlined_call_operand.hbm [shape: f32[1,4096], index: 9, kind: input, shape index: {}]
  %s10 = inlined_call_operand.vmem [shape: f32[16,256], index: 10, kind: output, shape index: {}]
  %s11 = sld [smem:[#allocation0]]
  $region113: #{conv_decoder_forward.1} parent=0
    _
  %s13 = ssub.s32 1, %s11
  %s14 = scalar_select 0, %s13, %s11
  $region1: #{conv_decoder_forward.1} parent=0
    #allocation2 [shape = 'u8[8192]{0}', space=vmem, size = 0x2000, scoped, tag = 'input window, operand 0']
    #allocation3 [shape = 's32[2]{0}', space=sflag, size = 0x8, scoped, tag = 'scoped memory for conv_decoder_forward.1']
    #allocation4 [shape = 'u8[8192]{0}', space=vmem, size = 0x2000, scoped, tag = 'input window, operand 1, single buffered']
    #allocation5 [shape = 's32[1]{0}', space=sflag, size = 0x4, scoped, tag = 'scoped memory for conv_decoder_forward.1']
    #allocation6 [shape = 'u8[16384]{0}', space=vmem, size = 0x4000, scoped, tag = 'input window, operand 2, single buffered']
    #allocation7 [shape = 'u8[65536]{0}', space=vmem, size = 0x10000, scoped, tag = 'input window, operand 3, single buffered']
    #allocation8 [shape = 's32[1]{0}', space=sflag, size = 0x4, scoped, tag = 'scoped memory for conv_decoder_forward.1']
    #allocation9 [shape = 'u8[524288]{0}', space=vmem, size = 0x80000, scoped, tag = 'input window, operand 4, single buffered']
    #allocation10 [shape = 'u8[1048576]{0}', space=vmem, size = 0x100000, scoped, tag = 'input window, operand 5, single buffered']
    #allocation11 [shape = 's32[1]{0}', space=sflag, size = 0x4, scoped, tag = 'scoped memory for conv_decoder_forward.1']
    #allocation12 [shape = 'u8[4194304]{0}', space=vmem, size = 0x400000, scoped, tag = 'input window, operand 6, single buffered']
    #allocation13 [shape = 'u8[2097152]{0}', space=vmem, size = 0x200000, scoped, tag = 'input window, operand 7, single buffered']
    #allocation14 [shape = 's32[1]{0}', space=sflag, size = 0x4, scoped, tag = 'scoped memory for conv_decoder_forward.1']
    #allocation15 [shape = 'u8[262144]{0}', space=vmem, size = 0x40000, scoped, tag = 'input window, operand 8, single buffered']
    #allocation16 [shape = 'u8[16384]{0}', space=vmem, size = 0x4000, scoped, tag = 'input window, operand 9, single buffered']
    #allocation17 [shape = 's32[1]{0}', space=sflag, size = 0x4, scoped, tag = 'scoped memory for conv_decoder_forward.1']
    %15 = vsyncpa [#allocation3], 0
    %s16 = scalar_lea.sflag [#allocation3], 1
    %17 = vsyncpa %s16, 0
    %18 = vsyncpa [#allocation5], 0
    %19 = vsyncpa [#allocation8], 0
    %20 = vsyncpa [#allocation11], 0
    %21 = vsyncpa [#allocation14], 0
    %22 = vsyncpa [#allocation17], 0
    loop: start=0, step=1, limit=4
    $region2: #{conv_decoder_forward.1} parent=1 // loop_pre_header
      _
    $region3: #{conv_decoder_forward.1} parent=1 // loop_header
      %s24 = sphi 0, %s28
      %p25 = scmp.ge.s32.totalorder %s24, 4
      %s34 = sphi 0, %s36
      %s37 = sphi 0, %s34
      %s38 = sphi 0, %s37
      %s54 = sphi 0, %s38
      %s58 = sphi 0, %s58
      %s60 = sphi 0, %s58
      %s61 = sphi 0, %s60
      %s75 = sphi 0, %s61
      %s79 = sphi 0, %s79
      %s81 = sphi 0, %s79
      %s82 = sphi 0, %s81
      %s96 = sphi 0, %s82
      %s100 = sphi 0, %s100
      %s102 = sphi 0, %s100
      %s103 = sphi 0, %s102
      %s117 = sphi 0, %s103
      %s121 = sphi 0, %s121
      %s123 = sphi 0, %s121
      %s124 = sphi 0, %s123
      %s138 = sphi 0, %s124
      %s142 = sphi 0, %s142
      %s144 = sphi 0, %s142
      %s145 = sphi 0, %s144
      %s159 = sphi 0, %s145
      %s163 = sphi 0, %s163
      %s165 = sphi 0, %s163
      %s166 = sphi 0, %s165
      %s180 = sphi 0, %s166
      %s184 = sphi 0, %s184
      %s186 = sphi 0, %s184
      %s187 = sphi 0, %s186
      %s201 = sphi 0, %s187
      %s205 = sphi 0, %s205
      %s207 = sphi 0, %s205
      %s208 = sphi 0, %s207
      %s222 = sphi 0, %s208
      %s226 = sphi 0, %s226
      %s228 = sphi 0, %s226
      %s229 = sphi 0, %s228
      %s243 = sphi 0, %s229
      %s249 = sphi 0, %s251
      %s252 = sphi 0, %s249
      %s253 = sphi 0, %s252
      %s269 = sphi 0, %s253
    $region4: #{conv_decoder_forward.1} parent=1 // loop_header_branch
      %27 = sbr.rel (%p25) target = $region8
    $region5: #{conv_decoder_forward.1} parent=1 // loop_body
      %s29 = ssub.s32 %s24, 1
      %s30 = ssub.s32 %s24, 2
      %s31 = sadd.s32 %s24, 1
      %s32 = ssub.s32 %s24, %s31
      %p33 = scmp.eq.s32.totalorder %s32, 0
      %s35 = sadd.s32 %s34, 1
      %s36 = scalar_select %p33, %s34, %s35
      %p39 = pneg %p33
      %p40 = scmp.eq.s32.totalorder %s24, 1
      %p41 = por %p39, %p40
      %p42 = scmp.ne.s32.totalorder %s34, %s37
      %p43 = scmp.eq.s32.totalorder %s24, 0
      %p44 = por %p42, %p43
      %p45 = scmp.ne.s32.totalorder %s34, %s37
      %p46 = scmp.eq.s32.totalorder %s29, 1
      %p47 = por %p45, %p46
      %p48 = scmp.ne.s32.totalorder %s37, %s38
      %p49 = scmp.eq.s32.totalorder %s29, 0
      %p50 = por %p48, %p49
      %p51 = scmp.ne.s32.totalorder %s37, %s38
      %p52 = scmp.eq.s32.totalorder %s30, 1
      %p53 = por %p51, %p52
      %p55 = scmp.ne.s32.totalorder %s38, %s54
      %p56 = scmp.eq.s32.totalorder %s30, 0
      %p57 = por %p55, %p56
      %s59 = sadd.s32 %s58, 1
      %p62 = scmp.eq.s32.totalorder %s24, 1
      %p63 = scmp.ne.s32.totalorder %s58, %s60
      %p64 = scmp.eq.s32.totalorder %s24, 0
      %p65 = por %p63, %p64
      %p66 = scmp.ne.s32.totalorder %s58, %s60
      %p67 = scmp.eq.s32.totalorder %s29, 1
      %p68 = por %p66, %p67
      %p69 = scmp.ne.s32.totalorder %s60, %s61
      %p70 = scmp.eq.s32.totalorder %s29, 0
      %p71 = por %p69, %p70
      %p72 = scmp.ne.s32.totalorder %s60, %s61
      %p73 = scmp.eq.s32.totalorder %s30, 1
      %p74 = por %p72, %p73
      %p76 = scmp.ne.s32.totalorder %s61, %s75
      %p77 = scmp.eq.s32.totalorder %s30, 0
      %p78 = por %p76, %p77
      %s80 = sadd.s32 %s79, 1
      %p83 = scmp.eq.s32.totalorder %s24, 1
      %p84 = scmp.ne.s32.totalorder %s79, %s81
      %p85 = scmp.eq.s32.totalorder %s24, 0
      %p86 = por %p84, %p85
      %p87 = scmp.ne.s32.totalorder %s79, %s81
      %p88 = scmp.eq.s32.totalorder %s29, 1
      %p89 = por %p87, %p88
      %p90 = scmp.ne.s32.totalorder %s81, %s82
      %p91 = scmp.eq.s32.totalorder %s29, 0
      %p92 = por %p90, %p91
      %p93 = scmp.ne.s32.totalorder %s81, %s82
      %p94 = scmp.eq.s32.totalorder %s30, 1
      %p95 = por %p93, %p94
      %p97 = scmp.ne.s32.totalorder %s82, %s96
      %p98 = scmp.eq.s32.totalorder %s30, 0
      %p99 = por %p97, %p98
      %s101 = sadd.s32 %s100, 1
      %p104 = scmp.eq.s32.totalorder %s24, 1
      %p105 = scmp.ne.s32.totalorder %s100, %s102
      %p106 = scmp.eq.s32.totalorder %s24, 0
      %p107 = por %p105, %p106
      %p108 = scmp.ne.s32.totalorder %s100, %s102
      %p109 = scmp.eq.s32.totalorder %s29, 1
      %p110 = por %p108, %p109
      %p111 = scmp.ne.s32.totalorder %s102, %s103
      %p112 = scmp.eq.s32.totalorder %s29, 0
      %p113 = por %p111, %p112
      %p114 = scmp.ne.s32.totalorder %s102, %s103
      %p115 = scmp.eq.s32.totalorder %s30, 1
      %p116 = por %p114, %p115
      %p118 = scmp.ne.s32.totalorder %s103, %s117
      %p119 = scmp.eq.s32.totalorder %s30, 0
      %p120 = por %p118, %p119
      %s122 = sadd.s32 %s121, 1
      %p125 = scmp.eq.s32.totalorder %s24, 1
      %p126 = scmp.ne.s32.totalorder %s121, %s123
      %p127 = scmp.eq.s32.totalorder %s24, 0
      %p128 = por %p126, %p127
      %p129 = scmp.ne.s32.totalorder %s121, %s123
      %p130 = scmp.eq.s32.totalorder %s29, 1
      %p131 = por %p129, %p130
      %p132 = scmp.ne.s32.totalorder %s123, %s124
      %p133 = scmp.eq.s32.totalorder %s29, 0
      %p134 = por %p132, %p133
      %p135 = scmp.ne.s32.totalorder %s123, %s124
      %p136 = scmp.eq.s32.totalorder %s30, 1
      %p137 = por %p135, %p136
      %p139 = scmp.ne.s32.totalorder %s124, %s138
      %p140 = scmp.eq.s32.totalorder %s30, 0
      %p141 = por %p139, %p140
      %s143 = sadd.s32 %s142, 1
      %p146 = scmp.eq.s32.totalorder %s24, 1
      %p147 = scmp.ne.s32.totalorder %s142, %s144
      %p148 = scmp.eq.s32.totalorder %s24, 0
      %p149 = por %p147, %p148
      %p150 = scmp.ne.s32.totalorder %s142, %s144
      %p151 = scmp.eq.s32.totalorder %s29, 1
      %p152 = por %p150, %p151
      %p153 = scmp.ne.s32.totalorder %s144, %s145
      %p154 = scmp.eq.s32.totalorder %s29, 0
      %p155 = por %p153, %p154
      %p156 = scmp.ne.s32.totalorder %s144, %s145
      %p157 = scmp.eq.s32.totalorder %s30, 1
      %p158 = por %p156, %p157
      %p160 = scmp.ne.s32.totalorder %s145, %s159
      %p161 = scmp.eq.s32.totalorder %s30, 0
      %p162 = por %p160, %p161
      %s164 = sadd.s32 %s163, 1
      %p167 = scmp.eq.s32.totalorder %s24, 1
      %p168 = scmp.ne.s32.totalorder %s163, %s165
      %p169 = scmp.eq.s32.totalorder %s24, 0
      %p170 = por %p168, %p169
      %p171 = scmp.ne.s32.totalorder %s163, %s165
      %p172 = scmp.eq.s32.totalorder %s29, 1
      %p173 = por %p171, %p172
      %p174 = scmp.ne.s32.totalorder %s165, %s166
      %p175 = scmp.eq.s32.totalorder %s29, 0
      %p176 = por %p174, %p175
      %p177 = scmp.ne.s32.totalorder %s165, %s166
      %p178 = scmp.eq.s32.totalorder %s30, 1
      %p179 = por %p177, %p178
      %p181 = scmp.ne.s32.totalorder %s166, %s180
      %p182 = scmp.eq.s32.totalorder %s30, 0
      %p183 = por %p181, %p182
      %s185 = sadd.s32 %s184, 1
      %p188 = scmp.eq.s32.totalorder %s24, 1
      %p189 = scmp.ne.s32.totalorder %s184, %s186
      %p190 = scmp.eq.s32.totalorder %s24, 0
      %p191 = por %p189, %p190
      %p192 = scmp.ne.s32.totalorder %s184, %s186
      %p193 = scmp.eq.s32.totalorder %s29, 1
      %p194 = por %p192, %p193
      %p195 = scmp.ne.s32.totalorder %s186, %s187
      %p196 = scmp.eq.s32.totalorder %s29, 0
      %p197 = por %p195, %p196
      %p198 = scmp.ne.s32.totalorder %s186, %s187
      %p199 = scmp.eq.s32.totalorder %s30, 1
      %p200 = por %p198, %p199
      %p202 = scmp.ne.s32.totalorder %s187, %s201
      %p203 = scmp.eq.s32.totalorder %s30, 0
      %p204 = por %p202, %p203
      %s206 = sadd.s32 %s205, 1
      %p209 = scmp.eq.s32.totalorder %s24, 1
      %p210 = scmp.ne.s32.totalorder %s205, %s207
      %p211 = scmp.eq.s32.totalorder %s24, 0
      %p212 = por %p210, %p211
      %p213 = scmp.ne.s32.totalorder %s205, %s207
      %p214 = scmp.eq.s32.totalorder %s29, 1
      %p215 = por %p213, %p214
      %p216 = scmp.ne.s32.totalorder %s207, %s208
      %p217 = scmp.eq.s32.totalorder %s29, 0
      %p218 = por %p216, %p217
      %p219 = scmp.ne.s32.totalorder %s207, %s208
      %p220 = scmp.eq.s32.totalorder %s30, 1
      %p221 = por %p219, %p220
      %p223 = scmp.ne.s32.totalorder %s208, %s222
      %p224 = scmp.eq.s32.totalorder %s30, 0
      %p225 = por %p223, %p224
      %s227 = sadd.s32 %s226, 1
      %p230 = scmp.eq.s32.totalorder %s24, 1
      %p231 = scmp.ne.s32.totalorder %s226, %s228
      %p232 = scmp.eq.s32.totalorder %s24, 0
      %p233 = por %p231, %p232
      %p234 = scmp.ne.s32.totalorder %s226, %s228
      %p235 = scmp.eq.s32.totalorder %s29, 1
      %p236 = por %p234, %p235
      %p237 = scmp.ne.s32.totalorder %s228, %s229
      %p238 = scmp.eq.s32.totalorder %s29, 0
      %p239 = por %p237, %p238
      %p240 = scmp.ne.s32.totalorder %s228, %s229
      %p241 = scmp.eq.s32.totalorder %s30, 1
      %p242 = por %p240, %p241
      %p244 = scmp.ne.s32.totalorder %s229, %s243
      %p245 = scmp.eq.s32.totalorder %s30, 0
      %p246 = por %p244, %p245
      %s247 = ssub.s32 %s24, %s31
      %p248 = scmp.eq.s32.totalorder %s247, 0
      %s250 = sadd.s32 %s249, 1
      %s251 = scalar_select %p248, %s249, %s250
      %p254 = pneg %p248
      %p255 = scmp.eq.s32.totalorder %s24, 1
      %p256 = por %p254, %p255
      %p257 = scmp.ne.s32.totalorder %s249, %s252
      %p258 = scmp.eq.s32.totalorder %s24, 0
      %p259 = por %p257, %p258
      %p260 = scmp.ne.s32.totalorder %s249, %s252
      %p261 = scmp.eq.s32.totalorder %s29, 1
      %p262 = por %p260, %p261
      %p263 = scmp.ne.s32.totalorder %s252, %s253
      %p264 = scmp.eq.s32.totalorder %s29, 0
      %p265 = por %p263, %p264
      %p266 = scmp.ne.s32.totalorder %s252, %s253
      %p267 = scmp.eq.s32.totalorder %s30, 1
      %p268 = por %p266, %p267
      %p270 = scmp.ne.s32.totalorder %s253, %s269
      %p271 = scmp.eq.s32.totalorder %s30, 0
      %p272 = por %p270, %p271
      %p273 = scmp.le.s32.totalorder 1, %s24
      %p274 = scmp.lt.s32.totalorder %s24, 3
      %p275 = pnand %p273, %p274
      %p276 = pneg %p275
      // Predicated region
      $region9: #{conv_decoder_forward.1} parent=5 // pred_check
        _
      $region10: #{conv_decoder_forward.1} parent=5 // pred_check_branch
        %278 = sbr.rel (%p275) target = $region12
      $region11: #{conv_decoder_forward.1} parent=5 // pred_region
        %s279 = ssub.s32 %s24, 1
        // Predicated region
        $region13: #{conv_decoder_forward.1} parent=11 // pred_check
          %p280 = pneg %p71
        $region14: #{conv_decoder_forward.1} parent=11 // pred_check_branch
          %282 = sbr.rel (%p280) target = $region16
        $region15: #{conv_decoder_forward.1} parent=11 // pred_region
          %284 = vsyncadd [#allocation5], 0
          %s285 = sshll.u32 %s1, 4
          %s286 = int_to_ptr.hbm [resolvable:$true] %s285
          %s287 = sshll.u32 [#allocation4], 4
          %s288 = int_to_ptr.vmem [resolvable:$true] %s287
          %293 = dma.hbm_to_vmem [thread:$0]  %s286, 256, %s288, [#allocation5], 128, 128, 8
        $region16: #{conv_decoder_forward.1} parent=11 // pred_fallthru
          _
        // Predicated region
        $region17: #{conv_decoder_forward.1} parent=11 // pred_check
          %p294 = pneg %p92
        $region18: #{conv_decoder_forward.1} parent=11 // pred_check_branch
          %296 = sbr.rel (%p294) target = $region20
        $region19: #{conv_decoder_forward.1} parent=11 // pred_region
          %298 = vsyncadd [#allocation5], 0
          %s299 = sshll.u32 %s2, 4
          %s300 = int_to_ptr.hbm [resolvable:$true] %s299
          %s301 = sshll.u32 [#allocation6], 4
          %s302 = int_to_ptr.vmem [resolvable:$true] %s301
          %307 = dma.hbm_to_vmem [thread:$0]  %s300, 512, %s302, [#allocation5], 128, 128, 8
        $region20: #{conv_decoder_forward.1} parent=11 // pred_fallthru
          _
        // Predicated region
        $region21: #{conv_decoder_forward.1} parent=11 // pred_check
          %p308 = pneg %p113
        $region22: #{conv_decoder_forward.1} parent=11 // pred_check_branch
          %310 = sbr.rel (%p308) target = $region24
        $region23: #{conv_decoder_forward.1} parent=11 // pred_region
          %312 = vsyncadd [#allocation8], 0
          %s313 = sshll.u32 %s3, 4
          %s314 = int_to_ptr.hbm [resolvable:$true] %s313
          %s315 = sshll.u32 [#allocation7], 4
          %s316 = int_to_ptr.vmem [resolvable:$true] %s315
          %321 = dma.hbm_to_vmem [thread:$0]  %s314, 2048, %s316, [#allocation8], 256, 256, 16
        $region24: #{conv_decoder_forward.1} parent=11 // pred_fallthru
          _
        // Predicated region
        $region25: #{conv_decoder_forward.1} parent=11 // pred_check
          %p322 = pneg %p134
        $region26: #{conv_decoder_forward.1} parent=11 // pred_check_branch
          %324 = sbr.rel (%p322) target = $region28
        $region27: #{conv_decoder_forward.1} parent=11 // pred_region
          %326 = vsyncadd [#allocation8], 0
          %s327 = sshll.u32 %s4, 4
          %s328 = int_to_ptr.hbm [resolvable:$true] %s327
          %s329 = sshll.u32 [#allocation9], 4
          %s330 = int_to_ptr.vmem [resolvable:$true] %s329
          %335 = dma.hbm_to_vmem [thread:$0]  %s328, 16384, %s330, [#allocation8], 512, 512, 32
        $region28: #{conv_decoder_forward.1} parent=11 // pred_fallthru
          _
        // Predicated region
        $region29: #{conv_decoder_forward.1} parent=11 // pred_check
          %p336 = pneg %p155
        $region30: #{conv_decoder_forward.1} parent=11 // pred_check_branch
          %338 = sbr.rel (%p336) target = $region32
        $region31: #{conv_decoder_forward.1} parent=11 // pred_region
          %340 = vsyncadd [#allocation11], 0
          %s341 = sshll.u32 %s5, 4
          %s342 = int_to_ptr.hbm [resolvable:$true] %s341
          %s343 = sshll.u32 [#allocation10], 4
          %s344 = int_to_ptr.vmem [resolvable:$true] %s343
          %349 = dma.hbm_to_vmem [thread:$0]  %s342, 32768, %s344, [#allocation11], 512, 512, 32
        $region32: #{conv_decoder_forward.1} parent=11 // pred_fallthru
          _
        // Predicated region
        $region33: #{conv_decoder_forward.1} parent=11 // pred_check
          %p350 = pneg %p176
        $region34: #{conv_decoder_forward.1} parent=11 // pred_check_branch
          %352 = sbr.rel (%p350) target = $region36
        $region35: #{conv_decoder_forward.1} parent=11 // pred_region
          %354 = vsyncadd [#allocation11], 0
          %s355 = sshll.u32 %s6, 4
          %s356 = int_to_ptr.hbm [resolvable:$true] %s355
          %s357 = sshll.u32 [#allocation12], 4
          %s358 = int_to_ptr.vmem [resolvable:$true] %s357
          %363 = dma.hbm_to_vmem [thread:$0]  %s356, 131072, %s358, [#allocation11], 2048, 2048, 128
        $region36: #{conv_decoder_forward.1} parent=11 // pred_fallthru
          _
        // Predicated region
        $region37: #{conv_decoder_forward.1} parent=11 // pred_check
          %p364 = pneg %p197
        $region38: #{conv_decoder_forward.1} parent=11 // pred_check_branch
          %366 = sbr.rel (%p364) target = $region40
        $region39: #{conv_decoder_forward.1} parent=11 // pred_region
          %368 = vsyncadd [#allocation14], 0
          %s369 = sshll.u32 %s7, 4
          %s370 = int_to_ptr.hbm [resolvable:$true] %s369
          %s371 = sshll.u32 [#allocation13], 4
          %s372 = int_to_ptr.vmem [resolvable:$true] %s371
          %377 = dma.hbm_to_vmem [thread:$0]  %s370, 65536, %s372, [#allocation14], 256, 256, 16
        $region40: #{conv_decoder_forward.1} parent=11 // pred_fallthru
          _
        // Predicated region
        $region41: #{conv_decoder_forward.1} parent=11 // pred_check
          %p378 = pneg %p218
        $region42: #{conv_decoder_forward.1} parent=11 // pred_check_branch
          %380 = sbr.rel (%p378) target = $region44
        $region43: #{conv_decoder_forward.1} parent=11 // pred_region
          %382 = vsyncadd [#allocation14], 0
          %s383 = sshll.u32 %s8, 4
          %s384 = int_to_ptr.hbm [resolvable:$true] %s383
          %s385 = sshll.u32 [#allocation15], 4
          %s386 = int_to_ptr.vmem [resolvable:$true] %s385
          %391 = dma.hbm_to_vmem [thread:$0]  %s384, 8192, %s386, [#allocation14], 256, 256, 16
        $region44: #{conv_decoder_forward.1} parent=11 // pred_fallthru
          _
        // Predicated region
        $region45: #{conv_decoder_forward.1} parent=11 // pred_check
          %p392 = pneg %p239
        $region46: #{conv_decoder_forward.1} parent=11 // pred_check_branch
          %394 = sbr.rel (%p392) target = $region48
        $region47: #{conv_decoder_forward.1} parent=11 // pred_region
          %396 = vsyncadd [#allocation17], 0
          %s398 = sshll.u32 %s9, 4
          %s399 = int_to_ptr.hbm [resolvable:$true] %s398
          %s400 = sshll.u32 [#allocation16], 4
          %s401 = int_to_ptr.vmem [resolvable:$true] %s400
          %403 = dma.hbm_to_vmem [thread:$0]  %s399, 512, %s401, [#allocation17]
        $region48: #{conv_decoder_forward.1} parent=11 // pred_fallthru
          _
      $region12: #{conv_decoder_forward.1} parent=5 // pred_fallthru
        _
      %p404 = scmp.lt.s32.totalorder %s24, 2
      // Predicated region
      $region49: #{conv_decoder_forward.1} parent=5 // pred_check
        %p405 = pneg %p404
      $region50: #{conv_decoder_forward.1} parent=5 // pred_check_branch
        %407 = sbr.rel (%p405) target = $region52
      $region51: #{conv_decoder_forward.1} parent=5 // pred_region
        // Predicated region
        $region53: #{conv_decoder_forward.1} parent=51 // pred_check
          %p408 = pneg %p44
        $region54: #{conv_decoder_forward.1} parent=51 // pred_check_branch
          %410 = sbr.rel (%p408) target = $region56
        $region55: #{conv_decoder_forward.1} parent=51 // pred_region
          %s411 = sand.u32 %s34, 1
          %s412 = scalar_lea.sflag [#allocation3], %s411
          %s413 = sand.u32 %s34, 1
          %s414 = smul.addr %s413, 8
          %s415 = scalar_lea.vmem [#allocation2], %s414
          %417 = vsyncadd %s412, 0
          %s418 = smul.addr %s24, 8
          %s419 = scalar_lea.hbm %s0, %s418
          %s421 = sshll.u32 %s419, 4
          %s422 = int_to_ptr.hbm [resolvable:$true] %s421
          %s423 = sshll.u32 %s415, 4
          %s424 = int_to_ptr.vmem [resolvable:$true] %s423
          %426 = dma.hbm_to_vmem [thread:$0]  %s422, 128, %s424, %s412
        $region56: #{conv_decoder_forward.1} parent=51 // pred_fallthru
          _
      $region52: #{conv_decoder_forward.1} parent=5 // pred_fallthru
        _
      %p427 = scmp.le.s32.totalorder 1, %s24
      %p428 = scmp.lt.s32.totalorder %s24, 3
      %p429 = pnand %p427, %p428
      %p430 = pneg %p429
      // Predicated region
      $region57: #{conv_decoder_forward.1} parent=5 // pred_check
        _
      $region58: #{conv_decoder_forward.1} parent=5 // pred_check_branch
        %432 = sbr.rel (%p429) target = $region60
      $region59: #{conv_decoder_forward.1} parent=5 // pred_region
        %s433 = ssub.s32 %s24, 1
        %s434 = sand.u32 %s37, 1
        %s435 = scalar_lea.sflag [#allocation3], %s434
        %s436 = sand.u32 %s37, 1
        %s437 = smul.addr %s436, 8
        %s438 = scalar_lea.vmem [#allocation2], %s437
        // Predicated region
        $region61: #{conv_decoder_forward.1} parent=59 // pred_check
          %p439 = pneg %p50
        $region62: #{conv_decoder_forward.1} parent=59 // pred_check_branch
          %441 = sbr.rel (%p439) target = $region64
        $region63: #{conv_decoder_forward.1} parent=59 // pred_region
          %443 = dma.done %s435, 128
        $region64: #{conv_decoder_forward.1} parent=59 // pred_fallthru
          _
        // Predicated region
        $region65: #{conv_decoder_forward.1} parent=59 // pred_check
          %p444 = pneg %p71
        $region66: #{conv_decoder_forward.1} parent=59 // pred_check_branch
          %446 = sbr.rel (%p444) target = $region68
        $region67: #{conv_decoder_forward.1} parent=59 // pred_region
          %448 = dma.done [#allocation5], 256
        $region68: #{conv_decoder_forward.1} parent=59 // pred_fallthru
          _
        // Predicated region
        $region69: #{conv_decoder_forward.1} parent=59 // pred_check
          %p449 = pneg %p92
        $region70: #{conv_decoder_forward.1} parent=59 // pred_check_branch
          %451 = sbr.rel (%p449) target = $region72
        $region71: #{conv_decoder_forward.1} parent=59 // pred_region
          %453 = dma.done [#allocation5], 512
        $region72: #{conv_decoder_forward.1} parent=59 // pred_fallthru
          _
        // Predicated region
        $region73: #{conv_decoder_forward.1} parent=59 // pred_check
          %p454 = pneg %p113
        $region74: #{conv_decoder_forward.1} parent=59 // pred_check_branch
          %456 = sbr.rel (%p454) target = $region76
        $region75: #{conv_decoder_forward.1} parent=59 // pred_region
          %458 = dma.done [#allocation8], 2048
        $region76: #{conv_decoder_forward.1} parent=59 // pred_fallthru
          _
        // Predicated region
        $region77: #{conv_decoder_forward.1} parent=59 // pred_check
          %p459 = pneg %p134
        $region78: #{conv_decoder_forward.1} parent=59 // pred_check_branch
          %461 = sbr.rel (%p459) target = $region80
        $region79: #{conv_decoder_forward.1} parent=59 // pred_region
          %463 = dma.done [#allocation8], 16384
        $region80: #{conv_decoder_forward.1} parent=59 // pred_fallthru
          _
        // Predicated region
        $region81: #{conv_decoder_forward.1} parent=59 // pred_check
          %p464 = pneg %p155
        $region82: #{conv_decoder_forward.1} parent=59 // pred_check_branch
          %466 = sbr.rel (%p464) target = $region84
        $region83: #{conv_decoder_forward.1} parent=59 // pred_region
          %468 = dma.done [#allocation11], 32768
        $region84: #{conv_decoder_forward.1} parent=59 // pred_fallthru
          _
        // Predicated region
        $region85: #{conv_decoder_forward.1} parent=59 // pred_check
          %p469 = pneg %p176
        $region86: #{conv_decoder_forward.1} parent=59 // pred_check_branch
          %471 = sbr.rel (%p469) target = $region88
        $region87: #{conv_decoder_forward.1} parent=59 // pred_region
          %473 = dma.done [#allocation11], 131072
        $region88: #{conv_decoder_forward.1} parent=59 // pred_fallthru
          _
        // Predicated region
        $region89: #{conv_decoder_forward.1} parent=59 // pred_check
          %p474 = pneg %p197
        $region90: #{conv_decoder_forward.1} parent=59 // pred_check_branch
          %476 = sbr.rel (%p474) target = $region92
        $region91: #{conv_decoder_forward.1} parent=59 // pred_region
          %478 = dma.done [#allocation14], 65536
        $region92: #{conv_decoder_forward.1} parent=59 // pred_fallthru
          _
        // Predicated region
        $region93: #{conv_decoder_forward.1} parent=59 // pred_check
          %p479 = pneg %p218
        $region94: #{conv_decoder_forward.1} parent=59 // pred_check_branch
          %481 = sbr.rel (%p479) target = $region96
        $region95: #{conv_decoder_forward.1} parent=59 // pred_region
          %483 = dma.done [#allocation14], 8192
        $region96: #{conv_decoder_forward.1} parent=59 // pred_fallthru
          _
        // Predicated region
        $region97: #{conv_decoder_forward.1} parent=59 // pred_check
          %p484 = pneg %p239
        $region98: #{conv_decoder_forward.1} parent=59 // pred_check_branch
          %486 = sbr.rel (%p484) target = $region100
        $region99: #{conv_decoder_forward.1} parent=59 // pred_region
          %488 = dma.done [#allocation17], 512
        $region100: #{conv_decoder_forward.1} parent=59 // pred_fallthru
          _
        %s489 = sand.u32 %s37, 1
        %s490 = scalar_lea.sflag [#allocation3], %s489
        %s491 = sand.u32 %s37, 1
        %s492 = smul.addr %s491, 8
        %s493 = scalar_lea.vmem [#allocation2], %s492
        %p494 = pneg %p50
        %p495 = pneg %p47
        %p496 = pneg %p71
        %p497 = pneg %p68
        %p498 = pneg %p92
        %p499 = pneg %p89
        %p500 = pneg %p113
        %p501 = pneg %p110
        %p502 = pneg %p134
        %p503 = pneg %p131
        %p504 = pneg %p155
        %p505 = pneg %p152
        %p506 = pneg %p176
        %p507 = pneg %p173
        %p508 = pneg %p197
        %p509 = pneg %p194
        %p510 = pneg %p218
        %p511 = pneg %p215
        %p512 = pneg %p239
        %p513 = pneg %p236
        %p514 = pneg %p265
        %p515 = pneg %p262
        %p516 = scmp.lt.s32.totalorder %s29, 1
        %s517 = scalar_select %p516, %s29, 1
        %s518 = smul.addr %s517, 2
        %s519 = smul.addr %s518, 8
        %s520 = scalar_lea.vmem %s10, %s519
        %p521 = scmp.lt.s32.totalorder %s29, 1
        %s522 = scalar_select %p521, %s29, 1
        %s523 = smul.addr %s522, 2
        %s524 = smul.addr %s523, 8
        %s525 = scalar_lea.vmem %s10, %s524
        %v526 = vld [vmem:[%s438] sm:$0xff]
        %v527 = vld [vmem:[#allocation4] sm:$0xff]
        %v528 = vld [vmem:[#allocation4 + $0x8] sm:$0xff]
        %v529 = vld [vmem:[#allocation16] sm:$0x1]
        %v531 = vperm.slane %v529, 0
        %vm533 = vcmask 130048
        %v535 = vsel %vm533, %v526, 0
        %537 = vmatpush.msra.mxu0 0.0
        %538 = vmatpush.msra.mxu0 0.0
        %539 = vmatpush.msra.mxu0 0.0
        %540 = vmatpush.msra.mxu0 0.0
        %541 = vmatpush.msra.mxu0 0.0
        %542 = vmatpush.msra.mxu0 0.0
        %543 = vmatpush.msra.mxu0 0.0
        %544 = vmatpush.msra.mxu0 0.0
        %545 = vmatpush.msra.mxu0 0.0
        %546 = vmatpush.msra.mxu0 0.0
        %547 = vmatpush.msra.mxu0 0.0
        %548 = vmatpush.msra.mxu0 0.0
        %549 = vmatpush.msra.mxu0 0.0
        %550 = vmatpush.msra.mxu0 0.0
        %551 = vmatpush.msra.mxu0 %v528
        %552 = vmatpush.msra.mxu0 %v527
        %553 = vmatmul.f32.gmra.mxu0 %v535
        %v554 = vpop.f32.mrf.mxu0
        %v555 = vadd.f32 %v531, %v554
        %556 = vdwg.mxu0
        %vm557 = vcmp.gt.f32.partialorder %v555, 0.0
        %v558 = vmul.f32 %v555, 0.01
        %v559 = vsel %vm557, %v555, %v558
        %v560 = vld [vmem:[#allocation6] sm:$0xff]
        %v561 = vld [vmem:[#allocation6 + $0x8] sm:$0xff]
        %v562 = vld [vmem:[#allocation6 + $0x10] sm:$0xff]
        %v563 = vld [vmem:[#allocation6 + $0x18] sm:$0xff]
        %v564 = vld [vmem:[#allocation16 + $0x1] sm:$0x1]
        %v566 = vperm.slane %v564, 0
        %vm568 = vcmask 261120
        %v570 = vsel %vm568, %v559, 0
        %572 = vmatpush.msra.mxu0 0.0
        %573 = vmatpush.msra.mxu0 0.0
        %574 = vmatpush.msra.mxu0 0.0
        %575 = vmatpush.msra.mxu0 0.0
        %576 = vmatpush.msra.mxu0 0.0
        %577 = vmatpush.msra.mxu0 0.0
        %578 = vmatpush.msra.mxu0 0.0
        %579 = vmatpush.msra.mxu0 0.0
        %580 = vmatpush.msra.mxu0 0.0
        %581 = vmatpush.msra.mxu0 0.0
        %582 = vmatpush.msra.mxu0 0.0
        %583 = vmatpush.msra.mxu0 0.0
        %584 = vmatpush.msra.mxu0 %v563
        %585 = vmatpush.msra.mxu0 %v562
        %586 = vmatpush.msra.mxu0 %v561
        %587 = vmatpush.msra.mxu0 %v560
        %588 = vmatmul.f32.gmra.mxu0 %v570
        %v589 = vpop.f32.mrf.mxu0
        %v590 = vadd.f32 %v566, %v589
        %591 = vdwg.mxu0
        %vm592 = vcmp.gt.f32.partialorder %v590, 0.0
        %v593 = vmul.f32 %v590, 0.01
        %v594 = vsel %vm592, %v590, %v593
        %v595 = vld [vmem:[#allocation7] sm:$0xff]
        %v596 = vld [vmem:[#allocation7 + $0x8] sm:$0xff]
        %v597 = vld [vmem:[#allocation7 + $0x10] sm:$0xff]
        %v598 = vld [vmem:[#allocation7 + $0x18] sm:$0xff]
        %v599 = vld [vmem:[#allocation7 + $0x20] sm:$0xff]
        %v600 = vld [vmem:[#allocation7 + $0x28] sm:$0xff]
        %v601 = vld [vmem:[#allocation7 + $0x30] sm:$0xff]
        %v602 = vld [vmem:[#allocation7 + $0x38] sm:$0xff]
        %v603 = vld [vmem:[#allocation7 + $0x40] sm:$0xff]
        %v604 = vld [vmem:[#allocation7 + $0x48] sm:$0xff]
        %v605 = vld [vmem:[#allocation7 + $0x50] sm:$0xff]
        %v606 = vld [vmem:[#allocation7 + $0x58] sm:$0xff]
        %v607 = vld [vmem:[#allocation7 + $0x60] sm:$0xff]
        %v608 = vld [vmem:[#allocation7 + $0x68] sm:$0xff]
        %v609 = vld [vmem:[#allocation7 + $0x70] sm:$0xff]
        %v610 = vld [vmem:[#allocation7 + $0x78] sm:$0xff]
        %v611 = vld [vmem:[#allocation16 + $0x2] sm:$0x3]
        %v613 = vperm.slane %v611, 0
        %v614 = vperm.slane %v611, 1
        %vm617 = vcmask 523264
        %v619 = vsel %vm617, %v594, 0
        %621 = vmatpush.msra.mxu0 0.0
        %622 = vmatpush.msra.mxu0 0.0
        %623 = vmatpush.msra.mxu0 0.0
        %624 = vmatpush.msra.mxu0 0.0
        %625 = vmatpush.msra.mxu0 0.0
        %626 = vmatpush.msra.mxu0 0.0
        %627 = vmatpush.msra.mxu0 0.0
        %628 = vmatpush.msra.mxu0 0.0
        %629 = vmatpush.msra.mxu0 %v609
        %630 = vmatpush.msra.mxu0 %v607
        %631 = vmatpush.msra.mxu0 %v605
        %632 = vmatpush.msra.mxu0 %v603
        %633 = vmatpush.msra.mxu0 %v601
        %634 = vmatpush.msra.mxu0 %v599
        %635 = vmatpush.msra.mxu0 %v597
        %636 = vmatpush.msra.mxu0 %v595
        %637 = vmatmul.f32.gmra.mxu0 %v619
        %v638 = vpop.f32.mrf.mxu0
        %v639 = vadd.f32 %v613, %v638
        %640 = vdwg.mxu0
        %641 = vmatpush.msra.mxu0 0.0
        %642 = vmatpush.msra.mxu0 0.0
        %643 = vmatpush.msra.mxu0 0.0
        %644 = vmatpush.msra.mxu0 0.0
        %645 = vmatpush.msra.mxu0 0.0
        %646 = vmatpush.msra.mxu0 0.0
        %647 = vmatpush.msra.mxu0 0.0
        %648 = vmatpush.msra.mxu0 0.0
        %649 = vmatpush.msra.mxu0 %v610
        %650 = vmatpush.msra.mxu0 %v608
        %651 = vmatpush.msra.mxu0 %v606
        %652 = vmatpush.msra.mxu0 %v604
        %653 = vmatpush.msra.mxu0 %v602
        %654 = vmatpush.msra.mxu0 %v600
        %655 = vmatpush.msra.mxu0 %v598
        %656 = vmatpush.msra.mxu0 %v596
        %657 = vmatmul.f32.gmra.mxu0 %v619
        %v658 = vpop.f32.mrf.mxu0
        %v659 = vadd.f32 %v614, %v658
        %660 = vdwg.mxu0
        %vm661 = vcmp.gt.f32.partialorder %v639, 0.0
        %vm662 = vcmp.gt.f32.partialorder %v659, 0.0
        %v663 = vmul.f32 %v639, 0.01
        %v664 = vmul.f32 %v659, 0.01
        %v665 = vsel %vm661, %v639, %v663
        %v666 = vsel %vm662, %v659, %v664
        %v667 = vld [vmem:[#allocation9] sm:$0xff]
        %v668 = vld [vmem:[#allocation9 + $0x8] sm:$0xff]
        %v669 = vld [vmem:[#allocation9 + $0x10] sm:$0xff]
        %v670 = vld [vmem:[#allocation9 + $0x18] sm:$0xff]
        %v671 = vld [vmem:[#allocation9 + $0x20] sm:$0xff]
        %v672 = vld [vmem:[#allocation9 + $0x28] sm:$0xff]
        %v673 = vld [vmem:[#allocation9 + $0x30] sm:$0xff]
        %v674 = vld [vmem:[#allocation9 + $0x38] sm:$0xff]
        %v675 = vld [vmem:[#allocation9 + $0x40] sm:$0xff]
        %v676 = vld [vmem:[#allocation9 + $0x48] sm:$0xff]
        %v677 = vld [vmem:[#allocation9 + $0x50] sm:$0xff]
        %v678 = vld [vmem:[#allocation9 + $0x58] sm:$0xff]
        %v679 = vld [vmem:[#allocation9 + $0x60] sm:$0xff]
        %v680 = vld [vmem:[#allocation9 + $0x68] sm:$0xff]
        %v681 = vld [vmem:[#allocation9 + $0x70] sm:$0xff]
        %v682 = vld [vmem:[#allocation9 + $0x78] sm:$0xff]
        %v683 = vld [vmem:[#allocation9 + $0x80] sm:$0xff]
        %v684 = vld [vmem:[#allocation9 + $0x88] sm:$0xff]
        %v685 = vld [vmem:[#allocation9 + $0x90] sm:$0xff]
        %v686 = vld [vmem:[#allocation9 + $0x98] sm:$0xff]
        %v687 = vld [vmem:[#allocation9 + $0xa0] sm:$0xff]
        %v688 = vld [vmem:[#allocation9 + $0xa8] sm:$0xff]
        %v689 = vld [vmem:[#allocation9 + $0xb0] sm:$0xff]
        %v690 = vld [vmem:[#allocation9 + $0xb8] sm:$0xff]
        %v691 = vld [vmem:[#allocation9 + $0xc0] sm:$0xff]
        %v692 = vld [vmem:[#allocation9 + $0xc8] sm:$0xff]
        %v693 = vld [vmem:[#allocation9 + $0xd0] sm:$0xff]
        %v694 = vld [vmem:[#allocation9 + $0xd8] sm:$0xff]
        %v695 = vld [vmem:[#allocation9 + $0xe0] sm:$0xff]
        %v696 = vld [vmem:[#allocation9 + $0xe8] sm:$0xff]
        %v697 = vld [vmem:[#allocation9 + $0xf0] sm:$0xff]
        %v698 = vld [vmem:[#allocation9 + $0xf8] sm:$0xff]
        %v699 = vld [vmem:[#allocation9 + $0x100] sm:$0xff]
        %v700 = vld [vmem:[#allocation9 + $0x108] sm:$0xff]
        %v701 = vld [vmem:[#allocation9 + $0x110] sm:$0xff]
        %v702 = vld [vmem:[#allocation9 + $0x118] sm:$0xff]
        %v703 = vld [vmem:[#allocation9 + $0x120] sm:$0xff]
        %v704 = vld [vmem:[#allocation9 + $0x128] sm:$0xff]
        %v705 = vld [vmem:[#allocation9 + $0x130] sm:$0xff]
        %v706 = vld [vmem:[#allocation9 + $0x138] sm:$0xff]
        %v707 = vld [vmem:[#allocation9 + $0x140] sm:$0xff]
        %v708 = vld [vmem:[#allocation9 + $0x148] sm:$0xff]
        %v709 = vld [vmem:[#allocation9 + $0x150] sm:$0xff]
        %v710 = vld [vmem:[#allocation9 + $0x158] sm:$0xff]
        %v711 = vld [vmem:[#allocation9 + $0x160] sm:$0xff]
        %v712 = vld [vmem:[#allocation9 + $0x168] sm:$0xff]
        %v713 = vld [vmem:[#allocation9 + $0x170] sm:$0xff]
        %v714 = vld [vmem:[#allocation9 + $0x178] sm:$0xff]
        %v715 = vld [vmem:[#allocation9 + $0x180] sm:$0xff]
        %v716 = vld [vmem:[#allocation9 + $0x188] sm:$0xff]
        %v717 = vld [vmem:[#allocation9 + $0x190] sm:$0xff]
        %v718 = vld [vmem:[#allocation9 + $0x198] sm:$0xff]
        %v719 = vld [vmem:[#allocation9 + $0x1a0] sm:$0xff]
        %v720 = vld [vmem:[#allocation9 + $0x1a8] sm:$0xff]
        %v721 = vld [vmem:[#allocation9 + $0x1b0] sm:$0xff]
        %v722 = vld [vmem:[#allocation9 + $0x1b8] sm:$0xff]
        %v723 = vld [vmem:[#allocation9 + $0x1c0] sm:$0xff]
        %v724 = vld [vmem:[#allocation9 + $0x1c8] sm:$0xff]
        %v725 = vld [vmem:[#allocation9 + $0x1d0] sm:$0xff]
        %v726 = vld [vmem:[#allocation9 + $0x1d8] sm:$0xff]
        %v727 = vld [vmem:[#allocation9 + $0x1e0] sm:$0xff]
        %v728 = vld [vmem:[#allocation9 + $0x1e8] sm:$0xff]
        %v729 = vld [vmem:[#allocation9 + $0x1f0] sm:$0xff]
        %v730 = vld [vmem:[#allocation9 + $0x1f8] sm:$0xff]
        %v731 = vld [vmem:[#allocation9 + $0x200] sm:$0xff]
        %v732 = vld [vmem:[#allocation9 + $0x208] sm:$0xff]
        %v733 = vld [vmem:[#allocation9 + $0x210] sm:$0xff]
        %v734 = vld [vmem:[#allocation9 + $0x218] sm:$0xff]
        %v735 = vld [vmem:[#allocation9 + $0x220] sm:$0xff]
        %v736 = vld [vmem:[#allocation9 + $0x228] sm:$0xff]
        %v737 = vld [vmem:[#allocation9 + $0x230] sm:$0xff]
        %v738 = vld [vmem:[#allocation9 + $0x238] sm:$0xff]
        %v739 = vld [vmem:[#allocation9 + $0x240] sm:$0xff]
        %v740 = vld [vmem:[#allocation9 + $0x248] sm:$0xff]
        %v741 = vld [vmem:[#allocation9 + $0x250] sm:$0xff]
        %v742 = vld [vmem:[#allocation9 + $0x258] sm:$0xff]
        %v743 = vld [vmem:[#allocation9 + $0x260] sm:$0xff]
        %v744 = vld [vmem:[#allocation9 + $0x268] sm:$0xff]
        %v745 = vld [vmem:[#allocation9 + $0x270] sm:$0xff]
        %v746 = vld [vmem:[#allocation9 + $0x278] sm:$0xff]
        %v747 = vld [vmem:[#allocation9 + $0x280] sm:$0xff]
        %v748 = vld [vmem:[#allocation9 + $0x288] sm:$0xff]
        %v749 = vld [vmem:[#allocation9 + $0x290] sm:$0xff]
        %v750 = vld [vmem:[#allocation9 + $0x298] sm:$0xff]
        %v751 = vld [vmem:[#allocation9 + $0x2a0] sm:$0xff]
        %v752 = vld [vmem:[#allocation9 + $0x2a8] sm:$0xff]
        %v753 = vld [vmem:[#allocation9 + $0x2b0] sm:$0xff]
        %v754 = vld [vmem:[#allocation9 + $0x2b8] sm:$0xff]
        %v755 = vld [vmem:[#allocation9 + $0x2c0] sm:$0xff]
        %v756 = vld [vmem:[#allocation9 + $0x2c8] sm:$0xff]
        %v757 = vld [vmem:[#allocation9 + $0x2d0] sm:$0xff]
        %v758 = vld [vmem:[#allocation9 + $0x2d8] sm:$0xff]
        %v759 = vld [vmem:[#allocation9 + $0x2e0] sm:$0xff]
        %v760 = vld [vmem:[#allocation9 + $0x2e8] sm:$0xff]
        %v761 = vld [vmem:[#allocation9 + $0x2f0] sm:$0xff]
        %v762 = vld [vmem:[#allocation9 + $0x2f8] sm:$0xff]
        %v763 = vld [vmem:[#allocation9 + $0x300] sm:$0xff]
        %v764 = vld [vmem:[#allocation9 + $0x308] sm:$0xff]
        %v765 = vld [vmem:[#allocation9 + $0x310] sm:$0xff]
        %v766 = vld [vmem:[#allocation9 + $0x318] sm:$0xff]
        %v767 = vld [vmem:[#allocation9 + $0x320] sm:$0xff]
        %v768 = vld [vmem:[#allocation9 + $0x328] sm:$0xff]
        %v769 = vld [vmem:[#allocation9 + $0x330] sm:$0xff]
        %v770 = vld [vmem:[#allocation9 + $0x338] sm:$0xff]
        %v771 = vld [vmem:[#allocation9 + $0x340] sm:$0xff]
        %v772 = vld [vmem:[#allocation9 + $0x348] sm:$0xff]
        %v773 = vld [vmem:[#allocation9 + $0x350] sm:$0xff]
        %v774 = vld [vmem:[#allocation9 + $0x358] sm:$0xff]
        %v775 = vld [vmem:[#allocation9 + $0x360] sm:$0xff]
        %v776 = vld [vmem:[#allocation9 + $0x368] sm:$0xff]
        %v777 = vld [vmem:[#allocation9 + $0x370] sm:$0xff]
        %v778 = vld [vmem:[#allocation9 + $0x378] sm:$0xff]
        %v779 = vld [vmem:[#allocation9 + $0x380] sm:$0xff]
        %v780 = vld [vmem:[#allocation9 + $0x388] sm:$0xff]
        %v781 = vld [vmem:[#allocation9 + $0x390] sm:$0xff]
        %v782 = vld [vmem:[#allocation9 + $0x398] sm:$0xff]
        %v783 = vld [vmem:[#allocation9 + $0x3a0] sm:$0xff]
        %v784 = vld [vmem:[#allocation9 + $0x3a8] sm:$0xff]
        %v785 = vld [vmem:[#allocation9 + $0x3b0] sm:$0xff]
        %v786 = vld [vmem:[#allocation9 + $0x3b8] sm:$0xff]
        %v787 = vld [vmem:[#allocation9 + $0x3c0] sm:$0xff]
        %v788 = vld [vmem:[#allocation9 + $0x3c8] sm:$0xff]
        %v789 = vld [vmem:[#allocation9 + $0x3d0] sm:$0xff]
        %v790 = vld [vmem:[#allocation9 + $0x3d8] sm:$0xff]
        %v791 = vld [vmem:[#allocation9 + $0x3e0] sm:$0xff]
        %v792 = vld [vmem:[#allocation9 + $0x3e8] sm:$0xff]
        %v793 = vld [vmem:[#allocation9 + $0x3f0] sm:$0xff]
        %v794 = vld [vmem:[#allocation9 + $0x3f8] sm:$0xff]
        %v795 = vld [vmem:[#allocation16 + $0x4] sm:$0xf]
        %v797 = vperm.slane %v795, 0
        %v798 = vperm.slane %v795, 1
        %v799 = vperm.slane %v795, 2
        %v800 = vperm.slane %v795, 3
        %805 = vmatpush.msra.mxu0 %v727
        %806 = vmatpush.msra.mxu0 %v723
        %807 = vmatpush.msra.mxu0 %v719
        %808 = vmatpush.msra.mxu0 %v715
        %809 = vmatpush.msra.mxu0 %v711
        %810 = vmatpush.msra.mxu0 %v707
        %811 = vmatpush.msra.mxu0 %v703
        %812 = vmatpush.msra.mxu0 %v699
        %813 = vmatpush.msra.mxu0 %v695
        %814 = vmatpush.msra.mxu0 %v691
        %815 = vmatpush.msra.mxu0 %v687
        %816 = vmatpush.msra.mxu0 %v683
        %817 = vmatpush.msra.mxu0 %v679
        %818 = vmatpush.msra.mxu0 %v675
        %819 = vmatpush.msra.mxu0 %v671
        %820 = vmatpush.msra.mxu0 %v667
        %821 = vmatmul.f32.gmra.mxu0 %v665
        %v822 = vpop.f32.mrf.mxu0
        %v823 = vadd.f32 %v797, %v822
        %824 = vdwg.mxu0
        %825 = vmatpush.msra.mxu0 %v791
        %826 = vmatpush.msra.mxu0 %v787
        %827 = vmatpush.msra.mxu0 %v783
        %828 = vmatpush.msra.mxu0 %v779
        %829 = vmatpush.msra.mxu0 %v775
        %830 = vmatpush.msra.mxu0 %v771
        %831 = vmatpush.msra.mxu0 %v767
        %832 = vmatpush.msra.mxu0 %v763
        %833 = vmatpush.msra.mxu0 %v759
        %834 = vmatpush.msra.mxu0 %v755
        %835 = vmatpush.msra.mxu0 %v751
        %836 = vmatpush.msra.mxu0 %v747
        %837 = vmatpush.msra.mxu0 %v743
        %838 = vmatpush.msra.mxu0 %v739
        %839 = vmatpush.msra.mxu0 %v735
        %840 = vmatpush.msra.mxu0 %v731
        %841 = vmatmul.f32.gmra.mxu0 %v666
        %v842 = vpop.f32.mrf.mxu0
        %v843 = vadd.f32 %v823, %v842
        %844 = vdwg.mxu0
        %845 = vmatpush.msra.mxu0 %v728
        %846 = vmatpush.msra.mxu0 %v724
        %847 = vmatpush.msra.mxu0 %v720
        %848 = vmatpush.msra.mxu0 %v716
        %849 = vmatpush.msra.mxu0 %v712
        %850 = vmatpush.msra.mxu0 %v708
        %851 = vmatpush.msra.mxu0 %v704
        %852 = vmatpush.msra.mxu0 %v700
        %853 = vmatpush.msra.mxu0 %v696
        %854 = vmatpush.msra.mxu0 %v692
        %855 = vmatpush.msra.mxu0 %v688
        %856 = vmatpush.msra.mxu0 %v684
        %857 = vmatpush.msra.mxu0 %v680
        %858 = vmatpush.msra.mxu0 %v676
        %859 = vmatpush.msra.mxu0 %v672
        %860 = vmatpush.msra.mxu0 %v668
        %861 = vmatmul.f32.gmra.mxu0 %v665
        %v862 = vpop.f32.mrf.mxu0
        %v863 = vadd.f32 %v798, %v862
        %864 = vdwg.mxu0
        %865 = vmatpush.msra.mxu0 %v792
        %866 = vmatpush.msra.mxu0 %v788
        %867 = vmatpush.msra.mxu0 %v784
        %868 = vmatpush.msra.mxu0 %v780
        %869 = vmatpush.msra.mxu0 %v776
        %870 = vmatpush.msra.mxu0 %v772
        %871 = vmatpush.msra.mxu0 %v768
        %872 = vmatpush.msra.mxu0 %v764
        %873 = vmatpush.msra.mxu0 %v760
        %874 = vmatpush.msra.mxu0 %v756
        %875 = vmatpush.msra.mxu0 %v752
        %876 = vmatpush.msra.mxu0 %v748
        %877 = vmatpush.msra.mxu0 %v744
        %878 = vmatpush.msra.mxu0 %v740
        %879 = vmatpush.msra.mxu0 %v736
        %880 = vmatpush.msra.mxu0 %v732
        %881 = vmatmul.f32.gmra.mxu0 %v666
        %v882 = vpop.f32.mrf.mxu0
        %v883 = vadd.f32 %v863, %v882
        %884 = vdwg.mxu0
        %885 = vmatpush.msra.mxu0 %v729
        %886 = vmatpush.msra.mxu0 %v725
        %887 = vmatpush.msra.mxu0 %v721
        %888 = vmatpush.msra.mxu0 %v717
        %889 = vmatpush.msra.mxu0 %v713
        %890 = vmatpush.msra.mxu0 %v709
        %891 = vmatpush.msra.mxu0 %v705
        %892 = vmatpush.msra.mxu0 %v701
        %893 = vmatpush.msra.mxu0 %v697
        %894 = vmatpush.msra.mxu0 %v693
        %895 = vmatpush.msra.mxu0 %v689
        %896 = vmatpush.msra.mxu0 %v685
        %897 = vmatpush.msra.mxu0 %v681
        %898 = vmatpush.msra.mxu0 %v677
        %899 = vmatpush.msra.mxu0 %v673
        %900 = vmatpush.msra.mxu0 %v669
        %901 = vmatmul.f32.gmra.mxu0 %v665
        %v902 = vpop.f32.mrf.mxu0
        %v903 = vadd.f32 %v799, %v902
        %904 = vdwg.mxu0
        %905 = vmatpush.msra.mxu0 %v793
        %906 = vmatpush.msra.mxu0 %v789
        %907 = vmatpush.msra.mxu0 %v785
        %908 = vmatpush.msra.mxu0 %v781
        %909 = vmatpush.msra.mxu0 %v777
        %910 = vmatpush.msra.mxu0 %v773
        %911 = vmatpush.msra.mxu0 %v769
        %912 = vmatpush.msra.mxu0 %v765
        %913 = vmatpush.msra.mxu0 %v761
        %914 = vmatpush.msra.mxu0 %v757
        %915 = vmatpush.msra.mxu0 %v753
        %916 = vmatpush.msra.mxu0 %v749
        %917 = vmatpush.msra.mxu0 %v745
        %918 = vmatpush.msra.mxu0 %v741
        %919 = vmatpush.msra.mxu0 %v737
        %920 = vmatpush.msra.mxu0 %v733
        %921 = vmatmul.f32.gmra.mxu0 %v666
        %v922 = vpop.f32.mrf.mxu0
        %v923 = vadd.f32 %v903, %v922
        %924 = vdwg.mxu0
        %925 = vmatpush.msra.mxu0 %v730
        %926 = vmatpush.msra.mxu0 %v726
        %927 = vmatpush.msra.mxu0 %v722
        %928 = vmatpush.msra.mxu0 %v718
        %929 = vmatpush.msra.mxu0 %v714
        %930 = vmatpush.msra.mxu0 %v710
        %931 = vmatpush.msra.mxu0 %v706
        %932 = vmatpush.msra.mxu0 %v702
        %933 = vmatpush.msra.mxu0 %v698
        %934 = vmatpush.msra.mxu0 %v694
        %935 = vmatpush.msra.mxu0 %v690
        %936 = vmatpush.msra.mxu0 %v686
        %937 = vmatpush.msra.mxu0 %v682
        %938 = vmatpush.msra.mxu0 %v678
        %939 = vmatpush.msra.mxu0 %v674
        %940 = vmatpush.msra.mxu0 %v670
        %941 = vmatmul.f32.gmra.mxu0 %v665
        %v942 = vpop.f32.mrf.mxu0
        %v943 = vadd.f32 %v800, %v942
        %944 = vdwg.mxu0
        %945 = vmatpush.msra.mxu0 %v794
        %946 = vmatpush.msra.mxu0 %v790
        %947 = vmatpush.msra.mxu0 %v786
        %948 = vmatpush.msra.mxu0 %v782
        %949 = vmatpush.msra.mxu0 %v778
        %950 = vmatpush.msra.mxu0 %v774
        %951 = vmatpush.msra.mxu0 %v770
        %952 = vmatpush.msra.mxu0 %v766
        %953 = vmatpush.msra.mxu0 %v762
        %954 = vmatpush.msra.mxu0 %v758
        %955 = vmatpush.msra.mxu0 %v754
        %956 = vmatpush.msra.mxu0 %v750
        %957 = vmatpush.msra.mxu0 %v746
        %958 = vmatpush.msra.mxu0 %v742
        %959 = vmatpush.msra.mxu0 %v738
        %960 = vmatpush.msra.mxu0 %v734
        %961 = vmatmul.f32.gmra.mxu0 %v666
        %v962 = vpop.f32.mrf.mxu0
        %v963 = vadd.f32 %v943, %v962
        %964 = vdwg.mxu0
        %vm965 = vcmp.gt.f32.partialorder %v843, 0.0
        %vm966 = vcmp.gt.f32.partialorder %v883, 0.0
        %vm967 = vcmp.gt.f32.partialorder %v923, 0.0
        %vm968 = vcmp.gt.f32.partialorder %v963, 0.0
        %v969 = vmul.f32 %v843, 0.01
        %v970 = vmul.f32 %v883, 0.01
        %v971 = vmul.f32 %v923, 0.01
        %v972 = vmul.f32 %v963, 0.01
        %v973 = vsel %vm965, %v843, %v969
        %v974 = vsel %vm966, %v883, %v970
        %v975 = vsel %vm967, %v923, %v971
        %v976 = vsel %vm968, %v963, %v972
        %v977 = vld [vmem:[#allocation10] sm:$0xff]
        %v978 = vld [vmem:[#allocation10 + $0x8] sm:$0xff]
        %v979 = vld [vmem:[#allocation10 + $0x10] sm:$0xff]
        %v980 = vld [vmem:[#allocation10 + $0x18] sm:$0xff]
        %v981 = vld [vmem:[#allocation10 + $0x20] sm:$0xff]
        %v982 = vld [vmem:[#allocation10 + $0x28] sm:$0xff]
        %v983 = vld [vmem:[#allocation10 + $0x30] sm:$0xff]
        %v984 = vld [vmem:[#allocation10 + $0x38] sm:$0xff]
        %v985 = vld [vmem:[#allocation10 + $0x40] sm:$0xff]
        %v986 = vld [vmem:[#allocation10 + $0x48] sm:$0xff]
        %v987 = vld [vmem:[#allocation10 + $0x50] sm:$0xff]
        %v988 = vld [vmem:[#allocation10 + $0x58] sm:$0xff]
        %v989 = vld [vmem:[#allocation10 + $0x60] sm:$0xff]
        %v990 = vld [vmem:[#allocation10 + $0x68] sm:$0xff]
        %v991 = vld [vmem:[#allocation10 + $0x70] sm:$0xff]
        %v992 = vld [vmem:[#allocation10 + $0x78] sm:$0xff]
        %v993 = vld [vmem:[#allocation10 + $0x80] sm:$0xff]
        %v994 = vld [vmem:[#allocation10 + $0x88] sm:$0xff]
        %v995 = vld [vmem:[#allocation10 + $0x90] sm:$0xff]
        %v996 = vld [vmem:[#allocation10 + $0x98] sm:$0xff]
        %v997 = vld [vmem:[#allocation10 + $0xa0] sm:$0xff]
        %v998 = vld [vmem:[#allocation10 + $0xa8] sm:$0xff]
        %v999 = vld [vmem:[#allocation10 + $0xb0] sm:$0xff]
        %v1000 = vld [vmem:[#allocation10 + $0xb8] sm:$0xff]
        %v1001 = vld [vmem:[#allocation10 + $0xc0] sm:$0xff]
        %v1002 = vld [vmem:[#allocation10 + $0xc8] sm:$0xff]
        %v1003 = vld [vmem:[#allocation10 + $0xd0] sm:$0xff]
        %v1004 = vld [vmem:[#allocation10 + $0xd8] sm:$0xff]
        %v1005 = vld [vmem:[#allocation10 + $0xe0] sm:$0xff]
        %v1006 = vld [vmem:[#allocation10 + $0xe8] sm:$0xff]
        %v1007 = vld [vmem:[#allocation10 + $0xf0] sm:$0xff]
        %v1008 = vld [vmem:[#allocation10 + $0xf8] sm:$0xff]
        %v1009 = vld [vmem:[#allocation10 + $0x100] sm:$0xff]
        %v1010 = vld [vmem:[#allocation10 + $0x108] sm:$0xff]
        %v1011 = vld [vmem:[#allocation10 + $0x110] sm:$0xff]
        %v1012 = vld [vmem:[#allocation10 + $0x118] sm:$0xff]
        %v1013 = vld [vmem:[#allocation10 + $0x120] sm:$0xff]
        %v1014 = vld [vmem:[#allocation10 + $0x128] sm:$0xff]
        %v1015 = vld [vmem:[#allocation10 + $0x130] sm:$0xff]
        %v1016 = vld [vmem:[#allocation10 + $0x138] sm:$0xff]
        %v1017 = vld [vmem:[#allocation10 + $0x140] sm:$0xff]
        %v1018 = vld [vmem:[#allocation10 + $0x148] sm:$0xff]
        %v1019 = vld [vmem:[#allocation10 + $0x150] sm:$0xff]
        %v1020 = vld [vmem:[#allocation10 + $0x158] sm:$0xff]
        %v1021 = vld [vmem:[#allocation10 + $0x160] sm:$0xff]
        %v1022 = vld [vmem:[#allocation10 + $0x168] sm:$0xff]
        %v1023 = vld [vmem:[#allocation10 + $0x170] sm:$0xff]
        %v1024 = vld [vmem:[#allocation10 + $0x178] sm:$0xff]
        %v1025 = vld [vmem:[#allocation10 + $0x180] sm:$0xff]
        %v1026 = vld [vmem:[#allocation10 + $0x188] sm:$0xff]
        %v1027 = vld [vmem:[#allocation10 + $0x190] sm:$0xff]
        %v1028 = vld [vmem:[#allocation10 + $0x198] sm:$0xff]
        %v1029 = vld [vmem:[#allocation10 + $0x1a0] sm:$0xff]
        %v1030 = vld [vmem:[#allocation10 + $0x1a8] sm:$0xff]
        %v1031 = vld [vmem:[#allocation10 + $0x1b0] sm:$0xff]
        %v1032 = vld [vmem:[#allocation10 + $0x1b8] sm:$0xff]
        %v1033 = vld [vmem:[#allocation10 + $0x1c0] sm:$0xff]
        %v1034 = vld [vmem:[#allocation10 + $0x1c8] sm:$0xff]
        %v1035 = vld [vmem:[#allocation10 + $0x1d0] sm:$0xff]
        %v1036 = vld [vmem:[#allocation10 + $0x1d8] sm:$0xff]
        %v1037 = vld [vmem:[#allocation10 + $0x1e0] sm:$0xff]
        %v1038 = vld [vmem:[#allocation10 + $0x1e8] sm:$0xff]
        %v1039 = vld [vmem:[#allocation10 + $0x1f0] sm:$0xff]
        %v1040 = vld [vmem:[#allocation10 + $0x1f8] sm:$0xff]
        %v1041 = vld [vmem:[#allocation10 + $0x200] sm:$0xff]
        %v1042 = vld [vmem:[#allocation10 + $0x208] sm:$0xff]
        %v1043 = vld [vmem:[#allocation10 + $0x210] sm:$0xff]
        %v1044 = vld [vmem:[#allocation10 + $0x218] sm:$0xff]
        %v1045 = vld [vmem:[#allocation10 + $0x220] sm:$0xff]
        %v1046 = vld [vmem:[#allocation10 + $0x228] sm:$0xff]
        %v1047 = vld [vmem:[#allocation10 + $0x230] sm:$0xff]
        %v1048 = vld [vmem:[#allocation10 + $0x238] sm:$0xff]
        %v1049 = vld [vmem:[#allocation10 + $0x240] sm:$0xff]
        %v1050 = vld [vmem:[#allocation10 + $0x248] sm:$0xff]
        %v1051 = vld [vmem:[#allocation10 + $0x250] sm:$0xff]
        %v1052 = vld [vmem:[#allocation10 + $0x258] sm:$0xff]
        %v1053 = vld [vmem:[#allocation10 + $0x260] sm:$0xff]
        %v1054 = vld [vmem:[#allocation10 + $0x268] sm:$0xff]
        %v1055 = vld [vmem:[#allocation10 + $0x270] sm:$0xff]
        %v1056 = vld [vmem:[#allocation10 + $0x278] sm:$0xff]
        %v1057 = vld [vmem:[#allocation10 + $0x280] sm:$0xff]
        %v1058 = vld [vmem:[#allocation10 + $0x288] sm:$0xff]
        %v1059 = vld [vmem:[#allocation10 + $0x290] sm:$0xff]
        %v1060 = vld [vmem:[#allocation10 + $0x298] sm:$0xff]
        %v1061 = vld [vmem:[#allocation10 + $0x2a0] sm:$0xff]
        %v1062 = vld [vmem:[#allocation10 + $0x2a8] sm:$0xff]
        %v1063 = vld [vmem:[#allocation10 + $0x2b0] sm:$0xff]
        %v1064 = vld [vmem:[#allocation10 + $0x2b8] sm:$0xff]
        %v1065 = vld [vmem:[#allocation10 + $0x2c0] sm:$0xff]
        %v1066 = vld [vmem:[#allocation10 + $0x2c8] sm:$0xff]
        %v1067 = vld [vmem:[#allocation10 + $0x2d0] sm:$0xff]
        %v1068 = vld [vmem:[#allocation10 + $0x2d8] sm:$0xff]
        %v1069 = vld [vmem:[#allocation10 + $0x2e0] sm:$0xff]
        %v1070 = vld [vmem:[#allocation10 + $0x2e8] sm:$0xff]
        %v1071 = vld [vmem:[#allocation10 + $0x2f0] sm:$0xff]
        %v1072 = vld [vmem:[#allocation10 + $0x2f8] sm:$0xff]
        %v1073 = vld [vmem:[#allocation10 + $0x300] sm:$0xff]
        %v1074 = vld [vmem:[#allocation10 + $0x308] sm:$0xff]
        %v1075 = vld [vmem:[#allocation10 + $0x310] sm:$0xff]
        %v1076 = vld [vmem:[#allocation10 + $0x318] sm:$0xff]
        %v1077 = vld [vmem:[#allocation10 + $0x320] sm:$0xff]
        %v1078 = vld [vmem:[#allocation10 + $0x328] sm:$0xff]
        %v1079 = vld [vmem:[#allocation10 + $0x330] sm:$0xff]
        %v1080 = vld [vmem:[#allocation10 + $0x338] sm:$0xff]
        %v1081 = vld [vmem:[#allocation10 + $0x340] sm:$0xff]
        %v1082 = vld [vmem:[#allocation10 + $0x348] sm:$0xff]
        %v1083 = vld [vmem:[#allocation10 + $0x350] sm:$0xff]
        %v1084 = vld [vmem:[#allocation10 + $0x358] sm:$0xff]
        %v1085 = vld [vmem:[#allocation10 + $0x360] sm:$0xff]
        %v1086 = vld [vmem:[#allocation10 + $0x368] sm:$0xff]
        %v1087 = vld [vmem:[#allocation10 + $0x370] sm:$0xff]
        %v1088 = vld [vmem:[#allocation10 + $0x378] sm:$0xff]
        %v1089 = vld [vmem:[#allocation10 + $0x380] sm:$0xff]
        %v1090 = vld [vmem:[#allocation10 + $0x388] sm:$0xff]
        %v1091 = vld [vmem:[#allocation10 + $0x390] sm:$0xff]
        %v1092 = vld [vmem:[#allocation10 + $0x398] sm:$0xff]
        %v1093 = vld [vmem:[#allocation10 + $0x3a0] sm:$0xff]
        %v1094 = vld [vmem:[#allocation10 + $0x3a8] sm:$0xff]
        %v1095 = vld [vmem:[#allocation10 + $0x3b0] sm:$0xff]
        %v1096 = vld [vmem:[#allocation10 + $0x3b8] sm:$0xff]
        %v1097 = vld [vmem:[#allocation10 + $0x3c0] sm:$0xff]
        %v1098 = vld [vmem:[#allocation10 + $0x3c8] sm:$0xff]
        %v1099 = vld [vmem:[#allocation10 + $0x3d0] sm:$0xff]
        %v1100 = vld [vmem:[#allocation10 + $0x3d8] sm:$0xff]
        %v1101 = vld [vmem:[#allocation10 + $0x3e0] sm:$0xff]
        %v1102 = vld [vmem:[#allocation10 + $0x3e8] sm:$0xff]
        %v1103 = vld [vmem:[#allocation10 + $0x3f0] sm:$0xff]
        %v1104 = vld [vmem:[#allocation10 + $0x3f8] sm:$0xff]
        %v1105 = vld [vmem:[#allocation10 + $0x400] sm:$0xff]
        %v1106 = vld [vmem:[#allocation10 + $0x408] sm:$0xff]
        %v1107 = vld [vmem:[#allocation10 + $0x410] sm:$0xff]
        %v1108 = vld [vmem:[#allocation10 + $0x418] sm:$0xff]
        %v1109 = vld [vmem:[#allocation10 + $0x420] sm:$0xff]
        %v1110 = vld [vmem:[#allocation10 + $0x428] sm:$0xff]
        %v1111 = vld [vmem:[#allocation10 + $0x430] sm:$0xff]
        %v1112 = vld [vmem:[#allocation10 + $0x438] sm:$0xff]
        %v1113 = vld [vmem:[#allocation10 + $0x440] sm:$0xff]
        %v1114 = vld [vmem:[#allocation10 + $0x448] sm:$0xff]
        %v1115 = vld [vmem:[#allocation10 + $0x450] sm:$0xff]
        %v1116 = vld [vmem:[#allocation10 + $0x458] sm:$0xff]
        %v1117 = vld [vmem:[#allocation10 + $0x460] sm:$0xff]
        %v1118 = vld [vmem:[#allocation10 + $0x468] sm:$0xff]
        %v1119 = vld [vmem:[#allocation10 + $0x470] sm:$0xff]
        %v1120 = vld [vmem:[#allocation10 + $0x478] sm:$0xff]
        %v1121 = vld [vmem:[#allocation10 + $0x480] sm:$0xff]
        %v1122 = vld [vmem:[#allocation10 + $0x488] sm:$0xff]
        %v1123 = vld [vmem:[#allocation10 + $0x490] sm:$0xff]
        %v1124 = vld [vmem:[#allocation10 + $0x498] sm:$0xff]
        %v1125 = vld [vmem:[#allocation10 + $0x4a0] sm:$0xff]
        %v1126 = vld [vmem:[#allocation10 + $0x4a8] sm:$0xff]
        %v1127 = vld [vmem:[#allocation10 + $0x4b0] sm:$0xff]
        %v1128 = vld [vmem:[#allocation10 + $0x4b8] sm:$0xff]
        %v1129 = vld [vmem:[#allocation10 + $0x4c0] sm:$0xff]
        %v1130 = vld [vmem:[#allocation10 + $0x4c8] sm:$0xff]
        %v1131 = vld [vmem:[#allocation10 + $0x4d0] sm:$0xff]
        %v1132 = vld [vmem:[#allocation10 + $0x4d8] sm:$0xff]
        %v1133 = vld [vmem:[#allocation10 + $0x4e0] sm:$0xff]
        %v1134 = vld [vmem:[#allocation10 + $0x4e8] sm:$0xff]
        %v1135 = vld [vmem:[#allocation10 + $0x4f0] sm:$0xff]
        %v1136 = vld [vmem:[#allocation10 + $0x4f8] sm:$0xff]
        %v1137 = vld [vmem:[#allocation10 + $0x500] sm:$0xff]
        %v1138 = vld [vmem:[#allocation10 + $0x508] sm:$0xff]
        %v1139 = vld [vmem:[#allocation10 + $0x510] sm:$0xff]
        %v1140 = vld [vmem:[#allocation10 + $0x518] sm:$0xff]
        %v1141 = vld [vmem:[#allocation10 + $0x520] sm:$0xff]
        %v1142 = vld [vmem:[#allocation10 + $0x528] sm:$0xff]
        %v1143 = vld [vmem:[#allocation10 + $0x530] sm:$0xff]
        %v1144 = vld [vmem:[#allocation10 + $0x538] sm:$0xff]
        %v1145 = vld [vmem:[#allocation10 + $0x540] sm:$0xff]
        %v1146 = vld [vmem:[#allocation10 + $0x548] sm:$0xff]
        %v1147 = vld [vmem:[#allocation10 + $0x550] sm:$0xff]
        %v1148 = vld [vmem:[#allocation10 + $0x558] sm:$0xff]
        %v1149 = vld [vmem:[#allocation10 + $0x560] sm:$0xff]
        %v1150 = vld [vmem:[#allocation10 + $0x568] sm:$0xff]
        %v1151 = vld [vmem:[#allocation10 + $0x570] sm:$0xff]
        %v1152 = vld [vmem:[#allocation10 + $0x578] sm:$0xff]
        %v1153 = vld [vmem:[#allocation10 + $0x580] sm:$0xff]
        %v1154 = vld [vmem:[#allocation10 + $0x588] sm:$0xff]
        %v1155 = vld [vmem:[#allocation10 + $0x590] sm:$0xff]
        %v1156 = vld [vmem:[#allocation10 + $0x598] sm:$0xff]
        %v1157 = vld [vmem:[#allocation10 + $0x5a0] sm:$0xff]
        %v1158 = vld [vmem:[#allocation10 + $0x5a8] sm:$0xff]
        %v1159 = vld [vmem:[#allocation10 + $0x5b0] sm:$0xff]
        %v1160 = vld [vmem:[#allocation10 + $0x5b8] sm:$0xff]
        %v1161 = vld [vmem:[#allocation10 + $0x5c0] sm:$0xff]
        %v1162 = vld [vmem:[#allocation10 + $0x5c8] sm:$0xff]
        %v1163 = vld [vmem:[#allocation10 + $0x5d0] sm:$0xff]
        %v1164 = vld [vmem:[#allocation10 + $0x5d8] sm:$0xff]
        %v1165 = vld [vmem:[#allocation10 + $0x5e0] sm:$0xff]
        %v1166 = vld [vmem:[#allocation10 + $0x5e8] sm:$0xff]
        %v1167 = vld [vmem:[#allocation10 + $0x5f0] sm:$0xff]
        %v1168 = vld [vmem:[#allocation10 + $0x5f8] sm:$0xff]
        %v1169 = vld [vmem:[#allocation10 + $0x600] sm:$0xff]
        %v1170 = vld [vmem:[#allocation10 + $0x608] sm:$0xff]
        %v1171 = vld [vmem:[#allocation10 + $0x610] sm:$0xff]
        %v1172 = vld [vmem:[#allocation10 + $0x618] sm:$0xff]
        %v1173 = vld [vmem:[#allocation10 + $0x620] sm:$0xff]
        %v1174 = vld [vmem:[#allocation10 + $0x628] sm:$0xff]
        %v1175 = vld [vmem:[#allocation10 + $0x630] sm:$0xff]
        %v1176 = vld [vmem:[#allocation10 + $0x638] sm:$0xff]
        %v1177 = vld [vmem:[#allocation10 + $0x640] sm:$0xff]
        %v1178 = vld [vmem:[#allocation10 + $0x648] sm:$0xff]
        %v1179 = vld [vmem:[#allocation10 + $0x650] sm:$0xff]
        %v1180 = vld [vmem:[#allocation10 + $0x658] sm:$0xff]
        %v1181 = vld [vmem:[#allocation10 + $0x660] sm:$0xff]
        %v1182 = vld [vmem:[#allocation10 + $0x668] sm:$0xff]
        %v1183 = vld [vmem:[#allocation10 + $0x670] sm:$0xff]
        %v1184 = vld [vmem:[#allocation10 + $0x678] sm:$0xff]
        %v1185 = vld [vmem:[#allocation10 + $0x680] sm:$0xff]
        %v1186 = vld [vmem:[#allocation10 + $0x688] sm:$0xff]
        %v1187 = vld [vmem:[#allocation10 + $0x690] sm:$0xff]
        %v1188 = vld [vmem:[#allocation10 + $0x698] sm:$0xff]
        %v1189 = vld [vmem:[#allocation10 + $0x6a0] sm:$0xff]
        %v1190 = vld [vmem:[#allocation10 + $0x6a8] sm:$0xff]
        %v1191 = vld [vmem:[#allocation10 + $0x6b0] sm:$0xff]
        %v1192 = vld [vmem:[#allocation10 + $0x6b8] sm:$0xff]
        %v1193 = vld [vmem:[#allocation10 + $0x6c0] sm:$0xff]
        %v1194 = vld [vmem:[#allocation10 + $0x6c8] sm:$0xff]
        %v1195 = vld [vmem:[#allocation10 + $0x6d0] sm:$0xff]
        %v1196 = vld [vmem:[#allocation10 + $0x6d8] sm:$0xff]
        %v1197 = vld [vmem:[#allocation10 + $0x6e0] sm:$0xff]
        %v1198 = vld [vmem:[#allocation10 + $0x6e8] sm:$0xff]
        %v1199 = vld [vmem:[#allocation10 + $0x6f0] sm:$0xff]
        %v1200 = vld [vmem:[#allocation10 + $0x6f8] sm:$0xff]
        %v1201 = vld [vmem:[#allocation10 + $0x700] sm:$0xff]
        %v1202 = vld [vmem:[#allocation10 + $0x708] sm:$0xff]
        %v1203 = vld [vmem:[#allocation10 + $0x710] sm:$0xff]
        %v1204 = vld [vmem:[#allocation10 + $0x718] sm:$0xff]
        %v1205 = vld [vmem:[#allocation10 + $0x720] sm:$0xff]
        %v1206 = vld [vmem:[#allocation10 + $0x728] sm:$0xff]
        %v1207 = vld [vmem:[#allocation10 + $0x730] sm:$0xff]
        %v1208 = vld [vmem:[#allocation10 + $0x738] sm:$0xff]
        %v1209 = vld [vmem:[#allocation10 + $0x740] sm:$0xff]
        %v1210 = vld [vmem:[#allocation10 + $0x748] sm:$0xff]
        %v1211 = vld [vmem:[#allocation10 + $0x750] sm:$0xff]
        %v1212 = vld [vmem:[#allocation10 + $0x758] sm:$0xff]
        %v1213 = vld [vmem:[#allocation10 + $0x760] sm:$0xff]
        %v1214 = vld [vmem:[#allocation10 + $0x768] sm:$0xff]
        %v1215 = vld [vmem:[#allocation10 + $0x770] sm:$0xff]
        %v1216 = vld [vmem:[#allocation10 + $0x778] sm:$0xff]
        %v1217 = vld [vmem:[#allocation10 + $0x780] sm:$0xff]
        %v1218 = vld [vmem:[#allocation10 + $0x788] sm:$0xff]
        %v1219 = vld [vmem:[#allocation10 + $0x790] sm:$0xff]
        %v1220 = vld [vmem:[#allocation10 + $0x798] sm:$0xff]
        %v1221 = vld [vmem:[#allocation10 + $0x7a0] sm:$0xff]
        %v1222 = vld [vmem:[#allocation10 + $0x7a8] sm:$0xff]
        %v1223 = vld [vmem:[#allocation10 + $0x7b0] sm:$0xff]
        %v1224 = vld [vmem:[#allocation10 + $0x7b8] sm:$0xff]
        %v1225 = vld [vmem:[#allocation10 + $0x7c0] sm:$0xff]
        %v1226 = vld [vmem:[#allocation10 + $0x7c8] sm:$0xff]
        %v1227 = vld [vmem:[#allocation10 + $0x7d0] sm:$0xff]
        %v1228 = vld [vmem:[#allocation10 + $0x7d8] sm:$0xff]
        %v1229 = vld [vmem:[#allocation10 + $0x7e0] sm:$0xff]
        %v1230 = vld [vmem:[#allocation10 + $0x7e8] sm:$0xff]
        %v1231 = vld [vmem:[#allocation10 + $0x7f0] sm:$0xff]
        %v1232 = vld [vmem:[#allocation10 + $0x7f8] sm:$0xff]
        %v1233 = vld [vmem:[#allocation16 + $0x8] sm:$0xf]
        %v1235 = vperm.slane %v1233, 0
        %v1236 = vperm.slane %v1233, 1
        %v1237 = vperm.slane %v1233, 2
        %v1238 = vperm.slane %v1233, 3
        %1243 = vmatpush.msra.mxu0 %v1037
        %1244 = vmatpush.msra.mxu0 %v1033
        %1245 = vmatpush.msra.mxu0 %v1029
        %1246 = vmatpush.msra.mxu0 %v1025
        %1247 = vmatpush.msra.mxu0 %v1021
        %1248 = vmatpush.msra.mxu0 %v1017
        %1249 = vmatpush.msra.mxu0 %v1013
        %1250 = vmatpush.msra.mxu0 %v1009
        %1251 = vmatpush.msra.mxu0 %v1005
        %1252 = vmatpush.msra.mxu0 %v1001
        %1253 = vmatpush.msra.mxu0 %v997
        %1254 = vmatpush.msra.mxu0 %v993
        %1255 = vmatpush.msra.mxu0 %v989
        %1256 = vmatpush.msra.mxu0 %v985
        %1257 = vmatpush.msra.mxu0 %v981
        %1258 = vmatpush.msra.mxu0 %v977
        %1259 = vmatmul.f32.gmra.mxu0 %v973
        %v1260 = vpop.f32.mrf.mxu0
        %v1261 = vadd.f32 %v1235, %v1260
        %1262 = vdwg.mxu0
        %1263 = vmatpush.msra.mxu0 %v1101
        %1264 = vmatpush.msra.mxu0 %v1097
        %1265 = vmatpush.msra.mxu0 %v1093
        %1266 = vmatpush.msra.mxu0 %v1089
        %1267 = vmatpush.msra.mxu0 %v1085
        %1268 = vmatpush.msra.mxu0 %v1081
        %1269 = vmatpush.msra.mxu0 %v1077
        %1270 = vmatpush.msra.mxu0 %v1073
        %1271 = vmatpush.msra.mxu0 %v1069
        %1272 = vmatpush.msra.mxu0 %v1065
        %1273 = vmatpush.msra.mxu0 %v1061
        %1274 = vmatpush.msra.mxu0 %v1057
        %1275 = vmatpush.msra.mxu0 %v1053
        %1276 = vmatpush.msra.mxu0 %v1049
        %1277 = vmatpush.msra.mxu0 %v1045
        %1278 = vmatpush.msra.mxu0 %v1041
        %1279 = vmatmul.f32.gmra.mxu0 %v974
        %v1280 = vpop.f32.mrf.mxu0
        %v1281 = vadd.f32 %v1261, %v1280
        %1282 = vdwg.mxu0
        %1283 = vmatpush.msra.mxu0 %v1165
        %1284 = vmatpush.msra.mxu0 %v1161
        %1285 = vmatpush.msra.mxu0 %v1157
        %1286 = vmatpush.msra.mxu0 %v1153
        %1287 = vmatpush.msra.mxu0 %v1149
        %1288 = vmatpush.msra.mxu0 %v1145
        %1289 = vmatpush.msra.mxu0 %v1141
        %1290 = vmatpush.msra.mxu0 %v1137
        %1291 = vmatpush.msra.mxu0 %v1133
        %1292 = vmatpush.msra.mxu0 %v1129
        %1293 = vmatpush.msra.mxu0 %v1125
        %1294 = vmatpush.msra.mxu0 %v1121
        %1295 = vmatpush.msra.mxu0 %v1117
        %1296 = vmatpush.msra.mxu0 %v1113
        %1297 = vmatpush.msra.mxu0 %v1109
        %1298 = vmatpush.msra.mxu0 %v1105
        %1299 = vmatmul.f32.gmra.mxu0 %v975
        %v1300 = vpop.f32.mrf.mxu0
        %v1301 = vadd.f32 %v1281, %v1300
        %1302 = vdwg.mxu0
        %1303 = vmatpush.msra.mxu0 %v1229
        %1304 = vmatpush.msra.mxu0 %v1225
        %1305 = vmatpush.msra.mxu0 %v1221
        %1306 = vmatpush.msra.mxu0 %v1217
        %1307 = vmatpush.msra.mxu0 %v1213
        %1308 = vmatpush.msra.mxu0 %v1209
        %1309 = vmatpush.msra.mxu0 %v1205
        %1310 = vmatpush.msra.mxu0 %v1201
        %1311 = vmatpush.msra.mxu0 %v1197
        %1312 = vmatpush.msra.mxu0 %v1193
        %1313 = vmatpush.msra.mxu0 %v1189
        %1314 = vmatpush.msra.mxu0 %v1185
        %1315 = vmatpush.msra.mxu0 %v1181
        %1316 = vmatpush.msra.mxu0 %v1177
        %1317 = vmatpush.msra.mxu0 %v1173
        %1318 = vmatpush.msra.mxu0 %v1169
        %1319 = vmatmul.f32.gmra.mxu0 %v976
        %v1320 = vpop.f32.mrf.mxu0
        %v1321 = vadd.f32 %v1301, %v1320
        %1322 = vdwg.mxu0
        %1323 = vmatpush.msra.mxu0 %v1038
        %1324 = vmatpush.msra.mxu0 %v1034
        %1325 = vmatpush.msra.mxu0 %v1030
        %1326 = vmatpush.msra.mxu0 %v1026
        %1327 = vmatpush.msra.mxu0 %v1022
        %1328 = vmatpush.msra.mxu0 %v1018
        %1329 = vmatpush.msra.mxu0 %v1014
        %1330 = vmatpush.msra.mxu0 %v1010
        %1331 = vmatpush.msra.mxu0 %v1006
        %1332 = vmatpush.msra.mxu0 %v1002
        %1333 = vmatpush.msra.mxu0 %v998
        %1334 = vmatpush.msra.mxu0 %v994
        %1335 = vmatpush.msra.mxu0 %v990
        %1336 = vmatpush.msra.mxu0 %v986
        %1337 = vmatpush.msra.mxu0 %v982
        %1338 = vmatpush.msra.mxu0 %v978
        %1339 = vmatmul.f32.gmra.mxu0 %v973
        %v1340 = vpop.f32.mrf.mxu0
        %v1341 = vadd.f32 %v1236, %v1340
        %1342 = vdwg.mxu0
        %1343 = vmatpush.msra.mxu0 %v1102
        %1344 = vmatpush.msra.mxu0 %v1098
        %1345 = vmatpush.msra.mxu0 %v1094
        %1346 = vmatpush.msra.mxu0 %v1090
        %1347 = vmatpush.msra.mxu0 %v1086
        %1348 = vmatpush.msra.mxu0 %v1082
        %1349 = vmatpush.msra.mxu0 %v1078
        %1350 = vmatpush.msra.mxu0 %v1074
        %1351 = vmatpush.msra.mxu0 %v1070
        %1352 = vmatpush.msra.mxu0 %v1066
        %1353 = vmatpush.msra.mxu0 %v1062
        %1354 = vmatpush.msra.mxu0 %v1058
        %1355 = vmatpush.msra.mxu0 %v1054
        %1356 = vmatpush.msra.mxu0 %v1050
        %1357 = vmatpush.msra.mxu0 %v1046
        %1358 = vmatpush.msra.mxu0 %v1042
        %1359 = vmatmul.f32.gmra.mxu0 %v974
        %v1360 = vpop.f32.mrf.mxu0
        %v1361 = vadd.f32 %v1341, %v1360
        %1362 = vdwg.mxu0
        %1363 = vmatpush.msra.mxu0 %v1166
        %1364 = vmatpush.msra.mxu0 %v1162
        %1365 = vmatpush.msra.mxu0 %v1158
        %1366 = vmatpush.msra.mxu0 %v1154
        %1367 = vmatpush.msra.mxu0 %v1150
        %1368 = vmatpush.msra.mxu0 %v1146
        %1369 = vmatpush.msra.mxu0 %v1142
        %1370 = vmatpush.msra.mxu0 %v1138
        %1371 = vmatpush.msra.mxu0 %v1134
        %1372 = vmatpush.msra.mxu0 %v1130
        %1373 = vmatpush.msra.mxu0 %v1126
        %1374 = vmatpush.msra.mxu0 %v1122
        %1375 = vmatpush.msra.mxu0 %v1118
        %1376 = vmatpush.msra.mxu0 %v1114
        %1377 = vmatpush.msra.mxu0 %v1110
        %1378 = vmatpush.msra.mxu0 %v1106
        %1379 = vmatmul.f32.gmra.mxu0 %v975
        %v1380 = vpop.f32.mrf.mxu0
        %v1381 = vadd.f32 %v1361, %v1380
        %1382 = vdwg.mxu0
        %1383 = vmatpush.msra.mxu0 %v1230
        %1384 = vmatpush.msra.mxu0 %v1226
        %1385 = vmatpush.msra.mxu0 %v1222
        %1386 = vmatpush.msra.mxu0 %v1218
        %1387 = vmatpush.msra.mxu0 %v1214
        %1388 = vmatpush.msra.mxu0 %v1210
        %1389 = vmatpush.msra.mxu0 %v1206
        %1390 = vmatpush.msra.mxu0 %v1202
        %1391 = vmatpush.msra.mxu0 %v1198
        %1392 = vmatpush.msra.mxu0 %v1194
        %1393 = vmatpush.msra.mxu0 %v1190
        %1394 = vmatpush.msra.mxu0 %v1186
        %1395 = vmatpush.msra.mxu0 %v1182
        %1396 = vmatpush.msra.mxu0 %v1178
        %1397 = vmatpush.msra.mxu0 %v1174
        %1398 = vmatpush.msra.mxu0 %v1170
        %1399 = vmatmul.f32.gmra.mxu0 %v976
        %v1400 = vpop.f32.mrf.mxu0
        %v1401 = vadd.f32 %v1381, %v1400
        %1402 = vdwg.mxu0
        %1403 = vmatpush.msra.mxu0 %v1039
        %1404 = vmatpush.msra.mxu0 %v1035
        %1405 = vmatpush.msra.mxu0 %v1031
        %1406 = vmatpush.msra.mxu0 %v1027
        %1407 = vmatpush.msra.mxu0 %v1023
        %1408 = vmatpush.msra.mxu0 %v1019
        %1409 = vmatpush.msra.mxu0 %v1015
        %1410 = vmatpush.msra.mxu0 %v1011
        %1411 = vmatpush.msra.mxu0 %v1007
        %1412 = vmatpush.msra.mxu0 %v1003
        %1413 = vmatpush.msra.mxu0 %v999
        %1414 = vmatpush.msra.mxu0 %v995
        %1415 = vmatpush.msra.mxu0 %v991
        %1416 = vmatpush.msra.mxu0 %v987
        %1417 = vmatpush.msra.mxu0 %v983
        %1418 = vmatpush.msra.mxu0 %v979
        %1419 = vmatmul.f32.gmra.mxu0 %v973
        %v1420 = vpop.f32.mrf.mxu0
        %v1421 = vadd.f32 %v1237, %v1420
        %1422 = vdwg.mxu0
        %1423 = vmatpush.msra.mxu0 %v1103
        %1424 = vmatpush.msra.mxu0 %v1099
        %1425 = vmatpush.msra.mxu0 %v1095
        %1426 = vmatpush.msra.mxu0 %v1091
        %1427 = vmatpush.msra.mxu0 %v1087
        %1428 = vmatpush.msra.mxu0 %v1083
        %1429 = vmatpush.msra.mxu0 %v1079
        %1430 = vmatpush.msra.mxu0 %v1075
        %1431 = vmatpush.msra.mxu0 %v1071
        %1432 = vmatpush.msra.mxu0 %v1067
        %1433 = vmatpush.msra.mxu0 %v1063
        %1434 = vmatpush.msra.mxu0 %v1059
        %1435 = vmatpush.msra.mxu0 %v1055
        %1436 = vmatpush.msra.mxu0 %v1051
        %1437 = vmatpush.msra.mxu0 %v1047
        %1438 = vmatpush.msra.mxu0 %v1043
        %1439 = vmatmul.f32.gmra.mxu0 %v974
        %v1440 = vpop.f32.mrf.mxu0
        %v1441 = vadd.f32 %v1421, %v1440
        %1442 = vdwg.mxu0
        %1443 = vmatpush.msra.mxu0 %v1167
        %1444 = vmatpush.msra.mxu0 %v1163
        %1445 = vmatpush.msra.mxu0 %v1159
        %1446 = vmatpush.msra.mxu0 %v1155
        %1447 = vmatpush.msra.mxu0 %v1151
        %1448 = vmatpush.msra.mxu0 %v1147
        %1449 = vmatpush.msra.mxu0 %v1143
        %1450 = vmatpush.msra.mxu0 %v1139
        %1451 = vmatpush.msra.mxu0 %v1135
        %1452 = vmatpush.msra.mxu0 %v1131
        %1453 = vmatpush.msra.mxu0 %v1127
        %1454 = vmatpush.msra.mxu0 %v1123
        %1455 = vmatpush.msra.mxu0 %v1119
        %1456 = vmatpush.msra.mxu0 %v1115
        %1457 = vmatpush.msra.mxu0 %v1111
        %1458 = vmatpush.msra.mxu0 %v1107
        %1459 = vmatmul.f32.gmra.mxu0 %v975
        %v1460 = vpop.f32.mrf.mxu0
        %v1461 = vadd.f32 %v1441, %v1460
        %1462 = vdwg.mxu0
        %1463 = vmatpush.msra.mxu0 %v1231
        %1464 = vmatpush.msra.mxu0 %v1227
        %1465 = vmatpush.msra.mxu0 %v1223
        %1466 = vmatpush.msra.mxu0 %v1219
        %1467 = vmatpush.msra.mxu0 %v1215
        %1468 = vmatpush.msra.mxu0 %v1211
        %1469 = vmatpush.msra.mxu0 %v1207
        %1470 = vmatpush.msra.mxu0 %v1203
        %1471 = vmatpush.msra.mxu0 %v1199
        %1472 = vmatpush.msra.mxu0 %v1195
        %1473 = vmatpush.msra.mxu0 %v1191
        %1474 = vmatpush.msra.mxu0 %v1187
        %1475 = vmatpush.msra.mxu0 %v1183
        %1476 = vmatpush.msra.mxu0 %v1179
        %1477 = vmatpush.msra.mxu0 %v1175
        %1478 = vmatpush.msra.mxu0 %v1171
        %1479 = vmatmul.f32.gmra.mxu0 %v976
        %v1480 = vpop.f32.mrf.mxu0
        %v1481 = vadd.f32 %v1461, %v1480
        %1482 = vdwg.mxu0
        %1483 = vmatpush.msra.mxu0 %v1040
        %1484 = vmatpush.msra.mxu0 %v1036
        %1485 = vmatpush.msra.mxu0 %v1032
        %1486 = vmatpush.msra.mxu0 %v1028
        %1487 = vmatpush.msra.mxu0 %v1024
        %1488 = vmatpush.msra.mxu0 %v1020
        %1489 = vmatpush.msra.mxu0 %v1016
        %1490 = vmatpush.msra.mxu0 %v1012
        %1491 = vmatpush.msra.mxu0 %v1008
        %1492 = vmatpush.msra.mxu0 %v1004
        %1493 = vmatpush.msra.mxu0 %v1000
        %1494 = vmatpush.msra.mxu0 %v996
        %1495 = vmatpush.msra.mxu0 %v992
        %1496 = vmatpush.msra.mxu0 %v988
        %1497 = vmatpush.msra.mxu0 %v984
        %1498 = vmatpush.msra.mxu0 %v980
        %1499 = vmatmul.f32.gmra.mxu0 %v973
        %v1500 = vpop.f32.mrf.mxu0
        %v1501 = vadd.f32 %v1238, %v1500
        %1502 = vdwg.mxu0
        %1503 = vmatpush.msra.mxu0 %v1104
        %1504 = vmatpush.msra.mxu0 %v1100
        %1505 = vmatpush.msra.mxu0 %v1096
        %1506 = vmatpush.msra.mxu0 %v1092
        %1507 = vmatpush.msra.mxu0 %v1088
        %1508 = vmatpush.msra.mxu0 %v1084
        %1509 = vmatpush.msra.mxu0 %v1080
        %1510 = vmatpush.msra.mxu0 %v1076
        %1511 = vmatpush.msra.mxu0 %v1072
        %1512 = vmatpush.msra.mxu0 %v1068
        %1513 = vmatpush.msra.mxu0 %v1064
        %1514 = vmatpush.msra.mxu0 %v1060
        %1515 = vmatpush.msra.mxu0 %v1056
        %1516 = vmatpush.msra.mxu0 %v1052
        %1517 = vmatpush.msra.mxu0 %v1048
        %1518 = vmatpush.msra.mxu0 %v1044
        %1519 = vmatmul.f32.gmra.mxu0 %v974
        %v1520 = vpop.f32.mrf.mxu0
        %v1521 = vadd.f32 %v1501, %v1520
        %1522 = vdwg.mxu0
        %1523 = vmatpush.msra.mxu0 %v1168
        %1524 = vmatpush.msra.mxu0 %v1164
        %1525 = vmatpush.msra.mxu0 %v1160
        %1526 = vmatpush.msra.mxu0 %v1156
        %1527 = vmatpush.msra.mxu0 %v1152
        %1528 = vmatpush.msra.mxu0 %v1148
        %1529 = vmatpush.msra.mxu0 %v1144
        %1530 = vmatpush.msra.mxu0 %v1140
        %1531 = vmatpush.msra.mxu0 %v1136
        %1532 = vmatpush.msra.mxu0 %v1132
        %1533 = vmatpush.msra.mxu0 %v1128
        %1534 = vmatpush.msra.mxu0 %v1124
        %1535 = vmatpush.msra.mxu0 %v1120
        %1536 = vmatpush.msra.mxu0 %v1116
        %1537 = vmatpush.msra.mxu0 %v1112
        %1538 = vmatpush.msra.mxu0 %v1108
        %1539 = vmatmul.f32.gmra.mxu0 %v975
        %v1540 = vpop.f32.mrf.mxu0
        %v1541 = vadd.f32 %v1521, %v1540
        %1542 = vdwg.mxu0
        %1543 = vmatpush.msra.mxu0 %v1232
        %1544 = vmatpush.msra.mxu0 %v1228
        %1545 = vmatpush.msra.mxu0 %v1224
        %1546 = vmatpush.msra.mxu0 %v1220
        %1547 = vmatpush.msra.mxu0 %v1216
        %1548 = vmatpush.msra.mxu0 %v1212
        %1549 = vmatpush.msra.mxu0 %v1208
        %1550 = vmatpush.msra.mxu0 %v1204
        %1551 = vmatpush.msra.mxu0 %v1200
        %1552 = vmatpush.msra.mxu0 %v1196
        %1553 = vmatpush.msra.mxu0 %v1192
        %1554 = vmatpush.msra.mxu0 %v1188
        %1555 = vmatpush.msra.mxu0 %v1184
        %1556 = vmatpush.msra.mxu0 %v1180
        %1557 = vmatpush.msra.mxu0 %v1176
        %1558 = vmatpush.msra.mxu0 %v1172
        %1559 = vmatmul.f32.gmra.mxu0 %v976
        %v1560 = vpop.f32.mrf.mxu0
        %v1561 = vadd.f32 %v1541, %v1560
        %1562 = vdwg.mxu0
        %vm1563 = vcmp.gt.f32.partialorder %v1321, 0.0
        %vm1564 = vcmp.gt.f32.partialorder %v1401, 0.0
        %vm1565 = vcmp.gt.f32.partialorder %v1481, 0.0
        %vm1566 = vcmp.gt.f32.partialorder %v1561, 0.0
        %v1567 = vmul.f32 %v1321, 0.01
        %v1568 = vmul.f32 %v1401, 0.01
        %v1569 = vmul.f32 %v1481, 0.01
        %v1570 = vmul.f32 %v1561, 0.01
        %v1571 = vsel %vm1563, %v1321, %v1567
        %v1572 = vsel %vm1564, %v1401, %v1568
        %v1573 = vsel %vm1565, %v1481, %v1569
        %v1574 = vsel %vm1566, %v1561, %v1570
        %v1575 = vld [vmem:[#allocation12] sm:$0xff]
        %v1576 = vld [vmem:[#allocation12 + $0x8] sm:$0xff]
        %v1577 = vld [vmem:[#allocation12 + $0x10] sm:$0xff]
        %v1578 = vld [vmem:[#allocation12 + $0x18] sm:$0xff]
        %v1579 = vld [vmem:[#allocation12 + $0x20] sm:$0xff]
        %v1580 = vld [vmem:[#allocation12 + $0x28] sm:$0xff]
        %v1581 = vld [vmem:[#allocation12 + $0x30] sm:$0xff]
        %v1582 = vld [vmem:[#allocation12 + $0x38] sm:$0xff]
        %v1583 = vld [vmem:[#allocation12 + $0x40] sm:$0xff]
        %v1584 = vld [vmem:[#allocation12 + $0x48] sm:$0xff]
        %v1585 = vld [vmem:[#allocation12 + $0x50] sm:$0xff]
        %v1586 = vld [vmem:[#allocation12 + $0x58] sm:$0xff]
        %v1587 = vld [vmem:[#allocation12 + $0x60] sm:$0xff]
        %v1588 = vld [vmem:[#allocation12 + $0x68] sm:$0xff]
        %v1589 = vld [vmem:[#allocation12 + $0x70] sm:$0xff]
        %v1590 = vld [vmem:[#allocation12 + $0x78] sm:$0xff]
        %v1591 = vld [vmem:[#allocation12 + $0x80] sm:$0xff]
        %v1592 = vld [vmem:[#allocation12 + $0x88] sm:$0xff]
        %v1593 = vld [vmem:[#allocation12 + $0x90] sm:$0xff]
        %v1594 = vld [vmem:[#allocation12 + $0x98] sm:$0xff]
        %v1595 = vld [vmem:[#allocation12 + $0xa0] sm:$0xff]
        %v1596 = vld [vmem:[#allocation12 + $0xa8] sm:$0xff]
        %v1597 = vld [vmem:[#allocation12 + $0xb0] sm:$0xff]
        %v1598 = vld [vmem:[#allocation12 + $0xb8] sm:$0xff]
        %v1599 = vld [vmem:[#allocation12 + $0xc0] sm:$0xff]
        %v1600 = vld [vmem:[#allocation12 + $0xc8] sm:$0xff]
        %v1601 = vld [vmem:[#allocation12 + $0xd0] sm:$0xff]
        %v1602 = vld [vmem:[#allocation12 + $0xd8] sm:$0xff]
        %v1603 = vld [vmem:[#allocation12 + $0xe0] sm:$0xff]
        %v1604 = vld [vmem:[#allocation12 + $0xe8] sm:$0xff]
        %v1605 = vld [vmem:[#allocation12 + $0xf0] sm:$0xff]
        %v1606 = vld [vmem:[#allocation12 + $0xf8] sm:$0xff]
        %v1607 = vld [vmem:[#allocation12 + $0x100] sm:$0xff]
        %v1608 = vld [vmem:[#allocation12 + $0x108] sm:$0xff]
        %v1609 = vld [vmem:[#allocation12 + $0x110] sm:$0xff]
        %v1610 = vld [vmem:[#allocation12 + $0x118] sm:$0xff]
        %v1611 = vld [vmem:[#allocation12 + $0x120] sm:$0xff]
        %v1612 = vld [vmem:[#allocation12 + $0x128] sm:$0xff]
        %v1613 = vld [vmem:[#allocation12 + $0x130] sm:$0xff]
        %v1614 = vld [vmem:[#allocation12 + $0x138] sm:$0xff]
        %v1615 = vld [vmem:[#allocation12 + $0x140] sm:$0xff]
        %v1616 = vld [vmem:[#allocation12 + $0x148] sm:$0xff]
        %v1617 = vld [vmem:[#allocation12 + $0x150] sm:$0xff]
        %v1618 = vld [vmem:[#allocation12 + $0x158] sm:$0xff]
        %v1619 = vld [vmem:[#allocation12 + $0x160] sm:$0xff]
        %v1620 = vld [vmem:[#allocation12 + $0x168] sm:$0xff]
        %v1621 = vld [vmem:[#allocation12 + $0x170] sm:$0xff]
        %v1622 = vld [vmem:[#allocation12 + $0x178] sm:$0xff]
        %v1623 = vld [vmem:[#allocation12 + $0x180] sm:$0xff]
        %v1624 = vld [vmem:[#allocation12 + $0x188] sm:$0xff]
        %v1625 = vld [vmem:[#allocation12 + $0x190] sm:$0xff]
        %v1626 = vld [vmem:[#allocation12 + $0x198] sm:$0xff]
        %v1627 = vld [vmem:[#allocation12 + $0x1a0] sm:$0xff]
        %v1628 = vld [vmem:[#allocation12 + $0x1a8] sm:$0xff]
        %v1629 = vld [vmem:[#allocation12 + $0x1b0] sm:$0xff]
        %v1630 = vld [vmem:[#allocation12 + $0x1b8] sm:$0xff]
        %v1631 = vld [vmem:[#allocation12 + $0x1c0] sm:$0xff]
        %v1632 = vld [vmem:[#allocation12 + $0x1c8] sm:$0xff]
        %v1633 = vld [vmem:[#allocation12 + $0x1d0] sm:$0xff]
        %v1634 = vld [vmem:[#allocation12 + $0x1d8] sm:$0xff]
        %v1635 = vld [vmem:[#allocation12 + $0x1e0] sm:$0xff]
        %v1636 = vld [vmem:[#allocation12 + $0x1e8] sm:$0xff]
        %v1637 = vld [vmem:[#allocation12 + $0x1f0] sm:$0xff]
        %v1638 = vld [vmem:[#allocation12 + $0x1f8] sm:$0xff]
        %v1639 = vld [vmem:[#allocation12 + $0x200] sm:$0xff]
        %v1640 = vld [vmem:[#allocation12 + $0x208] sm:$0xff]
        %v1641 = vld [vmem:[#allocation12 + $0x210] sm:$0xff]
        %v1642 = vld [vmem:[#allocation12 + $0x218] sm:$0xff]
        %v1643 = vld [vmem:[#allocation12 + $0x220] sm:$0xff]
        %v1644 = vld [vmem:[#allocation12 + $0x228] sm:$0xff]
        %v1645 = vld [vmem:[#allocation12 + $0x230] sm:$0xff]
        %v1646 = vld [vmem:[#allocation12 + $0x238] sm:$0xff]
        %v1647 = vld [vmem:[#allocation12 + $0x240] sm:$0xff]
        %v1648 = vld [vmem:[#allocation12 + $0x248] sm:$0xff]
        %v1649 = vld [vmem:[#allocation12 + $0x250] sm:$0xff]
        %v1650 = vld [vmem:[#allocation12 + $0x258] sm:$0xff]
        %v1651 = vld [vmem:[#allocation12 + $0x260] sm:$0xff]
        %v1652 = vld [vmem:[#allocation12 + $0x268] sm:$0xff]
        %v1653 = vld [vmem:[#allocation12 + $0x270] sm:$0xff]
        %v1654 = vld [vmem:[#allocation12 + $0x278] sm:$0xff]
        %v1655 = vld [vmem:[#allocation12 + $0x280] sm:$0xff]
        %v1656 = vld [vmem:[#allocation12 + $0x288] sm:$0xff]
        %v1657 = vld [vmem:[#allocation12 + $0x290] sm:$0xff]
        %v1658 = vld [vmem:[#allocation12 + $0x298] sm:$0xff]
        %v1659 = vld [vmem:[#allocation12 + $0x2a0] sm:$0xff]
        %v1660 = vld [vmem:[#allocation12 + $0x2a8] sm:$0xff]
        %v1661 = vld [vmem:[#allocation12 + $0x2b0] sm:$0xff]
        %v1662 = vld [vmem:[#allocation12 + $0x2b8] sm:$0xff]
        %v1663 = vld [vmem:[#allocation12 + $0x2c0] sm:$0xff]
        %v1664 = vld [vmem:[#allocation12 + $0x2c8] sm:$0xff]
        %v1665 = vld [vmem:[#allocation12 + $0x2d0] sm:$0xff]
        %v1666 = vld [vmem:[#allocation12 + $0x2d8] sm:$0xff]
        %v1667 = vld [vmem:[#allocation12 + $0x2e0] sm:$0xff]
        %v1668 = vld [vmem:[#allocation12 + $0x2e8] sm:$0xff]
        %v1669 = vld [vmem:[#allocation12 + $0x2f0] sm:$0xff]
        %v1670 = vld [vmem:[#allocation12 + $0x2f8] sm:$0xff]
        %v1671 = vld [vmem:[#allocation12 + $0x300] sm:$0xff]
        %v1672 = vld [vmem:[#allocation12 + $0x308] sm:$0xff]
        %v1673 = vld [vmem:[#allocation12 + $0x310] sm:$0xff]
        %v1674 = vld [vmem:[#allocation12 + $0x318] sm:$0xff]
        %v1675 = vld [vmem:[#allocation12 + $0x320] sm:$0xff]
        %v1676 = vld [vmem:[#allocation12 + $0x328] sm:$0xff]
        %v1677 = vld [vmem:[#allocation12 + $0x330] sm:$0xff]
        %v1678 = vld [vmem:[#allocation12 + $0x338] sm:$0xff]
        %v1679 = vld [vmem:[#allocation12 + $0x340] sm:$0xff]
        %v1680 = vld [vmem:[#allocation12 + $0x348] sm:$0xff]
        %v1681 = vld [vmem:[#allocation12 + $0x350] sm:$0xff]
        %v1682 = vld [vmem:[#allocation12 + $0x358] sm:$0xff]
        %v1683 = vld [vmem:[#allocation12 + $0x360] sm:$0xff]
        %v1684 = vld [vmem:[#allocation12 + $0x368] sm:$0xff]
        %v1685 = vld [vmem:[#allocation12 + $0x370] sm:$0xff]
        %v1686 = vld [vmem:[#allocation12 + $0x378] sm:$0xff]
        %v1687 = vld [vmem:[#allocation12 + $0x380] sm:$0xff]
        %v1688 = vld [vmem:[#allocation12 + $0x388] sm:$0xff]
        %v1689 = vld [vmem:[#allocation12 + $0x390] sm:$0xff]
        %v1690 = vld [vmem:[#allocation12 + $0x398] sm:$0xff]
        %v1691 = vld [vmem:[#allocation12 + $0x3a0] sm:$0xff]
        %v1692 = vld [vmem:[#allocation12 + $0x3a8] sm:$0xff]
        %v1693 = vld [vmem:[#allocation12 + $0x3b0] sm:$0xff]
        %v1694 = vld [vmem:[#allocation12 + $0x3b8] sm:$0xff]
        %v1695 = vld [vmem:[#allocation12 + $0x3c0] sm:$0xff]
        %v1696 = vld [vmem:[#allocation12 + $0x3c8] sm:$0xff]
        %v1697 = vld [vmem:[#allocation12 + $0x3d0] sm:$0xff]
        %v1698 = vld [vmem:[#allocation12 + $0x3d8] sm:$0xff]
        %v1699 = vld [vmem:[#allocation12 + $0x3e0] sm:$0xff]
        %v1700 = vld [vmem:[#allocation12 + $0x3e8] sm:$0xff]
        %v1701 = vld [vmem:[#allocation12 + $0x3f0] sm:$0xff]
        %v1702 = vld [vmem:[#allocation12 + $0x3f8] sm:$0xff]
        %v1703 = vld [vmem:[#allocation12 + $0x400] sm:$0xff]
        %v1704 = vld [vmem:[#allocation12 + $0x408] sm:$0xff]
        %v1705 = vld [vmem:[#allocation12 + $0x410] sm:$0xff]
        %v1706 = vld [vmem:[#allocation12 + $0x418] sm:$0xff]
        %v1707 = vld [vmem:[#allocation12 + $0x420] sm:$0xff]
        %v1708 = vld [vmem:[#allocation12 + $0x428] sm:$0xff]
        %v1709 = vld [vmem:[#allocation12 + $0x430] sm:$0xff]
        %v1710 = vld [vmem:[#allocation12 + $0x438] sm:$0xff]
        %v1711 = vld [vmem:[#allocation12 + $0x440] sm:$0xff]
        %v1712 = vld [vmem:[#allocation12 + $0x448] sm:$0xff]
        %v1713 = vld [vmem:[#allocation12 + $0x450] sm:$0xff]
        %v1714 = vld [vmem:[#allocation12 + $0x458] sm:$0xff]
        %v1715 = vld [vmem:[#allocation12 + $0x460] sm:$0xff]
        %v1716 = vld [vmem:[#allocation12 + $0x468] sm:$0xff]
        %v1717 = vld [vmem:[#allocation12 + $0x470] sm:$0xff]
        %v1718 = vld [vmem:[#allocation12 + $0x478] sm:$0xff]
        %v1719 = vld [vmem:[#allocation12 + $0x480] sm:$0xff]
        %v1720 = vld [vmem:[#allocation12 + $0x488] sm:$0xff]
        %v1721 = vld [vmem:[#allocation12 + $0x490] sm:$0xff]
        %v1722 = vld [vmem:[#allocation12 + $0x498] sm:$0xff]
        %v1723 = vld [vmem:[#allocation12 + $0x4a0] sm:$0xff]
        %v1724 = vld [vmem:[#allocation12 + $0x4a8] sm:$0xff]
        %v1725 = vld [vmem:[#allocation12 + $0x4b0] sm:$0xff]
        %v1726 = vld [vmem:[#allocation12 + $0x4b8] sm:$0xff]
        %v1727 = vld [vmem:[#allocation12 + $0x4c0] sm:$0xff]
        %v1728 = vld [vmem:[#allocation12 + $0x4c8] sm:$0xff]
        %v1729 = vld [vmem:[#allocation12 + $0x4d0] sm:$0xff]
        %v1730 = vld [vmem:[#allocation12 + $0x4d8] sm:$0xff]
        %v1731 = vld [vmem:[#allocation12 + $0x4e0] sm:$0xff]
        %v1732 = vld [vmem:[#allocation12 + $0x4e8] sm:$0xff]
        %v1733 = vld [vmem:[#allocation12 + $0x4f0] sm:$0xff]
        %v1734 = vld [vmem:[#allocation12 + $0x4f8] sm:$0xff]
        %v1735 = vld [vmem:[#allocation12 + $0x500] sm:$0xff]
        %v1736 = vld [vmem:[#allocation12 + $0x508] sm:$0xff]
        %v1737 = vld [vmem:[#allocation12 + $0x510] sm:$0xff]
        %v1738 = vld [vmem:[#allocation12 + $0x518] sm:$0xff]
        %v1739 = vld [vmem:[#allocation12 + $0x520] sm:$0xff]
        %v1740 = vld [vmem:[#allocation12 + $0x528] sm:$0xff]
        %v1741 = vld [vmem:[#allocation12 + $0x530] sm:$0xff]
        %v1742 = vld [vmem:[#allocation12 + $0x538] sm:$0xff]
        %v1743 = vld [vmem:[#allocation12 + $0x540] sm:$0xff]
        %v1744 = vld [vmem:[#allocation12 + $0x548] sm:$0xff]
        %v1745 = vld [vmem:[#allocation12 + $0x550] sm:$0xff]
        %v1746 = vld [vmem:[#allocation12 + $0x558] sm:$0xff]
        %v1747 = vld [vmem:[#allocation12 + $0x560] sm:$0xff]
        %v1748 = vld [vmem:[#allocation12 + $0x568] sm:$0xff]
        %v1749 = vld [vmem:[#allocation12 + $0x570] sm:$0xff]
        %v1750 = vld [vmem:[#allocation12 + $0x578] sm:$0xff]
        %v1751 = vld [vmem:[#allocation12 + $0x580] sm:$0xff]
        %v1752 = vld [vmem:[#allocation12 + $0x588] sm:$0xff]
        %v1753 = vld [vmem:[#allocation12 + $0x590] sm:$0xff]
        %v1754 = vld [vmem:[#allocation12 + $0x598] sm:$0xff]
        %v1755 = vld [vmem:[#allocation12 + $0x5a0] sm:$0xff]
        %v1756 = vld [vmem:[#allocation12 + $0x5a8] sm:$0xff]
        %v1757 = vld [vmem:[#allocation12 + $0x5b0] sm:$0xff]
        %v1758 = vld [vmem:[#allocation12 + $0x5b8] sm:$0xff]
        %v1759 = vld [vmem:[#allocation12 + $0x5c0] sm:$0xff]
        %v1760 = vld [vmem:[#allocation12 + $0x5c8] sm:$0xff]
        %v1761 = vld [vmem:[#allocation12 + $0x5d0] sm:$0xff]
        %v1762 = vld [vmem:[#allocation12 + $0x5d8] sm:$0xff]
        %v1763 = vld [vmem:[#allocation12 + $0x5e0] sm:$0xff]
        %v1764 = vld [vmem:[#allocation12 + $0x5e8] sm:$0xff]
        %v1765 = vld [vmem:[#allocation12 + $0x5f0] sm:$0xff]
        %v1766 = vld [vmem:[#allocation12 + $0x5f8] sm:$0xff]
        %v1767 = vld [vmem:[#allocation12 + $0x600] sm:$0xff]
        %v1768 = vld [vmem:[#allocation12 + $0x608] sm:$0xff]
        %v1769 = vld [vmem:[#allocation12 + $0x610] sm:$0xff]
        %v1770 = vld [vmem:[#allocation12 + $0x618] sm:$0xff]
        %v1771 = vld [vmem:[#allocation12 + $0x620] sm:$0xff]
        %v1772 = vld [vmem:[#allocation12 + $0x628] sm:$0xff]
        %v1773 = vld [vmem:[#allocation12 + $0x630] sm:$0xff]
        %v1774 = vld [vmem:[#allocation12 + $0x638] sm:$0xff]
        %v1775 = vld [vmem:[#allocation12 + $0x640] sm:$0xff]
        %v1776 = vld [vmem:[#allocation12 + $0x648] sm:$0xff]
        %v1777 = vld [vmem:[#allocation12 + $0x650] sm:$0xff]
        %v1778 = vld [vmem:[#allocation12 + $0x658] sm:$0xff]
        %v1779 = vld [vmem:[#allocation12 + $0x660] sm:$0xff]
        %v1780 = vld [vmem:[#allocation12 + $0x668] sm:$0xff]
        %v1781 = vld [vmem:[#allocation12 + $0x670] sm:$0xff]
        %v1782 = vld [vmem:[#allocation12 + $0x678] sm:$0xff]
        %v1783 = vld [vmem:[#allocation12 + $0x680] sm:$0xff]
        %v1784 = vld [vmem:[#allocation12 + $0x688] sm:$0xff]
        %v1785 = vld [vmem:[#allocation12 + $0x690] sm:$0xff]
        %v1786 = vld [vmem:[#allocation12 + $0x698] sm:$0xff]
        %v1787 = vld [vmem:[#allocation12 + $0x6a0] sm:$0xff]
        %v1788 = vld [vmem:[#allocation12 + $0x6a8] sm:$0xff]
        %v1789 = vld [vmem:[#allocation12 + $0x6b0] sm:$0xff]
        %v1790 = vld [vmem:[#allocation12 + $0x6b8] sm:$0xff]
        %v1791 = vld [vmem:[#allocation12 + $0x6c0] sm:$0xff]
        %v1792 = vld [vmem:[#allocation12 + $0x6c8] sm:$0xff]
        %v1793 = vld [vmem:[#allocation12 + $0x6d0] sm:$0xff]
        %v1794 = vld [vmem:[#allocation12 + $0x6d8] sm:$0xff]
        %v1795 = vld [vmem:[#allocation12 + $0x6e0] sm:$0xff]
        %v1796 = vld [vmem:[#allocation12 + $0x6e8] sm:$0xff]
        %v1797 = vld [vmem:[#allocation12 + $0x6f0] sm:$0xff]
        %v1798 = vld [vmem:[#allocation12 + $0x6f8] sm:$0xff]
        %v1799 = vld [vmem:[#allocation12 + $0x700] sm:$0xff]
        %v1800 = vld [vmem:[#allocation12 + $0x708] sm:$0xff]
        %v1801 = vld [vmem:[#allocation12 + $0x710] sm:$0xff]
        %v1802 = vld [vmem:[#allocation12 + $0x718] sm:$0xff]
        %v1803 = vld [vmem:[#allocation12 + $0x720] sm:$0xff]
        %v1804 = vld [vmem:[#allocation12 + $0x728] sm:$0xff]
        %v1805 = vld [vmem:[#allocation12 + $0x730] sm:$0xff]
        %v1806 = vld [vmem:[#allocation12 + $0x738] sm:$0xff]
        %v1807 = vld [vmem:[#allocation12 + $0x740] sm:$0xff]
        %v1808 = vld [vmem:[#allocation12 + $0x748] sm:$0xff]
        %v1809 = vld [vmem:[#allocation12 + $0x750] sm:$0xff]
        %v1810 = vld [vmem:[#allocation12 + $0x758] sm:$0xff]
        %v1811 = vld [vmem:[#allocation12 + $0x760] sm:$0xff]
        %v1812 = vld [vmem:[#allocation12 + $0x768] sm:$0xff]
        %v1813 = vld [vmem:[#allocation12 + $0x770] sm:$0xff]
        %v1814 = vld [vmem:[#allocation12 + $0x778] sm:$0xff]
        %v1815 = vld [vmem:[#allocation12 + $0x780] sm:$0xff]
        %v1816 = vld [vmem:[#allocation12 + $0x788] sm:$0xff]
        %v1817 = vld [vmem:[#allocation12 + $0x790] sm:$0xff]
        %v1818 = vld [vmem:[#allocation12 + $0x798] sm:$0xff]
        %v1819 = vld [vmem:[#allocation12 + $0x7a0] sm:$0xff]
        %v1820 = vld [vmem:[#allocation12 + $0x7a8] sm:$0xff]
        %v1821 = vld [vmem:[#allocation12 + $0x7b0] sm:$0xff]
        %v1822 = vld [vmem:[#allocation12 + $0x7b8] sm:$0xff]
        %v1823 = vld [vmem:[#allocation12 + $0x7c0] sm:$0xff]
        %v1824 = vld [vmem:[#allocation12 + $0x7c8] sm:$0xff]
        %v1825 = vld [vmem:[#allocation12 + $0x7d0] sm:$0xff]
        %v1826 = vld [vmem:[#allocation12 + $0x7d8] sm:$0xff]
        %v1827 = vld [vmem:[#allocation12 + $0x7e0] sm:$0xff]
        %v1828 = vld [vmem:[#allocation12 + $0x7e8] sm:$0xff]
        %v1829 = vld [vmem:[#allocation12 + $0x7f0] sm:$0xff]
        %v1830 = vld [vmem:[#allocation12 + $0x7f8] sm:$0xff]
        %v1831 = vld [vmem:[#allocation12 + $0x800] sm:$0xff]
        %v1832 = vld [vmem:[#allocation12 + $0x808] sm:$0xff]
        %v1833 = vld [vmem:[#allocation12 + $0x810] sm:$0xff]
        %v1834 = vld [vmem:[#allocation12 + $0x818] sm:$0xff]
        %v1835 = vld [vmem:[#allocation12 + $0x820] sm:$0xff]
        %v1836 = vld [vmem:[#allocation12 + $0x828] sm:$0xff]
        %v1837 = vld [vmem:[#allocation12 + $0x830] sm:$0xff]
        %v1838 = vld [vmem:[#allocation12 + $0x838] sm:$0xff]
        %v1839 = vld [vmem:[#allocation12 + $0x840] sm:$0xff]
        %v1840 = vld [vmem:[#allocation12 + $0x848] sm:$0xff]
        %v1841 = vld [vmem:[#allocation12 + $0x850] sm:$0xff]
        %v1842 = vld [vmem:[#allocation12 + $0x858] sm:$0xff]
        %v1843 = vld [vmem:[#allocation12 + $0x860] sm:$0xff]
        %v1844 = vld [vmem:[#allocation12 + $0x868] sm:$0xff]
        %v1845 = vld [vmem:[#allocation12 + $0x870] sm:$0xff]
        %v1846 = vld [vmem:[#allocation12 + $0x878] sm:$0xff]
        %v1847 = vld [vmem:[#allocation12 + $0x880] sm:$0xff]
        %v1848 = vld [vmem:[#allocation12 + $0x888] sm:$0xff]
        %v1849 = vld [vmem:[#allocation12 + $0x890] sm:$0xff]
        %v1850 = vld [vmem:[#allocation12 + $0x898] sm:$0xff]
        %v1851 = vld [vmem:[#allocation12 + $0x8a0] sm:$0xff]
        %v1852 = vld [vmem:[#allocation12 + $0x8a8] sm:$0xff]
        %v1853 = vld [vmem:[#allocation12 + $0x8b0] sm:$0xff]
        %v1854 = vld [vmem:[#allocation12 + $0x8b8] sm:$0xff]
        %v1855 = vld [vmem:[#allocation12 + $0x8c0] sm:$0xff]
        %v1856 = vld [vmem:[#allocation12 + $0x8c8] sm:$0xff]
        %v1857 = vld [vmem:[#allocation12 + $0x8d0] sm:$0xff]
        %v1858 = vld [vmem:[#allocation12 + $0x8d8] sm:$0xff]
        %v1859 = vld [vmem:[#allocation12 + $0x8e0] sm:$0xff]
        %v1860 = vld [vmem:[#allocation12 + $0x8e8] sm:$0xff]
        %v1861 = vld [vmem:[#allocation12 + $0x8f0] sm:$0xff]
        %v1862 = vld [vmem:[#allocation12 + $0x8f8] sm:$0xff]
        %v1863 = vld [vmem:[#allocation12 + $0x900] sm:$0xff]
        %v1864 = vld [vmem:[#allocation12 + $0x908] sm:$0xff]
        %v1865 = vld [vmem:[#allocation12 + $0x910] sm:$0xff]
        %v1866 = vld [vmem:[#allocation12 + $0x918] sm:$0xff]
        %v1867 = vld [vmem:[#allocation12 + $0x920] sm:$0xff]
        %v1868 = vld [vmem:[#allocation12 + $0x928] sm:$0xff]
        %v1869 = vld [vmem:[#allocation12 + $0x930] sm:$0xff]
        %v1870 = vld [vmem:[#allocation12 + $0x938] sm:$0xff]
        %v1871 = vld [vmem:[#allocation12 + $0x940] sm:$0xff]
        %v1872 = vld [vmem:[#allocation12 + $0x948] sm:$0xff]
        %v1873 = vld [vmem:[#allocation12 + $0x950] sm:$0xff]
        %v1874 = vld [vmem:[#allocation12 + $0x958] sm:$0xff]
        %v1875 = vld [vmem:[#allocation12 + $0x960] sm:$0xff]
        %v1876 = vld [vmem:[#allocation12 + $0x968] sm:$0xff]
        %v1877 = vld [vmem:[#allocation12 + $0x970] sm:$0xff]
        %v1878 = vld [vmem:[#allocation12 + $0x978] sm:$0xff]
        %v1879 = vld [vmem:[#allocation12 + $0x980] sm:$0xff]
        %v1880 = vld [vmem:[#allocation12 + $0x988] sm:$0xff]
        %v1881 = vld [vmem:[#allocation12 + $0x990] sm:$0xff]
        %v1882 = vld [vmem:[#allocation12 + $0x998] sm:$0xff]
        %v1883 = vld [vmem:[#allocation12 + $0x9a0] sm:$0xff]
        %v1884 = vld [vmem:[#allocation12 + $0x9a8] sm:$0xff]
        %v1885 = vld [vmem:[#allocation12 + $0x9b0] sm:$0xff]
        %v1886 = vld [vmem:[#allocation12 + $0x9b8] sm:$0xff]
        %v1887 = vld [vmem:[#allocation12 + $0x9c0] sm:$0xff]
        %v1888 = vld [vmem:[#allocation12 + $0x9c8] sm:$0xff]
        %v1889 = vld [vmem:[#allocation12 + $0x9d0] sm:$0xff]
        %v1890 = vld [vmem:[#allocation12 + $0x9d8] sm:$0xff]
        %v1891 = vld [vmem:[#allocation12 + $0x9e0] sm:$0xff]
        %v1892 = vld [vmem:[#allocation12 + $0x9e8] sm:$0xff]
        %v1893 = vld [vmem:[#allocation12 + $0x9f0] sm:$0xff]
        %v1894 = vld [vmem:[#allocation12 + $0x9f8] sm:$0xff]
        %v1895 = vld [vmem:[#allocation12 + $0xa00] sm:$0xff]
        %v1896 = vld [vmem:[#allocation12 + $0xa08] sm:$0xff]
        %v1897 = vld [vmem:[#allocation12 + $0xa10] sm:$0xff]
        %v1898 = vld [vmem:[#allocation12 + $0xa18] sm:$0xff]
        %v1899 = vld [vmem:[#allocation12 + $0xa20] sm:$0xff]
        %v1900 = vld [vmem:[#allocation12 + $0xa28] sm:$0xff]
        %v1901 = vld [vmem:[#allocation12 + $0xa30] sm:$0xff]
        %v1902 = vld [vmem:[#allocation12 + $0xa38] sm:$0xff]
        %v1903 = vld [vmem:[#allocation12 + $0xa40] sm:$0xff]
        %v1904 = vld [vmem:[#allocation12 + $0xa48] sm:$0xff]
        %v1905 = vld [vmem:[#allocation12 + $0xa50] sm:$0xff]
        %v1906 = vld [vmem:[#allocation12 + $0xa58] sm:$0xff]
        %v1907 = vld [vmem:[#allocation12 + $0xa60] sm:$0xff]
        %v1908 = vld [vmem:[#allocation12 + $0xa68] sm:$0xff]
        %v1909 = vld [vmem:[#allocation12 + $0xa70] sm:$0xff]
        %v1910 = vld [vmem:[#allocation12 + $0xa78] sm:$0xff]
        %v1911 = vld [vmem:[#allocation12 + $0xa80] sm:$0xff]
        %v1912 = vld [vmem:[#allocation12 + $0xa88] sm:$0xff]
        %v1913 = vld [vmem:[#allocation12 + $0xa90] sm:$0xff]
        %v1914 = vld [vmem:[#allocation12 + $0xa98] sm:$0xff]
        %v1915 = vld [vmem:[#allocation12 + $0xaa0] sm:$0xff]
        %v1916 = vld [vmem:[#allocation12 + $0xaa8] sm:$0xff]
        %v1917 = vld [vmem:[#allocation12 + $0xab0] sm:$0xff]
        %v1918 = vld [vmem:[#allocation12 + $0xab8] sm:$0xff]
        %v1919 = vld [vmem:[#allocation12 + $0xac0] sm:$0xff]
        %v1920 = vld [vmem:[#allocation12 + $0xac8] sm:$0xff]
        %v1921 = vld [vmem:[#allocation12 + $0xad0] sm:$0xff]
        %v1922 = vld [vmem:[#allocation12 + $0xad8] sm:$0xff]
        %v1923 = vld [vmem:[#allocation12 + $0xae0] sm:$0xff]
        %v1924 = vld [vmem:[#allocation12 + $0xae8] sm:$0xff]
        %v1925 = vld [vmem:[#allocation12 + $0xaf0] sm:$0xff]
        %v1926 = vld [vmem:[#allocation12 + $0xaf8] sm:$0xff]
        %v1927 = vld [vmem:[#allocation12 + $0xb00] sm:$0xff]
        %v1928 = vld [vmem:[#allocation12 + $0xb08] sm:$0xff]
        %v1929 = vld [vmem:[#allocation12 + $0xb10] sm:$0xff]
        %v1930 = vld [vmem:[#allocation12 + $0xb18] sm:$0xff]
        %v1931 = vld [vmem:[#allocation12 + $0xb20] sm:$0xff]
        %v1932 = vld [vmem:[#allocation12 + $0xb28] sm:$0xff]
        %v1933 = vld [vmem:[#allocation12 + $0xb30] sm:$0xff]
        %v1934 = vld [vmem:[#allocation12 + $0xb38] sm:$0xff]
        %v1935 = vld [vmem:[#allocation12 + $0xb40] sm:$0xff]
        %v1936 = vld [vmem:[#allocation12 + $0xb48] sm:$0xff]
        %v1937 = vld [vmem:[#allocation12 + $0xb50] sm:$0xff]
        %v1938 = vld [vmem:[#allocation12 + $0xb58] sm:$0xff]
        %v1939 = vld [vmem:[#allocation12 + $0xb60] sm:$0xff]
        %v1940 = vld [vmem:[#allocation12 + $0xb68] sm:$0xff]
        %v1941 = vld [vmem:[#allocation12 + $0xb70] sm:$0xff]
        %v1942 = vld [vmem:[#allocation12 + $0xb78] sm:$0xff]
        %v1943 = vld [vmem:[#allocation12 + $0xb80] sm:$0xff]
        %v1944 = vld [vmem:[#allocation12 + $0xb88] sm:$0xff]
        %v1945 = vld [vmem:[#allocation12 + $0xb90] sm:$0xff]
        %v1946 = vld [vmem:[#allocation12 + $0xb98] sm:$0xff]
        %v1947 = vld [vmem:[#allocation12 + $0xba0] sm:$0xff]
        %v1948 = vld [vmem:[#allocation12 + $0xba8] sm:$0xff]
        %v1949 = vld [vmem:[#allocation12 + $0xbb0] sm:$0xff]
        %v1950 = vld [vmem:[#allocation12 + $0xbb8] sm:$0xff]
        %v1951 = vld [vmem:[#allocation12 + $0xbc0] sm:$0xff]
        %v1952 = vld [vmem:[#allocation12 + $0xbc8] sm:$0xff]
        %v1953 = vld [vmem:[#allocation12 + $0xbd0] sm:$0xff]
        %v1954 = vld [vmem:[#allocation12 + $0xbd8] sm:$0xff]
        %v1955 = vld [vmem:[#allocation12 + $0xbe0] sm:$0xff]
        %v1956 = vld [vmem:[#allocation12 + $0xbe8] sm:$0xff]
        %v1957 = vld [vmem:[#allocation12 + $0xbf0] sm:$0xff]
        %v1958 = vld [vmem:[#allocation12 + $0xbf8] sm:$0xff]
        %v1959 = vld [vmem:[#allocation12 + $0xc00] sm:$0xff]
        %v1960 = vld [vmem:[#allocation12 + $0xc08] sm:$0xff]
        %v1961 = vld [vmem:[#allocation12 + $0xc10] sm:$0xff]
        %v1962 = vld [vmem:[#allocation12 + $0xc18] sm:$0xff]
        %v1963 = vld [vmem:[#allocation12 + $0xc20] sm:$0xff]
        %v1964 = vld [vmem:[#allocation12 + $0xc28] sm:$0xff]
        %v1965 = vld [vmem:[#allocation12 + $0xc30] sm:$0xff]
        %v1966 = vld [vmem:[#allocation12 + $0xc38] sm:$0xff]
        %v1967 = vld [vmem:[#allocation12 + $0xc40] sm:$0xff]
        %v1968 = vld [vmem:[#allocation12 + $0xc48] sm:$0xff]
        %v1969 = vld [vmem:[#allocation12 + $0xc50] sm:$0xff]
        %v1970 = vld [vmem:[#allocation12 + $0xc58] sm:$0xff]
        %v1971 = vld [vmem:[#allocation12 + $0xc60] sm:$0xff]
        %v1972 = vld [vmem:[#allocation12 + $0xc68] sm:$0xff]
        %v1973 = vld [vmem:[#allocation12 + $0xc70] sm:$0xff]
        %v1974 = vld [vmem:[#allocation12 + $0xc78] sm:$0xff]
        %v1975 = vld [vmem:[#allocation12 + $0xc80] sm:$0xff]
        %v1976 = vld [vmem:[#allocation12 + $0xc88] sm:$0xff]
        %v1977 = vld [vmem:[#allocation12 + $0xc90] sm:$0xff]
        %v1978 = vld [vmem:[#allocation12 + $0xc98] sm:$0xff]
        %v1979 = vld [vmem:[#allocation12 + $0xca0] sm:$0xff]
        %v1980 = vld [vmem:[#allocation12 + $0xca8] sm:$0xff]
        %v1981 = vld [vmem:[#allocation12 + $0xcb0] sm:$0xff]
        %v1982 = vld [vmem:[#allocation12 + $0xcb8] sm:$0xff]
        %v1983 = vld [vmem:[#allocation12 + $0xcc0] sm:$0xff]
        %v1984 = vld [vmem:[#allocation12 + $0xcc8] sm:$0xff]
        %v1985 = vld [vmem:[#allocation12 + $0xcd0] sm:$0xff]
        %v1986 = vld [vmem:[#allocation12 + $0xcd8] sm:$0xff]
        %v1987 = vld [vmem:[#allocation12 + $0xce0] sm:$0xff]
        %v1988 = vld [vmem:[#allocation12 + $0xce8] sm:$0xff]
        %v1989 = vld [vmem:[#allocation12 + $0xcf0] sm:$0xff]
        %v1990 = vld [vmem:[#allocation12 + $0xcf8] sm:$0xff]
        %v1991 = vld [vmem:[#allocation12 + $0xd00] sm:$0xff]
        %v1992 = vld [vmem:[#allocation12 + $0xd08] sm:$0xff]
        %v1993 = vld [vmem:[#allocation12 + $0xd10] sm:$0xff]
        %v1994 = vld [vmem:[#allocation12 + $0xd18] sm:$0xff]
        %v1995 = vld [vmem:[#allocation12 + $0xd20] sm:$0xff]
        %v1996 = vld [vmem:[#allocation12 + $0xd28] sm:$0xff]
        %v1997 = vld [vmem:[#allocation12 + $0xd30] sm:$0xff]
        %v1998 = vld [vmem:[#allocation12 + $0xd38] sm:$0xff]
        %v1999 = vld [vmem:[#allocation12 + $0xd40] sm:$0xff]
        %v2000 = vld [vmem:[#allocation12 + $0xd48] sm:$0xff]
        %v2001 = vld [vmem:[#allocation12 + $0xd50] sm:$0xff]
        %v2002 = vld [vmem:[#allocation12 + $0xd58] sm:$0xff]
        %v2003 = vld [vmem:[#allocation12 + $0xd60] sm:$0xff]
        %v2004 = vld [vmem:[#allocation12 + $0xd68] sm:$0xff]
        %v2005 = vld [vmem:[#allocation12 + $0xd70] sm:$0xff]
        %v2006 = vld [vmem:[#allocation12 + $0xd78] sm:$0xff]
        %v2007 = vld [vmem:[#allocation12 + $0xd80] sm:$0xff]
        %v2008 = vld [vmem:[#allocation12 + $0xd88] sm:$0xff]
        %v2009 = vld [vmem:[#allocation12 + $0xd90] sm:$0xff]
        %v2010 = vld [vmem:[#allocation12 + $0xd98] sm:$0xff]
        %v2011 = vld [vmem:[#allocation12 + $0xda0] sm:$0xff]
        %v2012 = vld [vmem:[#allocation12 + $0xda8] sm:$0xff]
        %v2013 = vld [vmem:[#allocation12 + $0xdb0] sm:$0xff]
        %v2014 = vld [vmem:[#allocation12 + $0xdb8] sm:$0xff]
        %v2015 = vld [vmem:[#allocation12 + $0xdc0] sm:$0xff]
        %v2016 = vld [vmem:[#allocation12 + $0xdc8] sm:$0xff]
        %v2017 = vld [vmem:[#allocation12 + $0xdd0] sm:$0xff]
        %v2018 = vld [vmem:[#allocation12 + $0xdd8] sm:$0xff]
        %v2019 = vld [vmem:[#allocation12 + $0xde0] sm:$0xff]
        %v2020 = vld [vmem:[#allocation12 + $0xde8] sm:$0xff]
        %v2021 = vld [vmem:[#allocation12 + $0xdf0] sm:$0xff]
        %v2022 = vld [vmem:[#allocation12 + $0xdf8] sm:$0xff]
        %v2023 = vld [vmem:[#allocation12 + $0xe00] sm:$0xff]
        %v2024 = vld [vmem:[#allocation12 + $0xe08] sm:$0xff]
        %v2025 = vld [vmem:[#allocation12 + $0xe10] sm:$0xff]
        %v2026 = vld [vmem:[#allocation12 + $0xe18] sm:$0xff]
        %v2027 = vld [vmem:[#allocation12 + $0xe20] sm:$0xff]
        %v2028 = vld [vmem:[#allocation12 + $0xe28] sm:$0xff]
        %v2029 = vld [vmem:[#allocation12 + $0xe30] sm:$0xff]
        %v2030 = vld [vmem:[#allocation12 + $0xe38] sm:$0xff]
        %v2031 = vld [vmem:[#allocation12 + $0xe40] sm:$0xff]
        %v2032 = vld [vmem:[#allocation12 + $0xe48] sm:$0xff]
        %v2033 = vld [vmem:[#allocation12 + $0xe50] sm:$0xff]
        %v2034 = vld [vmem:[#allocation12 + $0xe58] sm:$0xff]
        %v2035 = vld [vmem:[#allocation12 + $0xe60] sm:$0xff]
        %v2036 = vld [vmem:[#allocation12 + $0xe68] sm:$0xff]
        %v2037 = vld [vmem:[#allocation12 + $0xe70] sm:$0xff]
        %v2038 = vld [vmem:[#allocation12 + $0xe78] sm:$0xff]
        %v2039 = vld [vmem:[#allocation12 + $0xe80] sm:$0xff]
        %v2040 = vld [vmem:[#allocation12 + $0xe88] sm:$0xff]
        %v2041 = vld [vmem:[#allocation12 + $0xe90] sm:$0xff]
        %v2042 = vld [vmem:[#allocation12 + $0xe98] sm:$0xff]
        %v2043 = vld [vmem:[#allocation12 + $0xea0] sm:$0xff]
        %v2044 = vld [vmem:[#allocation12 + $0xea8] sm:$0xff]
        %v2045 = vld [vmem:[#allocation12 + $0xeb0] sm:$0xff]
        %v2046 = vld [vmem:[#allocation12 + $0xeb8] sm:$0xff]
        %v2047 = vld [vmem:[#allocation12 + $0xec0] sm:$0xff]
        %v2048 = vld [vmem:[#allocation12 + $0xec8] sm:$0xff]
        %v2049 = vld [vmem:[#allocation12 + $0xed0] sm:$0xff]
        %v2050 = vld [vmem:[#allocation12 + $0xed8] sm:$0xff]
        %v2051 = vld [vmem:[#allocation12 + $0xee0] sm:$0xff]
        %v2052 = vld [vmem:[#allocation12 + $0xee8] sm:$0xff]
        %v2053 = vld [vmem:[#allocation12 + $0xef0] sm:$0xff]
        %v2054 = vld [vmem:[#allocation12 + $0xef8] sm:$0xff]
        %v2055 = vld [vmem:[#allocation12 + $0xf00] sm:$0xff]
        %v2056 = vld [vmem:[#allocation12 + $0xf08] sm:$0xff]
        %v2057 = vld [vmem:[#allocation12 + $0xf10] sm:$0xff]
        %v2058 = vld [vmem:[#allocation12 + $0xf18] sm:$0xff]
        %v2059 = vld [vmem:[#allocation12 + $0xf20] sm:$0xff]
        %v2060 = vld [vmem:[#allocation12 + $0xf28] sm:$0xff]
        %v2061 = vld [vmem:[#allocation12 + $0xf30] sm:$0xff]
        %v2062 = vld [vmem:[#allocation12 + $0xf38] sm:$0xff]
        %v2063 = vld [vmem:[#allocation12 + $0xf40] sm:$0xff]
        %v2064 = vld [vmem:[#allocation12 + $0xf48] sm:$0xff]
        %v2065 = vld [vmem:[#allocation12 + $0xf50] sm:$0xff]
        %v2066 = vld [vmem:[#allocation12 + $0xf58] sm:$0xff]
        %v2067 = vld [vmem:[#allocation12 + $0xf60] sm:$0xff]
        %v2068 = vld [vmem:[#allocation12 + $0xf68] sm:$0xff]
        %v2069 = vld [vmem:[#allocation12 + $0xf70] sm:$0xff]
        %v2070 = vld [vmem:[#allocation12 + $0xf78] sm:$0xff]
        %v2071 = vld [vmem:[#allocation12 + $0xf80] sm:$0xff]
        %v2072 = vld [vmem:[#allocation12 + $0xf88] sm:$0xff]
        %v2073 = vld [vmem:[#allocation12 + $0xf90] sm:$0xff]
        %v2074 = vld [vmem:[#allocation12 + $0xf98] sm:$0xff]
        %v2075 = vld [vmem:[#allocation12 + $0xfa0] sm:$0xff]
        %v2076 = vld [vmem:[#allocation12 + $0xfa8] sm:$0xff]
        %v2077 = vld [vmem:[#allocation12 + $0xfb0] sm:$0xff]
        %v2078 = vld [vmem:[#allocation12 + $0xfb8] sm:$0xff]
        %v2079 = vld [vmem:[#allocation12 + $0xfc0] sm:$0xff]
        %v2080 = vld [vmem:[#allocation12 + $0xfc8] sm:$0xff]
        %v2081 = vld [vmem:[#allocation12 + $0xfd0] sm:$0xff]
        %v2082 = vld [vmem:[#allocation12 + $0xfd8] sm:$0xff]
        %v2083 = vld [vmem:[#allocation12 + $0xfe0] sm:$0xff]
        %v2084 = vld [vmem:[#allocation12 + $0xfe8] sm:$0xff]
        %v2085 = vld [vmem:[#allocation12 + $0xff0] sm:$0xff]
        %v2086 = vld [vmem:[#allocation12 + $0xff8] sm:$0xff]
        %v2087 = vld [vmem:[#allocation12 + $0x1000] sm:$0xff]
        %v2088 = vld [vmem:[#allocation12 + $0x1008] sm:$0xff]
        %v2089 = vld [vmem:[#allocation12 + $0x1010] sm:$0xff]
        %v2090 = vld [vmem:[#allocation12 + $0x1018] sm:$0xff]
        %v2091 = vld [vmem:[#allocation12 + $0x1020] sm:$0xff]
        %v2092 = vld [vmem:[#allocation12 + $0x1028] sm:$0xff]
        %v2093 = vld [vmem:[#allocation12 + $0x1030] sm:$0xff]
        %v2094 = vld [vmem:[#allocation12 + $0x1038] sm:$0xff]
        %v2095 = vld [vmem:[#allocation12 + $0x1040] sm:$0xff]
        %v2096 = vld [vmem:[#allocation12 + $0x1048] sm:$0xff]
        %v2097 = vld [vmem:[#allocation12 + $0x1050] sm:$0xff]
        %v2098 = vld [vmem:[#allocation12 + $0x1058] sm:$0xff]
        %v2099 = vld [vmem:[#allocation12 + $0x1060] sm:$0xff]
        %v2100 = vld [vmem:[#allocation12 + $0x1068] sm:$0xff]
        %v2101 = vld [vmem:[#allocation12 + $0x1070] sm:$0xff]
        %v2102 = vld [vmem:[#allocation12 + $0x1078] sm:$0xff]
        %v2103 = vld [vmem:[#allocation12 + $0x1080] sm:$0xff]
        %v2104 = vld [vmem:[#allocation12 + $0x1088] sm:$0xff]
        %v2105 = vld [vmem:[#allocation12 + $0x1090] sm:$0xff]
        %v2106 = vld [vmem:[#allocation12 + $0x1098] sm:$0xff]
        %v2107 = vld [vmem:[#allocation12 + $0x10a0] sm:$0xff]
        %v2108 = vld [vmem:[#allocation12 + $0x10a8] sm:$0xff]
        %v2109 = vld [vmem:[#allocation12 + $0x10b0] sm:$0xff]
        %v2110 = vld [vmem:[#allocation12 + $0x10b8] sm:$0xff]
        %v2111 = vld [vmem:[#allocation12 + $0x10c0] sm:$0xff]
        %v2112 = vld [vmem:[#allocation12 + $0x10c8] sm:$0xff]
        %v2113 = vld [vmem:[#allocation12 + $0x10d0] sm:$0xff]
        %v2114 = vld [vmem:[#allocation12 + $0x10d8] sm:$0xff]
        %v2115 = vld [vmem:[#allocation12 + $0x10e0] sm:$0xff]
        %v2116 = vld [vmem:[#allocation12 + $0x10e8] sm:$0xff]
        %v2117 = vld [vmem:[#allocation12 + $0x10f0] sm:$0xff]
        %v2118 = vld [vmem:[#allocation12 + $0x10f8] sm:$0xff]
        %v2119 = vld [vmem:[#allocation12 + $0x1100] sm:$0xff]
        %v2120 = vld [vmem:[#allocation12 + $0x1108] sm:$0xff]
        %v2121 = vld [vmem:[#allocation12 + $0x1110] sm:$0xff]
        %v2122 = vld [vmem:[#allocation12 + $0x1118] sm:$0xff]
        %v2123 = vld [vmem:[#allocation12 + $0x1120] sm:$0xff]
        %v2124 = vld [vmem:[#allocation12 + $0x1128] sm:$0xff]
        %v2125 = vld [vmem:[#allocation12 + $0x1130] sm:$0xff]
        %v2126 = vld [vmem:[#allocation12 + $0x1138] sm:$0xff]
        %v2127 = vld [vmem:[#allocation12 + $0x1140] sm:$0xff]
        %v2128 = vld [vmem:[#allocation12 + $0x1148] sm:$0xff]
        %v2129 = vld [vmem:[#allocation12 + $0x1150] sm:$0xff]
        %v2130 = vld [vmem:[#allocation12 + $0x1158] sm:$0xff]
        %v2131 = vld [vmem:[#allocation12 + $0x1160] sm:$0xff]
        %v2132 = vld [vmem:[#allocation12 + $0x1168] sm:$0xff]
        %v2133 = vld [vmem:[#allocation12 + $0x1170] sm:$0xff]
        %v2134 = vld [vmem:[#allocation12 + $0x1178] sm:$0xff]
        %v2135 = vld [vmem:[#allocation12 + $0x1180] sm:$0xff]
        %v2136 = vld [vmem:[#allocation12 + $0x1188] sm:$0xff]
        %v2137 = vld [vmem:[#allocation12 + $0x1190] sm:$0xff]
        %v2138 = vld [vmem:[#allocation12 + $0x1198] sm:$0xff]
        %v2139 = vld [vmem:[#allocation12 + $0x11a0] sm:$0xff]
        %v2140 = vld [vmem:[#allocation12 + $0x11a8] sm:$0xff]
        %v2141 = vld [vmem:[#allocation12 + $0x11b0] sm:$0xff]
        %v2142 = vld [vmem:[#allocation12 + $0x11b8] sm:$0xff]
        %v2143 = vld [vmem:[#allocation12 + $0x11c0] sm:$0xff]
        %v2144 = vld [vmem:[#allocation12 + $0x11c8] sm:$0xff]
        %v2145 = vld [vmem:[#allocation12 + $0x11d0] sm:$0xff]
        %v2146 = vld [vmem:[#allocation12 + $0x11d8] sm:$0xff]
        %v2147 = vld [vmem:[#allocation12 + $0x11e0] sm:$0xff]
        %v2148 = vld [vmem:[#allocation12 + $0x11e8] sm:$0xff]
        %v2149 = vld [vmem:[#allocation12 + $0x11f0] sm:$0xff]
        %v2150 = vld [vmem:[#allocation12 + $0x11f8] sm:$0xff]
        %v2151 = vld [vmem:[#allocation12 + $0x1200] sm:$0xff]
        %v2152 = vld [vmem:[#allocation12 + $0x1208] sm:$0xff]
        %v2153 = vld [vmem:[#allocation12 + $0x1210] sm:$0xff]
        %v2154 = vld [vmem:[#allocation12 + $0x1218] sm:$0xff]
        %v2155 = vld [vmem:[#allocation12 + $0x1220] sm:$0xff]
        %v2156 = vld [vmem:[#allocation12 + $0x1228] sm:$0xff]
        %v2157 = vld [vmem:[#allocation12 + $0x1230] sm:$0xff]
        %v2158 = vld [vmem:[#allocation12 + $0x1238] sm:$0xff]
        %v2159 = vld [vmem:[#allocation12 + $0x1240] sm:$0xff]
        %v2160 = vld [vmem:[#allocation12 + $0x1248] sm:$0xff]
        %v2161 = vld [vmem:[#allocation12 + $0x1250] sm:$0xff]
        %v2162 = vld [vmem:[#allocation12 + $0x1258] sm:$0xff]
        %v2163 = vld [vmem:[#allocation12 + $0x1260] sm:$0xff]
        %v2164 = vld [vmem:[#allocation12 + $0x1268] sm:$0xff]
        %v2165 = vld [vmem:[#allocation12 + $0x1270] sm:$0xff]
        %v2166 = vld [vmem:[#allocation12 + $0x1278] sm:$0xff]
        %v2167 = vld [vmem:[#allocation12 + $0x1280] sm:$0xff]
        %v2168 = vld [vmem:[#allocation12 + $0x1288] sm:$0xff]
        %v2169 = vld [vmem:[#allocation12 + $0x1290] sm:$0xff]
        %v2170 = vld [vmem:[#allocation12 + $0x1298] sm:$0xff]
        %v2171 = vld [vmem:[#allocation12 + $0x12a0] sm:$0xff]
        %v2172 = vld [vmem:[#allocation12 + $0x12a8] sm:$0xff]
        %v2173 = vld [vmem:[#allocation12 + $0x12b0] sm:$0xff]
        %v2174 = vld [vmem:[#allocation12 + $0x12b8] sm:$0xff]
        %v2175 = vld [vmem:[#allocation12 + $0x12c0] sm:$0xff]
        %v2176 = vld [vmem:[#allocation12 + $0x12c8] sm:$0xff]
        %v2177 = vld [vmem:[#allocation12 + $0x12d0] sm:$0xff]
        %v2178 = vld [vmem:[#allocation12 + $0x12d8] sm:$0xff]
        %v2179 = vld [vmem:[#allocation12 + $0x12e0] sm:$0xff]
        %v2180 = vld [vmem:[#allocation12 + $0x12e8] sm:$0xff]
        %v2181 = vld [vmem:[#allocation12 + $0x12f0] sm:$0xff]
        %v2182 = vld [vmem:[#allocation12 + $0x12f8] sm:$0xff]
        %v2183 = vld [vmem:[#allocation12 + $0x1300] sm:$0xff]
        %v2184 = vld [vmem:[#allocation12 + $0x1308] sm:$0xff]
        %v2185 = vld [vmem:[#allocation12 + $0x1310] sm:$0xff]
        %v2186 = vld [vmem:[#allocation12 + $0x1318] sm:$0xff]
        %v2187 = vld [vmem:[#allocation12 + $0x1320] sm:$0xff]
        %v2188 = vld [vmem:[#allocation12 + $0x1328] sm:$0xff]
        %v2189 = vld [vmem:[#allocation12 + $0x1330] sm:$0xff]
        %v2190 = vld [vmem:[#allocation12 + $0x1338] sm:$0xff]
        %v2191 = vld [vmem:[#allocation12 + $0x1340] sm:$0xff]
        %v2192 = vld [vmem:[#allocation12 + $0x1348] sm:$0xff]
        %v2193 = vld [vmem:[#allocation12 + $0x1350] sm:$0xff]
        %v2194 = vld [vmem:[#allocation12 + $0x1358] sm:$0xff]
        %v2195 = vld [vmem:[#allocation12 + $0x1360] sm:$0xff]
        %v2196 = vld [vmem:[#allocation12 + $0x1368] sm:$0xff]
        %v2197 = vld [vmem:[#allocation12 + $0x1370] sm:$0xff]
        %v2198 = vld [vmem:[#allocation12 + $0x1378] sm:$0xff]
        %v2199 = vld [vmem:[#allocation12 + $0x1380] sm:$0xff]
        %v2200 = vld [vmem:[#allocation12 + $0x1388] sm:$0xff]
        %v2201 = vld [vmem:[#allocation12 + $0x1390] sm:$0xff]
        %v2202 = vld [vmem:[#allocation12 + $0x1398] sm:$0xff]
        %v2203 = vld [vmem:[#allocation12 + $0x13a0] sm:$0xff]
        %v2204 = vld [vmem:[#allocation12 + $0x13a8] sm:$0xff]
        %v2205 = vld [vmem:[#allocation12 + $0x13b0] sm:$0xff]
        %v2206 = vld [vmem:[#allocation12 + $0x13b8] sm:$0xff]
        %v2207 = vld [vmem:[#allocation12 + $0x13c0] sm:$0xff]
        %v2208 = vld [vmem:[#allocation12 + $0x13c8] sm:$0xff]
        %v2209 = vld [vmem:[#allocation12 + $0x13d0] sm:$0xff]
        %v2210 = vld [vmem:[#allocation12 + $0x13d8] sm:$0xff]
        %v2211 = vld [vmem:[#allocation12 + $0x13e0] sm:$0xff]
        %v2212 = vld [vmem:[#allocation12 + $0x13e8] sm:$0xff]
        %v2213 = vld [vmem:[#allocation12 + $0x13f0] sm:$0xff]
        %v2214 = vld [vmem:[#allocation12 + $0x13f8] sm:$0xff]
        %v2215 = vld [vmem:[#allocation12 + $0x1400] sm:$0xff]
        %v2216 = vld [vmem:[#allocation12 + $0x1408] sm:$0xff]
        %v2217 = vld [vmem:[#allocation12 + $0x1410] sm:$0xff]
        %v2218 = vld [vmem:[#allocation12 + $0x1418] sm:$0xff]
        %v2219 = vld [vmem:[#allocation12 + $0x1420] sm:$0xff]
        %v2220 = vld [vmem:[#allocation12 + $0x1428] sm:$0xff]
        %v2221 = vld [vmem:[#allocation12 + $0x1430] sm:$0xff]
        %v2222 = vld [vmem:[#allocation12 + $0x1438] sm:$0xff]
        %v2223 = vld [vmem:[#allocation12 + $0x1440] sm:$0xff]
        %v2224 = vld [vmem:[#allocation12 + $0x1448] sm:$0xff]
        %v2225 = vld [vmem:[#allocation12 + $0x1450] sm:$0xff]
        %v2226 = vld [vmem:[#allocation12 + $0x1458] sm:$0xff]
        %v2227 = vld [vmem:[#allocation12 + $0x1460] sm:$0xff]
        %v2228 = vld [vmem:[#allocation12 + $0x1468] sm:$0xff]
        %v2229 = vld [vmem:[#allocation12 + $0x1470] sm:$0xff]
        %v2230 = vld [vmem:[#allocation12 + $0x1478] sm:$0xff]
        %v2231 = vld [vmem:[#allocation12 + $0x1480] sm:$0xff]
        %v2232 = vld [vmem:[#allocation12 + $0x1488] sm:$0xff]
        %v2233 = vld [vmem:[#allocation12 + $0x1490] sm:$0xff]
        %v2234 = vld [vmem:[#allocation12 + $0x1498] sm:$0xff]
        %v2235 = vld [vmem:[#allocation12 + $0x14a0] sm:$0xff]
        %v2236 = vld [vmem:[#allocation12 + $0x14a8] sm:$0xff]
        %v2237 = vld [vmem:[#allocation12 + $0x14b0] sm:$0xff]
        %v2238 = vld [vmem:[#allocation12 + $0x14b8] sm:$0xff]
        %v2239 = vld [vmem:[#allocation12 + $0x14c0] sm:$0xff]
        %v2240 = vld [vmem:[#allocation12 + $0x14c8] sm:$0xff]
        %v2241 = vld [vmem:[#allocation12 + $0x14d0] sm:$0xff]
        %v2242 = vld [vmem:[#allocation12 + $0x14d8] sm:$0xff]
        %v2243 = vld [vmem:[#allocation12 + $0x14e0] sm:$0xff]
        %v2244 = vld [vmem:[#allocation12 + $0x14e8] sm:$0xff]
        %v2245 = vld [vmem:[#allocation12 + $0x14f0] sm:$0xff]
        %v2246 = vld [vmem:[#allocation12 + $0x14f8] sm:$0xff]
        %v2247 = vld [vmem:[#allocation12 + $0x1500] sm:$0xff]
        %v2248 = vld [vmem:[#allocation12 + $0x1508] sm:$0xff]
        %v2249 = vld [vmem:[#allocation12 + $0x1510] sm:$0xff]
        %v2250 = vld [vmem:[#allocation12 + $0x1518] sm:$0xff]
        %v2251 = vld [vmem:[#allocation12 + $0x1520] sm:$0xff]
        %v2252 = vld [vmem:[#allocation12 + $0x1528] sm:$0xff]
        %v2253 = vld [vmem:[#allocation12 + $0x1530] sm:$0xff]
        %v2254 = vld [vmem:[#allocation12 + $0x1538] sm:$0xff]
        %v2255 = vld [vmem:[#allocation12 + $0x1540] sm:$0xff]
        %v2256 = vld [vmem:[#allocation12 + $0x1548] sm:$0xff]
        %v2257 = vld [vmem:[#allocation12 + $0x1550] sm:$0xff]
        %v2258 = vld [vmem:[#allocation12 + $0x1558] sm:$0xff]
        %v2259 = vld [vmem:[#allocation12 + $0x1560] sm:$0xff]
        %v2260 = vld [vmem:[#allocation12 + $0x1568] sm:$0xff]
        %v2261 = vld [vmem:[#allocation12 + $0x1570] sm:$0xff]
        %v2262 = vld [vmem:[#allocation12 + $0x1578] sm:$0xff]
        %v2263 = vld [vmem:[#allocation12 + $0x1580] sm:$0xff]
        %v2264 = vld [vmem:[#allocation12 + $0x1588] sm:$0xff]
        %v2265 = vld [vmem:[#allocation12 + $0x1590] sm:$0xff]
        %v2266 = vld [vmem:[#allocation12 + $0x1598] sm:$0xff]
        %v2267 = vld [vmem:[#allocation12 + $0x15a0] sm:$0xff]
        %v2268 = vld [vmem:[#allocation12 + $0x15a8] sm:$0xff]
        %v2269 = vld [vmem:[#allocation12 + $0x15b0] sm:$0xff]
        %v2270 = vld [vmem:[#allocation12 + $0x15b8] sm:$0xff]
        %v2271 = vld [vmem:[#allocation12 + $0x15c0] sm:$0xff]
        %v2272 = vld [vmem:[#allocation12 + $0x15c8] sm:$0xff]
        %v2273 = vld [vmem:[#allocation12 + $0x15d0] sm:$0xff]
        %v2274 = vld [vmem:[#allocation12 + $0x15d8] sm:$0xff]
        %v2275 = vld [vmem:[#allocation12 + $0x15e0] sm:$0xff]
        %v2276 = vld [vmem:[#allocation12 + $0x15e8] sm:$0xff]
        %v2277 = vld [vmem:[#allocation12 + $0x15f0] sm:$0xff]
        %v2278 = vld [vmem:[#allocation12 + $0x15f8] sm:$0xff]
        %v2279 = vld [vmem:[#allocation12 + $0x1600] sm:$0xff]
        %v2280 = vld [vmem:[#allocation12 + $0x1608] sm:$0xff]
        %v2281 = vld [vmem:[#allocation12 + $0x1610] sm:$0xff]
        %v2282 = vld [vmem:[#allocation12 + $0x1618] sm:$0xff]
        %v2283 = vld [vmem:[#allocation12 + $0x1620] sm:$0xff]
        %v2284 = vld [vmem:[#allocation12 + $0x1628] sm:$0xff]
        %v2285 = vld [vmem:[#allocation12 + $0x1630] sm:$0xff]
        %v2286 = vld [vmem:[#allocation12 + $0x1638] sm:$0xff]
        %v2287 = vld [vmem:[#allocation12 + $0x1640] sm:$0xff]
        %v2288 = vld [vmem:[#allocation12 + $0x1648] sm:$0xff]
        %v2289 = vld [vmem:[#allocation12 + $0x1650] sm:$0xff]
        %v2290 = vld [vmem:[#allocation12 + $0x1658] sm:$0xff]
        %v2291 = vld [vmem:[#allocation12 + $0x1660] sm:$0xff]
        %v2292 = vld [vmem:[#allocation12 + $0x1668] sm:$0xff]
        %v2293 = vld [vmem:[#allocation12 + $0x1670] sm:$0xff]
        %v2294 = vld [vmem:[#allocation12 + $0x1678] sm:$0xff]
        %v2295 = vld [vmem:[#allocation12 + $0x1680] sm:$0xff]
        %v2296 = vld [vmem:[#allocation12 + $0x1688] sm:$0xff]
        %v2297 = vld [vmem:[#allocation12 + $0x1690] sm:$0xff]
        %v2298 = vld [vmem:[#allocation12 + $0x1698] sm:$0xff]
        %v2299 = vld [vmem:[#allocation12 + $0x16a0] sm:$0xff]
        %v2300 = vld [vmem:[#allocation12 + $0x16a8] sm:$0xff]
        %v2301 = vld [vmem:[#allocation12 + $0x16b0] sm:$0xff]
        %v2302 = vld [vmem:[#allocation12 + $0x16b8] sm:$0xff]
        %v2303 = vld [vmem:[#allocation12 + $0x16c0] sm:$0xff]
        %v2304 = vld [vmem:[#allocation12 + $0x16c8] sm:$0xff]
        %v2305 = vld [vmem:[#allocation12 + $0x16d0] sm:$0xff]
        %v2306 = vld [vmem:[#allocation12 + $0x16d8] sm:$0xff]
        %v2307 = vld [vmem:[#allocation12 + $0x16e0] sm:$0xff]
        %v2308 = vld [vmem:[#allocation12 + $0x16e8] sm:$0xff]
        %v2309 = vld [vmem:[#allocation12 + $0x16f0] sm:$0xff]
        %v2310 = vld [vmem:[#allocation12 + $0x16f8] sm:$0xff]
        %v2311 = vld [vmem:[#allocation12 + $0x1700] sm:$0xff]
        %v2312 = vld [vmem:[#allocation12 + $0x1708] sm:$0xff]
        %v2313 = vld [vmem:[#allocation12 + $0x1710] sm:$0xff]
        %v2314 = vld [vmem:[#allocation12 + $0x1718] sm:$0xff]
        %v2315 = vld [vmem:[#allocation12 + $0x1720] sm:$0xff]
        %v2316 = vld [vmem:[#allocation12 + $0x1728] sm:$0xff]
        %v2317 = vld [vmem:[#allocation12 + $0x1730] sm:$0xff]
        %v2318 = vld [vmem:[#allocation12 + $0x1738] sm:$0xff]
        %v2319 = vld [vmem:[#allocation12 + $0x1740] sm:$0xff]
        %v2320 = vld [vmem:[#allocation12 + $0x1748] sm:$0xff]
        %v2321 = vld [vmem:[#allocation12 + $0x1750] sm:$0xff]
        %v2322 = vld [vmem:[#allocation12 + $0x1758] sm:$0xff]
        %v2323 = vld [vmem:[#allocation12 + $0x1760] sm:$0xff]
        %v2324 = vld [vmem:[#allocation12 + $0x1768] sm:$0xff]
        %v2325 = vld [vmem:[#allocation12 + $0x1770] sm:$0xff]
        %v2326 = vld [vmem:[#allocation12 + $0x1778] sm:$0xff]
        %v2327 = vld [vmem:[#allocation12 + $0x1780] sm:$0xff]
        %v2328 = vld [vmem:[#allocation12 + $0x1788] sm:$0xff]
        %v2329 = vld [vmem:[#allocation12 + $0x1790] sm:$0xff]
        %v2330 = vld [vmem:[#allocation12 + $0x1798] sm:$0xff]
        %v2331 = vld [vmem:[#allocation12 + $0x17a0] sm:$0xff]
        %v2332 = vld [vmem:[#allocation12 + $0x17a8] sm:$0xff]
        %v2333 = vld [vmem:[#allocation12 + $0x17b0] sm:$0xff]
        %v2334 = vld [vmem:[#allocation12 + $0x17b8] sm:$0xff]
        %v2335 = vld [vmem:[#allocation12 + $0x17c0] sm:$0xff]
        %v2336 = vld [vmem:[#allocation12 + $0x17c8] sm:$0xff]
        %v2337 = vld [vmem:[#allocation12 + $0x17d0] sm:$0xff]
        %v2338 = vld [vmem:[#allocation12 + $0x17d8] sm:$0xff]
        %v2339 = vld [vmem:[#allocation12 + $0x17e0] sm:$0xff]
        %v2340 = vld [vmem:[#allocation12 + $0x17e8] sm:$0xff]
        %v2341 = vld [vmem:[#allocation12 + $0x17f0] sm:$0xff]
        %v2342 = vld [vmem:[#allocation12 + $0x17f8] sm:$0xff]
        %v2343 = vld [vmem:[#allocation12 + $0x1800] sm:$0xff]
        %v2344 = vld [vmem:[#allocation12 + $0x1808] sm:$0xff]
        %v2345 = vld [vmem:[#allocation12 + $0x1810] sm:$0xff]
        %v2346 = vld [vmem:[#allocation12 + $0x1818] sm:$0xff]
        %v2347 = vld [vmem:[#allocation12 + $0x1820] sm:$0xff]
        %v2348 = vld [vmem:[#allocation12 + $0x1828] sm:$0xff]
        %v2349 = vld [vmem:[#allocation12 + $0x1830] sm:$0xff]
        %v2350 = vld [vmem:[#allocation12 + $0x1838] sm:$0xff]
        %v2351 = vld [vmem:[#allocation12 + $0x1840] sm:$0xff]
        %v2352 = vld [vmem:[#allocation12 + $0x1848] sm:$0xff]
        %v2353 = vld [vmem:[#allocation12 + $0x1850] sm:$0xff]
        %v2354 = vld [vmem:[#allocation12 + $0x1858] sm:$0xff]
        %v2355 = vld [vmem:[#allocation12 + $0x1860] sm:$0xff]
        %v2356 = vld [vmem:[#allocation12 + $0x1868] sm:$0xff]
        %v2357 = vld [vmem:[#allocation12 + $0x1870] sm:$0xff]
        %v2358 = vld [vmem:[#allocation12 + $0x1878] sm:$0xff]
        %v2359 = vld [vmem:[#allocation12 + $0x1880] sm:$0xff]
        %v2360 = vld [vmem:[#allocation12 + $0x1888] sm:$0xff]
        %v2361 = vld [vmem:[#allocation12 + $0x1890] sm:$0xff]
        %v2362 = vld [vmem:[#allocation12 + $0x1898] sm:$0xff]
        %v2363 = vld [vmem:[#allocation12 + $0x18a0] sm:$0xff]
        %v2364 = vld [vmem:[#allocation12 + $0x18a8] sm:$0xff]
        %v2365 = vld [vmem:[#allocation12 + $0x18b0] sm:$0xff]
        %v2366 = vld [vmem:[#allocation12 + $0x18b8] sm:$0xff]
        %v2367 = vld [vmem:[#allocation12 + $0x18c0] sm:$0xff]
        %v2368 = vld [vmem:[#allocation12 + $0x18c8] sm:$0xff]
        %v2369 = vld [vmem:[#allocation12 + $0x18d0] sm:$0xff]
        %v2370 = vld [vmem:[#allocation12 + $0x18d8] sm:$0xff]
        %v2371 = vld [vmem:[#allocation12 + $0x18e0] sm:$0xff]
        %v2372 = vld [vmem:[#allocation12 + $0x18e8] sm:$0xff]
        %v2373 = vld [vmem:[#allocation12 + $0x18f0] sm:$0xff]
        %v2374 = vld [vmem:[#allocation12 + $0x18f8] sm:$0xff]
        %v2375 = vld [vmem:[#allocation12 + $0x1900] sm:$0xff]
        %v2376 = vld [vmem:[#allocation12 + $0x1908] sm:$0xff]
        %v2377 = vld [vmem:[#allocation12 + $0x1910] sm:$0xff]
        %v2378 = vld [vmem:[#allocation12 + $0x1918] sm:$0xff]
        %v2379 = vld [vmem:[#allocation12 + $0x1920] sm:$0xff]
        %v2380 = vld [vmem:[#allocation12 + $0x1928] sm:$0xff]
        %v2381 = vld [vmem:[#allocation12 + $0x1930] sm:$0xff]
        %v2382 = vld [vmem:[#allocation12 + $0x1938] sm:$0xff]
        %v2383 = vld [vmem:[#allocation12 + $0x1940] sm:$0xff]
        %v2384 = vld [vmem:[#allocation12 + $0x1948] sm:$0xff]
        %v2385 = vld [vmem:[#allocation12 + $0x1950] sm:$0xff]
        %v2386 = vld [vmem:[#allocation12 + $0x1958] sm:$0xff]
        %v2387 = vld [vmem:[#allocation12 + $0x1960] sm:$0xff]
        %v2388 = vld [vmem:[#allocation12 + $0x1968] sm:$0xff]
        %v2389 = vld [vmem:[#allocation12 + $0x1970] sm:$0xff]
        %v2390 = vld [vmem:[#allocation12 + $0x1978] sm:$0xff]
        %v2391 = vld [vmem:[#allocation12 + $0x1980] sm:$0xff]
        %v2392 = vld [vmem:[#allocation12 + $0x1988] sm:$0xff]
        %v2393 = vld [vmem:[#allocation12 + $0x1990] sm:$0xff]
        %v2394 = vld [vmem:[#allocation12 + $0x1998] sm:$0xff]
        %v2395 = vld [vmem:[#allocation12 + $0x19a0] sm:$0xff]
        %v2396 = vld [vmem:[#allocation12 + $0x19a8] sm:$0xff]
        %v2397 = vld [vmem:[#allocation12 + $0x19b0] sm:$0xff]
        %v2398 = vld [vmem:[#allocation12 + $0x19b8] sm:$0xff]
        %v2399 = vld [vmem:[#allocation12 + $0x19c0] sm:$0xff]
        %v2400 = vld [vmem:[#allocation12 + $0x19c8] sm:$0xff]
        %v2401 = vld [vmem:[#allocation12 + $0x19d0] sm:$0xff]
        %v2402 = vld [vmem:[#allocation12 + $0x19d8] sm:$0xff]
        %v2403 = vld [vmem:[#allocation12 + $0x19e0] sm:$0xff]
        %v2404 = vld [vmem:[#allocation12 + $0x19e8] sm:$0xff]
        %v2405 = vld [vmem:[#allocation12 + $0x19f0] sm:$0xff]
        %v2406 = vld [vmem:[#allocation12 + $0x19f8] sm:$0xff]
        %v2407 = vld [vmem:[#allocation12 + $0x1a00] sm:$0xff]
        %v2408 = vld [vmem:[#allocation12 + $0x1a08] sm:$0xff]
        %v2409 = vld [vmem:[#allocation12 + $0x1a10] sm:$0xff]
        %v2410 = vld [vmem:[#allocation12 + $0x1a18] sm:$0xff]
        %v2411 = vld [vmem:[#allocation12 + $0x1a20] sm:$0xff]
        %v2412 = vld [vmem:[#allocation12 + $0x1a28] sm:$0xff]
        %v2413 = vld [vmem:[#allocation12 + $0x1a30] sm:$0xff]
        %v2414 = vld [vmem:[#allocation12 + $0x1a38] sm:$0xff]
        %v2415 = vld [vmem:[#allocation12 + $0x1a40] sm:$0xff]
        %v2416 = vld [vmem:[#allocation12 + $0x1a48] sm:$0xff]
        %v2417 = vld [vmem:[#allocation12 + $0x1a50] sm:$0xff]
        %v2418 = vld [vmem:[#allocation12 + $0x1a58] sm:$0xff]
        %v2419 = vld [vmem:[#allocation12 + $0x1a60] sm:$0xff]
        %v2420 = vld [vmem:[#allocation12 + $0x1a68] sm:$0xff]
        %v2421 = vld [vmem:[#allocation12 + $0x1a70] sm:$0xff]
        %v2422 = vld [vmem:[#allocation12 + $0x1a78] sm:$0xff]
        %v2423 = vld [vmem:[#allocation12 + $0x1a80] sm:$0xff]
        %v2424 = vld [vmem:[#allocation12 + $0x1a88] sm:$0xff]
        %v2425 = vld [vmem:[#allocation12 + $0x1a90] sm:$0xff]
        %v2426 = vld [vmem:[#allocation12 + $0x1a98] sm:$0xff]
        %v2427 = vld [vmem:[#allocation12 + $0x1aa0] sm:$0xff]
        %v2428 = vld [vmem:[#allocation12 + $0x1aa8] sm:$0xff]
        %v2429 = vld [vmem:[#allocation12 + $0x1ab0] sm:$0xff]
        %v2430 = vld [vmem:[#allocation12 + $0x1ab8] sm:$0xff]
        %v2431 = vld [vmem:[#allocation12 + $0x1ac0] sm:$0xff]
        %v2432 = vld [vmem:[#allocation12 + $0x1ac8] sm:$0xff]
        %v2433 = vld [vmem:[#allocation12 + $0x1ad0] sm:$0xff]
        %v2434 = vld [vmem:[#allocation12 + $0x1ad8] sm:$0xff]
        %v2435 = vld [vmem:[#allocation12 + $0x1ae0] sm:$0xff]
        %v2436 = vld [vmem:[#allocation12 + $0x1ae8] sm:$0xff]
        %v2437 = vld [vmem:[#allocation12 + $0x1af0] sm:$0xff]
        %v2438 = vld [vmem:[#allocation12 + $0x1af8] sm:$0xff]
        %v2439 = vld [vmem:[#allocation12 + $0x1b00] sm:$0xff]
        %v2440 = vld [vmem:[#allocation12 + $0x1b08] sm:$0xff]
        %v2441 = vld [vmem:[#allocation12 + $0x1b10] sm:$0xff]
        %v2442 = vld [vmem:[#allocation12 + $0x1b18] sm:$0xff]
        %v2443 = vld [vmem:[#allocation12 + $0x1b20] sm:$0xff]
        %v2444 = vld [vmem:[#allocation12 + $0x1b28] sm:$0xff]
        %v2445 = vld [vmem:[#allocation12 + $0x1b30] sm:$0xff]
        %v2446 = vld [vmem:[#allocation12 + $0x1b38] sm:$0xff]
        %v2447 = vld [vmem:[#allocation12 + $0x1b40] sm:$0xff]
        %v2448 = vld [vmem:[#allocation12 + $0x1b48] sm:$0xff]
        %v2449 = vld [vmem:[#allocation12 + $0x1b50] sm:$0xff]
        %v2450 = vld [vmem:[#allocation12 + $0x1b58] sm:$0xff]
        %v2451 = vld [vmem:[#allocation12 + $0x1b60] sm:$0xff]
        %v2452 = vld [vmem:[#allocation12 + $0x1b68] sm:$0xff]
        %v2453 = vld [vmem:[#allocation12 + $0x1b70] sm:$0xff]
        %v2454 = vld [vmem:[#allocation12 + $0x1b78] sm:$0xff]
        %v2455 = vld [vmem:[#allocation12 + $0x1b80] sm:$0xff]
        %v2456 = vld [vmem:[#allocation12 + $0x1b88] sm:$0xff]
        %v2457 = vld [vmem:[#allocation12 + $0x1b90] sm:$0xff]
        %v2458 = vld [vmem:[#allocation12 + $0x1b98] sm:$0xff]
        %v2459 = vld [vmem:[#allocation12 + $0x1ba0] sm:$0xff]
        %v2460 = vld [vmem:[#allocation12 + $0x1ba8] sm:$0xff]
        %v2461 = vld [vmem:[#allocation12 + $0x1bb0] sm:$0xff]
        %v2462 = vld [vmem:[#allocation12 + $0x1bb8] sm:$0xff]
        %v2463 = vld [vmem:[#allocation12 + $0x1bc0] sm:$0xff]
        %v2464 = vld [vmem:[#allocation12 + $0x1bc8] sm:$0xff]
        %v2465 = vld [vmem:[#allocation12 + $0x1bd0] sm:$0xff]
        %v2466 = vld [vmem:[#allocation12 + $0x1bd8] sm:$0xff]
        %v2467 = vld [vmem:[#allocation12 + $0x1be0] sm:$0xff]
        %v2468 = vld [vmem:[#allocation12 + $0x1be8] sm:$0xff]
        %v2469 = vld [vmem:[#allocation12 + $0x1bf0] sm:$0xff]
        %v2470 = vld [vmem:[#allocation12 + $0x1bf8] sm:$0xff]
        %v2471 = vld [vmem:[#allocation12 + $0x1c00] sm:$0xff]
        %v2472 = vld [vmem:[#allocation12 + $0x1c08] sm:$0xff]
        %v2473 = vld [vmem:[#allocation12 + $0x1c10] sm:$0xff]
        %v2474 = vld [vmem:[#allocation12 + $0x1c18] sm:$0xff]
        %v2475 = vld [vmem:[#allocation12 + $0x1c20] sm:$0xff]
        %v2476 = vld [vmem:[#allocation12 + $0x1c28] sm:$0xff]
        %v2477 = vld [vmem:[#allocation12 + $0x1c30] sm:$0xff]
        %v2478 = vld [vmem:[#allocation12 + $0x1c38] sm:$0xff]
        %v2479 = vld [vmem:[#allocation12 + $0x1c40] sm:$0xff]
        %v2480 = vld [vmem:[#allocation12 + $0x1c48] sm:$0xff]
        %v2481 = vld [vmem:[#allocation12 + $0x1c50] sm:$0xff]
        %v2482 = vld [vmem:[#allocation12 + $0x1c58] sm:$0xff]
        %v2483 = vld [vmem:[#allocation12 + $0x1c60] sm:$0xff]
        %v2484 = vld [vmem:[#allocation12 + $0x1c68] sm:$0xff]
        %v2485 = vld [vmem:[#allocation12 + $0x1c70] sm:$0xff]
        %v2486 = vld [vmem:[#allocation12 + $0x1c78] sm:$0xff]
        %v2487 = vld [vmem:[#allocation12 + $0x1c80] sm:$0xff]
        %v2488 = vld [vmem:[#allocation12 + $0x1c88] sm:$0xff]
        %v2489 = vld [vmem:[#allocation12 + $0x1c90] sm:$0xff]
        %v2490 = vld [vmem:[#allocation12 + $0x1c98] sm:$0xff]
        %v2491 = vld [vmem:[#allocation12 + $0x1ca0] sm:$0xff]
        %v2492 = vld [vmem:[#allocation12 + $0x1ca8] sm:$0xff]
        %v2493 = vld [vmem:[#allocation12 + $0x1cb0] sm:$0xff]
        %v2494 = vld [vmem:[#allocation12 + $0x1cb8] sm:$0xff]
        %v2495 = vld [vmem:[#allocation12 + $0x1cc0] sm:$0xff]
        %v2496 = vld [vmem:[#allocation12 + $0x1cc8] sm:$0xff]
        %v2497 = vld [vmem:[#allocation12 + $0x1cd0] sm:$0xff]
        %v2498 = vld [vmem:[#allocation12 + $0x1cd8] sm:$0xff]
        %v2499 = vld [vmem:[#allocation12 + $0x1ce0] sm:$0xff]
        %v2500 = vld [vmem:[#allocation12 + $0x1ce8] sm:$0xff]
        %v2501 = vld [vmem:[#allocation12 + $0x1cf0] sm:$0xff]
        %v2502 = vld [vmem:[#allocation12 + $0x1cf8] sm:$0xff]
        %v2503 = vld [vmem:[#allocation12 + $0x1d00] sm:$0xff]
        %v2504 = vld [vmem:[#allocation12 + $0x1d08] sm:$0xff]
        %v2505 = vld [vmem:[#allocation12 + $0x1d10] sm:$0xff]
        %v2506 = vld [vmem:[#allocation12 + $0x1d18] sm:$0xff]
        %v2507 = vld [vmem:[#allocation12 + $0x1d20] sm:$0xff]
        %v2508 = vld [vmem:[#allocation12 + $0x1d28] sm:$0xff]
        %v2509 = vld [vmem:[#allocation12 + $0x1d30] sm:$0xff]
        %v2510 = vld [vmem:[#allocation12 + $0x1d38] sm:$0xff]
        %v2511 = vld [vmem:[#allocation12 + $0x1d40] sm:$0xff]
        %v2512 = vld [vmem:[#allocation12 + $0x1d48] sm:$0xff]
        %v2513 = vld [vmem:[#allocation12 + $0x1d50] sm:$0xff]
        %v2514 = vld [vmem:[#allocation12 + $0x1d58] sm:$0xff]
        %v2515 = vld [vmem:[#allocation12 + $0x1d60] sm:$0xff]
        %v2516 = vld [vmem:[#allocation12 + $0x1d68] sm:$0xff]
        %v2517 = vld [vmem:[#allocation12 + $0x1d70] sm:$0xff]
        %v2518 = vld [vmem:[#allocation12 + $0x1d78] sm:$0xff]
        %v2519 = vld [vmem:[#allocation12 + $0x1d80] sm:$0xff]
        %v2520 = vld [vmem:[#allocation12 + $0x1d88] sm:$0xff]
        %v2521 = vld [vmem:[#allocation12 + $0x1d90] sm:$0xff]
        %v2522 = vld [vmem:[#allocation12 + $0x1d98] sm:$0xff]
        %v2523 = vld [vmem:[#allocation12 + $0x1da0] sm:$0xff]
        %v2524 = vld [vmem:[#allocation12 + $0x1da8] sm:$0xff]
        %v2525 = vld [vmem:[#allocation12 + $0x1db0] sm:$0xff]
        %v2526 = vld [vmem:[#allocation12 + $0x1db8] sm:$0xff]
        %v2527 = vld [vmem:[#allocation12 + $0x1dc0] sm:$0xff]
        %v2528 = vld [vmem:[#allocation12 + $0x1dc8] sm:$0xff]
        %v2529 = vld [vmem:[#allocation12 + $0x1dd0] sm:$0xff]
        %v2530 = vld [vmem:[#allocation12 + $0x1dd8] sm:$0xff]
        %v2531 = vld [vmem:[#allocation12 + $0x1de0] sm:$0xff]
        %v2532 = vld [vmem:[#allocation12 + $0x1de8] sm:$0xff]
        %v2533 = vld [vmem:[#allocation12 + $0x1df0] sm:$0xff]
        %v2534 = vld [vmem:[#allocation12 + $0x1df8] sm:$0xff]
        %v2535 = vld [vmem:[#allocation12 + $0x1e00] sm:$0xff]
        %v2536 = vld [vmem:[#allocation12 + $0x1e08] sm:$0xff]
        %v2537 = vld [vmem:[#allocation12 + $0x1e10] sm:$0xff]
        %v2538 = vld [vmem:[#allocation12 + $0x1e18] sm:$0xff]
        %v2539 = vld [vmem:[#allocation12 + $0x1e20] sm:$0xff]
        %v2540 = vld [vmem:[#allocation12 + $0x1e28] sm:$0xff]
        %v2541 = vld [vmem:[#allocation12 + $0x1e30] sm:$0xff]
        %v2542 = vld [vmem:[#allocation12 + $0x1e38] sm:$0xff]
        %v2543 = vld [vmem:[#allocation12 + $0x1e40] sm:$0xff]
        %v2544 = vld [vmem:[#allocation12 + $0x1e48] sm:$0xff]
        %v2545 = vld [vmem:[#allocation12 + $0x1e50] sm:$0xff]
        %v2546 = vld [vmem:[#allocation12 + $0x1e58] sm:$0xff]
        %v2547 = vld [vmem:[#allocation12 + $0x1e60] sm:$0xff]
        %v2548 = vld [vmem:[#allocation12 + $0x1e68] sm:$0xff]
        %v2549 = vld [vmem:[#allocation12 + $0x1e70] sm:$0xff]
        %v2550 = vld [vmem:[#allocation12 + $0x1e78] sm:$0xff]
        %v2551 = vld [vmem:[#allocation12 + $0x1e80] sm:$0xff]
        %v2552 = vld [vmem:[#allocation12 + $0x1e88] sm:$0xff]
        %v2553 = vld [vmem:[#allocation12 + $0x1e90] sm:$0xff]
        %v2554 = vld [vmem:[#allocation12 + $0x1e98] sm:$0xff]
        %v2555 = vld [vmem:[#allocation12 + $0x1ea0] sm:$0xff]
        %v2556 = vld [vmem:[#allocation12 + $0x1ea8] sm:$0xff]
        %v2557 = vld [vmem:[#allocation12 + $0x1eb0] sm:$0xff]
        %v2558 = vld [vmem:[#allocation12 + $0x1eb8] sm:$0xff]
        %v2559 = vld [vmem:[#allocation12 + $0x1ec0] sm:$0xff]
        %v2560 = vld [vmem:[#allocation12 + $0x1ec8] sm:$0xff]
        %v2561 = vld [vmem:[#allocation12 + $0x1ed0] sm:$0xff]
        %v2562 = vld [vmem:[#allocation12 + $0x1ed8] sm:$0xff]
        %v2563 = vld [vmem:[#allocation12 + $0x1ee0] sm:$0xff]
        %v2564 = vld [vmem:[#allocation12 + $0x1ee8] sm:$0xff]
        %v2565 = vld [vmem:[#allocation12 + $0x1ef0] sm:$0xff]
        %v2566 = vld [vmem:[#allocation12 + $0x1ef8] sm:$0xff]
        %v2567 = vld [vmem:[#allocation12 + $0x1f00] sm:$0xff]
        %v2568 = vld [vmem:[#allocation12 + $0x1f08] sm:$0xff]
        %v2569 = vld [vmem:[#allocation12 + $0x1f10] sm:$0xff]
        %v2570 = vld [vmem:[#allocation12 + $0x1f18] sm:$0xff]
        %v2571 = vld [vmem:[#allocation12 + $0x1f20] sm:$0xff]
        %v2572 = vld [vmem:[#allocation12 + $0x1f28] sm:$0xff]
        %v2573 = vld [vmem:[#allocation12 + $0x1f30] sm:$0xff]
        %v2574 = vld [vmem:[#allocation12 + $0x1f38] sm:$0xff]
        %v2575 = vld [vmem:[#allocation12 + $0x1f40] sm:$0xff]
        %v2576 = vld [vmem:[#allocation12 + $0x1f48] sm:$0xff]
        %v2577 = vld [vmem:[#allocation12 + $0x1f50] sm:$0xff]
        %v2578 = vld [vmem:[#allocation12 + $0x1f58] sm:$0xff]
        %v2579 = vld [vmem:[#allocation12 + $0x1f60] sm:$0xff]
        %v2580 = vld [vmem:[#allocation12 + $0x1f68] sm:$0xff]
        %v2581 = vld [vmem:[#allocation12 + $0x1f70] sm:$0xff]
        %v2582 = vld [vmem:[#allocation12 + $0x1f78] sm:$0xff]
        %v2583 = vld [vmem:[#allocation12 + $0x1f80] sm:$0xff]
        %v2584 = vld [vmem:[#allocation12 + $0x1f88] sm:$0xff]
        %v2585 = vld [vmem:[#allocation12 + $0x1f90] sm:$0xff]
        %v2586 = vld [vmem:[#allocation12 + $0x1f98] sm:$0xff]
        %v2587 = vld [vmem:[#allocation12 + $0x1fa0] sm:$0xff]
        %v2588 = vld [vmem:[#allocation12 + $0x1fa8] sm:$0xff]
        %v2589 = vld [vmem:[#allocation12 + $0x1fb0] sm:$0xff]
        %v2590 = vld [vmem:[#allocation12 + $0x1fb8] sm:$0xff]
        %v2591 = vld [vmem:[#allocation12 + $0x1fc0] sm:$0xff]
        %v2592 = vld [vmem:[#allocation12 + $0x1fc8] sm:$0xff]
        %v2593 = vld [vmem:[#allocation12 + $0x1fd0] sm:$0xff]
        %v2594 = vld [vmem:[#allocation12 + $0x1fd8] sm:$0xff]
        %v2595 = vld [vmem:[#allocation12 + $0x1fe0] sm:$0xff]
        %v2596 = vld [vmem:[#allocation12 + $0x1fe8] sm:$0xff]
        %v2597 = vld [vmem:[#allocation12 + $0x1ff0] sm:$0xff]
        %v2598 = vld [vmem:[#allocation12 + $0x1ff8] sm:$0xff]
        %v2599 = vld [vmem:[#allocation16 + $0xc] sm:$0xff]
        %v2600 = vld [vmem:[#allocation16 + $0x14] sm:$0xff]
        %v2603 = vperm.slane %v2599, 0
        %v2604 = vperm.slane %v2599, 1
        %v2605 = vperm.slane %v2599, 2
        %v2606 = vperm.slane %v2599, 3
        %v2607 = vperm.slane %v2599, 4
        %v2608 = vperm.slane %v2599, 5
        %v2609 = vperm.slane %v2599, 6
        %v2610 = vperm.slane %v2599, 7
        %v2611 = vperm.slane %v2600, 0
        %v2612 = vperm.slane %v2600, 1
        %v2613 = vperm.slane %v2600, 2
        %v2614 = vperm.slane %v2600, 3
        %v2615 = vperm.slane %v2600, 4
        %v2616 = vperm.slane %v2600, 5
        %v2617 = vperm.slane %v2600, 6
        %v2618 = vperm.slane %v2600, 7
        %2635 = vmatpush.msra.mxu0 %v1815
        %2636 = vmatpush.msra.mxu0 %v1799
        %2637 = vmatpush.msra.mxu0 %v1783
        %2638 = vmatpush.msra.mxu0 %v1767
        %2639 = vmatpush.msra.mxu0 %v1751
        %2640 = vmatpush.msra.mxu0 %v1735
        %2641 = vmatpush.msra.mxu0 %v1719
        %2642 = vmatpush.msra.mxu0 %v1703
        %2643 = vmatpush.msra.mxu0 %v1687
        %2644 = vmatpush.msra.mxu0 %v1671
        %2645 = vmatpush.msra.mxu0 %v1655
        %2646 = vmatpush.msra.mxu0 %v1639
        %2647 = vmatpush.msra.mxu0 %v1623
        %2648 = vmatpush.msra.mxu0 %v1607
        %2649 = vmatpush.msra.mxu0 %v1591
        %2650 = vmatpush.msra.mxu0 %v1575
        %2651 = vmatmul.f32.gmra.mxu0 %v1571
        %v2652 = vpop.f32.mrf.mxu0
        %v2653 = vadd.f32 %v2603, %v2652
        %2654 = vdwg.mxu0
        %2655 = vmatpush.msra.mxu0 %v2071
        %2656 = vmatpush.msra.mxu0 %v2055
        %2657 = vmatpush.msra.mxu0 %v2039
        %2658 = vmatpush.msra.mxu0 %v2023
        %2659 = vmatpush.msra.mxu0 %v2007
        %2660 = vmatpush.msra.mxu0 %v1991
        %2661 = vmatpush.msra.mxu0 %v1975
        %2662 = vmatpush.msra.mxu0 %v1959
        %2663 = vmatpush.msra.mxu0 %v1943
        %2664 = vmatpush.msra.mxu0 %v1927
        %2665 = vmatpush.msra.mxu0 %v1911
        %2666 = vmatpush.msra.mxu0 %v1895
        %2667 = vmatpush.msra.mxu0 %v1879
        %2668 = vmatpush.msra.mxu0 %v1863
        %2669 = vmatpush.msra.mxu0 %v1847
        %2670 = vmatpush.msra.mxu0 %v1831
        %2671 = vmatmul.f32.gmra.mxu0 %v1572
        %v2672 = vpop.f32.mrf.mxu0
        %v2673 = vadd.f32 %v2653, %v2672
        %2674 = vdwg.mxu0
        %2675 = vmatpush.msra.mxu0 %v2327
        %2676 = vmatpush.msra.mxu0 %v2311
        %2677 = vmatpush.msra.mxu0 %v2295
        %2678 = vmatpush.msra.mxu0 %v2279
        %2679 = vmatpush.msra.mxu0 %v2263
        %2680 = vmatpush.msra.mxu0 %v2247
        %2681 = vmatpush.msra.mxu0 %v2231
        %2682 = vmatpush.msra.mxu0 %v2215
        %2683 = vmatpush.msra.mxu0 %v2199
        %2684 = vmatpush.msra.mxu0 %v2183
        %2685 = vmatpush.msra.mxu0 %v2167
        %2686 = vmatpush.msra.mxu0 %v2151
        %2687 = vmatpush.msra.mxu0 %v2135
        %2688 = vmatpush.msra.mxu0 %v2119
        %2689 = vmatpush.msra.mxu0 %v2103
        %2690 = vmatpush.msra.mxu0 %v2087
        %2691 = vmatmul.f32.gmra.mxu0 %v1573
        %v2692 = vpop.f32.mrf.mxu0
        %v2693 = vadd.f32 %v2673, %v2692
        %2694 = vdwg.mxu0
        %2695 = vmatpush.msra.mxu0 %v2583
        %2696 = vmatpush.msra.mxu0 %v2567
        %2697 = vmatpush.msra.mxu0 %v2551
        %2698 = vmatpush.msra.mxu0 %v2535
        %2699 = vmatpush.msra.mxu0 %v2519
        %2700 = vmatpush.msra.mxu0 %v2503
        %2701 = vmatpush.msra.mxu0 %v2487
        %2702 = vmatpush.msra.mxu0 %v2471
        %2703 = vmatpush.msra.mxu0 %v2455
        %2704 = vmatpush.msra.mxu0 %v2439
        %2705 = vmatpush.msra.mxu0 %v2423
        %2706 = vmatpush.msra.mxu0 %v2407
        %2707 = vmatpush.msra.mxu0 %v2391
        %2708 = vmatpush.msra.mxu0 %v2375
        %2709 = vmatpush.msra.mxu0 %v2359
        %2710 = vmatpush.msra.mxu0 %v2343
        %2711 = vmatmul.f32.gmra.mxu0 %v1574
        %v2712 = vpop.f32.mrf.mxu0
        %v2713 = vadd.f32 %v2693, %v2712
        %2714 = vdwg.mxu0
        %2715 = vmatpush.msra.mxu0 %v1816
        %2716 = vmatpush.msra.mxu0 %v1800
        %2717 = vmatpush.msra.mxu0 %v1784
        %2718 = vmatpush.msra.mxu0 %v1768
        %2719 = vmatpush.msra.mxu0 %v1752
        %2720 = vmatpush.msra.mxu0 %v1736
        %2721 = vmatpush.msra.mxu0 %v1720
        %2722 = vmatpush.msra.mxu0 %v1704
        %2723 = vmatpush.msra.mxu0 %v1688
        %2724 = vmatpush.msra.mxu0 %v1672
        %2725 = vmatpush.msra.mxu0 %v1656
        %2726 = vmatpush.msra.mxu0 %v1640
        %2727 = vmatpush.msra.mxu0 %v1624
        %2728 = vmatpush.msra.mxu0 %v1608
        %2729 = vmatpush.msra.mxu0 %v1592
        %2730 = vmatpush.msra.mxu0 %v1576
        %2731 = vmatmul.f32.gmra.mxu0 %v1571
        %v2732 = vpop.f32.mrf.mxu0
        %v2733 = vadd.f32 %v2604, %v2732
        %2734 = vdwg.mxu0
        %2735 = vmatpush.msra.mxu0 %v2072
        %2736 = vmatpush.msra.mxu0 %v2056
        %2737 = vmatpush.msra.mxu0 %v2040
        %2738 = vmatpush.msra.mxu0 %v2024
        %2739 = vmatpush.msra.mxu0 %v2008
        %2740 = vmatpush.msra.mxu0 %v1992
        %2741 = vmatpush.msra.mxu0 %v1976
        %2742 = vmatpush.msra.mxu0 %v1960
        %2743 = vmatpush.msra.mxu0 %v1944
        %2744 = vmatpush.msra.mxu0 %v1928
        %2745 = vmatpush.msra.mxu0 %v1912
        %2746 = vmatpush.msra.mxu0 %v1896
        %2747 = vmatpush.msra.mxu0 %v1880
        %2748 = vmatpush.msra.mxu0 %v1864
        %2749 = vmatpush.msra.mxu0 %v1848
        %2750 = vmatpush.msra.mxu0 %v1832
        %2751 = vmatmul.f32.gmra.mxu0 %v1572
        %v2752 = vpop.f32.mrf.mxu0
        %v2753 = vadd.f32 %v2733, %v2752
        %2754 = vdwg.mxu0
        %2755 = vmatpush.msra.mxu0 %v2328
        %2756 = vmatpush.msra.mxu0 %v2312
        %2757 = vmatpush.msra.mxu0 %v2296
        %2758 = vmatpush.msra.mxu0 %v2280
        %2759 = vmatpush.msra.mxu0 %v2264
        %2760 = vmatpush.msra.mxu0 %v2248
        %2761 = vmatpush.msra.mxu0 %v2232
        %2762 = vmatpush.msra.mxu0 %v2216
        %2763 = vmatpush.msra.mxu0 %v2200
        %2764 = vmatpush.msra.mxu0 %v2184
        %2765 = vmatpush.msra.mxu0 %v2168
        %2766 = vmatpush.msra.mxu0 %v2152
        %2767 = vmatpush.msra.mxu0 %v2136
        %2768 = vmatpush.msra.mxu0 %v2120
        %2769 = vmatpush.msra.mxu0 %v2104
        %2770 = vmatpush.msra.mxu0 %v2088
        %2771 = vmatmul.f32.gmra.mxu0 %v1573
        %v2772 = vpop.f32.mrf.mxu0
        %v2773 = vadd.f32 %v2753, %v2772
        %2774 = vdwg.mxu0
        %2775 = vmatpush.msra.mxu0 %v2584
        %2776 = vmatpush.msra.mxu0 %v2568
        %2777 = vmatpush.msra.mxu0 %v2552
        %2778 = vmatpush.msra.mxu0 %v2536
        %2779 = vmatpush.msra.mxu0 %v2520
        %2780 = vmatpush.msra.mxu0 %v2504
        %2781 = vmatpush.msra.mxu0 %v2488
        %2782 = vmatpush.msra.mxu0 %v2472
        %2783 = vmatpush.msra.mxu0 %v2456
        %2784 = vmatpush.msra.mxu0 %v2440
        %2785 = vmatpush.msra.mxu0 %v2424
        %2786 = vmatpush.msra.mxu0 %v2408
        %2787 = vmatpush.msra.mxu0 %v2392
        %2788 = vmatpush.msra.mxu0 %v2376
        %2789 = vmatpush.msra.mxu0 %v2360
        %2790 = vmatpush.msra.mxu0 %v2344
        %2791 = vmatmul.f32.gmra.mxu0 %v1574
        %v2792 = vpop.f32.mrf.mxu0
        %v2793 = vadd.f32 %v2773, %v2792
        %2794 = vdwg.mxu0
        %2795 = vmatpush.msra.mxu0 %v1817
        %2796 = vmatpush.msra.mxu0 %v1801
        %2797 = vmatpush.msra.mxu0 %v1785
        %2798 = vmatpush.msra.mxu0 %v1769
        %2799 = vmatpush.msra.mxu0 %v1753
        %2800 = vmatpush.msra.mxu0 %v1737
        %2801 = vmatpush.msra.mxu0 %v1721
        %2802 = vmatpush.msra.mxu0 %v1705
        %2803 = vmatpush.msra.mxu0 %v1689
        %2804 = vmatpush.msra.mxu0 %v1673
        %2805 = vmatpush.msra.mxu0 %v1657
        %2806 = vmatpush.msra.mxu0 %v1641
        %2807 = vmatpush.msra.mxu0 %v1625
        %2808 = vmatpush.msra.mxu0 %v1609
        %2809 = vmatpush.msra.mxu0 %v1593
        %2810 = vmatpush.msra.mxu0 %v1577
        %2811 = vmatmul.f32.gmra.mxu0 %v1571
        %v2812 = vpop.f32.mrf.mxu0
        %v2813 = vadd.f32 %v2605, %v2812
        %2814 = vdwg.mxu0
        %2815 = vmatpush.msra.mxu0 %v2073
        %2816 = vmatpush.msra.mxu0 %v2057
        %2817 = vmatpush.msra.mxu0 %v2041
        %2818 = vmatpush.msra.mxu0 %v2025
        %2819 = vmatpush.msra.mxu0 %v2009
        %2820 = vmatpush.msra.mxu0 %v1993
        %2821 = vmatpush.msra.mxu0 %v1977
        %2822 = vmatpush.msra.mxu0 %v1961
        %2823 = vmatpush.msra.mxu0 %v1945
        %2824 = vmatpush.msra.mxu0 %v1929
        %2825 = vmatpush.msra.mxu0 %v1913
        %2826 = vmatpush.msra.mxu0 %v1897
        %2827 = vmatpush.msra.mxu0 %v1881
        %2828 = vmatpush.msra.mxu0 %v1865
        %2829 = vmatpush.msra.mxu0 %v1849
        %2830 = vmatpush.msra.mxu0 %v1833
        %2831 = vmatmul.f32.gmra.mxu0 %v1572
        %v2832 = vpop.f32.mrf.mxu0
        %v2833 = vadd.f32 %v2813, %v2832
        %2834 = vdwg.mxu0
        %2835 = vmatpush.msra.mxu0 %v2329
        %2836 = vmatpush.msra.mxu0 %v2313
        %2837 = vmatpush.msra.mxu0 %v2297
        %2838 = vmatpush.msra.mxu0 %v2281
        %2839 = vmatpush.msra.mxu0 %v2265
        %2840 = vmatpush.msra.mxu0 %v2249
        %2841 = vmatpush.msra.mxu0 %v2233
        %2842 = vmatpush.msra.mxu0 %v2217
        %2843 = vmatpush.msra.mxu0 %v2201
        %2844 = vmatpush.msra.mxu0 %v2185
        %2845 = vmatpush.msra.mxu0 %v2169
        %2846 = vmatpush.msra.mxu0 %v2153
        %2847 = vmatpush.msra.mxu0 %v2137
        %2848 = vmatpush.msra.mxu0 %v2121
        %2849 = vmatpush.msra.mxu0 %v2105
        %2850 = vmatpush.msra.mxu0 %v2089
        %2851 = vmatmul.f32.gmra.mxu0 %v1573
        %v2852 = vpop.f32.mrf.mxu0
        %v2853 = vadd.f32 %v2833, %v2852
        %2854 = vdwg.mxu0
        %2855 = vmatpush.msra.mxu0 %v2585
        %2856 = vmatpush.msra.mxu0 %v2569
        %2857 = vmatpush.msra.mxu0 %v2553
        %2858 = vmatpush.msra.mxu0 %v2537
        %2859 = vmatpush.msra.mxu0 %v2521
        %2860 = vmatpush.msra.mxu0 %v2505
        %2861 = vmatpush.msra.mxu0 %v2489
        %2862 = vmatpush.msra.mxu0 %v2473
        %2863 = vmatpush.msra.mxu0 %v2457
        %2864 = vmatpush.msra.mxu0 %v2441
        %2865 = vmatpush.msra.mxu0 %v2425
        %2866 = vmatpush.msra.mxu0 %v2409
        %2867 = vmatpush.msra.mxu0 %v2393
        %2868 = vmatpush.msra.mxu0 %v2377
        %2869 = vmatpush.msra.mxu0 %v2361
        %2870 = vmatpush.msra.mxu0 %v2345
        %2871 = vmatmul.f32.gmra.mxu0 %v1574
        %v2872 = vpop.f32.mrf.mxu0
        %v2873 = vadd.f32 %v2853, %v2872
        %2874 = vdwg.mxu0
        %2875 = vmatpush.msra.mxu0 %v1818
        %2876 = vmatpush.msra.mxu0 %v1802
        %2877 = vmatpush.msra.mxu0 %v1786
        %2878 = vmatpush.msra.mxu0 %v1770
        %2879 = vmatpush.msra.mxu0 %v1754
        %2880 = vmatpush.msra.mxu0 %v1738
        %2881 = vmatpush.msra.mxu0 %v1722
        %2882 = vmatpush.msra.mxu0 %v1706
        %2883 = vmatpush.msra.mxu0 %v1690
        %2884 = vmatpush.msra.mxu0 %v1674
        %2885 = vmatpush.msra.mxu0 %v1658
        %2886 = vmatpush.msra.mxu0 %v1642
        %2887 = vmatpush.msra.mxu0 %v1626
        %2888 = vmatpush.msra.mxu0 %v1610
        %2889 = vmatpush.msra.mxu0 %v1594
        %2890 = vmatpush.msra.mxu0 %v1578
        %2891 = vmatmul.f32.gmra.mxu0 %v1571
        %v2892 = vpop.f32.mrf.mxu0
        %v2893 = vadd.f32 %v2606, %v2892
        %2894 = vdwg.mxu0
        %2895 = vmatpush.msra.mxu0 %v2074
        %2896 = vmatpush.msra.mxu0 %v2058
        %2897 = vmatpush.msra.mxu0 %v2042
        %2898 = vmatpush.msra.mxu0 %v2026
        %2899 = vmatpush.msra.mxu0 %v2010
        %2900 = vmatpush.msra.mxu0 %v1994
        %2901 = vmatpush.msra.mxu0 %v1978
        %2902 = vmatpush.msra.mxu0 %v1962
        %2903 = vmatpush.msra.mxu0 %v1946
        %2904 = vmatpush.msra.mxu0 %v1930
        %2905 = vmatpush.msra.mxu0 %v1914
        %2906 = vmatpush.msra.mxu0 %v1898
        %2907 = vmatpush.msra.mxu0 %v1882
        %2908 = vmatpush.msra.mxu0 %v1866
        %2909 = vmatpush.msra.mxu0 %v1850
        %2910 = vmatpush.msra.mxu0 %v1834
        %2911 = vmatmul.f32.gmra.mxu0 %v1572
        %v2912 = vpop.f32.mrf.mxu0
        %v2913 = vadd.f32 %v2893, %v2912
        %2914 = vdwg.mxu0
        %2915 = vmatpush.msra.mxu0 %v2330
        %2916 = vmatpush.msra.mxu0 %v2314
        %2917 = vmatpush.msra.mxu0 %v2298
        %2918 = vmatpush.msra.mxu0 %v2282
        %2919 = vmatpush.msra.mxu0 %v2266
        %2920 = vmatpush.msra.mxu0 %v2250
        %2921 = vmatpush.msra.mxu0 %v2234
        %2922 = vmatpush.msra.mxu0 %v2218
        %2923 = vmatpush.msra.mxu0 %v2202
        %2924 = vmatpush.msra.mxu0 %v2186
        %2925 = vmatpush.msra.mxu0 %v2170
        %2926 = vmatpush.msra.mxu0 %v2154
        %2927 = vmatpush.msra.mxu0 %v2138
        %2928 = vmatpush.msra.mxu0 %v2122
        %2929 = vmatpush.msra.mxu0 %v2106
        %2930 = vmatpush.msra.mxu0 %v2090
        %2931 = vmatmul.f32.gmra.mxu0 %v1573
        %v2932 = vpop.f32.mrf.mxu0
        %v2933 = vadd.f32 %v2913, %v2932
        %2934 = vdwg.mxu0
        %2935 = vmatpush.msra.mxu0 %v2586
        %2936 = vmatpush.msra.mxu0 %v2570
        %2937 = vmatpush.msra.mxu0 %v2554
        %2938 = vmatpush.msra.mxu0 %v2538
        %2939 = vmatpush.msra.mxu0 %v2522
        %2940 = vmatpush.msra.mxu0 %v2506
        %2941 = vmatpush.msra.mxu0 %v2490
        %2942 = vmatpush.msra.mxu0 %v2474
        %2943 = vmatpush.msra.mxu0 %v2458
        %2944 = vmatpush.msra.mxu0 %v2442
        %2945 = vmatpush.msra.mxu0 %v2426
        %2946 = vmatpush.msra.mxu0 %v2410
        %2947 = vmatpush.msra.mxu0 %v2394
        %2948 = vmatpush.msra.mxu0 %v2378
        %2949 = vmatpush.msra.mxu0 %v2362
        %2950 = vmatpush.msra.mxu0 %v2346
        %2951 = vmatmul.f32.gmra.mxu0 %v1574
        %v2952 = vpop.f32.mrf.mxu0
        %v2953 = vadd.f32 %v2933, %v2952
        %2954 = vdwg.mxu0
        %2955 = vmatpush.msra.mxu0 %v1819
        %2956 = vmatpush.msra.mxu0 %v1803
        %2957 = vmatpush.msra.mxu0 %v1787
        %2958 = vmatpush.msra.mxu0 %v1771
        %2959 = vmatpush.msra.mxu0 %v1755
        %2960 = vmatpush.msra.mxu0 %v1739
        %2961 = vmatpush.msra.mxu0 %v1723
        %2962 = vmatpush.msra.mxu0 %v1707
        %2963 = vmatpush.msra.mxu0 %v1691
        %2964 = vmatpush.msra.mxu0 %v1675
        %2965 = vmatpush.msra.mxu0 %v1659
        %2966 = vmatpush.msra.mxu0 %v1643
        %2967 = vmatpush.msra.mxu0 %v1627
        %2968 = vmatpush.msra.mxu0 %v1611
        %2969 = vmatpush.msra.mxu0 %v1595
        %2970 = vmatpush.msra.mxu0 %v1579
        %2971 = vmatmul.f32.gmra.mxu0 %v1571
        %v2972 = vpop.f32.mrf.mxu0
        %v2973 = vadd.f32 %v2607, %v2972
        %2974 = vdwg.mxu0
        %2975 = vmatpush.msra.mxu0 %v2075
        %2976 = vmatpush.msra.mxu0 %v2059
        %2977 = vmatpush.msra.mxu0 %v2043
        %2978 = vmatpush.msra.mxu0 %v2027
        %2979 = vmatpush.msra.mxu0 %v2011
        %2980 = vmatpush.msra.mxu0 %v1995
        %2981 = vmatpush.msra.mxu0 %v1979
        %2982 = vmatpush.msra.mxu0 %v1963
        %2983 = vmatpush.msra.mxu0 %v1947
        %2984 = vmatpush.msra.mxu0 %v1931
        %2985 = vmatpush.msra.mxu0 %v1915
        %2986 = vmatpush.msra.mxu0 %v1899
        %2987 = vmatpush.msra.mxu0 %v1883
        %2988 = vmatpush.msra.mxu0 %v1867
        %2989 = vmatpush.msra.mxu0 %v1851
        %2990 = vmatpush.msra.mxu0 %v1835
        %2991 = vmatmul.f32.gmra.mxu0 %v1572
        %v2992 = vpop.f32.mrf.mxu0
        %v2993 = vadd.f32 %v2973, %v2992
        %2994 = vdwg.mxu0
        %2995 = vmatpush.msra.mxu0 %v2331
        %2996 = vmatpush.msra.mxu0 %v2315
        %2997 = vmatpush.msra.mxu0 %v2299
        %2998 = vmatpush.msra.mxu0 %v2283
        %2999 = vmatpush.msra.mxu0 %v2267
        %3000 = vmatpush.msra.mxu0 %v2251
        %3001 = vmatpush.msra.mxu0 %v2235
        %3002 = vmatpush.msra.mxu0 %v2219
        %3003 = vmatpush.msra.mxu0 %v2203
        %3004 = vmatpush.msra.mxu0 %v2187
        %3005 = vmatpush.msra.mxu0 %v2171
        %3006 = vmatpush.msra.mxu0 %v2155
        %3007 = vmatpush.msra.mxu0 %v2139
        %3008 = vmatpush.msra.mxu0 %v2123
        %3009 = vmatpush.msra.mxu0 %v2107
        %3010 = vmatpush.msra.mxu0 %v2091
        %3011 = vmatmul.f32.gmra.mxu0 %v1573
        %v3012 = vpop.f32.mrf.mxu0
        %v3013 = vadd.f32 %v2993, %v3012
        %3014 = vdwg.mxu0
        %3015 = vmatpush.msra.mxu0 %v2587
        %3016 = vmatpush.msra.mxu0 %v2571
        %3017 = vmatpush.msra.mxu0 %v2555
        %3018 = vmatpush.msra.mxu0 %v2539
        %3019 = vmatpush.msra.mxu0 %v2523
        %3020 = vmatpush.msra.mxu0 %v2507
        %3021 = vmatpush.msra.mxu0 %v2491
        %3022 = vmatpush.msra.mxu0 %v2475
        %3023 = vmatpush.msra.mxu0 %v2459
        %3024 = vmatpush.msra.mxu0 %v2443
        %3025 = vmatpush.msra.mxu0 %v2427
        %3026 = vmatpush.msra.mxu0 %v2411
        %3027 = vmatpush.msra.mxu0 %v2395
        %3028 = vmatpush.msra.mxu0 %v2379
        %3029 = vmatpush.msra.mxu0 %v2363
        %3030 = vmatpush.msra.mxu0 %v2347
        %3031 = vmatmul.f32.gmra.mxu0 %v1574
        %v3032 = vpop.f32.mrf.mxu0
        %v3033 = vadd.f32 %v3013, %v3032
        %3034 = vdwg.mxu0
        %3035 = vmatpush.msra.mxu0 %v1820
        %3036 = vmatpush.msra.mxu0 %v1804
        %3037 = vmatpush.msra.mxu0 %v1788
        %3038 = vmatpush.msra.mxu0 %v1772
        %3039 = vmatpush.msra.mxu0 %v1756
        %3040 = vmatpush.msra.mxu0 %v1740
        %3041 = vmatpush.msra.mxu0 %v1724
        %3042 = vmatpush.msra.mxu0 %v1708
        %3043 = vmatpush.msra.mxu0 %v1692
        %3044 = vmatpush.msra.mxu0 %v1676
        %3045 = vmatpush.msra.mxu0 %v1660
        %3046 = vmatpush.msra.mxu0 %v1644
        %3047 = vmatpush.msra.mxu0 %v1628
        %3048 = vmatpush.msra.mxu0 %v1612
        %3049 = vmatpush.msra.mxu0 %v1596
        %3050 = vmatpush.msra.mxu0 %v1580
        %3051 = vmatmul.f32.gmra.mxu0 %v1571
        %v3052 = vpop.f32.mrf.mxu0
        %v3053 = vadd.f32 %v2608, %v3052
        %3054 = vdwg.mxu0
        %3055 = vmatpush.msra.mxu0 %v2076
        %3056 = vmatpush.msra.mxu0 %v2060
        %3057 = vmatpush.msra.mxu0 %v2044
        %3058 = vmatpush.msra.mxu0 %v2028
        %3059 = vmatpush.msra.mxu0 %v2012
        %3060 = vmatpush.msra.mxu0 %v1996
        %3061 = vmatpush.msra.mxu0 %v1980
        %3062 = vmatpush.msra.mxu0 %v1964
        %3063 = vmatpush.msra.mxu0 %v1948
        %3064 = vmatpush.msra.mxu0 %v1932
        %3065 = vmatpush.msra.mxu0 %v1916
        %3066 = vmatpush.msra.mxu0 %v1900
        %3067 = vmatpush.msra.mxu0 %v1884
        %3068 = vmatpush.msra.mxu0 %v1868
        %3069 = vmatpush.msra.mxu0 %v1852
        %3070 = vmatpush.msra.mxu0 %v1836
        %3071 = vmatmul.f32.gmra.mxu0 %v1572
        %v3072 = vpop.f32.mrf.mxu0
        %v3073 = vadd.f32 %v3053, %v3072
        %3074 = vdwg.mxu0
        %3075 = vmatpush.msra.mxu0 %v2332
        %3076 = vmatpush.msra.mxu0 %v2316
        %3077 = vmatpush.msra.mxu0 %v2300
        %3078 = vmatpush.msra.mxu0 %v2284
        %3079 = vmatpush.msra.mxu0 %v2268
        %3080 = vmatpush.msra.mxu0 %v2252
        %3081 = vmatpush.msra.mxu0 %v2236
        %3082 = vmatpush.msra.mxu0 %v2220
        %3083 = vmatpush.msra.mxu0 %v2204
        %3084 = vmatpush.msra.mxu0 %v2188
        %3085 = vmatpush.msra.mxu0 %v2172
        %3086 = vmatpush.msra.mxu0 %v2156
        %3087 = vmatpush.msra.mxu0 %v2140
        %3088 = vmatpush.msra.mxu0 %v2124
        %3089 = vmatpush.msra.mxu0 %v2108
        %3090 = vmatpush.msra.mxu0 %v2092
        %3091 = vmatmul.f32.gmra.mxu0 %v1573
        %v3092 = vpop.f32.mrf.mxu0
        %v3093 = vadd.f32 %v3073, %v3092
        %3094 = vdwg.mxu0
        %3095 = vmatpush.msra.mxu0 %v2588
        %3096 = vmatpush.msra.mxu0 %v2572
        %3097 = vmatpush.msra.mxu0 %v2556
        %3098 = vmatpush.msra.mxu0 %v2540
        %3099 = vmatpush.msra.mxu0 %v2524
        %3100 = vmatpush.msra.mxu0 %v2508
        %3101 = vmatpush.msra.mxu0 %v2492
        %3102 = vmatpush.msra.mxu0 %v2476
        %3103 = vmatpush.msra.mxu0 %v2460
        %3104 = vmatpush.msra.mxu0 %v2444
        %3105 = vmatpush.msra.mxu0 %v2428
        %3106 = vmatpush.msra.mxu0 %v2412
        %3107 = vmatpush.msra.mxu0 %v2396
        %3108 = vmatpush.msra.mxu0 %v2380
        %3109 = vmatpush.msra.mxu0 %v2364
        %3110 = vmatpush.msra.mxu0 %v2348
        %3111 = vmatmul.f32.gmra.mxu0 %v1574
        %v3112 = vpop.f32.mrf.mxu0
        %v3113 = vadd.f32 %v3093, %v3112
        %3114 = vdwg.mxu0
        %3115 = vmatpush.msra.mxu0 %v1821
        %3116 = vmatpush.msra.mxu0 %v1805
        %3117 = vmatpush.msra.mxu0 %v1789
        %3118 = vmatpush.msra.mxu0 %v1773
        %3119 = vmatpush.msra.mxu0 %v1757
        %3120 = vmatpush.msra.mxu0 %v1741
        %3121 = vmatpush.msra.mxu0 %v1725
        %3122 = vmatpush.msra.mxu0 %v1709
        %3123 = vmatpush.msra.mxu0 %v1693
        %3124 = vmatpush.msra.mxu0 %v1677
        %3125 = vmatpush.msra.mxu0 %v1661
        %3126 = vmatpush.msra.mxu0 %v1645
        %3127 = vmatpush.msra.mxu0 %v1629
        %3128 = vmatpush.msra.mxu0 %v1613
        %3129 = vmatpush.msra.mxu0 %v1597
        %3130 = vmatpush.msra.mxu0 %v1581
        %3131 = vmatmul.f32.gmra.mxu0 %v1571
        %v3132 = vpop.f32.mrf.mxu0
        %v3133 = vadd.f32 %v2609, %v3132
        %3134 = vdwg.mxu0
        %3135 = vmatpush.msra.mxu0 %v2077
        %3136 = vmatpush.msra.mxu0 %v2061
        %3137 = vmatpush.msra.mxu0 %v2045
        %3138 = vmatpush.msra.mxu0 %v2029
        %3139 = vmatpush.msra.mxu0 %v2013
        %3140 = vmatpush.msra.mxu0 %v1997
        %3141 = vmatpush.msra.mxu0 %v1981
        %3142 = vmatpush.msra.mxu0 %v1965
        %3143 = vmatpush.msra.mxu0 %v1949
        %3144 = vmatpush.msra.mxu0 %v1933
        %3145 = vmatpush.msra.mxu0 %v1917
        %3146 = vmatpush.msra.mxu0 %v1901
        %3147 = vmatpush.msra.mxu0 %v1885
        %3148 = vmatpush.msra.mxu0 %v1869
        %3149 = vmatpush.msra.mxu0 %v1853
        %3150 = vmatpush.msra.mxu0 %v1837
        %3151 = vmatmul.f32.gmra.mxu0 %v1572
        %v3152 = vpop.f32.mrf.mxu0
        %v3153 = vadd.f32 %v3133, %v3152
        %3154 = vdwg.mxu0
        %3155 = vmatpush.msra.mxu0 %v2333
        %3156 = vmatpush.msra.mxu0 %v2317
        %3157 = vmatpush.msra.mxu0 %v2301
        %3158 = vmatpush.msra.mxu0 %v2285
        %3159 = vmatpush.msra.mxu0 %v2269
        %3160 = vmatpush.msra.mxu0 %v2253
        %3161 = vmatpush.msra.mxu0 %v2237
        %3162 = vmatpush.msra.mxu0 %v2221
        %3163 = vmatpush.msra.mxu0 %v2205
        %3164 = vmatpush.msra.mxu0 %v2189
        %3165 = vmatpush.msra.mxu0 %v2173
        %3166 = vmatpush.msra.mxu0 %v2157
        %3167 = vmatpush.msra.mxu0 %v2141
        %3168 = vmatpush.msra.mxu0 %v2125
        %3169 = vmatpush.msra.mxu0 %v2109
        %3170 = vmatpush.msra.mxu0 %v2093
        %3171 = vmatmul.f32.gmra.mxu0 %v1573
        %v3172 = vpop.f32.mrf.mxu0
        %v3173 = vadd.f32 %v3153, %v3172
        %3174 = vdwg.mxu0
        %3175 = vmatpush.msra.mxu0 %v2589
        %3176 = vmatpush.msra.mxu0 %v2573
        %3177 = vmatpush.msra.mxu0 %v2557
        %3178 = vmatpush.msra.mxu0 %v2541
        %3179 = vmatpush.msra.mxu0 %v2525
        %3180 = vmatpush.msra.mxu0 %v2509
        %3181 = vmatpush.msra.mxu0 %v2493
        %3182 = vmatpush.msra.mxu0 %v2477
        %3183 = vmatpush.msra.mxu0 %v2461
        %3184 = vmatpush.msra.mxu0 %v2445
        %3185 = vmatpush.msra.mxu0 %v2429
        %3186 = vmatpush.msra.mxu0 %v2413
        %3187 = vmatpush.msra.mxu0 %v2397
        %3188 = vmatpush.msra.mxu0 %v2381
        %3189 = vmatpush.msra.mxu0 %v2365
        %3190 = vmatpush.msra.mxu0 %v2349
        %3191 = vmatmul.f32.gmra.mxu0 %v1574
        %v3192 = vpop.f32.mrf.mxu0
        %v3193 = vadd.f32 %v3173, %v3192
        %3194 = vdwg.mxu0
        %3195 = vmatpush.msra.mxu0 %v1822
        %3196 = vmatpush.msra.mxu0 %v1806
        %3197 = vmatpush.msra.mxu0 %v1790
        %3198 = vmatpush.msra.mxu0 %v1774
        %3199 = vmatpush.msra.mxu0 %v1758
        %3200 = vmatpush.msra.mxu0 %v1742
        %3201 = vmatpush.msra.mxu0 %v1726
        %3202 = vmatpush.msra.mxu0 %v1710
        %3203 = vmatpush.msra.mxu0 %v1694
        %3204 = vmatpush.msra.mxu0 %v1678
        %3205 = vmatpush.msra.mxu0 %v1662
        %3206 = vmatpush.msra.mxu0 %v1646
        %3207 = vmatpush.msra.mxu0 %v1630
        %3208 = vmatpush.msra.mxu0 %v1614
        %3209 = vmatpush.msra.mxu0 %v1598
        %3210 = vmatpush.msra.mxu0 %v1582
        %3211 = vmatmul.f32.gmra.mxu0 %v1571
        %v3212 = vpop.f32.mrf.mxu0
        %v3213 = vadd.f32 %v2610, %v3212
        %3214 = vdwg.mxu0
        %3215 = vmatpush.msra.mxu0 %v2078
        %3216 = vmatpush.msra.mxu0 %v2062
        %3217 = vmatpush.msra.mxu0 %v2046
        %3218 = vmatpush.msra.mxu0 %v2030
        %3219 = vmatpush.msra.mxu0 %v2014
        %3220 = vmatpush.msra.mxu0 %v1998
        %3221 = vmatpush.msra.mxu0 %v1982
        %3222 = vmatpush.msra.mxu0 %v1966
        %3223 = vmatpush.msra.mxu0 %v1950
        %3224 = vmatpush.msra.mxu0 %v1934
        %3225 = vmatpush.msra.mxu0 %v1918
        %3226 = vmatpush.msra.mxu0 %v1902
        %3227 = vmatpush.msra.mxu0 %v1886
        %3228 = vmatpush.msra.mxu0 %v1870
        %3229 = vmatpush.msra.mxu0 %v1854
        %3230 = vmatpush.msra.mxu0 %v1838
        %3231 = vmatmul.f32.gmra.mxu0 %v1572
        %v3232 = vpop.f32.mrf.mxu0
        %v3233 = vadd.f32 %v3213, %v3232
        %3234 = vdwg.mxu0
        %3235 = vmatpush.msra.mxu0 %v2334
        %3236 = vmatpush.msra.mxu0 %v2318
        %3237 = vmatpush.msra.mxu0 %v2302
        %3238 = vmatpush.msra.mxu0 %v2286
        %3239 = vmatpush.msra.mxu0 %v2270
        %3240 = vmatpush.msra.mxu0 %v2254
        %3241 = vmatpush.msra.mxu0 %v2238
        %3242 = vmatpush.msra.mxu0 %v2222
        %3243 = vmatpush.msra.mxu0 %v2206
        %3244 = vmatpush.msra.mxu0 %v2190
        %3245 = vmatpush.msra.mxu0 %v2174
        %3246 = vmatpush.msra.mxu0 %v2158
        %3247 = vmatpush.msra.mxu0 %v2142
        %3248 = vmatpush.msra.mxu0 %v2126
        %3249 = vmatpush.msra.mxu0 %v2110
        %3250 = vmatpush.msra.mxu0 %v2094
        %3251 = vmatmul.f32.gmra.mxu0 %v1573
        %v3252 = vpop.f32.mrf.mxu0
        %v3253 = vadd.f32 %v3233, %v3252
        %3254 = vdwg.mxu0
        %3255 = vmatpush.msra.mxu0 %v2590
        %3256 = vmatpush.msra.mxu0 %v2574
        %3257 = vmatpush.msra.mxu0 %v2558
        %3258 = vmatpush.msra.mxu0 %v2542
        %3259 = vmatpush.msra.mxu0 %v2526
        %3260 = vmatpush.msra.mxu0 %v2510
        %3261 = vmatpush.msra.mxu0 %v2494
        %3262 = vmatpush.msra.mxu0 %v2478
        %3263 = vmatpush.msra.mxu0 %v2462
        %3264 = vmatpush.msra.mxu0 %v2446
        %3265 = vmatpush.msra.mxu0 %v2430
        %3266 = vmatpush.msra.mxu0 %v2414
        %3267 = vmatpush.msra.mxu0 %v2398
        %3268 = vmatpush.msra.mxu0 %v2382
        %3269 = vmatpush.msra.mxu0 %v2366
        %3270 = vmatpush.msra.mxu0 %v2350
        %3271 = vmatmul.f32.gmra.mxu0 %v1574
        %v3272 = vpop.f32.mrf.mxu0
        %v3273 = vadd.f32 %v3253, %v3272
        %3274 = vdwg.mxu0
        %3275 = vmatpush.msra.mxu0 %v1823
        %3276 = vmatpush.msra.mxu0 %v1807
        %3277 = vmatpush.msra.mxu0 %v1791
        %3278 = vmatpush.msra.mxu0 %v1775
        %3279 = vmatpush.msra.mxu0 %v1759
        %3280 = vmatpush.msra.mxu0 %v1743
        %3281 = vmatpush.msra.mxu0 %v1727
        %3282 = vmatpush.msra.mxu0 %v1711
        %3283 = vmatpush.msra.mxu0 %v1695
        %3284 = vmatpush.msra.mxu0 %v1679
        %3285 = vmatpush.msra.mxu0 %v1663
        %3286 = vmatpush.msra.mxu0 %v1647
        %3287 = vmatpush.msra.mxu0 %v1631
        %3288 = vmatpush.msra.mxu0 %v1615
        %3289 = vmatpush.msra.mxu0 %v1599
        %3290 = vmatpush.msra.mxu0 %v1583
        %3291 = vmatmul.f32.gmra.mxu0 %v1571
        %v3292 = vpop.f32.mrf.mxu0
        %v3293 = vadd.f32 %v2611, %v3292
        %3294 = vdwg.mxu0
        %3295 = vmatpush.msra.mxu0 %v2079
        %3296 = vmatpush.msra.mxu0 %v2063
        %3297 = vmatpush.msra.mxu0 %v2047
        %3298 = vmatpush.msra.mxu0 %v2031
        %3299 = vmatpush.msra.mxu0 %v2015
        %3300 = vmatpush.msra.mxu0 %v1999
        %3301 = vmatpush.msra.mxu0 %v1983
        %3302 = vmatpush.msra.mxu0 %v1967
        %3303 = vmatpush.msra.mxu0 %v1951
        %3304 = vmatpush.msra.mxu0 %v1935
        %3305 = vmatpush.msra.mxu0 %v1919
        %3306 = vmatpush.msra.mxu0 %v1903
        %3307 = vmatpush.msra.mxu0 %v1887
        %3308 = vmatpush.msra.mxu0 %v1871
        %3309 = vmatpush.msra.mxu0 %v1855
        %3310 = vmatpush.msra.mxu0 %v1839
        %3311 = vmatmul.f32.gmra.mxu0 %v1572
        %v3312 = vpop.f32.mrf.mxu0
        %v3313 = vadd.f32 %v3293, %v3312
        %3314 = vdwg.mxu0
        %3315 = vmatpush.msra.mxu0 %v2335
        %3316 = vmatpush.msra.mxu0 %v2319
        %3317 = vmatpush.msra.mxu0 %v2303
        %3318 = vmatpush.msra.mxu0 %v2287
        %3319 = vmatpush.msra.mxu0 %v2271
        %3320 = vmatpush.msra.mxu0 %v2255
        %3321 = vmatpush.msra.mxu0 %v2239
        %3322 = vmatpush.msra.mxu0 %v2223
        %3323 = vmatpush.msra.mxu0 %v2207
        %3324 = vmatpush.msra.mxu0 %v2191
        %3325 = vmatpush.msra.mxu0 %v2175
        %3326 = vmatpush.msra.mxu0 %v2159
        %3327 = vmatpush.msra.mxu0 %v2143
        %3328 = vmatpush.msra.mxu0 %v2127
        %3329 = vmatpush.msra.mxu0 %v2111
        %3330 = vmatpush.msra.mxu0 %v2095
        %3331 = vmatmul.f32.gmra.mxu0 %v1573
        %v3332 = vpop.f32.mrf.mxu0
        %v3333 = vadd.f32 %v3313, %v3332
        %3334 = vdwg.mxu0
        %3335 = vmatpush.msra.mxu0 %v2591
        %3336 = vmatpush.msra.mxu0 %v2575
        %3337 = vmatpush.msra.mxu0 %v2559
        %3338 = vmatpush.msra.mxu0 %v2543
        %3339 = vmatpush.msra.mxu0 %v2527
        %3340 = vmatpush.msra.mxu0 %v2511
        %3341 = vmatpush.msra.mxu0 %v2495
        %3342 = vmatpush.msra.mxu0 %v2479
        %3343 = vmatpush.msra.mxu0 %v2463
        %3344 = vmatpush.msra.mxu0 %v2447
        %3345 = vmatpush.msra.mxu0 %v2431
        %3346 = vmatpush.msra.mxu0 %v2415
        %3347 = vmatpush.msra.mxu0 %v2399
        %3348 = vmatpush.msra.mxu0 %v2383
        %3349 = vmatpush.msra.mxu0 %v2367
        %3350 = vmatpush.msra.mxu0 %v2351
        %3351 = vmatmul.f32.gmra.mxu0 %v1574
        %v3352 = vpop.f32.mrf.mxu0
        %v3353 = vadd.f32 %v3333, %v3352
        %3354 = vdwg.mxu0
        %3355 = vmatpush.msra.mxu0 %v1824
        %3356 = vmatpush.msra.mxu0 %v1808
        %3357 = vmatpush.msra.mxu0 %v1792
        %3358 = vmatpush.msra.mxu0 %v1776
        %3359 = vmatpush.msra.mxu0 %v1760
        %3360 = vmatpush.msra.mxu0 %v1744
        %3361 = vmatpush.msra.mxu0 %v1728
        %3362 = vmatpush.msra.mxu0 %v1712
        %3363 = vmatpush.msra.mxu0 %v1696
        %3364 = vmatpush.msra.mxu0 %v1680
        %3365 = vmatpush.msra.mxu0 %v1664
        %3366 = vmatpush.msra.mxu0 %v1648
        %3367 = vmatpush.msra.mxu0 %v1632
        %3368 = vmatpush.msra.mxu0 %v1616
        %3369 = vmatpush.msra.mxu0 %v1600
        %3370 = vmatpush.msra.mxu0 %v1584
        %3371 = vmatmul.f32.gmra.mxu0 %v1571
        %v3372 = vpop.f32.mrf.mxu0
        %v3373 = vadd.f32 %v2612, %v3372
        %3374 = vdwg.mxu0
        %3375 = vmatpush.msra.mxu0 %v2080
        %3376 = vmatpush.msra.mxu0 %v2064
        %3377 = vmatpush.msra.mxu0 %v2048
        %3378 = vmatpush.msra.mxu0 %v2032
        %3379 = vmatpush.msra.mxu0 %v2016
        %3380 = vmatpush.msra.mxu0 %v2000
        %3381 = vmatpush.msra.mxu0 %v1984
        %3382 = vmatpush.msra.mxu0 %v1968
        %3383 = vmatpush.msra.mxu0 %v1952
        %3384 = vmatpush.msra.mxu0 %v1936
        %3385 = vmatpush.msra.mxu0 %v1920
        %3386 = vmatpush.msra.mxu0 %v1904
        %3387 = vmatpush.msra.mxu0 %v1888
        %3388 = vmatpush.msra.mxu0 %v1872
        %3389 = vmatpush.msra.mxu0 %v1856
        %3390 = vmatpush.msra.mxu0 %v1840
        %3391 = vmatmul.f32.gmra.mxu0 %v1572
        %v3392 = vpop.f32.mrf.mxu0
        %v3393 = vadd.f32 %v3373, %v3392
        %3394 = vdwg.mxu0
        %3395 = vmatpush.msra.mxu0 %v2336
        %3396 = vmatpush.msra.mxu0 %v2320
        %3397 = vmatpush.msra.mxu0 %v2304
        %3398 = vmatpush.msra.mxu0 %v2288
        %3399 = vmatpush.msra.mxu0 %v2272
        %3400 = vmatpush.msra.mxu0 %v2256
        %3401 = vmatpush.msra.mxu0 %v2240
        %3402 = vmatpush.msra.mxu0 %v2224
        %3403 = vmatpush.msra.mxu0 %v2208
        %3404 = vmatpush.msra.mxu0 %v2192
        %3405 = vmatpush.msra.mxu0 %v2176
        %3406 = vmatpush.msra.mxu0 %v2160
        %3407 = vmatpush.msra.mxu0 %v2144
        %3408 = vmatpush.msra.mxu0 %v2128
        %3409 = vmatpush.msra.mxu0 %v2112
        %3410 = vmatpush.msra.mxu0 %v2096
        %3411 = vmatmul.f32.gmra.mxu0 %v1573
        %v3412 = vpop.f32.mrf.mxu0
        %v3413 = vadd.f32 %v3393, %v3412
        %3414 = vdwg.mxu0
        %3415 = vmatpush.msra.mxu0 %v2592
        %3416 = vmatpush.msra.mxu0 %v2576
        %3417 = vmatpush.msra.mxu0 %v2560
        %3418 = vmatpush.msra.mxu0 %v2544
        %3419 = vmatpush.msra.mxu0 %v2528
        %3420 = vmatpush.msra.mxu0 %v2512
        %3421 = vmatpush.msra.mxu0 %v2496
        %3422 = vmatpush.msra.mxu0 %v2480
        %3423 = vmatpush.msra.mxu0 %v2464
        %3424 = vmatpush.msra.mxu0 %v2448
        %3425 = vmatpush.msra.mxu0 %v2432
        %3426 = vmatpush.msra.mxu0 %v2416
        %3427 = vmatpush.msra.mxu0 %v2400
        %3428 = vmatpush.msra.mxu0 %v2384
        %3429 = vmatpush.msra.mxu0 %v2368
        %3430 = vmatpush.msra.mxu0 %v2352
        %3431 = vmatmul.f32.gmra.mxu0 %v1574
        %v3432 = vpop.f32.mrf.mxu0
        %v3433 = vadd.f32 %v3413, %v3432
        %3434 = vdwg.mxu0
        %3435 = vmatpush.msra.mxu0 %v1825
        %3436 = vmatpush.msra.mxu0 %v1809
        %3437 = vmatpush.msra.mxu0 %v1793
        %3438 = vmatpush.msra.mxu0 %v1777
        %3439 = vmatpush.msra.mxu0 %v1761
        %3440 = vmatpush.msra.mxu0 %v1745
        %3441 = vmatpush.msra.mxu0 %v1729
        %3442 = vmatpush.msra.mxu0 %v1713
        %3443 = vmatpush.msra.mxu0 %v1697
        %3444 = vmatpush.msra.mxu0 %v1681
        %3445 = vmatpush.msra.mxu0 %v1665
        %3446 = vmatpush.msra.mxu0 %v1649
        %3447 = vmatpush.msra.mxu0 %v1633
        %3448 = vmatpush.msra.mxu0 %v1617
        %3449 = vmatpush.msra.mxu0 %v1601
        %3450 = vmatpush.msra.mxu0 %v1585
        %3451 = vmatmul.f32.gmra.mxu0 %v1571
        %v3452 = vpop.f32.mrf.mxu0
        %v3453 = vadd.f32 %v2613, %v3452
        %3454 = vdwg.mxu0
        %3455 = vmatpush.msra.mxu0 %v2081
        %3456 = vmatpush.msra.mxu0 %v2065
        %3457 = vmatpush.msra.mxu0 %v2049
        %3458 = vmatpush.msra.mxu0 %v2033
        %3459 = vmatpush.msra.mxu0 %v2017
        %3460 = vmatpush.msra.mxu0 %v2001
        %3461 = vmatpush.msra.mxu0 %v1985
        %3462 = vmatpush.msra.mxu0 %v1969
        %3463 = vmatpush.msra.mxu0 %v1953
        %3464 = vmatpush.msra.mxu0 %v1937
        %3465 = vmatpush.msra.mxu0 %v1921
        %3466 = vmatpush.msra.mxu0 %v1905
        %3467 = vmatpush.msra.mxu0 %v1889
        %3468 = vmatpush.msra.mxu0 %v1873
        %3469 = vmatpush.msra.mxu0 %v1857
        %3470 = vmatpush.msra.mxu0 %v1841
        %3471 = vmatmul.f32.gmra.mxu0 %v1572
        %v3472 = vpop.f32.mrf.mxu0
        %v3473 = vadd.f32 %v3453, %v3472
        %3474 = vdwg.mxu0
        %3475 = vmatpush.msra.mxu0 %v2337
        %3476 = vmatpush.msra.mxu0 %v2321
        %3477 = vmatpush.msra.mxu0 %v2305
        %3478 = vmatpush.msra.mxu0 %v2289
        %3479 = vmatpush.msra.mxu0 %v2273
        %3480 = vmatpush.msra.mxu0 %v2257
        %3481 = vmatpush.msra.mxu0 %v2241
        %3482 = vmatpush.msra.mxu0 %v2225
        %3483 = vmatpush.msra.mxu0 %v2209
        %3484 = vmatpush.msra.mxu0 %v2193
        %3485 = vmatpush.msra.mxu0 %v2177
        %3486 = vmatpush.msra.mxu0 %v2161
        %3487 = vmatpush.msra.mxu0 %v2145
        %3488 = vmatpush.msra.mxu0 %v2129
        %3489 = vmatpush.msra.mxu0 %v2113
        %3490 = vmatpush.msra.mxu0 %v2097
        %3491 = vmatmul.f32.gmra.mxu0 %v1573
        %v3492 = vpop.f32.mrf.mxu0
        %v3493 = vadd.f32 %v3473, %v3492
        %3494 = vdwg.mxu0
        %3495 = vmatpush.msra.mxu0 %v2593
        %3496 = vmatpush.msra.mxu0 %v2577
        %3497 = vmatpush.msra.mxu0 %v2561
        %3498 = vmatpush.msra.mxu0 %v2545
        %3499 = vmatpush.msra.mxu0 %v2529
        %3500 = vmatpush.msra.mxu0 %v2513
        %3501 = vmatpush.msra.mxu0 %v2497
        %3502 = vmatpush.msra.mxu0 %v2481
        %3503 = vmatpush.msra.mxu0 %v2465
        %3504 = vmatpush.msra.mxu0 %v2449
        %3505 = vmatpush.msra.mxu0 %v2433
        %3506 = vmatpush.msra.mxu0 %v2417
        %3507 = vmatpush.msra.mxu0 %v2401
        %3508 = vmatpush.msra.mxu0 %v2385
        %3509 = vmatpush.msra.mxu0 %v2369
        %3510 = vmatpush.msra.mxu0 %v2353
        %3511 = vmatmul.f32.gmra.mxu0 %v1574
        %v3512 = vpop.f32.mrf.mxu0
        %v3513 = vadd.f32 %v3493, %v3512
        %3514 = vdwg.mxu0
        %3515 = vmatpush.msra.mxu0 %v1826
        %3516 = vmatpush.msra.mxu0 %v1810
        %3517 = vmatpush.msra.mxu0 %v1794
        %3518 = vmatpush.msra.mxu0 %v1778
        %3519 = vmatpush.msra.mxu0 %v1762
        %3520 = vmatpush.msra.mxu0 %v1746
        %3521 = vmatpush.msra.mxu0 %v1730
        %3522 = vmatpush.msra.mxu0 %v1714
        %3523 = vmatpush.msra.mxu0 %v1698
        %3524 = vmatpush.msra.mxu0 %v1682
        %3525 = vmatpush.msra.mxu0 %v1666
        %3526 = vmatpush.msra.mxu0 %v1650
        %3527 = vmatpush.msra.mxu0 %v1634
        %3528 = vmatpush.msra.mxu0 %v1618
        %3529 = vmatpush.msra.mxu0 %v1602
        %3530 = vmatpush.msra.mxu0 %v1586
        %3531 = vmatmul.f32.gmra.mxu0 %v1571
        %v3532 = vpop.f32.mrf.mxu0
        %v3533 = vadd.f32 %v2614, %v3532
        %3534 = vdwg.mxu0
        %3535 = vmatpush.msra.mxu0 %v2082
        %3536 = vmatpush.msra.mxu0 %v2066
        %3537 = vmatpush.msra.mxu0 %v2050
        %3538 = vmatpush.msra.mxu0 %v2034
        %3539 = vmatpush.msra.mxu0 %v2018
        %3540 = vmatpush.msra.mxu0 %v2002
        %3541 = vmatpush.msra.mxu0 %v1986
        %3542 = vmatpush.msra.mxu0 %v1970
        %3543 = vmatpush.msra.mxu0 %v1954
        %3544 = vmatpush.msra.mxu0 %v1938
        %3545 = vmatpush.msra.mxu0 %v1922
        %3546 = vmatpush.msra.mxu0 %v1906
        %3547 = vmatpush.msra.mxu0 %v1890
        %3548 = vmatpush.msra.mxu0 %v1874
        %3549 = vmatpush.msra.mxu0 %v1858
        %3550 = vmatpush.msra.mxu0 %v1842
        %3551 = vmatmul.f32.gmra.mxu0 %v1572
        %v3552 = vpop.f32.mrf.mxu0
        %v3553 = vadd.f32 %v3533, %v3552
        %3554 = vdwg.mxu0
        %3555 = vmatpush.msra.mxu0 %v2338
        %3556 = vmatpush.msra.mxu0 %v2322
        %3557 = vmatpush.msra.mxu0 %v2306
        %3558 = vmatpush.msra.mxu0 %v2290
        %3559 = vmatpush.msra.mxu0 %v2274
        %3560 = vmatpush.msra.mxu0 %v2258
        %3561 = vmatpush.msra.mxu0 %v2242
        %3562 = vmatpush.msra.mxu0 %v2226
        %3563 = vmatpush.msra.mxu0 %v2210
        %3564 = vmatpush.msra.mxu0 %v2194
        %3565 = vmatpush.msra.mxu0 %v2178
        %3566 = vmatpush.msra.mxu0 %v2162
        %3567 = vmatpush.msra.mxu0 %v2146
        %3568 = vmatpush.msra.mxu0 %v2130
        %3569 = vmatpush.msra.mxu0 %v2114
        %3570 = vmatpush.msra.mxu0 %v2098
        %3571 = vmatmul.f32.gmra.mxu0 %v1573
        %v3572 = vpop.f32.mrf.mxu0
        %v3573 = vadd.f32 %v3553, %v3572
        %3574 = vdwg.mxu0
        %3575 = vmatpush.msra.mxu0 %v2594
        %3576 = vmatpush.msra.mxu0 %v2578
        %3577 = vmatpush.msra.mxu0 %v2562
        %3578 = vmatpush.msra.mxu0 %v2546
        %3579 = vmatpush.msra.mxu0 %v2530
        %3580 = vmatpush.msra.mxu0 %v2514
        %3581 = vmatpush.msra.mxu0 %v2498
        %3582 = vmatpush.msra.mxu0 %v2482
        %3583 = vmatpush.msra.mxu0 %v2466
        %3584 = vmatpush.msra.mxu0 %v2450
        %3585 = vmatpush.msra.mxu0 %v2434
        %3586 = vmatpush.msra.mxu0 %v2418
        %3587 = vmatpush.msra.mxu0 %v2402
        %3588 = vmatpush.msra.mxu0 %v2386
        %3589 = vmatpush.msra.mxu0 %v2370
        %3590 = vmatpush.msra.mxu0 %v2354
        %3591 = vmatmul.f32.gmra.mxu0 %v1574
        %v3592 = vpop.f32.mrf.mxu0
        %v3593 = vadd.f32 %v3573, %v3592
        %3594 = vdwg.mxu0
        %3595 = vmatpush.msra.mxu0 %v1827
        %3596 = vmatpush.msra.mxu0 %v1811
        %3597 = vmatpush.msra.mxu0 %v1795
        %3598 = vmatpush.msra.mxu0 %v1779
        %3599 = vmatpush.msra.mxu0 %v1763
        %3600 = vmatpush.msra.mxu0 %v1747
        %3601 = vmatpush.msra.mxu0 %v1731
        %3602 = vmatpush.msra.mxu0 %v1715
        %3603 = vmatpush.msra.mxu0 %v1699
        %3604 = vmatpush.msra.mxu0 %v1683
        %3605 = vmatpush.msra.mxu0 %v1667
        %3606 = vmatpush.msra.mxu0 %v1651
        %3607 = vmatpush.msra.mxu0 %v1635
        %3608 = vmatpush.msra.mxu0 %v1619
        %3609 = vmatpush.msra.mxu0 %v1603
        %3610 = vmatpush.msra.mxu0 %v1587
        %3611 = vmatmul.f32.gmra.mxu0 %v1571
        %v3612 = vpop.f32.mrf.mxu0
        %v3613 = vadd.f32 %v2615, %v3612
        %3614 = vdwg.mxu0
        %3615 = vmatpush.msra.mxu0 %v2083
        %3616 = vmatpush.msra.mxu0 %v2067
        %3617 = vmatpush.msra.mxu0 %v2051
        %3618 = vmatpush.msra.mxu0 %v2035
        %3619 = vmatpush.msra.mxu0 %v2019
        %3620 = vmatpush.msra.mxu0 %v2003
        %3621 = vmatpush.msra.mxu0 %v1987
        %3622 = vmatpush.msra.mxu0 %v1971
        %3623 = vmatpush.msra.mxu0 %v1955
        %3624 = vmatpush.msra.mxu0 %v1939
        %3625 = vmatpush.msra.mxu0 %v1923
        %3626 = vmatpush.msra.mxu0 %v1907
        %3627 = vmatpush.msra.mxu0 %v1891
        %3628 = vmatpush.msra.mxu0 %v1875
        %3629 = vmatpush.msra.mxu0 %v1859
        %3630 = vmatpush.msra.mxu0 %v1843
        %3631 = vmatmul.f32.gmra.mxu0 %v1572
        %v3632 = vpop.f32.mrf.mxu0
        %v3633 = vadd.f32 %v3613, %v3632
        %3634 = vdwg.mxu0
        %3635 = vmatpush.msra.mxu0 %v2339
        %3636 = vmatpush.msra.mxu0 %v2323
        %3637 = vmatpush.msra.mxu0 %v2307
        %3638 = vmatpush.msra.mxu0 %v2291
        %3639 = vmatpush.msra.mxu0 %v2275
        %3640 = vmatpush.msra.mxu0 %v2259
        %3641 = vmatpush.msra.mxu0 %v2243
        %3642 = vmatpush.msra.mxu0 %v2227
        %3643 = vmatpush.msra.mxu0 %v2211
        %3644 = vmatpush.msra.mxu0 %v2195
        %3645 = vmatpush.msra.mxu0 %v2179
        %3646 = vmatpush.msra.mxu0 %v2163
        %3647 = vmatpush.msra.mxu0 %v2147
        %3648 = vmatpush.msra.mxu0 %v2131
        %3649 = vmatpush.msra.mxu0 %v2115
        %3650 = vmatpush.msra.mxu0 %v2099
        %3651 = vmatmul.f32.gmra.mxu0 %v1573
        %v3652 = vpop.f32.mrf.mxu0
        %v3653 = vadd.f32 %v3633, %v3652
        %3654 = vdwg.mxu0
        %3655 = vmatpush.msra.mxu0 %v2595
        %3656 = vmatpush.msra.mxu0 %v2579
        %3657 = vmatpush.msra.mxu0 %v2563
        %3658 = vmatpush.msra.mxu0 %v2547
        %3659 = vmatpush.msra.mxu0 %v2531
        %3660 = vmatpush.msra.mxu0 %v2515
        %3661 = vmatpush.msra.mxu0 %v2499
        %3662 = vmatpush.msra.mxu0 %v2483
        %3663 = vmatpush.msra.mxu0 %v2467
        %3664 = vmatpush.msra.mxu0 %v2451
        %3665 = vmatpush.msra.mxu0 %v2435
        %3666 = vmatpush.msra.mxu0 %v2419
        %3667 = vmatpush.msra.mxu0 %v2403
        %3668 = vmatpush.msra.mxu0 %v2387
        %3669 = vmatpush.msra.mxu0 %v2371
        %3670 = vmatpush.msra.mxu0 %v2355
        %3671 = vmatmul.f32.gmra.mxu0 %v1574
        %v3672 = vpop.f32.mrf.mxu0
        %v3673 = vadd.f32 %v3653, %v3672
        %3674 = vdwg.mxu0
        %3675 = vmatpush.msra.mxu0 %v1828
        %3676 = vmatpush.msra.mxu0 %v1812
        %3677 = vmatpush.msra.mxu0 %v1796
        %3678 = vmatpush.msra.mxu0 %v1780
        %3679 = vmatpush.msra.mxu0 %v1764
        %3680 = vmatpush.msra.mxu0 %v1748
        %3681 = vmatpush.msra.mxu0 %v1732
        %3682 = vmatpush.msra.mxu0 %v1716
        %3683 = vmatpush.msra.mxu0 %v1700
        %3684 = vmatpush.msra.mxu0 %v1684
        %3685 = vmatpush.msra.mxu0 %v1668
        %3686 = vmatpush.msra.mxu0 %v1652
        %3687 = vmatpush.msra.mxu0 %v1636
        %3688 = vmatpush.msra.mxu0 %v1620
        %3689 = vmatpush.msra.mxu0 %v1604
        %3690 = vmatpush.msra.mxu0 %v1588
        %3691 = vmatmul.f32.gmra.mxu0 %v1571
        %v3692 = vpop.f32.mrf.mxu0
        %v3693 = vadd.f32 %v2616, %v3692
        %3694 = vdwg.mxu0
        %3695 = vmatpush.msra.mxu0 %v2084
        %3696 = vmatpush.msra.mxu0 %v2068
        %3697 = vmatpush.msra.mxu0 %v2052
        %3698 = vmatpush.msra.mxu0 %v2036
        %3699 = vmatpush.msra.mxu0 %v2020
        %3700 = vmatpush.msra.mxu0 %v2004
        %3701 = vmatpush.msra.mxu0 %v1988
        %3702 = vmatpush.msra.mxu0 %v1972
        %3703 = vmatpush.msra.mxu0 %v1956
        %3704 = vmatpush.msra.mxu0 %v1940
        %3705 = vmatpush.msra.mxu0 %v1924
        %3706 = vmatpush.msra.mxu0 %v1908
        %3707 = vmatpush.msra.mxu0 %v1892
        %3708 = vmatpush.msra.mxu0 %v1876
        %3709 = vmatpush.msra.mxu0 %v1860
        %3710 = vmatpush.msra.mxu0 %v1844
        %3711 = vmatmul.f32.gmra.mxu0 %v1572
        %v3712 = vpop.f32.mrf.mxu0
        %v3713 = vadd.f32 %v3693, %v3712
        %3714 = vdwg.mxu0
        %3715 = vmatpush.msra.mxu0 %v2340
        %3716 = vmatpush.msra.mxu0 %v2324
        %3717 = vmatpush.msra.mxu0 %v2308
        %3718 = vmatpush.msra.mxu0 %v2292
        %3719 = vmatpush.msra.mxu0 %v2276
        %3720 = vmatpush.msra.mxu0 %v2260
        %3721 = vmatpush.msra.mxu0 %v2244
        %3722 = vmatpush.msra.mxu0 %v2228
        %3723 = vmatpush.msra.mxu0 %v2212
        %3724 = vmatpush.msra.mxu0 %v2196
        %3725 = vmatpush.msra.mxu0 %v2180
        %3726 = vmatpush.msra.mxu0 %v2164
        %3727 = vmatpush.msra.mxu0 %v2148
        %3728 = vmatpush.msra.mxu0 %v2132
        %3729 = vmatpush.msra.mxu0 %v2116
        %3730 = vmatpush.msra.mxu0 %v2100
        %3731 = vmatmul.f32.gmra.mxu0 %v1573
        %v3732 = vpop.f32.mrf.mxu0
        %v3733 = vadd.f32 %v3713, %v3732
        %3734 = vdwg.mxu0
        %3735 = vmatpush.msra.mxu0 %v2596
        %3736 = vmatpush.msra.mxu0 %v2580
        %3737 = vmatpush.msra.mxu0 %v2564
        %3738 = vmatpush.msra.mxu0 %v2548
        %3739 = vmatpush.msra.mxu0 %v2532
        %3740 = vmatpush.msra.mxu0 %v2516
        %3741 = vmatpush.msra.mxu0 %v2500
        %3742 = vmatpush.msra.mxu0 %v2484
        %3743 = vmatpush.msra.mxu0 %v2468
        %3744 = vmatpush.msra.mxu0 %v2452
        %3745 = vmatpush.msra.mxu0 %v2436
        %3746 = vmatpush.msra.mxu0 %v2420
        %3747 = vmatpush.msra.mxu0 %v2404
        %3748 = vmatpush.msra.mxu0 %v2388
        %3749 = vmatpush.msra.mxu0 %v2372
        %3750 = vmatpush.msra.mxu0 %v2356
        %3751 = vmatmul.f32.gmra.mxu0 %v1574
        %v3752 = vpop.f32.mrf.mxu0
        %v3753 = vadd.f32 %v3733, %v3752
        %3754 = vdwg.mxu0
        %3755 = vmatpush.msra.mxu0 %v1829
        %3756 = vmatpush.msra.mxu0 %v1813
        %3757 = vmatpush.msra.mxu0 %v1797
        %3758 = vmatpush.msra.mxu0 %v1781
        %3759 = vmatpush.msra.mxu0 %v1765
        %3760 = vmatpush.msra.mxu0 %v1749
        %3761 = vmatpush.msra.mxu0 %v1733
        %3762 = vmatpush.msra.mxu0 %v1717
        %3763 = vmatpush.msra.mxu0 %v1701
        %3764 = vmatpush.msra.mxu0 %v1685
        %3765 = vmatpush.msra.mxu0 %v1669
        %3766 = vmatpush.msra.mxu0 %v1653
        %3767 = vmatpush.msra.mxu0 %v1637
        %3768 = vmatpush.msra.mxu0 %v1621
        %3769 = vmatpush.msra.mxu0 %v1605
        %3770 = vmatpush.msra.mxu0 %v1589
        %3771 = vmatmul.f32.gmra.mxu0 %v1571
        %v3772 = vpop.f32.mrf.mxu0
        %v3773 = vadd.f32 %v2617, %v3772
        %3774 = vdwg.mxu0
        %3775 = vmatpush.msra.mxu0 %v2085
        %3776 = vmatpush.msra.mxu0 %v2069
        %3777 = vmatpush.msra.mxu0 %v2053
        %3778 = vmatpush.msra.mxu0 %v2037
        %3779 = vmatpush.msra.mxu0 %v2021
        %3780 = vmatpush.msra.mxu0 %v2005
        %3781 = vmatpush.msra.mxu0 %v1989
        %3782 = vmatpush.msra.mxu0 %v1973
        %3783 = vmatpush.msra.mxu0 %v1957
        %3784 = vmatpush.msra.mxu0 %v1941
        %3785 = vmatpush.msra.mxu0 %v1925
        %3786 = vmatpush.msra.mxu0 %v1909
        %3787 = vmatpush.msra.mxu0 %v1893
        %3788 = vmatpush.msra.mxu0 %v1877
        %3789 = vmatpush.msra.mxu0 %v1861
        %3790 = vmatpush.msra.mxu0 %v1845
        %3791 = vmatmul.f32.gmra.mxu0 %v1572
        %v3792 = vpop.f32.mrf.mxu0
        %v3793 = vadd.f32 %v3773, %v3792
        %3794 = vdwg.mxu0
        %3795 = vmatpush.msra.mxu0 %v2341
        %3796 = vmatpush.msra.mxu0 %v2325
        %3797 = vmatpush.msra.mxu0 %v2309
        %3798 = vmatpush.msra.mxu0 %v2293
        %3799 = vmatpush.msra.mxu0 %v2277
        %3800 = vmatpush.msra.mxu0 %v2261
        %3801 = vmatpush.msra.mxu0 %v2245
        %3802 = vmatpush.msra.mxu0 %v2229
        %3803 = vmatpush.msra.mxu0 %v2213
        %3804 = vmatpush.msra.mxu0 %v2197
        %3805 = vmatpush.msra.mxu0 %v2181
        %3806 = vmatpush.msra.mxu0 %v2165
        %3807 = vmatpush.msra.mxu0 %v2149
        %3808 = vmatpush.msra.mxu0 %v2133
        %3809 = vmatpush.msra.mxu0 %v2117
        %3810 = vmatpush.msra.mxu0 %v2101
        %3811 = vmatmul.f32.gmra.mxu0 %v1573
        %v3812 = vpop.f32.mrf.mxu0
        %v3813 = vadd.f32 %v3793, %v3812
        %3814 = vdwg.mxu0
        %3815 = vmatpush.msra.mxu0 %v2597
        %3816 = vmatpush.msra.mxu0 %v2581
        %3817 = vmatpush.msra.mxu0 %v2565
        %3818 = vmatpush.msra.mxu0 %v2549
        %3819 = vmatpush.msra.mxu0 %v2533
        %3820 = vmatpush.msra.mxu0 %v2517
        %3821 = vmatpush.msra.mxu0 %v2501
        %3822 = vmatpush.msra.mxu0 %v2485
        %3823 = vmatpush.msra.mxu0 %v2469
        %3824 = vmatpush.msra.mxu0 %v2453
        %3825 = vmatpush.msra.mxu0 %v2437
        %3826 = vmatpush.msra.mxu0 %v2421
        %3827 = vmatpush.msra.mxu0 %v2405
        %3828 = vmatpush.msra.mxu0 %v2389
        %3829 = vmatpush.msra.mxu0 %v2373
        %3830 = vmatpush.msra.mxu0 %v2357
        %3831 = vmatmul.f32.gmra.mxu0 %v1574
        %v3832 = vpop.f32.mrf.mxu0
        %v3833 = vadd.f32 %v3813, %v3832
        %3834 = vdwg.mxu0
        %3835 = vmatpush.msra.mxu0 %v1830
        %3836 = vmatpush.msra.mxu0 %v1814
        %3837 = vmatpush.msra.mxu0 %v1798
        %3838 = vmatpush.msra.mxu0 %v1782
        %3839 = vmatpush.msra.mxu0 %v1766
        %3840 = vmatpush.msra.mxu0 %v1750
        %3841 = vmatpush.msra.mxu0 %v1734
        %3842 = vmatpush.msra.mxu0 %v1718
        %3843 = vmatpush.msra.mxu0 %v1702
        %3844 = vmatpush.msra.mxu0 %v1686
        %3845 = vmatpush.msra.mxu0 %v1670
        %3846 = vmatpush.msra.mxu0 %v1654
        %3847 = vmatpush.msra.mxu0 %v1638
        %3848 = vmatpush.msra.mxu0 %v1622
        %3849 = vmatpush.msra.mxu0 %v1606
        %3850 = vmatpush.msra.mxu0 %v1590
        %3851 = vmatmul.f32.gmra.mxu0 %v1571
        %v3852 = vpop.f32.mrf.mxu0
        %v3853 = vadd.f32 %v2618, %v3852
        %3854 = vdwg.mxu0
        %3855 = vmatpush.msra.mxu0 %v2086
        %3856 = vmatpush.msra.mxu0 %v2070
        %3857 = vmatpush.msra.mxu0 %v2054
        %3858 = vmatpush.msra.mxu0 %v2038
        %3859 = vmatpush.msra.mxu0 %v2022
        %3860 = vmatpush.msra.mxu0 %v2006
        %3861 = vmatpush.msra.mxu0 %v1990
        %3862 = vmatpush.msra.mxu0 %v1974
        %3863 = vmatpush.msra.mxu0 %v1958
        %3864 = vmatpush.msra.mxu0 %v1942
        %3865 = vmatpush.msra.mxu0 %v1926
        %3866 = vmatpush.msra.mxu0 %v1910
        %3867 = vmatpush.msra.mxu0 %v1894
        %3868 = vmatpush.msra.mxu0 %v1878
        %3869 = vmatpush.msra.mxu0 %v1862
        %3870 = vmatpush.msra.mxu0 %v1846
        %3871 = vmatmul.f32.gmra.mxu0 %v1572
        %v3872 = vpop.f32.mrf.mxu0
        %v3873 = vadd.f32 %v3853, %v3872
        %3874 = vdwg.mxu0
        %3875 = vmatpush.msra.mxu0 %v2342
        %3876 = vmatpush.msra.mxu0 %v2326
        %3877 = vmatpush.msra.mxu0 %v2310
        %3878 = vmatpush.msra.mxu0 %v2294
        %3879 = vmatpush.msra.mxu0 %v2278
        %3880 = vmatpush.msra.mxu0 %v2262
        %3881 = vmatpush.msra.mxu0 %v2246
        %3882 = vmatpush.msra.mxu0 %v2230
        %3883 = vmatpush.msra.mxu0 %v2214
        %3884 = vmatpush.msra.mxu0 %v2198
        %3885 = vmatpush.msra.mxu0 %v2182
        %3886 = vmatpush.msra.mxu0 %v2166
        %3887 = vmatpush.msra.mxu0 %v2150
        %3888 = vmatpush.msra.mxu0 %v2134
        %3889 = vmatpush.msra.mxu0 %v2118
        %3890 = vmatpush.msra.mxu0 %v2102
        %3891 = vmatmul.f32.gmra.mxu0 %v1573
        %v3892 = vpop.f32.mrf.mxu0
        %v3893 = vadd.f32 %v3873, %v3892
        %3894 = vdwg.mxu0
        %3895 = vmatpush.msra.mxu0 %v2598
        %3896 = vmatpush.msra.mxu0 %v2582
        %3897 = vmatpush.msra.mxu0 %v2566
        %3898 = vmatpush.msra.mxu0 %v2550
        %3899 = vmatpush.msra.mxu0 %v2534
        %3900 = vmatpush.msra.mxu0 %v2518
        %3901 = vmatpush.msra.mxu0 %v2502
        %3902 = vmatpush.msra.mxu0 %v2486
        %3903 = vmatpush.msra.mxu0 %v2470
        %3904 = vmatpush.msra.mxu0 %v2454
        %3905 = vmatpush.msra.mxu0 %v2438
        %3906 = vmatpush.msra.mxu0 %v2422
        %3907 = vmatpush.msra.mxu0 %v2406
        %3908 = vmatpush.msra.mxu0 %v2390
        %3909 = vmatpush.msra.mxu0 %v2374
        %3910 = vmatpush.msra.mxu0 %v2358
        %3911 = vmatmul.f32.gmra.mxu0 %v1574
        %v3912 = vpop.f32.mrf.mxu0
        %v3913 = vadd.f32 %v3893, %v3912
        %3914 = vdwg.mxu0
        %vm3915 = vcmp.gt.f32.partialorder %v2713, 0.0
        %vm3916 = vcmp.gt.f32.partialorder %v2793, 0.0
        %vm3917 = vcmp.gt.f32.partialorder %v2873, 0.0
        %vm3918 = vcmp.gt.f32.partialorder %v2953, 0.0
        %vm3919 = vcmp.gt.f32.partialorder %v3033, 0.0
        %vm3920 = vcmp.gt.f32.partialorder %v3113, 0.0
        %vm3921 = vcmp.gt.f32.partialorder %v3193, 0.0
        %vm3922 = vcmp.gt.f32.partialorder %v3273, 0.0
        %vm3923 = vcmp.gt.f32.partialorder %v3353, 0.0
        %vm3924 = vcmp.gt.f32.partialorder %v3433, 0.0
        %vm3925 = vcmp.gt.f32.partialorder %v3513, 0.0
        %vm3926 = vcmp.gt.f32.partialorder %v3593, 0.0
        %vm3927 = vcmp.gt.f32.partialorder %v3673, 0.0
        %vm3928 = vcmp.gt.f32.partialorder %v3753, 0.0
        %vm3929 = vcmp.gt.f32.partialorder %v3833, 0.0
        %vm3930 = vcmp.gt.f32.partialorder %v3913, 0.0
        %v3931 = vmul.f32 %v2713, 0.01
        %v3932 = vmul.f32 %v2793, 0.01
        %v3933 = vmul.f32 %v2873, 0.01
        %v3934 = vmul.f32 %v2953, 0.01
        %v3935 = vmul.f32 %v3033, 0.01
        %v3936 = vmul.f32 %v3113, 0.01
        %v3937 = vmul.f32 %v3193, 0.01
        %v3938 = vmul.f32 %v3273, 0.01
        %v3939 = vmul.f32 %v3353, 0.01
        %v3940 = vmul.f32 %v3433, 0.01
        %v3941 = vmul.f32 %v3513, 0.01
        %v3942 = vmul.f32 %v3593, 0.01
        %v3943 = vmul.f32 %v3673, 0.01
        %v3944 = vmul.f32 %v3753, 0.01
        %v3945 = vmul.f32 %v3833, 0.01
        %v3946 = vmul.f32 %v3913, 0.01
        %v3947 = vsel %vm3915, %v2713, %v3931
        %v3948 = vsel %vm3916, %v2793, %v3932
        %v3949 = vsel %vm3917, %v2873, %v3933
        %v3950 = vsel %vm3918, %v2953, %v3934
        %v3951 = vsel %vm3919, %v3033, %v3935
        %v3952 = vsel %vm3920, %v3113, %v3936
        %v3953 = vsel %vm3921, %v3193, %v3937
        %v3954 = vsel %vm3922, %v3273, %v3938
        %v3955 = vsel %vm3923, %v3353, %v3939
        %v3956 = vsel %vm3924, %v3433, %v3940
        %v3957 = vsel %vm3925, %v3513, %v3941
        %v3958 = vsel %vm3926, %v3593, %v3942
        %v3959 = vsel %vm3927, %v3673, %v3943
        %v3960 = vsel %vm3928, %v3753, %v3944
        %v3961 = vsel %vm3929, %v3833, %v3945
        %v3962 = vsel %vm3930, %v3913, %v3946
        %v3963 = vld [vmem:[#allocation13] sm:$0xff]
        %v3964 = vld [vmem:[#allocation13 + $0x8] sm:$0xff]
        %v3965 = vld [vmem:[#allocation13 + $0x10] sm:$0xff]
        %v3966 = vld [vmem:[#allocation13 + $0x18] sm:$0xff]
        %v3967 = vld [vmem:[#allocation13 + $0x20] sm:$0xff]
        %v3968 = vld [vmem:[#allocation13 + $0x28] sm:$0xff]
        %v3969 = vld [vmem:[#allocation13 + $0x30] sm:$0xff]
        %v3970 = vld [vmem:[#allocation13 + $0x38] sm:$0xff]
        %v3971 = vld [vmem:[#allocation13 + $0x40] sm:$0xff]
        %v3972 = vld [vmem:[#allocation13 + $0x48] sm:$0xff]
        %v3973 = vld [vmem:[#allocation13 + $0x50] sm:$0xff]
        %v3974 = vld [vmem:[#allocation13 + $0x58] sm:$0xff]
        %v3975 = vld [vmem:[#allocation13 + $0x60] sm:$0xff]
        %v3976 = vld [vmem:[#allocation13 + $0x68] sm:$0xff]
        %v3977 = vld [vmem:[#allocation13 + $0x70] sm:$0xff]
        %v3978 = vld [vmem:[#allocation13 + $0x78] sm:$0xff]
        %v3979 = vld [vmem:[#allocation13 + $0x80] sm:$0xff]
        %v3980 = vld [vmem:[#allocation13 + $0x88] sm:$0xff]
        %v3981 = vld [vmem:[#allocation13 + $0x90] sm:$0xff]
        %v3982 = vld [vmem:[#allocation13 + $0x98] sm:$0xff]
        %v3983 = vld [vmem:[#allocation13 + $0xa0] sm:$0xff]
        %v3984 = vld [vmem:[#allocation13 + $0xa8] sm:$0xff]
        %v3985 = vld [vmem:[#allocation13 + $0xb0] sm:$0xff]
        %v3986 = vld [vmem:[#allocation13 + $0xb8] sm:$0xff]
        %v3987 = vld [vmem:[#allocation13 + $0xc0] sm:$0xff]
        %v3988 = vld [vmem:[#allocation13 + $0xc8] sm:$0xff]
        %v3989 = vld [vmem:[#allocation13 + $0xd0] sm:$0xff]
        %v3990 = vld [vmem:[#allocation13 + $0xd8] sm:$0xff]
        %v3991 = vld [vmem:[#allocation13 + $0xe0] sm:$0xff]
        %v3992 = vld [vmem:[#allocation13 + $0xe8] sm:$0xff]
        %v3993 = vld [vmem:[#allocation13 + $0xf0] sm:$0xff]
        %v3994 = vld [vmem:[#allocation13 + $0xf8] sm:$0xff]
        %v3995 = vld [vmem:[#allocation13 + $0x100] sm:$0xff]
        %v3996 = vld [vmem:[#allocation13 + $0x108] sm:$0xff]
        %v3997 = vld [vmem:[#allocation13 + $0x110] sm:$0xff]
        %v3998 = vld [vmem:[#allocation13 + $0x118] sm:$0xff]
        %v3999 = vld [vmem:[#allocation13 + $0x120] sm:$0xff]
        %v4000 = vld [vmem:[#allocation13 + $0x128] sm:$0xff]
        %v4001 = vld [vmem:[#allocation13 + $0x130] sm:$0xff]
        %v4002 = vld [vmem:[#allocation13 + $0x138] sm:$0xff]
        %v4003 = vld [vmem:[#allocation13 + $0x140] sm:$0xff]
        %v4004 = vld [vmem:[#allocation13 + $0x148] sm:$0xff]
        %v4005 = vld [vmem:[#allocation13 + $0x150] sm:$0xff]
        %v4006 = vld [vmem:[#allocation13 + $0x158] sm:$0xff]
        %v4007 = vld [vmem:[#allocation13 + $0x160] sm:$0xff]
        %v4008 = vld [vmem:[#allocation13 + $0x168] sm:$0xff]
        %v4009 = vld [vmem:[#allocation13 + $0x170] sm:$0xff]
        %v4010 = vld [vmem:[#allocation13 + $0x178] sm:$0xff]
        %v4011 = vld [vmem:[#allocation13 + $0x180] sm:$0xff]
        %v4012 = vld [vmem:[#allocation13 + $0x188] sm:$0xff]
        %v4013 = vld [vmem:[#allocation13 + $0x190] sm:$0xff]
        %v4014 = vld [vmem:[#allocation13 + $0x198] sm:$0xff]
        %v4015 = vld [vmem:[#allocation13 + $0x1a0] sm:$0xff]
        %v4016 = vld [vmem:[#allocation13 + $0x1a8] sm:$0xff]
        %v4017 = vld [vmem:[#allocation13 + $0x1b0] sm:$0xff]
        %v4018 = vld [vmem:[#allocation13 + $0x1b8] sm:$0xff]
        %v4019 = vld [vmem:[#allocation13 + $0x1c0] sm:$0xff]
        %v4020 = vld [vmem:[#allocation13 + $0x1c8] sm:$0xff]
        %v4021 = vld [vmem:[#allocation13 + $0x1d0] sm:$0xff]
        %v4022 = vld [vmem:[#allocation13 + $0x1d8] sm:$0xff]
        %v4023 = vld [vmem:[#allocation13 + $0x1e0] sm:$0xff]
        %v4024 = vld [vmem:[#allocation13 + $0x1e8] sm:$0xff]
        %v4025 = vld [vmem:[#allocation13 + $0x1f0] sm:$0xff]
        %v4026 = vld [vmem:[#allocation13 + $0x1f8] sm:$0xff]
        %v4027 = vld [vmem:[#allocation13 + $0x200] sm:$0xff]
        %v4028 = vld [vmem:[#allocation13 + $0x208] sm:$0xff]
        %v4029 = vld [vmem:[#allocation13 + $0x210] sm:$0xff]
        %v4030 = vld [vmem:[#allocation13 + $0x218] sm:$0xff]
        %v4031 = vld [vmem:[#allocation13 + $0x220] sm:$0xff]
        %v4032 = vld [vmem:[#allocation13 + $0x228] sm:$0xff]
        %v4033 = vld [vmem:[#allocation13 + $0x230] sm:$0xff]
        %v4034 = vld [vmem:[#allocation13 + $0x238] sm:$0xff]
        %v4035 = vld [vmem:[#allocation13 + $0x240] sm:$0xff]
        %v4036 = vld [vmem:[#allocation13 + $0x248] sm:$0xff]
        %v4037 = vld [vmem:[#allocation13 + $0x250] sm:$0xff]
        %v4038 = vld [vmem:[#allocation13 + $0x258] sm:$0xff]
        %v4039 = vld [vmem:[#allocation13 + $0x260] sm:$0xff]
        %v4040 = vld [vmem:[#allocation13 + $0x268] sm:$0xff]
        %v4041 = vld [vmem:[#allocation13 + $0x270] sm:$0xff]
        %v4042 = vld [vmem:[#allocation13 + $0x278] sm:$0xff]
        %v4043 = vld [vmem:[#allocation13 + $0x280] sm:$0xff]
        %v4044 = vld [vmem:[#allocation13 + $0x288] sm:$0xff]
        %v4045 = vld [vmem:[#allocation13 + $0x290] sm:$0xff]
        %v4046 = vld [vmem:[#allocation13 + $0x298] sm:$0xff]
        %v4047 = vld [vmem:[#allocation13 + $0x2a0] sm:$0xff]
        %v4048 = vld [vmem:[#allocation13 + $0x2a8] sm:$0xff]
        %v4049 = vld [vmem:[#allocation13 + $0x2b0] sm:$0xff]
        %v4050 = vld [vmem:[#allocation13 + $0x2b8] sm:$0xff]
        %v4051 = vld [vmem:[#allocation13 + $0x2c0] sm:$0xff]
        %v4052 = vld [vmem:[#allocation13 + $0x2c8] sm:$0xff]
        %v4053 = vld [vmem:[#allocation13 + $0x2d0] sm:$0xff]
        %v4054 = vld [vmem:[#allocation13 + $0x2d8] sm:$0xff]
        %v4055 = vld [vmem:[#allocation13 + $0x2e0] sm:$0xff]
        %v4056 = vld [vmem:[#allocation13 + $0x2e8] sm:$0xff]
        %v4057 = vld [vmem:[#allocation13 + $0x2f0] sm:$0xff]
        %v4058 = vld [vmem:[#allocation13 + $0x2f8] sm:$0xff]
        %v4059 = vld [vmem:[#allocation13 + $0x300] sm:$0xff]
        %v4060 = vld [vmem:[#allocation13 + $0x308] sm:$0xff]
        %v4061 = vld [vmem:[#allocation13 + $0x310] sm:$0xff]
        %v4062 = vld [vmem:[#allocation13 + $0x318] sm:$0xff]
        %v4063 = vld [vmem:[#allocation13 + $0x320] sm:$0xff]
        %v4064 = vld [vmem:[#allocation13 + $0x328] sm:$0xff]
        %v4065 = vld [vmem:[#allocation13 + $0x330] sm:$0xff]
        %v4066 = vld [vmem:[#allocation13 + $0x338] sm:$0xff]
        %v4067 = vld [vmem:[#allocation13 + $0x340] sm:$0xff]
        %v4068 = vld [vmem:[#allocation13 + $0x348] sm:$0xff]
        %v4069 = vld [vmem:[#allocation13 + $0x350] sm:$0xff]
        %v4070 = vld [vmem:[#allocation13 + $0x358] sm:$0xff]
        %v4071 = vld [vmem:[#allocation13 + $0x360] sm:$0xff]
        %v4072 = vld [vmem:[#allocation13 + $0x368] sm:$0xff]
        %v4073 = vld [vmem:[#allocation13 + $0x370] sm:$0xff]
        %v4074 = vld [vmem:[#allocation13 + $0x378] sm:$0xff]
        %v4075 = vld [vmem:[#allocation13 + $0x380] sm:$0xff]
        %v4076 = vld [vmem:[#allocation13 + $0x388] sm:$0xff]
        %v4077 = vld [vmem:[#allocation13 + $0x390] sm:$0xff]
        %v4078 = vld [vmem:[#allocation13 + $0x398] sm:$0xff]
        %v4079 = vld [vmem:[#allocation13 + $0x3a0] sm:$0xff]
        %v4080 = vld [vmem:[#allocation13 + $0x3a8] sm:$0xff]
        %v4081 = vld [vmem:[#allocation13 + $0x3b0] sm:$0xff]
        %v4082 = vld [vmem:[#allocation13 + $0x3b8] sm:$0xff]
        %v4083 = vld [vmem:[#allocation13 + $0x3c0] sm:$0xff]
        %v4084 = vld [vmem:[#allocation13 + $0x3c8] sm:$0xff]
        %v4085 = vld [vmem:[#allocation13 + $0x3d0] sm:$0xff]
        %v4086 = vld [vmem:[#allocation13 + $0x3d8] sm:$0xff]
        %v4087 = vld [vmem:[#allocation13 + $0x3e0] sm:$0xff]
        %v4088 = vld [vmem:[#allocation13 + $0x3e8] sm:$0xff]
        %v4089 = vld [vmem:[#allocation13 + $0x3f0] sm:$0xff]
        %v4090 = vld [vmem:[#allocation13 + $0x3f8] sm:$0xff]
        %v4091 = vld [vmem:[#allocation13 + $0x400] sm:$0xff]
        %v4092 = vld [vmem:[#allocation13 + $0x408] sm:$0xff]
        %v4093 = vld [vmem:[#allocation13 + $0x410] sm:$0xff]
        %v4094 = vld [vmem:[#allocation13 + $0x418] sm:$0xff]
        %v4095 = vld [vmem:[#allocation13 + $0x420] sm:$0xff]
        %v4096 = vld [vmem:[#allocation13 + $0x428] sm:$0xff]
        %v4097 = vld [vmem:[#allocation13 + $0x430] sm:$0xff]
        %v4098 = vld [vmem:[#allocation13 + $0x438] sm:$0xff]
        %v4099 = vld [vmem:[#allocation13 + $0x440] sm:$0xff]
        %v4100 = vld [vmem:[#allocation13 + $0x448] sm:$0xff]
        %v4101 = vld [vmem:[#allocation13 + $0x450] sm:$0xff]
        %v4102 = vld [vmem:[#allocation13 + $0x458] sm:$0xff]
        %v4103 = vld [vmem:[#allocation13 + $0x460] sm:$0xff]
        %v4104 = vld [vmem:[#allocation13 + $0x468] sm:$0xff]
        %v4105 = vld [vmem:[#allocation13 + $0x470] sm:$0xff]
        %v4106 = vld [vmem:[#allocation13 + $0x478] sm:$0xff]
        %v4107 = vld [vmem:[#allocation13 + $0x480] sm:$0xff]
        %v4108 = vld [vmem:[#allocation13 + $0x488] sm:$0xff]
        %v4109 = vld [vmem:[#allocation13 + $0x490] sm:$0xff]
        %v4110 = vld [vmem:[#allocation13 + $0x498] sm:$0xff]
        %v4111 = vld [vmem:[#allocation13 + $0x4a0] sm:$0xff]
        %v4112 = vld [vmem:[#allocation13 + $0x4a8] sm:$0xff]
        %v4113 = vld [vmem:[#allocation13 + $0x4b0] sm:$0xff]
        %v4114 = vld [vmem:[#allocation13 + $0x4b8] sm:$0xff]
        %v4115 = vld [vmem:[#allocation13 + $0x4c0] sm:$0xff]
        %v4116 = vld [vmem:[#allocation13 + $0x4c8] sm:$0xff]
        %v4117 = vld [vmem:[#allocation13 + $0x4d0] sm:$0xff]
        %v4118 = vld [vmem:[#allocation13 + $0x4d8] sm:$0xff]
        %v4119 = vld [vmem:[#allocation13 + $0x4e0] sm:$0xff]
        %v4120 = vld [vmem:[#allocation13 + $0x4e8] sm:$0xff]
        %v4121 = vld [vmem:[#allocation13 + $0x4f0] sm:$0xff]
        %v4122 = vld [vmem:[#allocation13 + $0x4f8] sm:$0xff]
        %v4123 = vld [vmem:[#allocation13 + $0x500] sm:$0xff]
        %v4124 = vld [vmem:[#allocation13 + $0x508] sm:$0xff]
        %v4125 = vld [vmem:[#allocation13 + $0x510] sm:$0xff]
        %v4126 = vld [vmem:[#allocation13 + $0x518] sm:$0xff]
        %v4127 = vld [vmem:[#allocation13 + $0x520] sm:$0xff]
        %v4128 = vld [vmem:[#allocation13 + $0x528] sm:$0xff]
        %v4129 = vld [vmem:[#allocation13 + $0x530] sm:$0xff]
        %v4130 = vld [vmem:[#allocation13 + $0x538] sm:$0xff]
        %v4131 = vld [vmem:[#allocation13 + $0x540] sm:$0xff]
        %v4132 = vld [vmem:[#allocation13 + $0x548] sm:$0xff]
        %v4133 = vld [vmem:[#allocation13 + $0x550] sm:$0xff]
        %v4134 = vld [vmem:[#allocation13 + $0x558] sm:$0xff]
        %v4135 = vld [vmem:[#allocation13 + $0x560] sm:$0xff]
        %v4136 = vld [vmem:[#allocation13 + $0x568] sm:$0xff]
        %v4137 = vld [vmem:[#allocation13 + $0x570] sm:$0xff]
        %v4138 = vld [vmem:[#allocation13 + $0x578] sm:$0xff]
        %v4139 = vld [vmem:[#allocation13 + $0x580] sm:$0xff]
        %v4140 = vld [vmem:[#allocation13 + $0x588] sm:$0xff]
        %v4141 = vld [vmem:[#allocation13 + $0x590] sm:$0xff]
        %v4142 = vld [vmem:[#allocation13 + $0x598] sm:$0xff]
        %v4143 = vld [vmem:[#allocation13 + $0x5a0] sm:$0xff]
        %v4144 = vld [vmem:[#allocation13 + $0x5a8] sm:$0xff]
        %v4145 = vld [vmem:[#allocation13 + $0x5b0] sm:$0xff]
        %v4146 = vld [vmem:[#allocation13 + $0x5b8] sm:$0xff]
        %v4147 = vld [vmem:[#allocation13 + $0x5c0] sm:$0xff]
        %v4148 = vld [vmem:[#allocation13 + $0x5c8] sm:$0xff]
        %v4149 = vld [vmem:[#allocation13 + $0x5d0] sm:$0xff]
        %v4150 = vld [vmem:[#allocation13 + $0x5d8] sm:$0xff]
        %v4151 = vld [vmem:[#allocation13 + $0x5e0] sm:$0xff]
        %v4152 = vld [vmem:[#allocation13 + $0x5e8] sm:$0xff]
        %v4153 = vld [vmem:[#allocation13 + $0x5f0] sm:$0xff]
        %v4154 = vld [vmem:[#allocation13 + $0x5f8] sm:$0xff]
        %v4155 = vld [vmem:[#allocation13 + $0x600] sm:$0xff]
        %v4156 = vld [vmem:[#allocation13 + $0x608] sm:$0xff]
        %v4157 = vld [vmem:[#allocation13 + $0x610] sm:$0xff]
        %v4158 = vld [vmem:[#allocation13 + $0x618] sm:$0xff]
        %v4159 = vld [vmem:[#allocation13 + $0x620] sm:$0xff]
        %v4160 = vld [vmem:[#allocation13 + $0x628] sm:$0xff]
        %v4161 = vld [vmem:[#allocation13 + $0x630] sm:$0xff]
        %v4162 = vld [vmem:[#allocation13 + $0x638] sm:$0xff]
        %v4163 = vld [vmem:[#allocation13 + $0x640] sm:$0xff]
        %v4164 = vld [vmem:[#allocation13 + $0x648] sm:$0xff]
        %v4165 = vld [vmem:[#allocation13 + $0x650] sm:$0xff]
        %v4166 = vld [vmem:[#allocation13 + $0x658] sm:$0xff]
        %v4167 = vld [vmem:[#allocation13 + $0x660] sm:$0xff]
        %v4168 = vld [vmem:[#allocation13 + $0x668] sm:$0xff]
        %v4169 = vld [vmem:[#allocation13 + $0x670] sm:$0xff]
        %v4170 = vld [vmem:[#allocation13 + $0x678] sm:$0xff]
        %v4171 = vld [vmem:[#allocation13 + $0x680] sm:$0xff]
        %v4172 = vld [vmem:[#allocation13 + $0x688] sm:$0xff]
        %v4173 = vld [vmem:[#allocation13 + $0x690] sm:$0xff]
        %v4174 = vld [vmem:[#allocation13 + $0x698] sm:$0xff]
        %v4175 = vld [vmem:[#allocation13 + $0x6a0] sm:$0xff]
        %v4176 = vld [vmem:[#allocation13 + $0x6a8] sm:$0xff]
        %v4177 = vld [vmem:[#allocation13 + $0x6b0] sm:$0xff]
        %v4178 = vld [vmem:[#allocation13 + $0x6b8] sm:$0xff]
        %v4179 = vld [vmem:[#allocation13 + $0x6c0] sm:$0xff]
        %v4180 = vld [vmem:[#allocation13 + $0x6c8] sm:$0xff]
        %v4181 = vld [vmem:[#allocation13 + $0x6d0] sm:$0xff]
        %v4182 = vld [vmem:[#allocation13 + $0x6d8] sm:$0xff]
        %v4183 = vld [vmem:[#allocation13 + $0x6e0] sm:$0xff]
        %v4184 = vld [vmem:[#allocation13 + $0x6e8] sm:$0xff]
        %v4185 = vld [vmem:[#allocation13 + $0x6f0] sm:$0xff]
        %v4186 = vld [vmem:[#allocation13 + $0x6f8] sm:$0xff]
        %v4187 = vld [vmem:[#allocation13 + $0x700] sm:$0xff]
        %v4188 = vld [vmem:[#allocation13 + $0x708] sm:$0xff]
        %v4189 = vld [vmem:[#allocation13 + $0x710] sm:$0xff]
        %v4190 = vld [vmem:[#allocation13 + $0x718] sm:$0xff]
        %v4191 = vld [vmem:[#allocation13 + $0x720] sm:$0xff]
        %v4192 = vld [vmem:[#allocation13 + $0x728] sm:$0xff]
        %v4193 = vld [vmem:[#allocation13 + $0x730] sm:$0xff]
        %v4194 = vld [vmem:[#allocation13 + $0x738] sm:$0xff]
        %v4195 = vld [vmem:[#allocation13 + $0x740] sm:$0xff]
        %v4196 = vld [vmem:[#allocation13 + $0x748] sm:$0xff]
        %v4197 = vld [vmem:[#allocation13 + $0x750] sm:$0xff]
        %v4198 = vld [vmem:[#allocation13 + $0x758] sm:$0xff]
        %v4199 = vld [vmem:[#allocation13 + $0x760] sm:$0xff]
        %v4200 = vld [vmem:[#allocation13 + $0x768] sm:$0xff]
        %v4201 = vld [vmem:[#allocation13 + $0x770] sm:$0xff]
        %v4202 = vld [vmem:[#allocation13 + $0x778] sm:$0xff]
        %v4203 = vld [vmem:[#allocation13 + $0x780] sm:$0xff]
        %v4204 = vld [vmem:[#allocation13 + $0x788] sm:$0xff]
        %v4205 = vld [vmem:[#allocation13 + $0x790] sm:$0xff]
        %v4206 = vld [vmem:[#allocation13 + $0x798] sm:$0xff]
        %v4207 = vld [vmem:[#allocation13 + $0x7a0] sm:$0xff]
        %v4208 = vld [vmem:[#allocation13 + $0x7a8] sm:$0xff]
        %v4209 = vld [vmem:[#allocation13 + $0x7b0] sm:$0xff]
        %v4210 = vld [vmem:[#allocation13 + $0x7b8] sm:$0xff]
        %v4211 = vld [vmem:[#allocation13 + $0x7c0] sm:$0xff]
        %v4212 = vld [vmem:[#allocation13 + $0x7c8] sm:$0xff]
        %v4213 = vld [vmem:[#allocation13 + $0x7d0] sm:$0xff]
        %v4214 = vld [vmem:[#allocation13 + $0x7d8] sm:$0xff]
        %v4215 = vld [vmem:[#allocation13 + $0x7e0] sm:$0xff]
        %v4216 = vld [vmem:[#allocation13 + $0x7e8] sm:$0xff]
        %v4217 = vld [vmem:[#allocation13 + $0x7f0] sm:$0xff]
        %v4218 = vld [vmem:[#allocation13 + $0x7f8] sm:$0xff]
        %v4219 = vld [vmem:[#allocation13 + $0x800] sm:$0xff]
        %v4220 = vld [vmem:[#allocation13 + $0x808] sm:$0xff]
        %v4221 = vld [vmem:[#allocation13 + $0x810] sm:$0xff]
        %v4222 = vld [vmem:[#allocation13 + $0x818] sm:$0xff]
        %v4223 = vld [vmem:[#allocation13 + $0x820] sm:$0xff]
        %v4224 = vld [vmem:[#allocation13 + $0x828] sm:$0xff]
        %v4225 = vld [vmem:[#allocation13 + $0x830] sm:$0xff]
        %v4226 = vld [vmem:[#allocation13 + $0x838] sm:$0xff]
        %v4227 = vld [vmem:[#allocation13 + $0x840] sm:$0xff]
        %v4228 = vld [vmem:[#allocation13 + $0x848] sm:$0xff]
        %v4229 = vld [vmem:[#allocation13 + $0x850] sm:$0xff]
        %v4230 = vld [vmem:[#allocation13 + $0x858] sm:$0xff]
        %v4231 = vld [vmem:[#allocation13 + $0x860] sm:$0xff]
        %v4232 = vld [vmem:[#allocation13 + $0x868] sm:$0xff]
        %v4233 = vld [vmem:[#allocation13 + $0x870] sm:$0xff]
        %v4234 = vld [vmem:[#allocation13 + $0x878] sm:$0xff]
        %v4235 = vld [vmem:[#allocation13 + $0x880] sm:$0xff]
        %v4236 = vld [vmem:[#allocation13 + $0x888] sm:$0xff]
        %v4237 = vld [vmem:[#allocation13 + $0x890] sm:$0xff]
        %v4238 = vld [vmem:[#allocation13 + $0x898] sm:$0xff]
        %v4239 = vld [vmem:[#allocation13 + $0x8a0] sm:$0xff]
        %v4240 = vld [vmem:[#allocation13 + $0x8a8] sm:$0xff]
        %v4241 = vld [vmem:[#allocation13 + $0x8b0] sm:$0xff]
        %v4242 = vld [vmem:[#allocation13 + $0x8b8] sm:$0xff]
        %v4243 = vld [vmem:[#allocation13 + $0x8c0] sm:$0xff]
        %v4244 = vld [vmem:[#allocation13 + $0x8c8] sm:$0xff]
        %v4245 = vld [vmem:[#allocation13 + $0x8d0] sm:$0xff]
        %v4246 = vld [vmem:[#allocation13 + $0x8d8] sm:$0xff]
        %v4247 = vld [vmem:[#allocation13 + $0x8e0] sm:$0xff]
        %v4248 = vld [vmem:[#allocation13 + $0x8e8] sm:$0xff]
        %v4249 = vld [vmem:[#allocation13 + $0x8f0] sm:$0xff]
        %v4250 = vld [vmem:[#allocation13 + $0x8f8] sm:$0xff]
        %v4251 = vld [vmem:[#allocation13 + $0x900] sm:$0xff]
        %v4252 = vld [vmem:[#allocation13 + $0x908] sm:$0xff]
        %v4253 = vld [vmem:[#allocation13 + $0x910] sm:$0xff]
        %v4254 = vld [vmem:[#allocation13 + $0x918] sm:$0xff]
        %v4255 = vld [vmem:[#allocation13 + $0x920] sm:$0xff]
        %v4256 = vld [vmem:[#allocation13 + $0x928] sm:$0xff]
        %v4257 = vld [vmem:[#allocation13 + $0x930] sm:$0xff]
        %v4258 = vld [vmem:[#allocation13 + $0x938] sm:$0xff]
        %v4259 = vld [vmem:[#allocation13 + $0x940] sm:$0xff]
        %v4260 = vld [vmem:[#allocation13 + $0x948] sm:$0xff]
        %v4261 = vld [vmem:[#allocation13 + $0x950] sm:$0xff]
        %v4262 = vld [vmem:[#allocation13 + $0x958] sm:$0xff]
        %v4263 = vld [vmem:[#allocation13 + $0x960] sm:$0xff]
        %v4264 = vld [vmem:[#allocation13 + $0x968] sm:$0xff]
        %v4265 = vld [vmem:[#allocation13 + $0x970] sm:$0xff]
        %v4266 = vld [vmem:[#allocation13 + $0x978] sm:$0xff]
        %v4267 = vld [vmem:[#allocation13 + $0x980] sm:$0xff]
        %v4268 = vld [vmem:[#allocation13 + $0x988] sm:$0xff]
        %v4269 = vld [vmem:[#allocation13 + $0x990] sm:$0xff]
        %v4270 = vld [vmem:[#allocation13 + $0x998] sm:$0xff]
        %v4271 = vld [vmem:[#allocation13 + $0x9a0] sm:$0xff]
        %v4272 = vld [vmem:[#allocation13 + $0x9a8] sm:$0xff]
        %v4273 = vld [vmem:[#allocation13 + $0x9b0] sm:$0xff]
        %v4274 = vld [vmem:[#allocation13 + $0x9b8] sm:$0xff]
        %v4275 = vld [vmem:[#allocation13 + $0x9c0] sm:$0xff]
        %v4276 = vld [vmem:[#allocation13 + $0x9c8] sm:$0xff]
        %v4277 = vld [vmem:[#allocation13 + $0x9d0] sm:$0xff]
        %v4278 = vld [vmem:[#allocation13 + $0x9d8] sm:$0xff]
        %v4279 = vld [vmem:[#allocation13 + $0x9e0] sm:$0xff]
        %v4280 = vld [vmem:[#allocation13 + $0x9e8] sm:$0xff]
        %v4281 = vld [vmem:[#allocation13 + $0x9f0] sm:$0xff]
        %v4282 = vld [vmem:[#allocation13 + $0x9f8] sm:$0xff]
        %v4283 = vld [vmem:[#allocation13 + $0xa00] sm:$0xff]
        %v4284 = vld [vmem:[#allocation13 + $0xa08] sm:$0xff]
        %v4285 = vld [vmem:[#allocation13 + $0xa10] sm:$0xff]
        %v4286 = vld [vmem:[#allocation13 + $0xa18] sm:$0xff]
        %v4287 = vld [vmem:[#allocation13 + $0xa20] sm:$0xff]
        %v4288 = vld [vmem:[#allocation13 + $0xa28] sm:$0xff]
        %v4289 = vld [vmem:[#allocation13 + $0xa30] sm:$0xff]
        %v4290 = vld [vmem:[#allocation13 + $0xa38] sm:$0xff]
        %v4291 = vld [vmem:[#allocation13 + $0xa40] sm:$0xff]
        %v4292 = vld [vmem:[#allocation13 + $0xa48] sm:$0xff]
        %v4293 = vld [vmem:[#allocation13 + $0xa50] sm:$0xff]
        %v4294 = vld [vmem:[#allocation13 + $0xa58] sm:$0xff]
        %v4295 = vld [vmem:[#allocation13 + $0xa60] sm:$0xff]
        %v4296 = vld [vmem:[#allocation13 + $0xa68] sm:$0xff]
        %v4297 = vld [vmem:[#allocation13 + $0xa70] sm:$0xff]
        %v4298 = vld [vmem:[#allocation13 + $0xa78] sm:$0xff]
        %v4299 = vld [vmem:[#allocation13 + $0xa80] sm:$0xff]
        %v4300 = vld [vmem:[#allocation13 + $0xa88] sm:$0xff]
        %v4301 = vld [vmem:[#allocation13 + $0xa90] sm:$0xff]
        %v4302 = vld [vmem:[#allocation13 + $0xa98] sm:$0xff]
        %v4303 = vld [vmem:[#allocation13 + $0xaa0] sm:$0xff]
        %v4304 = vld [vmem:[#allocation13 + $0xaa8] sm:$0xff]
        %v4305 = vld [vmem:[#allocation13 + $0xab0] sm:$0xff]
        %v4306 = vld [vmem:[#allocation13 + $0xab8] sm:$0xff]
        %v4307 = vld [vmem:[#allocation13 + $0xac0] sm:$0xff]
        %v4308 = vld [vmem:[#allocation13 + $0xac8] sm:$0xff]
        %v4309 = vld [vmem:[#allocation13 + $0xad0] sm:$0xff]
        %v4310 = vld [vmem:[#allocation13 + $0xad8] sm:$0xff]
        %v4311 = vld [vmem:[#allocation13 + $0xae0] sm:$0xff]
        %v4312 = vld [vmem:[#allocation13 + $0xae8] sm:$0xff]
        %v4313 = vld [vmem:[#allocation13 + $0xaf0] sm:$0xff]
        %v4314 = vld [vmem:[#allocation13 + $0xaf8] sm:$0xff]
        %v4315 = vld [vmem:[#allocation13 + $0xb00] sm:$0xff]
        %v4316 = vld [vmem:[#allocation13 + $0xb08] sm:$0xff]
        %v4317 = vld [vmem:[#allocation13 + $0xb10] sm:$0xff]
        %v4318 = vld [vmem:[#allocation13 + $0xb18] sm:$0xff]
        %v4319 = vld [vmem:[#allocation13 + $0xb20] sm:$0xff]
        %v4320 = vld [vmem:[#allocation13 + $0xb28] sm:$0xff]
        %v4321 = vld [vmem:[#allocation13 + $0xb30] sm:$0xff]
        %v4322 = vld [vmem:[#allocation13 + $0xb38] sm:$0xff]
        %v4323 = vld [vmem:[#allocation13 + $0xb40] sm:$0xff]
        %v4324 = vld [vmem:[#allocation13 + $0xb48] sm:$0xff]
        %v4325 = vld [vmem:[#allocation13 + $0xb50] sm:$0xff]
        %v4326 = vld [vmem:[#allocation13 + $0xb58] sm:$0xff]
        %v4327 = vld [vmem:[#allocation13 + $0xb60] sm:$0xff]
        %v4328 = vld [vmem:[#allocation13 + $0xb68] sm:$0xff]
        %v4329 = vld [vmem:[#allocation13 + $0xb70] sm:$0xff]
        %v4330 = vld [vmem:[#allocation13 + $0xb78] sm:$0xff]
        %v4331 = vld [vmem:[#allocation13 + $0xb80] sm:$0xff]
        %v4332 = vld [vmem:[#allocation13 + $0xb88] sm:$0xff]
        %v4333 = vld [vmem:[#allocation13 + $0xb90] sm:$0xff]
        %v4334 = vld [vmem:[#allocation13 + $0xb98] sm:$0xff]
        %v4335 = vld [vmem:[#allocation13 + $0xba0] sm:$0xff]
        %v4336 = vld [vmem:[#allocation13 + $0xba8] sm:$0xff]
        %v4337 = vld [vmem:[#allocation13 + $0xbb0] sm:$0xff]
        %v4338 = vld [vmem:[#allocation13 + $0xbb8] sm:$0xff]
        %v4339 = vld [vmem:[#allocation13 + $0xbc0] sm:$0xff]
        %v4340 = vld [vmem:[#allocation13 + $0xbc8] sm:$0xff]
        %v4341 = vld [vmem:[#allocation13 + $0xbd0] sm:$0xff]
        %v4342 = vld [vmem:[#allocation13 + $0xbd8] sm:$0xff]
        %v4343 = vld [vmem:[#allocation13 + $0xbe0] sm:$0xff]
        %v4344 = vld [vmem:[#allocation13 + $0xbe8] sm:$0xff]
        %v4345 = vld [vmem:[#allocation13 + $0xbf0] sm:$0xff]
        %v4346 = vld [vmem:[#allocation13 + $0xbf8] sm:$0xff]
        %v4347 = vld [vmem:[#allocation13 + $0xc00] sm:$0xff]
        %v4348 = vld [vmem:[#allocation13 + $0xc08] sm:$0xff]
        %v4349 = vld [vmem:[#allocation13 + $0xc10] sm:$0xff]
        %v4350 = vld [vmem:[#allocation13 + $0xc18] sm:$0xff]
        %v4351 = vld [vmem:[#allocation13 + $0xc20] sm:$0xff]
        %v4352 = vld [vmem:[#allocation13 + $0xc28] sm:$0xff]
        %v4353 = vld [vmem:[#allocation13 + $0xc30] sm:$0xff]
        %v4354 = vld [vmem:[#allocation13 + $0xc38] sm:$0xff]
        %v4355 = vld [vmem:[#allocation13 + $0xc40] sm:$0xff]
        %v4356 = vld [vmem:[#allocation13 + $0xc48] sm:$0xff]
        %v4357 = vld [vmem:[#allocation13 + $0xc50] sm:$0xff]
        %v4358 = vld [vmem:[#allocation13 + $0xc58] sm:$0xff]
        %v4359 = vld [vmem:[#allocation13 + $0xc60] sm:$0xff]
        %v4360 = vld [vmem:[#allocation13 + $0xc68] sm:$0xff]
        %v4361 = vld [vmem:[#allocation13 + $0xc70] sm:$0xff]
        %v4362 = vld [vmem:[#allocation13 + $0xc78] sm:$0xff]
        %v4363 = vld [vmem:[#allocation13 + $0xc80] sm:$0xff]
        %v4364 = vld [vmem:[#allocation13 + $0xc88] sm:$0xff]
        %v4365 = vld [vmem:[#allocation13 + $0xc90] sm:$0xff]
        %v4366 = vld [vmem:[#allocation13 + $0xc98] sm:$0xff]
        %v4367 = vld [vmem:[#allocation13 + $0xca0] sm:$0xff]
        %v4368 = vld [vmem:[#allocation13 + $0xca8] sm:$0xff]
        %v4369 = vld [vmem:[#allocation13 + $0xcb0] sm:$0xff]
        %v4370 = vld [vmem:[#allocation13 + $0xcb8] sm:$0xff]
        %v4371 = vld [vmem:[#allocation13 + $0xcc0] sm:$0xff]
        %v4372 = vld [vmem:[#allocation13 + $0xcc8] sm:$0xff]
        %v4373 = vld [vmem:[#allocation13 + $0xcd0] sm:$0xff]
        %v4374 = vld [vmem:[#allocation13 + $0xcd8] sm:$0xff]
        %v4375 = vld [vmem:[#allocation13 + $0xce0] sm:$0xff]
        %v4376 = vld [vmem:[#allocation13 + $0xce8] sm:$0xff]
        %v4377 = vld [vmem:[#allocation13 + $0xcf0] sm:$0xff]
        %v4378 = vld [vmem:[#allocation13 + $0xcf8] sm:$0xff]
        %v4379 = vld [vmem:[#allocation13 + $0xd00] sm:$0xff]
        %v4380 = vld [vmem:[#allocation13 + $0xd08] sm:$0xff]
        %v4381 = vld [vmem:[#allocation13 + $0xd10] sm:$0xff]
        %v4382 = vld [vmem:[#allocation13 + $0xd18] sm:$0xff]
        %v4383 = vld [vmem:[#allocation13 + $0xd20] sm:$0xff]
        %v4384 = vld [vmem:[#allocation13 + $0xd28] sm:$0xff]
        %v4385 = vld [vmem:[#allocation13 + $0xd30] sm:$0xff]
        %v4386 = vld [vmem:[#allocation13 + $0xd38] sm:$0xff]
        %v4387 = vld [vmem:[#allocation13 + $0xd40] sm:$0xff]
        %v4388 = vld [vmem:[#allocation13 + $0xd48] sm:$0xff]
        %v4389 = vld [vmem:[#allocation13 + $0xd50] sm:$0xff]
        %v4390 = vld [vmem:[#allocation13 + $0xd58] sm:$0xff]
        %v4391 = vld [vmem:[#allocation13 + $0xd60] sm:$0xff]
        %v4392 = vld [vmem:[#allocation13 + $0xd68] sm:$0xff]
        %v4393 = vld [vmem:[#allocation13 + $0xd70] sm:$0xff]
        %v4394 = vld [vmem:[#allocation13 + $0xd78] sm:$0xff]
        %v4395 = vld [vmem:[#allocation13 + $0xd80] sm:$0xff]
        %v4396 = vld [vmem:[#allocation13 + $0xd88] sm:$0xff]
        %v4397 = vld [vmem:[#allocation13 + $0xd90] sm:$0xff]
        %v4398 = vld [vmem:[#allocation13 + $0xd98] sm:$0xff]
        %v4399 = vld [vmem:[#allocation13 + $0xda0] sm:$0xff]
        %v4400 = vld [vmem:[#allocation13 + $0xda8] sm:$0xff]
        %v4401 = vld [vmem:[#allocation13 + $0xdb0] sm:$0xff]
        %v4402 = vld [vmem:[#allocation13 + $0xdb8] sm:$0xff]
        %v4403 = vld [vmem:[#allocation13 + $0xdc0] sm:$0xff]
        %v4404 = vld [vmem:[#allocation13 + $0xdc8] sm:$0xff]
        %v4405 = vld [vmem:[#allocation13 + $0xdd0] sm:$0xff]
        %v4406 = vld [vmem:[#allocation13 + $0xdd8] sm:$0xff]
        %v4407 = vld [vmem:[#allocation13 + $0xde0] sm:$0xff]
        %v4408 = vld [vmem:[#allocation13 + $0xde8] sm:$0xff]
        %v4409 = vld [vmem:[#allocation13 + $0xdf0] sm:$0xff]
        %v4410 = vld [vmem:[#allocation13 + $0xdf8] sm:$0xff]
        %v4411 = vld [vmem:[#allocation13 + $0xe00] sm:$0xff]
        %v4412 = vld [vmem:[#allocation13 + $0xe08] sm:$0xff]
        %v4413 = vld [vmem:[#allocation13 + $0xe10] sm:$0xff]
        %v4414 = vld [vmem:[#allocation13 + $0xe18] sm:$0xff]
        %v4415 = vld [vmem:[#allocation13 + $0xe20] sm:$0xff]
        %v4416 = vld [vmem:[#allocation13 + $0xe28] sm:$0xff]
        %v4417 = vld [vmem:[#allocation13 + $0xe30] sm:$0xff]
        %v4418 = vld [vmem:[#allocation13 + $0xe38] sm:$0xff]
        %v4419 = vld [vmem:[#allocation13 + $0xe40] sm:$0xff]
        %v4420 = vld [vmem:[#allocation13 + $0xe48] sm:$0xff]
        %v4421 = vld [vmem:[#allocation13 + $0xe50] sm:$0xff]
        %v4422 = vld [vmem:[#allocation13 + $0xe58] sm:$0xff]
        %v4423 = vld [vmem:[#allocation13 + $0xe60] sm:$0xff]
        %v4424 = vld [vmem:[#allocation13 + $0xe68] sm:$0xff]
        %v4425 = vld [vmem:[#allocation13 + $0xe70] sm:$0xff]
        %v4426 = vld [vmem:[#allocation13 + $0xe78] sm:$0xff]
        %v4427 = vld [vmem:[#allocation13 + $0xe80] sm:$0xff]
        %v4428 = vld [vmem:[#allocation13 + $0xe88] sm:$0xff]
        %v4429 = vld [vmem:[#allocation13 + $0xe90] sm:$0xff]
        %v4430 = vld [vmem:[#allocation13 + $0xe98] sm:$0xff]
        %v4431 = vld [vmem:[#allocation13 + $0xea0] sm:$0xff]
        %v4432 = vld [vmem:[#allocation13 + $0xea8] sm:$0xff]
        %v4433 = vld [vmem:[#allocation13 + $0xeb0] sm:$0xff]
        %v4434 = vld [vmem:[#allocation13 + $0xeb8] sm:$0xff]
        %v4435 = vld [vmem:[#allocation13 + $0xec0] sm:$0xff]
        %v4436 = vld [vmem:[#allocation13 + $0xec8] sm:$0xff]
        %v4437 = vld [vmem:[#allocation13 + $0xed0] sm:$0xff]
        %v4438 = vld [vmem:[#allocation13 + $0xed8] sm:$0xff]
        %v4439 = vld [vmem:[#allocation13 + $0xee0] sm:$0xff]
        %v4440 = vld [vmem:[#allocation13 + $0xee8] sm:$0xff]
        %v4441 = vld [vmem:[#allocation13 + $0xef0] sm:$0xff]
        %v4442 = vld [vmem:[#allocation13 + $0xef8] sm:$0xff]
        %v4443 = vld [vmem:[#allocation13 + $0xf00] sm:$0xff]
        %v4444 = vld [vmem:[#allocation13 + $0xf08] sm:$0xff]
        %v4445 = vld [vmem:[#allocation13 + $0xf10] sm:$0xff]
        %v4446 = vld [vmem:[#allocation13 + $0xf18] sm:$0xff]
        %v4447 = vld [vmem:[#allocation13 + $0xf20] sm:$0xff]
        %v4448 = vld [vmem:[#allocation13 + $0xf28] sm:$0xff]
        %v4449 = vld [vmem:[#allocation13 + $0xf30] sm:$0xff]
        %v4450 = vld [vmem:[#allocation13 + $0xf38] sm:$0xff]
        %v4451 = vld [vmem:[#allocation13 + $0xf40] sm:$0xff]
        %v4452 = vld [vmem:[#allocation13 + $0xf48] sm:$0xff]
        %v4453 = vld [vmem:[#allocation13 + $0xf50] sm:$0xff]
        %v4454 = vld [vmem:[#allocation13 + $0xf58] sm:$0xff]
        %v4455 = vld [vmem:[#allocation13 + $0xf60] sm:$0xff]
        %v4456 = vld [vmem:[#allocation13 + $0xf68] sm:$0xff]
        %v4457 = vld [vmem:[#allocation13 + $0xf70] sm:$0xff]
        %v4458 = vld [vmem:[#allocation13 + $0xf78] sm:$0xff]
        %v4459 = vld [vmem:[#allocation13 + $0xf80] sm:$0xff]
        %v4460 = vld [vmem:[#allocation13 + $0xf88] sm:$0xff]
        %v4461 = vld [vmem:[#allocation13 + $0xf90] sm:$0xff]
        %v4462 = vld [vmem:[#allocation13 + $0xf98] sm:$0xff]
        %v4463 = vld [vmem:[#allocation13 + $0xfa0] sm:$0xff]
        %v4464 = vld [vmem:[#allocation13 + $0xfa8] sm:$0xff]
        %v4465 = vld [vmem:[#allocation13 + $0xfb0] sm:$0xff]
        %v4466 = vld [vmem:[#allocation13 + $0xfb8] sm:$0xff]
        %v4467 = vld [vmem:[#allocation13 + $0xfc0] sm:$0xff]
        %v4468 = vld [vmem:[#allocation13 + $0xfc8] sm:$0xff]
        %v4469 = vld [vmem:[#allocation13 + $0xfd0] sm:$0xff]
        %v4470 = vld [vmem:[#allocation13 + $0xfd8] sm:$0xff]
        %v4471 = vld [vmem:[#allocation13 + $0xfe0] sm:$0xff]
        %v4472 = vld [vmem:[#allocation13 + $0xfe8] sm:$0xff]
        %v4473 = vld [vmem:[#allocation13 + $0xff0] sm:$0xff]
        %v4474 = vld [vmem:[#allocation13 + $0xff8] sm:$0xff]
        %v4475 = vld [vmem:[#allocation16 + $0x1c] sm:$0x3]
        %v4477 = vperm.slane %v4475, 0
        %v4478 = vperm.slane %v4475, 1
        %4481 = vmatpush.msra.mxu0 %v3993
        %4482 = vmatpush.msra.mxu0 %v3991
        %4483 = vmatpush.msra.mxu0 %v3989
        %4484 = vmatpush.msra.mxu0 %v3987
        %4485 = vmatpush.msra.mxu0 %v3985
        %4486 = vmatpush.msra.mxu0 %v3983
        %4487 = vmatpush.msra.mxu0 %v3981
        %4488 = vmatpush.msra.mxu0 %v3979
        %4489 = vmatpush.msra.mxu0 %v3977
        %4490 = vmatpush.msra.mxu0 %v3975
        %4491 = vmatpush.msra.mxu0 %v3973
        %4492 = vmatpush.msra.mxu0 %v3971
        %4493 = vmatpush.msra.mxu0 %v3969
        %4494 = vmatpush.msra.mxu0 %v3967
        %4495 = vmatpush.msra.mxu0 %v3965
        %4496 = vmatpush.msra.mxu0 %v3963
        %4497 = vmatmul.f32.gmra.mxu0 %v3947
        %v4498 = vpop.f32.mrf.mxu0
        %v4499 = vadd.f32 %v4477, %v4498
        %4500 = vdwg.mxu0
        %4501 = vmatpush.msra.mxu0 %v4025
        %4502 = vmatpush.msra.mxu0 %v4023
        %4503 = vmatpush.msra.mxu0 %v4021
        %4504 = vmatpush.msra.mxu0 %v4019
        %4505 = vmatpush.msra.mxu0 %v4017
        %4506 = vmatpush.msra.mxu0 %v4015
        %4507 = vmatpush.msra.mxu0 %v4013
        %4508 = vmatpush.msra.mxu0 %v4011
        %4509 = vmatpush.msra.mxu0 %v4009
        %4510 = vmatpush.msra.mxu0 %v4007
        %4511 = vmatpush.msra.mxu0 %v4005
        %4512 = vmatpush.msra.mxu0 %v4003
        %4513 = vmatpush.msra.mxu0 %v4001
        %4514 = vmatpush.msra.mxu0 %v3999
        %4515 = vmatpush.msra.mxu0 %v3997
        %4516 = vmatpush.msra.mxu0 %v3995
        %4517 = vmatmul.f32.gmra.mxu0 %v3948
        %v4518 = vpop.f32.mrf.mxu0
        %v4519 = vadd.f32 %v4499, %v4518
        %4520 = vdwg.mxu0
        %4521 = vmatpush.msra.mxu0 %v4057
        %4522 = vmatpush.msra.mxu0 %v4055
        %4523 = vmatpush.msra.mxu0 %v4053
        %4524 = vmatpush.msra.mxu0 %v4051
        %4525 = vmatpush.msra.mxu0 %v4049
        %4526 = vmatpush.msra.mxu0 %v4047
        %4527 = vmatpush.msra.mxu0 %v4045
        %4528 = vmatpush.msra.mxu0 %v4043
        %4529 = vmatpush.msra.mxu0 %v4041
        %4530 = vmatpush.msra.mxu0 %v4039
        %4531 = vmatpush.msra.mxu0 %v4037
        %4532 = vmatpush.msra.mxu0 %v4035
        %4533 = vmatpush.msra.mxu0 %v4033
        %4534 = vmatpush.msra.mxu0 %v4031
        %4535 = vmatpush.msra.mxu0 %v4029
        %4536 = vmatpush.msra.mxu0 %v4027
        %4537 = vmatmul.f32.gmra.mxu0 %v3949
        %v4538 = vpop.f32.mrf.mxu0
        %v4539 = vadd.f32 %v4519, %v4538
        %4540 = vdwg.mxu0
        %4541 = vmatpush.msra.mxu0 %v4089
        %4542 = vmatpush.msra.mxu0 %v4087
        %4543 = vmatpush.msra.mxu0 %v4085
        %4544 = vmatpush.msra.mxu0 %v4083
        %4545 = vmatpush.msra.mxu0 %v4081
        %4546 = vmatpush.msra.mxu0 %v4079
        %4547 = vmatpush.msra.mxu0 %v4077
        %4548 = vmatpush.msra.mxu0 %v4075
        %4549 = vmatpush.msra.mxu0 %v4073
        %4550 = vmatpush.msra.mxu0 %v4071
        %4551 = vmatpush.msra.mxu0 %v4069
        %4552 = vmatpush.msra.mxu0 %v4067
        %4553 = vmatpush.msra.mxu0 %v4065
        %4554 = vmatpush.msra.mxu0 %v4063
        %4555 = vmatpush.msra.mxu0 %v4061
        %4556 = vmatpush.msra.mxu0 %v4059
        %4557 = vmatmul.f32.gmra.mxu0 %v3950
        %v4558 = vpop.f32.mrf.mxu0
        %v4559 = vadd.f32 %v4539, %v4558
        %4560 = vdwg.mxu0
        %4561 = vmatpush.msra.mxu0 %v4121
        %4562 = vmatpush.msra.mxu0 %v4119
        %4563 = vmatpush.msra.mxu0 %v4117
        %4564 = vmatpush.msra.mxu0 %v4115
        %4565 = vmatpush.msra.mxu0 %v4113
        %4566 = vmatpush.msra.mxu0 %v4111
        %4567 = vmatpush.msra.mxu0 %v4109
        %4568 = vmatpush.msra.mxu0 %v4107
        %4569 = vmatpush.msra.mxu0 %v4105
        %4570 = vmatpush.msra.mxu0 %v4103
        %4571 = vmatpush.msra.mxu0 %v4101
        %4572 = vmatpush.msra.mxu0 %v4099
        %4573 = vmatpush.msra.mxu0 %v4097
        %4574 = vmatpush.msra.mxu0 %v4095
        %4575 = vmatpush.msra.mxu0 %v4093
        %4576 = vmatpush.msra.mxu0 %v4091
        %4577 = vmatmul.f32.gmra.mxu0 %v3951
        %v4578 = vpop.f32.mrf.mxu0
        %v4579 = vadd.f32 %v4559, %v4578
        %4580 = vdwg.mxu0
        %4581 = vmatpush.msra.mxu0 %v4153
        %4582 = vmatpush.msra.mxu0 %v4151
        %4583 = vmatpush.msra.mxu0 %v4149
        %4584 = vmatpush.msra.mxu0 %v4147
        %4585 = vmatpush.msra.mxu0 %v4145
        %4586 = vmatpush.msra.mxu0 %v4143
        %4587 = vmatpush.msra.mxu0 %v4141
        %4588 = vmatpush.msra.mxu0 %v4139
        %4589 = vmatpush.msra.mxu0 %v4137
        %4590 = vmatpush.msra.mxu0 %v4135
        %4591 = vmatpush.msra.mxu0 %v4133
        %4592 = vmatpush.msra.mxu0 %v4131
        %4593 = vmatpush.msra.mxu0 %v4129
        %4594 = vmatpush.msra.mxu0 %v4127
        %4595 = vmatpush.msra.mxu0 %v4125
        %4596 = vmatpush.msra.mxu0 %v4123
        %4597 = vmatmul.f32.gmra.mxu0 %v3952
        %v4598 = vpop.f32.mrf.mxu0
        %v4599 = vadd.f32 %v4579, %v4598
        %4600 = vdwg.mxu0
        %4601 = vmatpush.msra.mxu0 %v4185
        %4602 = vmatpush.msra.mxu0 %v4183
        %4603 = vmatpush.msra.mxu0 %v4181
        %4604 = vmatpush.msra.mxu0 %v4179
        %4605 = vmatpush.msra.mxu0 %v4177
        %4606 = vmatpush.msra.mxu0 %v4175
        %4607 = vmatpush.msra.mxu0 %v4173
        %4608 = vmatpush.msra.mxu0 %v4171
        %4609 = vmatpush.msra.mxu0 %v4169
        %4610 = vmatpush.msra.mxu0 %v4167
        %4611 = vmatpush.msra.mxu0 %v4165
        %4612 = vmatpush.msra.mxu0 %v4163
        %4613 = vmatpush.msra.mxu0 %v4161
        %4614 = vmatpush.msra.mxu0 %v4159
        %4615 = vmatpush.msra.mxu0 %v4157
        %4616 = vmatpush.msra.mxu0 %v4155
        %4617 = vmatmul.f32.gmra.mxu0 %v3953
        %v4618 = vpop.f32.mrf.mxu0
        %v4619 = vadd.f32 %v4599, %v4618
        %4620 = vdwg.mxu0
        %4621 = vmatpush.msra.mxu0 %v4217
        %4622 = vmatpush.msra.mxu0 %v4215
        %4623 = vmatpush.msra.mxu0 %v4213
        %4624 = vmatpush.msra.mxu0 %v4211
        %4625 = vmatpush.msra.mxu0 %v4209
        %4626 = vmatpush.msra.mxu0 %v4207
        %4627 = vmatpush.msra.mxu0 %v4205
        %4628 = vmatpush.msra.mxu0 %v4203
        %4629 = vmatpush.msra.mxu0 %v4201
        %4630 = vmatpush.msra.mxu0 %v4199
        %4631 = vmatpush.msra.mxu0 %v4197
        %4632 = vmatpush.msra.mxu0 %v4195
        %4633 = vmatpush.msra.mxu0 %v4193
        %4634 = vmatpush.msra.mxu0 %v4191
        %4635 = vmatpush.msra.mxu0 %v4189
        %4636 = vmatpush.msra.mxu0 %v4187
        %4637 = vmatmul.f32.gmra.mxu0 %v3954
        %v4638 = vpop.f32.mrf.mxu0
        %v4639 = vadd.f32 %v4619, %v4638
        %4640 = vdwg.mxu0
        %4641 = vmatpush.msra.mxu0 %v4249
        %4642 = vmatpush.msra.mxu0 %v4247
        %4643 = vmatpush.msra.mxu0 %v4245
        %4644 = vmatpush.msra.mxu0 %v4243
        %4645 = vmatpush.msra.mxu0 %v4241
        %4646 = vmatpush.msra.mxu0 %v4239
        %4647 = vmatpush.msra.mxu0 %v4237
        %4648 = vmatpush.msra.mxu0 %v4235
        %4649 = vmatpush.msra.mxu0 %v4233
        %4650 = vmatpush.msra.mxu0 %v4231
        %4651 = vmatpush.msra.mxu0 %v4229
        %4652 = vmatpush.msra.mxu0 %v4227
        %4653 = vmatpush.msra.mxu0 %v4225
        %4654 = vmatpush.msra.mxu0 %v4223
        %4655 = vmatpush.msra.mxu0 %v4221
        %4656 = vmatpush.msra.mxu0 %v4219
        %4657 = vmatmul.f32.gmra.mxu0 %v3955
        %v4658 = vpop.f32.mrf.mxu0
        %v4659 = vadd.f32 %v4639, %v4658
        %4660 = vdwg.mxu0
        %4661 = vmatpush.msra.mxu0 %v4281
        %4662 = vmatpush.msra.mxu0 %v4279
        %4663 = vmatpush.msra.mxu0 %v4277
        %4664 = vmatpush.msra.mxu0 %v4275
        %4665 = vmatpush.msra.mxu0 %v4273
        %4666 = vmatpush.msra.mxu0 %v4271
        %4667 = vmatpush.msra.mxu0 %v4269
        %4668 = vmatpush.msra.mxu0 %v4267
        %4669 = vmatpush.msra.mxu0 %v4265
        %4670 = vmatpush.msra.mxu0 %v4263
        %4671 = vmatpush.msra.mxu0 %v4261
        %4672 = vmatpush.msra.mxu0 %v4259
        %4673 = vmatpush.msra.mxu0 %v4257
        %4674 = vmatpush.msra.mxu0 %v4255
        %4675 = vmatpush.msra.mxu0 %v4253
        %4676 = vmatpush.msra.mxu0 %v4251
        %4677 = vmatmul.f32.gmra.mxu0 %v3956
        %v4678 = vpop.f32.mrf.mxu0
        %v4679 = vadd.f32 %v4659, %v4678
        %4680 = vdwg.mxu0
        %4681 = vmatpush.msra.mxu0 %v4313
        %4682 = vmatpush.msra.mxu0 %v4311
        %4683 = vmatpush.msra.mxu0 %v4309
        %4684 = vmatpush.msra.mxu0 %v4307
        %4685 = vmatpush.msra.mxu0 %v4305
        %4686 = vmatpush.msra.mxu0 %v4303
        %4687 = vmatpush.msra.mxu0 %v4301
        %4688 = vmatpush.msra.mxu0 %v4299
        %4689 = vmatpush.msra.mxu0 %v4297
        %4690 = vmatpush.msra.mxu0 %v4295
        %4691 = vmatpush.msra.mxu0 %v4293
        %4692 = vmatpush.msra.mxu0 %v4291
        %4693 = vmatpush.msra.mxu0 %v4289
        %4694 = vmatpush.msra.mxu0 %v4287
        %4695 = vmatpush.msra.mxu0 %v4285
        %4696 = vmatpush.msra.mxu0 %v4283
        %4697 = vmatmul.f32.gmra.mxu0 %v3957
        %v4698 = vpop.f32.mrf.mxu0
        %v4699 = vadd.f32 %v4679, %v4698
        %4700 = vdwg.mxu0
        %4701 = vmatpush.msra.mxu0 %v4345
        %4702 = vmatpush.msra.mxu0 %v4343
        %4703 = vmatpush.msra.mxu0 %v4341
        %4704 = vmatpush.msra.mxu0 %v4339
        %4705 = vmatpush.msra.mxu0 %v4337
        %4706 = vmatpush.msra.mxu0 %v4335
        %4707 = vmatpush.msra.mxu0 %v4333
        %4708 = vmatpush.msra.mxu0 %v4331
        %4709 = vmatpush.msra.mxu0 %v4329
        %4710 = vmatpush.msra.mxu0 %v4327
        %4711 = vmatpush.msra.mxu0 %v4325
        %4712 = vmatpush.msra.mxu0 %v4323
        %4713 = vmatpush.msra.mxu0 %v4321
        %4714 = vmatpush.msra.mxu0 %v4319
        %4715 = vmatpush.msra.mxu0 %v4317
        %4716 = vmatpush.msra.mxu0 %v4315
        %4717 = vmatmul.f32.gmra.mxu0 %v3958
        %v4718 = vpop.f32.mrf.mxu0
        %v4719 = vadd.f32 %v4699, %v4718
        %4720 = vdwg.mxu0
        %4721 = vmatpush.msra.mxu0 %v4377
        %4722 = vmatpush.msra.mxu0 %v4375
        %4723 = vmatpush.msra.mxu0 %v4373
        %4724 = vmatpush.msra.mxu0 %v4371
        %4725 = vmatpush.msra.mxu0 %v4369
        %4726 = vmatpush.msra.mxu0 %v4367
        %4727 = vmatpush.msra.mxu0 %v4365
        %4728 = vmatpush.msra.mxu0 %v4363
        %4729 = vmatpush.msra.mxu0 %v4361
        %4730 = vmatpush.msra.mxu0 %v4359
        %4731 = vmatpush.msra.mxu0 %v4357
        %4732 = vmatpush.msra.mxu0 %v4355
        %4733 = vmatpush.msra.mxu0 %v4353
        %4734 = vmatpush.msra.mxu0 %v4351
        %4735 = vmatpush.msra.mxu0 %v4349
        %4736 = vmatpush.msra.mxu0 %v4347
        %4737 = vmatmul.f32.gmra.mxu0 %v3959
        %v4738 = vpop.f32.mrf.mxu0
        %v4739 = vadd.f32 %v4719, %v4738
        %4740 = vdwg.mxu0
        %4741 = vmatpush.msra.mxu0 %v4409
        %4742 = vmatpush.msra.mxu0 %v4407
        %4743 = vmatpush.msra.mxu0 %v4405
        %4744 = vmatpush.msra.mxu0 %v4403
        %4745 = vmatpush.msra.mxu0 %v4401
        %4746 = vmatpush.msra.mxu0 %v4399
        %4747 = vmatpush.msra.mxu0 %v4397
        %4748 = vmatpush.msra.mxu0 %v4395
        %4749 = vmatpush.msra.mxu0 %v4393
        %4750 = vmatpush.msra.mxu0 %v4391
        %4751 = vmatpush.msra.mxu0 %v4389
        %4752 = vmatpush.msra.mxu0 %v4387
        %4753 = vmatpush.msra.mxu0 %v4385
        %4754 = vmatpush.msra.mxu0 %v4383
        %4755 = vmatpush.msra.mxu0 %v4381
        %4756 = vmatpush.msra.mxu0 %v4379
        %4757 = vmatmul.f32.gmra.mxu0 %v3960
        %v4758 = vpop.f32.mrf.mxu0
        %v4759 = vadd.f32 %v4739, %v4758
        %4760 = vdwg.mxu0
        %4761 = vmatpush.msra.mxu0 %v4441
        %4762 = vmatpush.msra.mxu0 %v4439
        %4763 = vmatpush.msra.mxu0 %v4437
        %4764 = vmatpush.msra.mxu0 %v4435
        %4765 = vmatpush.msra.mxu0 %v4433
        %4766 = vmatpush.msra.mxu0 %v4431
        %4767 = vmatpush.msra.mxu0 %v4429
        %4768 = vmatpush.msra.mxu0 %v4427
        %4769 = vmatpush.msra.mxu0 %v4425
        %4770 = vmatpush.msra.mxu0 %v4423
        %4771 = vmatpush.msra.mxu0 %v4421
        %4772 = vmatpush.msra.mxu0 %v4419
        %4773 = vmatpush.msra.mxu0 %v4417
        %4774 = vmatpush.msra.mxu0 %v4415
        %4775 = vmatpush.msra.mxu0 %v4413
        %4776 = vmatpush.msra.mxu0 %v4411
        %4777 = vmatmul.f32.gmra.mxu0 %v3961
        %v4778 = vpop.f32.mrf.mxu0
        %v4779 = vadd.f32 %v4759, %v4778
        %4780 = vdwg.mxu0
        %4781 = vmatpush.msra.mxu0 %v4473
        %4782 = vmatpush.msra.mxu0 %v4471
        %4783 = vmatpush.msra.mxu0 %v4469
        %4784 = vmatpush.msra.mxu0 %v4467
        %4785 = vmatpush.msra.mxu0 %v4465
        %4786 = vmatpush.msra.mxu0 %v4463
        %4787 = vmatpush.msra.mxu0 %v4461
        %4788 = vmatpush.msra.mxu0 %v4459
        %4789 = vmatpush.msra.mxu0 %v4457
        %4790 = vmatpush.msra.mxu0 %v4455
        %4791 = vmatpush.msra.mxu0 %v4453
        %4792 = vmatpush.msra.mxu0 %v4451
        %4793 = vmatpush.msra.mxu0 %v4449
        %4794 = vmatpush.msra.mxu0 %v4447
        %4795 = vmatpush.msra.mxu0 %v4445
        %4796 = vmatpush.msra.mxu0 %v4443
        %4797 = vmatmul.f32.gmra.mxu0 %v3962
        %v4798 = vpop.f32.mrf.mxu0
        %v4799 = vadd.f32 %v4779, %v4798
        %4800 = vdwg.mxu0
        %4801 = vmatpush.msra.mxu0 %v3994
        %4802 = vmatpush.msra.mxu0 %v3992
        %4803 = vmatpush.msra.mxu0 %v3990
        %4804 = vmatpush.msra.mxu0 %v3988
        %4805 = vmatpush.msra.mxu0 %v3986
        %4806 = vmatpush.msra.mxu0 %v3984
        %4807 = vmatpush.msra.mxu0 %v3982
        %4808 = vmatpush.msra.mxu0 %v3980
        %4809 = vmatpush.msra.mxu0 %v3978
        %4810 = vmatpush.msra.mxu0 %v3976
        %4811 = vmatpush.msra.mxu0 %v3974
        %4812 = vmatpush.msra.mxu0 %v3972
        %4813 = vmatpush.msra.mxu0 %v3970
        %4814 = vmatpush.msra.mxu0 %v3968
        %4815 = vmatpush.msra.mxu0 %v3966
        %4816 = vmatpush.msra.mxu0 %v3964
        %4817 = vmatmul.f32.gmra.mxu0 %v3947
        %v4818 = vpop.f32.mrf.mxu0
        %v4819 = vadd.f32 %v4478, %v4818
        %4820 = vdwg.mxu0
        %4821 = vmatpush.msra.mxu0 %v4026
        %4822 = vmatpush.msra.mxu0 %v4024
        %4823 = vmatpush.msra.mxu0 %v4022
        %4824 = vmatpush.msra.mxu0 %v4020
        %4825 = vmatpush.msra.mxu0 %v4018
        %4826 = vmatpush.msra.mxu0 %v4016
        %4827 = vmatpush.msra.mxu0 %v4014
        %4828 = vmatpush.msra.mxu0 %v4012
        %4829 = vmatpush.msra.mxu0 %v4010
        %4830 = vmatpush.msra.mxu0 %v4008
        %4831 = vmatpush.msra.mxu0 %v4006
        %4832 = vmatpush.msra.mxu0 %v4004
        %4833 = vmatpush.msra.mxu0 %v4002
        %4834 = vmatpush.msra.mxu0 %v4000
        %4835 = vmatpush.msra.mxu0 %v3998
        %4836 = vmatpush.msra.mxu0 %v3996
        %4837 = vmatmul.f32.gmra.mxu0 %v3948
        %v4838 = vpop.f32.mrf.mxu0
        %v4839 = vadd.f32 %v4819, %v4838
        %4840 = vdwg.mxu0
        %4841 = vmatpush.msra.mxu0 %v4058
        %4842 = vmatpush.msra.mxu0 %v4056
        %4843 = vmatpush.msra.mxu0 %v4054
        %4844 = vmatpush.msra.mxu0 %v4052
        %4845 = vmatpush.msra.mxu0 %v4050
        %4846 = vmatpush.msra.mxu0 %v4048
        %4847 = vmatpush.msra.mxu0 %v4046
        %4848 = vmatpush.msra.mxu0 %v4044
        %4849 = vmatpush.msra.mxu0 %v4042
        %4850 = vmatpush.msra.mxu0 %v4040
        %4851 = vmatpush.msra.mxu0 %v4038
        %4852 = vmatpush.msra.mxu0 %v4036
        %4853 = vmatpush.msra.mxu0 %v4034
        %4854 = vmatpush.msra.mxu0 %v4032
        %4855 = vmatpush.msra.mxu0 %v4030
        %4856 = vmatpush.msra.mxu0 %v4028
        %4857 = vmatmul.f32.gmra.mxu0 %v3949
        %v4858 = vpop.f32.mrf.mxu0
        %v4859 = vadd.f32 %v4839, %v4858
        %4860 = vdwg.mxu0
        %4861 = vmatpush.msra.mxu0 %v4090
        %4862 = vmatpush.msra.mxu0 %v4088
        %4863 = vmatpush.msra.mxu0 %v4086
        %4864 = vmatpush.msra.mxu0 %v4084
        %4865 = vmatpush.msra.mxu0 %v4082
        %4866 = vmatpush.msra.mxu0 %v4080
        %4867 = vmatpush.msra.mxu0 %v4078
        %4868 = vmatpush.msra.mxu0 %v4076
        %4869 = vmatpush.msra.mxu0 %v4074
        %4870 = vmatpush.msra.mxu0 %v4072
        %4871 = vmatpush.msra.mxu0 %v4070
        %4872 = vmatpush.msra.mxu0 %v4068
        %4873 = vmatpush.msra.mxu0 %v4066
        %4874 = vmatpush.msra.mxu0 %v4064
        %4875 = vmatpush.msra.mxu0 %v4062
        %4876 = vmatpush.msra.mxu0 %v4060
        %4877 = vmatmul.f32.gmra.mxu0 %v3950
        %v4878 = vpop.f32.mrf.mxu0
        %v4879 = vadd.f32 %v4859, %v4878
        %4880 = vdwg.mxu0
        %4881 = vmatpush.msra.mxu0 %v4122
        %4882 = vmatpush.msra.mxu0 %v4120
        %4883 = vmatpush.msra.mxu0 %v4118
        %4884 = vmatpush.msra.mxu0 %v4116
        %4885 = vmatpush.msra.mxu0 %v4114
        %4886 = vmatpush.msra.mxu0 %v4112
        %4887 = vmatpush.msra.mxu0 %v4110
        %4888 = vmatpush.msra.mxu0 %v4108
        %4889 = vmatpush.msra.mxu0 %v4106
        %4890 = vmatpush.msra.mxu0 %v4104
        %4891 = vmatpush.msra.mxu0 %v4102
        %4892 = vmatpush.msra.mxu0 %v4100
        %4893 = vmatpush.msra.mxu0 %v4098
        %4894 = vmatpush.msra.mxu0 %v4096
        %4895 = vmatpush.msra.mxu0 %v4094
        %4896 = vmatpush.msra.mxu0 %v4092
        %4897 = vmatmul.f32.gmra.mxu0 %v3951
        %v4898 = vpop.f32.mrf.mxu0
        %v4899 = vadd.f32 %v4879, %v4898
        %4900 = vdwg.mxu0
        %4901 = vmatpush.msra.mxu0 %v4154
        %4902 = vmatpush.msra.mxu0 %v4152
        %4903 = vmatpush.msra.mxu0 %v4150
        %4904 = vmatpush.msra.mxu0 %v4148
        %4905 = vmatpush.msra.mxu0 %v4146
        %4906 = vmatpush.msra.mxu0 %v4144
        %4907 = vmatpush.msra.mxu0 %v4142
        %4908 = vmatpush.msra.mxu0 %v4140
        %4909 = vmatpush.msra.mxu0 %v4138
        %4910 = vmatpush.msra.mxu0 %v4136
        %4911 = vmatpush.msra.mxu0 %v4134
        %4912 = vmatpush.msra.mxu0 %v4132
        %4913 = vmatpush.msra.mxu0 %v4130
        %4914 = vmatpush.msra.mxu0 %v4128
        %4915 = vmatpush.msra.mxu0 %v4126
        %4916 = vmatpush.msra.mxu0 %v4124
        %4917 = vmatmul.f32.gmra.mxu0 %v3952
        %v4918 = vpop.f32.mrf.mxu0
        %v4919 = vadd.f32 %v4899, %v4918
        %4920 = vdwg.mxu0
        %4921 = vmatpush.msra.mxu0 %v4186
        %4922 = vmatpush.msra.mxu0 %v4184
        %4923 = vmatpush.msra.mxu0 %v4182
        %4924 = vmatpush.msra.mxu0 %v4180
        %4925 = vmatpush.msra.mxu0 %v4178
        %4926 = vmatpush.msra.mxu0 %v4176
        %4927 = vmatpush.msra.mxu0 %v4174
        %4928 = vmatpush.msra.mxu0 %v4172
        %4929 = vmatpush.msra.mxu0 %v4170
        %4930 = vmatpush.msra.mxu0 %v4168
        %4931 = vmatpush.msra.mxu0 %v4166
        %4932 = vmatpush.msra.mxu0 %v4164
        %4933 = vmatpush.msra.mxu0 %v4162
        %4934 = vmatpush.msra.mxu0 %v4160
        %4935 = vmatpush.msra.mxu0 %v4158
        %4936 = vmatpush.msra.mxu0 %v4156
        %4937 = vmatmul.f32.gmra.mxu0 %v3953
        %v4938 = vpop.f32.mrf.mxu0
        %v4939 = vadd.f32 %v4919, %v4938
        %4940 = vdwg.mxu0
        %4941 = vmatpush.msra.mxu0 %v4218
        %4942 = vmatpush.msra.mxu0 %v4216
        %4943 = vmatpush.msra.mxu0 %v4214
        %4944 = vmatpush.msra.mxu0 %v4212
        %4945 = vmatpush.msra.mxu0 %v4210
        %4946 = vmatpush.msra.mxu0 %v4208
        %4947 = vmatpush.msra.mxu0 %v4206
        %4948 = vmatpush.msra.mxu0 %v4204
        %4949 = vmatpush.msra.mxu0 %v4202
        %4950 = vmatpush.msra.mxu0 %v4200
        %4951 = vmatpush.msra.mxu0 %v4198
        %4952 = vmatpush.msra.mxu0 %v4196
        %4953 = vmatpush.msra.mxu0 %v4194
        %4954 = vmatpush.msra.mxu0 %v4192
        %4955 = vmatpush.msra.mxu0 %v4190
        %4956 = vmatpush.msra.mxu0 %v4188
        %4957 = vmatmul.f32.gmra.mxu0 %v3954
        %v4958 = vpop.f32.mrf.mxu0
        %v4959 = vadd.f32 %v4939, %v4958
        %4960 = vdwg.mxu0
        %4961 = vmatpush.msra.mxu0 %v4250
        %4962 = vmatpush.msra.mxu0 %v4248
        %4963 = vmatpush.msra.mxu0 %v4246
        %4964 = vmatpush.msra.mxu0 %v4244
        %4965 = vmatpush.msra.mxu0 %v4242
        %4966 = vmatpush.msra.mxu0 %v4240
        %4967 = vmatpush.msra.mxu0 %v4238
        %4968 = vmatpush.msra.mxu0 %v4236
        %4969 = vmatpush.msra.mxu0 %v4234
        %4970 = vmatpush.msra.mxu0 %v4232
        %4971 = vmatpush.msra.mxu0 %v4230
        %4972 = vmatpush.msra.mxu0 %v4228
        %4973 = vmatpush.msra.mxu0 %v4226
        %4974 = vmatpush.msra.mxu0 %v4224
        %4975 = vmatpush.msra.mxu0 %v4222
        %4976 = vmatpush.msra.mxu0 %v4220
        %4977 = vmatmul.f32.gmra.mxu0 %v3955
        %v4978 = vpop.f32.mrf.mxu0
        %v4979 = vadd.f32 %v4959, %v4978
        %4980 = vdwg.mxu0
        %4981 = vmatpush.msra.mxu0 %v4282
        %4982 = vmatpush.msra.mxu0 %v4280
        %4983 = vmatpush.msra.mxu0 %v4278
        %4984 = vmatpush.msra.mxu0 %v4276
        %4985 = vmatpush.msra.mxu0 %v4274
        %4986 = vmatpush.msra.mxu0 %v4272
        %4987 = vmatpush.msra.mxu0 %v4270
        %4988 = vmatpush.msra.mxu0 %v4268
        %4989 = vmatpush.msra.mxu0 %v4266
        %4990 = vmatpush.msra.mxu0 %v4264
        %4991 = vmatpush.msra.mxu0 %v4262
        %4992 = vmatpush.msra.mxu0 %v4260
        %4993 = vmatpush.msra.mxu0 %v4258
        %4994 = vmatpush.msra.mxu0 %v4256
        %4995 = vmatpush.msra.mxu0 %v4254
        %4996 = vmatpush.msra.mxu0 %v4252
        %4997 = vmatmul.f32.gmra.mxu0 %v3956
        %v4998 = vpop.f32.mrf.mxu0
        %v4999 = vadd.f32 %v4979, %v4998
        %5000 = vdwg.mxu0
        %5001 = vmatpush.msra.mxu0 %v4314
        %5002 = vmatpush.msra.mxu0 %v4312
        %5003 = vmatpush.msra.mxu0 %v4310
        %5004 = vmatpush.msra.mxu0 %v4308
        %5005 = vmatpush.msra.mxu0 %v4306
        %5006 = vmatpush.msra.mxu0 %v4304
        %5007 = vmatpush.msra.mxu0 %v4302
        %5008 = vmatpush.msra.mxu0 %v4300
        %5009 = vmatpush.msra.mxu0 %v4298
        %5010 = vmatpush.msra.mxu0 %v4296
        %5011 = vmatpush.msra.mxu0 %v4294
        %5012 = vmatpush.msra.mxu0 %v4292
        %5013 = vmatpush.msra.mxu0 %v4290
        %5014 = vmatpush.msra.mxu0 %v4288
        %5015 = vmatpush.msra.mxu0 %v4286
        %5016 = vmatpush.msra.mxu0 %v4284
        %5017 = vmatmul.f32.gmra.mxu0 %v3957
        %v5018 = vpop.f32.mrf.mxu0
        %v5019 = vadd.f32 %v4999, %v5018
        %5020 = vdwg.mxu0
        %5021 = vmatpush.msra.mxu0 %v4346
        %5022 = vmatpush.msra.mxu0 %v4344
        %5023 = vmatpush.msra.mxu0 %v4342
        %5024 = vmatpush.msra.mxu0 %v4340
        %5025 = vmatpush.msra.mxu0 %v4338
        %5026 = vmatpush.msra.mxu0 %v4336
        %5027 = vmatpush.msra.mxu0 %v4334
        %5028 = vmatpush.msra.mxu0 %v4332
        %5029 = vmatpush.msra.mxu0 %v4330
        %5030 = vmatpush.msra.mxu0 %v4328
        %5031 = vmatpush.msra.mxu0 %v4326
        %5032 = vmatpush.msra.mxu0 %v4324
        %5033 = vmatpush.msra.mxu0 %v4322
        %5034 = vmatpush.msra.mxu0 %v4320
        %5035 = vmatpush.msra.mxu0 %v4318
        %5036 = vmatpush.msra.mxu0 %v4316
        %5037 = vmatmul.f32.gmra.mxu0 %v3958
        %v5038 = vpop.f32.mrf.mxu0
        %v5039 = vadd.f32 %v5019, %v5038
        %5040 = vdwg.mxu0
        %5041 = vmatpush.msra.mxu0 %v4378
        %5042 = vmatpush.msra.mxu0 %v4376
        %5043 = vmatpush.msra.mxu0 %v4374
        %5044 = vmatpush.msra.mxu0 %v4372
        %5045 = vmatpush.msra.mxu0 %v4370
        %5046 = vmatpush.msra.mxu0 %v4368
        %5047 = vmatpush.msra.mxu0 %v4366
        %5048 = vmatpush.msra.mxu0 %v4364
        %5049 = vmatpush.msra.mxu0 %v4362
        %5050 = vmatpush.msra.mxu0 %v4360
        %5051 = vmatpush.msra.mxu0 %v4358
        %5052 = vmatpush.msra.mxu0 %v4356
        %5053 = vmatpush.msra.mxu0 %v4354
        %5054 = vmatpush.msra.mxu0 %v4352
        %5055 = vmatpush.msra.mxu0 %v4350
        %5056 = vmatpush.msra.mxu0 %v4348
        %5057 = vmatmul.f32.gmra.mxu0 %v3959
        %v5058 = vpop.f32.mrf.mxu0
        %v5059 = vadd.f32 %v5039, %v5058
        %5060 = vdwg.mxu0
        %5061 = vmatpush.msra.mxu0 %v4410
        %5062 = vmatpush.msra.mxu0 %v4408
        %5063 = vmatpush.msra.mxu0 %v4406
        %5064 = vmatpush.msra.mxu0 %v4404
        %5065 = vmatpush.msra.mxu0 %v4402
        %5066 = vmatpush.msra.mxu0 %v4400
        %5067 = vmatpush.msra.mxu0 %v4398
        %5068 = vmatpush.msra.mxu0 %v4396
        %5069 = vmatpush.msra.mxu0 %v4394
        %5070 = vmatpush.msra.mxu0 %v4392
        %5071 = vmatpush.msra.mxu0 %v4390
        %5072 = vmatpush.msra.mxu0 %v4388
        %5073 = vmatpush.msra.mxu0 %v4386
        %5074 = vmatpush.msra.mxu0 %v4384
        %5075 = vmatpush.msra.mxu0 %v4382
        %5076 = vmatpush.msra.mxu0 %v4380
        %5077 = vmatmul.f32.gmra.mxu0 %v3960
        %v5078 = vpop.f32.mrf.mxu0
        %v5079 = vadd.f32 %v5059, %v5078
        %5080 = vdwg.mxu0
        %5081 = vmatpush.msra.mxu0 %v4442
        %5082 = vmatpush.msra.mxu0 %v4440
        %5083 = vmatpush.msra.mxu0 %v4438
        %5084 = vmatpush.msra.mxu0 %v4436
        %5085 = vmatpush.msra.mxu0 %v4434
        %5086 = vmatpush.msra.mxu0 %v4432
        %5087 = vmatpush.msra.mxu0 %v4430
        %5088 = vmatpush.msra.mxu0 %v4428
        %5089 = vmatpush.msra.mxu0 %v4426
        %5090 = vmatpush.msra.mxu0 %v4424
        %5091 = vmatpush.msra.mxu0 %v4422
        %5092 = vmatpush.msra.mxu0 %v4420
        %5093 = vmatpush.msra.mxu0 %v4418
        %5094 = vmatpush.msra.mxu0 %v4416
        %5095 = vmatpush.msra.mxu0 %v4414
        %5096 = vmatpush.msra.mxu0 %v4412
        %5097 = vmatmul.f32.gmra.mxu0 %v3961
        %v5098 = vpop.f32.mrf.mxu0
        %v5099 = vadd.f32 %v5079, %v5098
        %5100 = vdwg.mxu0
        %5101 = vmatpush.msra.mxu0 %v4474
        %5102 = vmatpush.msra.mxu0 %v4472
        %5103 = vmatpush.msra.mxu0 %v4470
        %5104 = vmatpush.msra.mxu0 %v4468
        %5105 = vmatpush.msra.mxu0 %v4466
        %5106 = vmatpush.msra.mxu0 %v4464
        %5107 = vmatpush.msra.mxu0 %v4462
        %5108 = vmatpush.msra.mxu0 %v4460
        %5109 = vmatpush.msra.mxu0 %v4458
        %5110 = vmatpush.msra.mxu0 %v4456
        %5111 = vmatpush.msra.mxu0 %v4454
        %5112 = vmatpush.msra.mxu0 %v4452
        %5113 = vmatpush.msra.mxu0 %v4450
        %5114 = vmatpush.msra.mxu0 %v4448
        %5115 = vmatpush.msra.mxu0 %v4446
        %5116 = vmatpush.msra.mxu0 %v4444
        %5117 = vmatmul.f32.gmra.mxu0 %v3962
        %v5118 = vpop.f32.mrf.mxu0
        %v5119 = vadd.f32 %v5099, %v5118
        %5120 = vdwg.mxu0
        %vm5121 = vcmp.gt.f32.partialorder %v4799, 0.0
        %vm5122 = vcmp.gt.f32.partialorder %v5119, 0.0
        %v5123 = vmul.f32 %v4799, 0.01
        %v5124 = vmul.f32 %v5119, 0.01
        %v5125 = vsel %vm5121, %v4799, %v5123
        %v5126 = vsel %vm5122, %v5119, %v5124
        %v5127 = vld [vmem:[#allocation15] sm:$0xff]
        %v5128 = vld [vmem:[#allocation15 + $0x8] sm:$0xff]
        %v5129 = vld [vmem:[#allocation15 + $0x10] sm:$0xff]
        %v5130 = vld [vmem:[#allocation15 + $0x18] sm:$0xff]
        %v5131 = vld [vmem:[#allocation15 + $0x20] sm:$0xff]
        %v5132 = vld [vmem:[#allocation15 + $0x28] sm:$0xff]
        %v5133 = vld [vmem:[#allocation15 + $0x30] sm:$0xff]
        %v5134 = vld [vmem:[#allocation15 + $0x38] sm:$0xff]
        %v5135 = vld [vmem:[#allocation15 + $0x40] sm:$0xff]
        %v5136 = vld [vmem:[#allocation15 + $0x48] sm:$0xff]
        %v5137 = vld [vmem:[#allocation15 + $0x50] sm:$0xff]
        %v5138 = vld [vmem:[#allocation15 + $0x58] sm:$0xff]
        %v5139 = vld [vmem:[#allocation15 + $0x60] sm:$0xff]
        %v5140 = vld [vmem:[#allocation15 + $0x68] sm:$0xff]
        %v5141 = vld [vmem:[#allocation15 + $0x70] sm:$0xff]
        %v5142 = vld [vmem:[#allocation15 + $0x78] sm:$0xff]
        %v5143 = vld [vmem:[#allocation15 + $0x80] sm:$0xff]
        %v5144 = vld [vmem:[#allocation15 + $0x88] sm:$0xff]
        %v5145 = vld [vmem:[#allocation15 + $0x90] sm:$0xff]
        %v5146 = vld [vmem:[#allocation15 + $0x98] sm:$0xff]
        %v5147 = vld [vmem:[#allocation15 + $0xa0] sm:$0xff]
        %v5148 = vld [vmem:[#allocation15 + $0xa8] sm:$0xff]
        %v5149 = vld [vmem:[#allocation15 + $0xb0] sm:$0xff]
        %v5150 = vld [vmem:[#allocation15 + $0xb8] sm:$0xff]
        %v5151 = vld [vmem:[#allocation15 + $0xc0] sm:$0xff]
        %v5152 = vld [vmem:[#allocation15 + $0xc8] sm:$0xff]
        %v5153 = vld [vmem:[#allocation15 + $0xd0] sm:$0xff]
        %v5154 = vld [vmem:[#allocation15 + $0xd8] sm:$0xff]
        %v5155 = vld [vmem:[#allocation15 + $0xe0] sm:$0xff]
        %v5156 = vld [vmem:[#allocation15 + $0xe8] sm:$0xff]
        %v5157 = vld [vmem:[#allocation15 + $0xf0] sm:$0xff]
        %v5158 = vld [vmem:[#allocation15 + $0xf8] sm:$0xff]
        %v5159 = vld [vmem:[#allocation15 + $0x100] sm:$0xff]
        %v5160 = vld [vmem:[#allocation15 + $0x108] sm:$0xff]
        %v5161 = vld [vmem:[#allocation15 + $0x110] sm:$0xff]
        %v5162 = vld [vmem:[#allocation15 + $0x118] sm:$0xff]
        %v5163 = vld [vmem:[#allocation15 + $0x120] sm:$0xff]
        %v5164 = vld [vmem:[#allocation15 + $0x128] sm:$0xff]
        %v5165 = vld [vmem:[#allocation15 + $0x130] sm:$0xff]
        %v5166 = vld [vmem:[#allocation15 + $0x138] sm:$0xff]
        %v5167 = vld [vmem:[#allocation15 + $0x140] sm:$0xff]
        %v5168 = vld [vmem:[#allocation15 + $0x148] sm:$0xff]
        %v5169 = vld [vmem:[#allocation15 + $0x150] sm:$0xff]
        %v5170 = vld [vmem:[#allocation15 + $0x158] sm:$0xff]
        %v5171 = vld [vmem:[#allocation15 + $0x160] sm:$0xff]
        %v5172 = vld [vmem:[#allocation15 + $0x168] sm:$0xff]
        %v5173 = vld [vmem:[#allocation15 + $0x170] sm:$0xff]
        %v5174 = vld [vmem:[#allocation15 + $0x178] sm:$0xff]
        %v5175 = vld [vmem:[#allocation15 + $0x180] sm:$0xff]
        %v5176 = vld [vmem:[#allocation15 + $0x188] sm:$0xff]
        %v5177 = vld [vmem:[#allocation15 + $0x190] sm:$0xff]
        %v5178 = vld [vmem:[#allocation15 + $0x198] sm:$0xff]
        %v5179 = vld [vmem:[#allocation15 + $0x1a0] sm:$0xff]
        %v5180 = vld [vmem:[#allocation15 + $0x1a8] sm:$0xff]
        %v5181 = vld [vmem:[#allocation15 + $0x1b0] sm:$0xff]
        %v5182 = vld [vmem:[#allocation15 + $0x1b8] sm:$0xff]
        %v5183 = vld [vmem:[#allocation15 + $0x1c0] sm:$0xff]
        %v5184 = vld [vmem:[#allocation15 + $0x1c8] sm:$0xff]
        %v5185 = vld [vmem:[#allocation15 + $0x1d0] sm:$0xff]
        %v5186 = vld [vmem:[#allocation15 + $0x1d8] sm:$0xff]
        %v5187 = vld [vmem:[#allocation15 + $0x1e0] sm:$0xff]
        %v5188 = vld [vmem:[#allocation15 + $0x1e8] sm:$0xff]
        %v5189 = vld [vmem:[#allocation15 + $0x1f0] sm:$0xff]
        %v5190 = vld [vmem:[#allocation15 + $0x1f8] sm:$0xff]
        %v5191 = vld [vmem:[#allocation16 + $0x1e] sm:$0x3]
        %v5193 = vperm.slane %v5191, 0
        %v5194 = vperm.slane %v5191, 1
        %5197 = vmatpush.msra.mxu0 %v5157
        %5198 = vmatpush.msra.mxu0 %v5155
        %5199 = vmatpush.msra.mxu0 %v5153
        %5200 = vmatpush.msra.mxu0 %v5151
        %5201 = vmatpush.msra.mxu0 %v5149
        %5202 = vmatpush.msra.mxu0 %v5147
        %5203 = vmatpush.msra.mxu0 %v5145
        %5204 = vmatpush.msra.mxu0 %v5143
        %5205 = vmatpush.msra.mxu0 %v5141
        %5206 = vmatpush.msra.mxu0 %v5139
        %5207 = vmatpush.msra.mxu0 %v5137
        %5208 = vmatpush.msra.mxu0 %v5135
        %5209 = vmatpush.msra.mxu0 %v5133
        %5210 = vmatpush.msra.mxu0 %v5131
        %5211 = vmatpush.msra.mxu0 %v5129
        %5212 = vmatpush.msra.mxu0 %v5127
        %5213 = vmatmul.f32.gmra.mxu0 %v5125
        %v5214 = vpop.f32.mrf.mxu0
        %v5215 = vadd.f32 %v5193, %v5214
        %5216 = vdwg.mxu0
        %5217 = vmatpush.msra.mxu0 %v5189
        %5218 = vmatpush.msra.mxu0 %v5187
        %5219 = vmatpush.msra.mxu0 %v5185
        %5220 = vmatpush.msra.mxu0 %v5183
        %5221 = vmatpush.msra.mxu0 %v5181
        %5222 = vmatpush.msra.mxu0 %v5179
        %5223 = vmatpush.msra.mxu0 %v5177
        %5224 = vmatpush.msra.mxu0 %v5175
        %5225 = vmatpush.msra.mxu0 %v5173
        %5226 = vmatpush.msra.mxu0 %v5171
        %5227 = vmatpush.msra.mxu0 %v5169
        %5228 = vmatpush.msra.mxu0 %v5167
        %5229 = vmatpush.msra.mxu0 %v5165
        %5230 = vmatpush.msra.mxu0 %v5163
        %5231 = vmatpush.msra.mxu0 %v5161
        %5232 = vmatpush.msra.mxu0 %v5159
        %5233 = vmatmul.f32.gmra.mxu0 %v5126
        %v5234 = vpop.f32.mrf.mxu0
        %v5235 = vadd.f32 %v5215, %v5234
        %5236 = vdwg.mxu0
        %5237 = vmatpush.msra.mxu0 %v5158
        %5238 = vmatpush.msra.mxu0 %v5156
        %5239 = vmatpush.msra.mxu0 %v5154
        %5240 = vmatpush.msra.mxu0 %v5152
        %5241 = vmatpush.msra.mxu0 %v5150
        %5242 = vmatpush.msra.mxu0 %v5148
        %5243 = vmatpush.msra.mxu0 %v5146
        %5244 = vmatpush.msra.mxu0 %v5144
        %5245 = vmatpush.msra.mxu0 %v5142
        %5246 = vmatpush.msra.mxu0 %v5140
        %5247 = vmatpush.msra.mxu0 %v5138
        %5248 = vmatpush.msra.mxu0 %v5136
        %5249 = vmatpush.msra.mxu0 %v5134
        %5250 = vmatpush.msra.mxu0 %v5132
        %5251 = vmatpush.msra.mxu0 %v5130
        %5252 = vmatpush.msra.mxu0 %v5128
        %5253 = vmatmul.f32.gmra.mxu0 %v5125
        %v5254 = vpop.f32.mrf.mxu0
        %v5255 = vadd.f32 %v5194, %v5254
        %5256 = vdwg.mxu0
        %5257 = vmatpush.msra.mxu0 %v5190
        %5258 = vmatpush.msra.mxu0 %v5188
        %5259 = vmatpush.msra.mxu0 %v5186
        %5260 = vmatpush.msra.mxu0 %v5184
        %5261 = vmatpush.msra.mxu0 %v5182
        %5262 = vmatpush.msra.mxu0 %v5180
        %5263 = vmatpush.msra.mxu0 %v5178
        %5264 = vmatpush.msra.mxu0 %v5176
        %5265 = vmatpush.msra.mxu0 %v5174
        %5266 = vmatpush.msra.mxu0 %v5172
        %5267 = vmatpush.msra.mxu0 %v5170
        %5268 = vmatpush.msra.mxu0 %v5168
        %5269 = vmatpush.msra.mxu0 %v5166
        %5270 = vmatpush.msra.mxu0 %v5164
        %5271 = vmatpush.msra.mxu0 %v5162
        %5272 = vmatpush.msra.mxu0 %v5160
        %5273 = vmatmul.f32.gmra.mxu0 %v5126
        %v5274 = vpop.f32.mrf.mxu0
        %v5275 = vadd.f32 %v5255, %v5274
        %5276 = vdwg.mxu0
        %5277 = vst [vmem:[%s525] sm:$0xff] %v5235
        %5278 = vst [vmem:[%s525 + $0x8] sm:$0xff] %v5275
        %p5279 = scmp.lt.s32.totalorder %s29, 1
        %s5280 = scalar_select %p5279, %s29, 1
        %s5281 = smul.addr %s5280, 2
        %s5282 = smul.addr %s5281, 8
        %s5283 = scalar_lea.vmem %s10, %s5282
        // Predicated region
        $region101: #{conv_decoder_forward.1} parent=59 // pred_check
          %p5284 = pneg %p262
        $region102: #{conv_decoder_forward.1} parent=59 // pred_check_branch
          %5286 = sbr.rel (%p5284) target = $region104
        $region103: #{conv_decoder_forward.1} parent=59 // pred_region
          _
        $region104: #{conv_decoder_forward.1} parent=59 // pred_fallthru
          _
      $region60: #{conv_decoder_forward.1} parent=5 // pred_fallthru
        _
      %p5287 = scmp.le.s32.totalorder 2, %s24
      // Predicated region
      $region105: #{conv_decoder_forward.1} parent=5 // pred_check
        %p5288 = pneg %p5287
      $region106: #{conv_decoder_forward.1} parent=5 // pred_check_branch
        %5290 = sbr.rel (%p5288) target = $region108
      $region107: #{conv_decoder_forward.1} parent=5 // pred_region
        %s5291 = ssub.s32 %s24, 2
        // Predicated region
        $region109: #{conv_decoder_forward.1} parent=107 // pred_check
          %p5292 = pneg %p268
        $region110: #{conv_decoder_forward.1} parent=107 // pred_check_branch
          %5294 = sbr.rel (%p5292) target = $region112
        $region111: #{conv_decoder_forward.1} parent=107 // pred_region
          %p5295 = scmp.lt.s32.totalorder %s30, 1
          %s5296 = scalar_select %p5295, %s30, 1
          %s5297 = smul.addr %s5296, 2
          %s5298 = smul.addr %s5297, 8
          %s5299 = scalar_lea.vmem %s10, %s5298
        $region112: #{conv_decoder_forward.1} parent=107 // pred_fallthru
          _
      $region108: #{conv_decoder_forward.1} parent=5 // pred_fallthru
        _
    $region6: #{conv_decoder_forward.1} parent=1 // loop_footer
      %s28 = sadd.s32 1, %s24
    $region7: #{conv_decoder_forward.1} parent=1 // loop_footer_branch
      %23 = sbr.rel target = $region3
    $region8: #{conv_decoder_forward.1} parent=1 // loop_exit
      _
    %5300 = vsyncpa [#allocation3], 1
    %s5301 = scalar_lea.sflag [#allocation3], 1
    %5302 = vsyncpa %s5301, 1
    %5303 = vsyncpa [#allocation5], 1
    %5304 = vsyncpa [#allocation8], 1
    %5305 = vsyncpa [#allocation11], 1
    %5306 = vsyncpa [#allocation14], 1
    %5307 = vsyncpa [#allocation17], 1

</llo_original>
